<compile_context>
chip_gen: v6e
topology: v6e:2x2x1
jax: 0.10.0
libtpu: 0.0.40
codegen_flags: <defaults>
</compile_context>

<pallas_src>
import functools

import jax
import jax.numpy as jnp
from jax import lax
from jax.experimental import pallas as pl
from jax.experimental.pallas import tpu as pltpu


def _context_block_kernel(
    x_ref,                                 # (1, H, W, Cin)   f32
    w0_ref, b0_ref,                        # (Cin, Cout) bf16, (1, Cout) f32
    wd1_ref, wd2_ref, wd3_ref, wd4_ref,    # (9*Cout, Cout) bf16 each (im2col layout)
    bcat_ref,                              # (1, 4*Cout) f32   (conv1..4 biases, concatenated)
    wf_ref, bf_ref,                        # (4*Cout, Cin) bf16, (1, Cin) f32
    out_ref,                               # (1, H, W, Cin)   f32
    pad_scr,                               # VMEM scratch (H+2p, W+2p, Cout) f32
    *, H, W, Cin, Cout, dils, pad,
):
    HW = H * W
    x3 = x_ref[0]                                   # (H, W, Cin)
    x2d = x3.reshape(HW, Cin)

    # ---- conv0: 1x1 pointwise (bf16 MXU operands, f32 accumulate) + bias
    xr = jnp.dot(x2d.astype(jnp.bfloat16), w0_ref[...],
                 preferred_element_type=jnp.float32) + b0_ref[...]      # (HW, Cout)

    # ---- zero-padded x_reduce in a VMEM scratch (halo = `pad` on every side).
    # Re-zeroed each step: the batch grid axis is "parallel", so scratch state
    # cannot be carried across steps (megacore splits the grid across cores).
    pad_scr[...] = jnp.zeros_like(pad_scr)
    pad_scr[pad:pad + H, pad:pad + W, :] = xr.reshape(H, W, Cout)

    # ---- four dilated 3x3 convs, each as a single im2col matmul
    branches = []
    for d, w_ref in zip(dils, (wd1_ref, wd2_ref, wd3_ref, wd4_ref)):
        taps = [
            pad_scr[pad - d + kh * d: pad - d + kh * d + H,
                    pad - d + kw * d: pad - d + kw * d + W, :].astype(jnp.bfloat16)
            for kh in range(3) for kw in range(3)
        ]
        patches = jnp.concatenate(taps, axis=-1)      # (H, W, 9*Cout) bf16
        patches = patches.reshape(HW, 9 * Cout)
        branches.append(jnp.dot(patches, w_ref[...],
                                preferred_element_type=jnp.float32))    # (HW, Cout)

    # ---- lane-dense (HW, 4*Cout = 128): bias + LeakyReLU(0.2)
    cat = jnp.concatenate(branches, axis=-1) + bcat_ref[...]
    cat = jnp.where(cat >= 0.0, cat, 0.2 * cat)

    # ---- fusion 1x1 conv + residual add
    fused = jnp.dot(cat.astype(jnp.bfloat16), wf_ref[...],
                    preferred_element_type=jnp.float32) + bf_ref[...]   # (HW, Cin)
    out_ref[0] = (fused + x2d).reshape(H, W, Cin)


def context_block(x_nchw, params, dilations=(1, 2, 3, 4)):
    """ContextBlock forward. x_nchw: (N, Cin, H, W) f32 -> (N, Cin, H, W)."""
    x = jnp.transpose(x_nchw, (0, 2, 3, 1)).astype(jnp.float32)         # NHWC
    N, H, W, Cin = x.shape
    Cout = params["w0"].shape[1]
    pad = 8                                  # halo: >= max dilation, 8-aligned scratch writes
    assert max(dilations) <= pad

    # bf16 MXU operands, packed to im2col layout; biases stay f32.
    w0 = params["w0"].astype(jnp.bfloat16)                              # (Cin, Cout)
    wds = [params[f"w{i}"].reshape(9 * Cout, Cout).astype(jnp.bfloat16)
           for i in (1, 2, 3, 4)]                                       # (9*Cout, Cout)
    bcat = jnp.concatenate([params[f"b{i}"] for i in (1, 2, 3, 4)], axis=1)   # (1, 4*Cout)
    wf = params["wf"].astype(jnp.bfloat16)                              # (4*Cout, Cin)

    inputs = [x, w0, params["b0"], *wds, bcat, wf, params["bf"]]

    def _full(arr):   # small parameter: whole array in VMEM, same block every step
        return pl.BlockSpec(arr.shape, lambda *_: (0,) * arr.ndim)

    in_specs = [pl.BlockSpec((1, H, W, Cin), lambda b: (b, 0, 0, 0))]
    in_specs += [_full(a) for a in inputs[1:]]

    flops = 2 * N * H * W * (Cin * Cout + 4 * 9 * Cout * Cout + 4 * Cout * Cin)
    bytes_accessed = int(sum(a.size * a.dtype.itemsize for a in inputs)
                         + N * H * W * Cin * 4)

    kern = functools.partial(_context_block_kernel, H=H, W=W, Cin=Cin, Cout=Cout,
                             dils=tuple(dilations), pad=pad)

    out = pl.pallas_call(
        kern,
        out_shape=jax.ShapeDtypeStruct((N, H, W, Cin), jnp.float32),
        grid_spec=pltpu.PrefetchScalarGridSpec(
            num_scalar_prefetch=0,
            grid=(N,),
            in_specs=in_specs,
            out_specs=pl.BlockSpec((1, H, W, Cin), lambda b: (b, 0, 0, 0)),
            scratch_shapes=[pltpu.VMEM((H + 2 * pad, W + 2 * pad, Cout), jnp.float32)],
        ),
        compiler_params=pltpu.CompilerParams(
            dimension_semantics=("parallel",),
            vmem_limit_bytes=32 * 1024 * 1024,
        ),
        cost_estimate=pl.CostEstimate(flops=flops, transcendentals=0,
                                      bytes_accessed=bytes_accessed),
    )(*inputs)
    return jnp.transpose(out, (0, 3, 1, 2))


def make_params(key, c_in=32, c_out=32):
    """Parameters in JAX-friendly layouts: conv weights HWIO, linear weights (in, out)."""
    ks = jax.random.split(key, 12)
    s = 0.1
    p = {
        "w0": s * jax.random.normal(ks[0], (c_in, c_out), jnp.float32),
        "b0": s * jax.random.normal(ks[1], (1, c_out), jnp.float32),
        "wf": s * jax.random.normal(ks[2], (4 * c_out, c_in), jnp.float32),
        "bf": s * jax.random.normal(ks[3], (1, c_in), jnp.float32),
    }
    for i in range(1, 5):
        p[f"w{i}"] = s * jax.random.normal(ks[3 + i], (3, 3, c_out, c_out), jnp.float32)
        p[f"b{i}"] = s * jax.random.normal(ks[7 + i], (1, c_out), jnp.float32)
    return p


def reference_forward(x_nchw, params, dilations=(1, 2, 3, 4)):
    """Pure-JAX reference mirroring the kernel's bf16-MXU / f32-accumulate policy."""
    bf16, f32 = jnp.bfloat16, jnp.float32
    x = jnp.transpose(x_nchw, (0, 2, 3, 1)).astype(f32)                 # NHWC
    xr = jnp.tensordot(x.astype(bf16), params["w0"].astype(bf16),
                       axes=[[3], [0]],
                       preferred_element_type=f32) + params["b0"][0]
    branches = []
    for i, d in enumerate(dilations, start=1):
        c = lax.conv_general_dilated(
            xr.astype(bf16), params[f"w{i}"].astype(bf16),
            window_strides=(1, 1), padding=[(d, d), (d, d)],
            rhs_dilation=(d, d),
            dimension_numbers=("NHWC", "HWIO", "NHWC"),
            preferred_element_type=f32) + params[f"b{i}"][0]
        branches.append(jnp.where(c >= 0.0, c, 0.2 * c))
    cat = jnp.concatenate(branches, axis=-1)                            # (N, H, W, 4*Cout)
    fused = jnp.tensordot(cat.astype(bf16), params["wf"].astype(bf16),
                          axes=[[3], [0]],
                          preferred_element_type=f32) + params["bf"][0]
    out = fused + x
    return jnp.transpose(out, (0, 3, 1, 2))


if __name__ == "__main__":
    N, Cin, H, W = 2, 32, 16, 16          # module defaults: input_channel = output_channel = 32
    key = jax.random.PRNGKey(0)
    kx, kp = jax.random.split(key)
    x = jax.random.normal(kx, (N, Cin, H, W), jnp.float32)   # NCHW (PyTorch layout)
    params = make_params(kp, c_in=Cin, c_out=32)

    out = jax.block_until_ready(context_block(x, params))
    ref = jax.block_until_ready(reference_forward(x, params))

    assert out.shape == (N, Cin, H, W)
    assert jnp.allclose(out, ref, atol=5e-3, rtol=5e-3), "mismatch vs JAX reference"
    print("KERNEL_OK")
</pallas_src>

<mosaic_0001>
module attributes {stable_mosaic.version = 11 : i64} {
  func.func @_context_block_kernel(%arg0: i32, %arg1: memref<1x16x16x32xf32, #tpu.memory_space<vmem>>, %arg2: memref<32x32xbf16, #tpu.memory_space<vmem>>, %arg3: memref<1x32xf32, #tpu.memory_space<vmem>>, %arg4: memref<288x32xbf16, #tpu.memory_space<vmem>>, %arg5: memref<288x32xbf16, #tpu.memory_space<vmem>>, %arg6: memref<288x32xbf16, #tpu.memory_space<vmem>>, %arg7: memref<288x32xbf16, #tpu.memory_space<vmem>>, %arg8: memref<1x128xf32, #tpu.memory_space<vmem>>, %arg9: memref<128x32xbf16, #tpu.memory_space<vmem>>, %arg10: memref<1x32xf32, #tpu.memory_space<vmem>>, %arg11: memref<1x16x16x32xf32, #tpu.memory_space<vmem>>, %arg12: memref<32x32x32xf32, #tpu.memory_space<vmem>>) attributes {dimension_semantics = [#tpu.dimension_semantics<parallel>], iteration_bounds = array<i64: 2>, scalar_prefetch = 0 : i64, scratch_operands = 1 : i64, tpu.core_type = #tpu.core_type<tc>, window_params = [{transform_indices = @transform_0, window_bounds = array<i64: 1, 16, 16, 32>}, {pipeline_mode = #tpu.pipeline_mode<synchronous>, transform_indices = @transform_1, window_bounds = array<i64: 32, 32>}, {pipeline_mode = #tpu.pipeline_mode<synchronous>, transform_indices = @transform_2, window_bounds = array<i64: 1, 32>}, {pipeline_mode = #tpu.pipeline_mode<synchronous>, transform_indices = @transform_3, window_bounds = array<i64: 288, 32>}, {pipeline_mode = #tpu.pipeline_mode<synchronous>, transform_indices = @transform_4, window_bounds = array<i64: 288, 32>}, {pipeline_mode = #tpu.pipeline_mode<synchronous>, transform_indices = @transform_5, window_bounds = array<i64: 288, 32>}, {pipeline_mode = #tpu.pipeline_mode<synchronous>, transform_indices = @transform_6, window_bounds = array<i64: 288, 32>}, {pipeline_mode = #tpu.pipeline_mode<synchronous>, transform_indices = @transform_7, window_bounds = array<i64: 1, 128>}, {pipeline_mode = #tpu.pipeline_mode<synchronous>, transform_indices = @transform_8, window_bounds = array<i64: 128, 32>}, {pipeline_mode = #tpu.pipeline_mode<synchronous>, transform_indices = @transform_9, window_bounds = array<i64: 1, 32>}, {transform_indices = @transform_10, window_bounds = array<i64: 1, 16, 16, 32>}]} {
    %c0 = arith.constant 0 : index
    %c0_0 = arith.constant 0 : index
    %c0_1 = arith.constant 0 : index
    %c0_2 = arith.constant 0 : index
    %0 = vector.load %arg1[%c0, %c0_0, %c0_1, %c0_2] : memref<1x16x16x32xf32, #tpu.memory_space<vmem>>, vector<1x16x16x32xf32>
    %1 = vector.shape_cast %0 : vector<1x16x16x32xf32> to vector<16x16x32xf32>
    %2 = vector.shape_cast %1 : vector<16x16x32xf32> to vector<256x32xf32>
    %3 = arith.truncf %2 : vector<256x32xf32> to vector<256x32xbf16>
    %c0_3 = arith.constant 0 : index
    %c0_4 = arith.constant 0 : index
    %4 = vector.load %arg2[%c0_3, %c0_4] : memref<32x32xbf16, #tpu.memory_space<vmem>>, vector<32x32xbf16>
    %cst = arith.constant dense<0.000000e+00> : vector<256x32xf32>
    %5 = tpu.matmul %3, %4, %cst {dimension_numbers = #tpu.dot_dimension_numbers<[1], [0], [0], [1], [0, 0, 1, 1], [], []>} : vector<256x32xbf16>, vector<32x32xbf16>, vector<256x32xf32> -> vector<256x32xf32>
    %c0_5 = arith.constant 0 : index
    %c0_6 = arith.constant 0 : index
    %6 = vector.load %arg3[%c0_5, %c0_6] : memref<1x32xf32, #tpu.memory_space<vmem>>, vector<1x32xf32>
    %7 = vector.broadcast %6 : vector<1x32xf32> to vector<256x32xf32>
    %8 = arith.addf %5, %7 : vector<256x32xf32>
    %cst_7 = arith.constant 0.000000e+00 : f32
    %9 = vector.broadcast %cst_7 : f32 to vector<32x32x32xf32>
    %c0_8 = arith.constant 0 : index
    %c0_9 = arith.constant 0 : index
    %c0_10 = arith.constant 0 : index
    %10 = vector.load %arg12[%c0_8, %c0_9, %c0_10] : memref<32x32x32xf32, #tpu.memory_space<vmem>>, vector<32x32x32xf32>
    tpu.vector_store %arg12[%c0_8, %c0_9, %c0_10], %9 {strides = array<i32>} : memref<32x32x32xf32, #tpu.memory_space<vmem>>, vector<32x32x32xf32>,
    %11 = vector.shape_cast %8 : vector<256x32xf32> to vector<16x16x32xf32>
    %c8 = arith.constant 8 : index
    %c8_11 = arith.constant 8 : index
    %c0_12 = arith.constant 0 : index
    %12 = vector.load %arg12[%c8, %c8_11, %c0_12] : memref<32x32x32xf32, #tpu.memory_space<vmem>>, vector<16x16x32xf32>
    tpu.vector_store %arg12[%c8, %c8_11, %c0_12], %11 {strides = array<i32>} : memref<32x32x32xf32, #tpu.memory_space<vmem>>, vector<16x16x32xf32>,
    %c7 = arith.constant 7 : index
    %c7_13 = arith.constant 7 : index
    %c0_14 = arith.constant 0 : index
    %13 = vector.load %arg12[%c7, %c7_13, %c0_14] : memref<32x32x32xf32, #tpu.memory_space<vmem>>, vector<16x16x32xf32>
    %14 = arith.truncf %13 : vector<16x16x32xf32> to vector<16x16x32xbf16>
    %c7_15 = arith.constant 7 : index
    %c8_16 = arith.constant 8 : index
    %c0_17 = arith.constant 0 : index
    %15 = vector.load %arg12[%c7_15, %c8_16, %c0_17] : memref<32x32x32xf32, #tpu.memory_space<vmem>>, vector<16x16x32xf32>
    %16 = arith.truncf %15 : vector<16x16x32xf32> to vector<16x16x32xbf16>
    %c7_18 = arith.constant 7 : index
    %c9 = arith.constant 9 : index
    %c0_19 = arith.constant 0 : index
    %17 = vector.load %arg12[%c7_18, %c9, %c0_19] : memref<32x32x32xf32, #tpu.memory_space<vmem>>, vector<16x16x32xf32>
    %18 = arith.truncf %17 : vector<16x16x32xf32> to vector<16x16x32xbf16>
    %c8_20 = arith.constant 8 : index
    %c7_21 = arith.constant 7 : index
    %c0_22 = arith.constant 0 : index
    %19 = vector.load %arg12[%c8_20, %c7_21, %c0_22] : memref<32x32x32xf32, #tpu.memory_space<vmem>>, vector<16x16x32xf32>
    %20 = arith.truncf %19 : vector<16x16x32xf32> to vector<16x16x32xbf16>
    %c8_23 = arith.constant 8 : index
    %c8_24 = arith.constant 8 : index
    %c0_25 = arith.constant 0 : index
    %21 = vector.load %arg12[%c8_23, %c8_24, %c0_25] : memref<32x32x32xf32, #tpu.memory_space<vmem>>, vector<16x16x32xf32>
    %22 = arith.truncf %21 : vector<16x16x32xf32> to vector<16x16x32xbf16>
    %c8_26 = arith.constant 8 : index
    %c9_27 = arith.constant 9 : index
    %c0_28 = arith.constant 0 : index
    %23 = vector.load %arg12[%c8_26, %c9_27, %c0_28] : memref<32x32x32xf32, #tpu.memory_space<vmem>>, vector<16x16x32xf32>
    %24 = arith.truncf %23 : vector<16x16x32xf32> to vector<16x16x32xbf16>
    %c9_29 = arith.constant 9 : index
    %c7_30 = arith.constant 7 : index
    %c0_31 = arith.constant 0 : index
    %25 = vector.load %arg12[%c9_29, %c7_30, %c0_31] : memref<32x32x32xf32, #tpu.memory_space<vmem>>, vector<16x16x32xf32>
    %26 = arith.truncf %25 : vector<16x16x32xf32> to vector<16x16x32xbf16>
    %c9_32 = arith.constant 9 : index
    %c8_33 = arith.constant 8 : index
    %c0_34 = arith.constant 0 : index
    %27 = vector.load %arg12[%c9_32, %c8_33, %c0_34] : memref<32x32x32xf32, #tpu.memory_space<vmem>>, vector<16x16x32xf32>
    %28 = arith.truncf %27 : vector<16x16x32xf32> to vector<16x16x32xbf16>
    %c9_35 = arith.constant 9 : index
    %c9_36 = arith.constant 9 : index
    %c0_37 = arith.constant 0 : index
    %29 = vector.load %arg12[%c9_35, %c9_36, %c0_37] : memref<32x32x32xf32, #tpu.memory_space<vmem>>, vector<16x16x32xf32>
    %30 = arith.truncf %29 : vector<16x16x32xf32> to vector<16x16x32xbf16>
    %31 = tpu.concatenate %14, %16, %18, %20, %22, %24, %26, %28, %30 in 2 : vector<16x16x32xbf16>, vector<16x16x32xbf16>, vector<16x16x32xbf16>, vector<16x16x32xbf16>, vector<16x16x32xbf16>, vector<16x16x32xbf16>, vector<16x16x32xbf16>, vector<16x16x32xbf16>, vector<16x16x32xbf16> -> vector<16x16x288xbf16>
    %32 = vector.shape_cast %31 : vector<16x16x288xbf16> to vector<256x288xbf16>
    %c0_38 = arith.constant 0 : index
    %c0_39 = arith.constant 0 : index
    %33 = vector.load %arg4[%c0_38, %c0_39] : memref<288x32xbf16, #tpu.memory_space<vmem>>, vector<288x32xbf16>
    %cst_40 = arith.constant dense<0.000000e+00> : vector<256x32xf32>
    %34 = tpu.matmul %32, %33, %cst_40 {dimension_numbers = #tpu.dot_dimension_numbers<[1], [0], [0], [1], [0, 0, 1, 1], [], []>} : vector<256x288xbf16>, vector<288x32xbf16>, vector<256x32xf32> -> vector<256x32xf32>
    %c6 = arith.constant 6 : index
    %c6_41 = arith.constant 6 : index
    %c0_42 = arith.constant 0 : index
    %35 = vector.load %arg12[%c6, %c6_41, %c0_42] : memref<32x32x32xf32, #tpu.memory_space<vmem>>, vector<16x16x32xf32>
    %36 = arith.truncf %35 : vector<16x16x32xf32> to vector<16x16x32xbf16>
    %c6_43 = arith.constant 6 : index
    %c8_44 = arith.constant 8 : index
    %c0_45 = arith.constant 0 : index
    %37 = vector.load %arg12[%c6_43, %c8_44, %c0_45] : memref<32x32x32xf32, #tpu.memory_space<vmem>>, vector<16x16x32xf32>
    %38 = arith.truncf %37 : vector<16x16x32xf32> to vector<16x16x32xbf16>
    %c6_46 = arith.constant 6 : index
    %c10 = arith.constant 10 : index
    %c0_47 = arith.constant 0 : index
    %39 = vector.load %arg12[%c6_46, %c10, %c0_47] : memref<32x32x32xf32, #tpu.memory_space<vmem>>, vector<16x16x32xf32>
    %40 = arith.truncf %39 : vector<16x16x32xf32> to vector<16x16x32xbf16>
    %c8_48 = arith.constant 8 : index
    %c6_49 = arith.constant 6 : index
    %c0_50 = arith.constant 0 : index
    %41 = vector.load %arg12[%c8_48, %c6_49, %c0_50] : memref<32x32x32xf32, #tpu.memory_space<vmem>>, vector<16x16x32xf32>
    %42 = arith.truncf %41 : vector<16x16x32xf32> to vector<16x16x32xbf16>
    %c8_51 = arith.constant 8 : index
    %c8_52 = arith.constant 8 : index
    %c0_53 = arith.constant 0 : index
    %43 = vector.load %arg12[%c8_51, %c8_52, %c0_53] : memref<32x32x32xf32, #tpu.memory_space<vmem>>, vector<16x16x32xf32>
    %44 = arith.truncf %43 : vector<16x16x32xf32> to vector<16x16x32xbf16>
    %c8_54 = arith.constant 8 : index
    %c10_55 = arith.constant 10 : index
    %c0_56 = arith.constant 0 : index
    %45 = vector.load %arg12[%c8_54, %c10_55, %c0_56] : memref<32x32x32xf32, #tpu.memory_space<vmem>>, vector<16x16x32xf32>
    %46 = arith.truncf %45 : vector<16x16x32xf32> to vector<16x16x32xbf16>
    %c10_57 = arith.constant 10 : index
    %c6_58 = arith.constant 6 : index
    %c0_59 = arith.constant 0 : index
    %47 = vector.load %arg12[%c10_57, %c6_58, %c0_59] : memref<32x32x32xf32, #tpu.memory_space<vmem>>, vector<16x16x32xf32>
    %48 = arith.truncf %47 : vector<16x16x32xf32> to vector<16x16x32xbf16>
    %c10_60 = arith.constant 10 : index
    %c8_61 = arith.constant 8 : index
    %c0_62 = arith.constant 0 : index
    %49 = vector.load %arg12[%c10_60, %c8_61, %c0_62] : memref<32x32x32xf32, #tpu.memory_space<vmem>>, vector<16x16x32xf32>
    %50 = arith.truncf %49 : vector<16x16x32xf32> to vector<16x16x32xbf16>
    %c10_63 = arith.constant 10 : index
    %c10_64 = arith.constant 10 : index
    %c0_65 = arith.constant 0 : index
    %51 = vector.load %arg12[%c10_63, %c10_64, %c0_65] : memref<32x32x32xf32, #tpu.memory_space<vmem>>, vector<16x16x32xf32>
    %52 = arith.truncf %51 : vector<16x16x32xf32> to vector<16x16x32xbf16>
    %53 = tpu.concatenate %36, %38, %40, %42, %44, %46, %48, %50, %52 in 2 : vector<16x16x32xbf16>, vector<16x16x32xbf16>, vector<16x16x32xbf16>, vector<16x16x32xbf16>, vector<16x16x32xbf16>, vector<16x16x32xbf16>, vector<16x16x32xbf16>, vector<16x16x32xbf16>, vector<16x16x32xbf16> -> vector<16x16x288xbf16>
    %54 = vector.shape_cast %53 : vector<16x16x288xbf16> to vector<256x288xbf16>
    %c0_66 = arith.constant 0 : index
    %c0_67 = arith.constant 0 : index
    %55 = vector.load %arg5[%c0_66, %c0_67] : memref<288x32xbf16, #tpu.memory_space<vmem>>, vector<288x32xbf16>
    %cst_68 = arith.constant dense<0.000000e+00> : vector<256x32xf32>
    %56 = tpu.matmul %54, %55, %cst_68 {dimension_numbers = #tpu.dot_dimension_numbers<[1], [0], [0], [1], [0, 0, 1, 1], [], []>} : vector<256x288xbf16>, vector<288x32xbf16>, vector<256x32xf32> -> vector<256x32xf32>
    %c5 = arith.constant 5 : index
    %c5_69 = arith.constant 5 : index
    %c0_70 = arith.constant 0 : index
    %57 = vector.load %arg12[%c5, %c5_69, %c0_70] : memref<32x32x32xf32, #tpu.memory_space<vmem>>, vector<16x16x32xf32>
    %58 = arith.truncf %57 : vector<16x16x32xf32> to vector<16x16x32xbf16>
    %c5_71 = arith.constant 5 : index
    %c8_72 = arith.constant 8 : index
    %c0_73 = arith.constant 0 : index
    %59 = vector.load %arg12[%c5_71, %c8_72, %c0_73] : memref<32x32x32xf32, #tpu.memory_space<vmem>>, vector<16x16x32xf32>
    %60 = arith.truncf %59 : vector<16x16x32xf32> to vector<16x16x32xbf16>
    %c5_74 = arith.constant 5 : index
    %c11 = arith.constant 11 : index
    %c0_75 = arith.constant 0 : index
    %61 = vector.load %arg12[%c5_74, %c11, %c0_75] : memref<32x32x32xf32, #tpu.memory_space<vmem>>, vector<16x16x32xf32>
    %62 = arith.truncf %61 : vector<16x16x32xf32> to vector<16x16x32xbf16>
    %c8_76 = arith.constant 8 : index
    %c5_77 = arith.constant 5 : index
    %c0_78 = arith.constant 0 : index
    %63 = vector.load %arg12[%c8_76, %c5_77, %c0_78] : memref<32x32x32xf32, #tpu.memory_space<vmem>>, vector<16x16x32xf32>
    %64 = arith.truncf %63 : vector<16x16x32xf32> to vector<16x16x32xbf16>
    %c8_79 = arith.constant 8 : index
    %c8_80 = arith.constant 8 : index
    %c0_81 = arith.constant 0 : index
    %65 = vector.load %arg12[%c8_79, %c8_80, %c0_81] : memref<32x32x32xf32, #tpu.memory_space<vmem>>, vector<16x16x32xf32>
    %66 = arith.truncf %65 : vector<16x16x32xf32> to vector<16x16x32xbf16>
    %c8_82 = arith.constant 8 : index
    %c11_83 = arith.constant 11 : index
    %c0_84 = arith.constant 0 : index
    %67 = vector.load %arg12[%c8_82, %c11_83, %c0_84] : memref<32x32x32xf32, #tpu.memory_space<vmem>>, vector<16x16x32xf32>
    %68 = arith.truncf %67 : vector<16x16x32xf32> to vector<16x16x32xbf16>
    %c11_85 = arith.constant 11 : index
    %c5_86 = arith.constant 5 : index
    %c0_87 = arith.constant 0 : index
    %69 = vector.load %arg12[%c11_85, %c5_86, %c0_87] : memref<32x32x32xf32, #tpu.memory_space<vmem>>, vector<16x16x32xf32>
    %70 = arith.truncf %69 : vector<16x16x32xf32> to vector<16x16x32xbf16>
    %c11_88 = arith.constant 11 : index
    %c8_89 = arith.constant 8 : index
    %c0_90 = arith.constant 0 : index
    %71 = vector.load %arg12[%c11_88, %c8_89, %c0_90] : memref<32x32x32xf32, #tpu.memory_space<vmem>>, vector<16x16x32xf32>
    %72 = arith.truncf %71 : vector<16x16x32xf32> to vector<16x16x32xbf16>
    %c11_91 = arith.constant 11 : index
    %c11_92 = arith.constant 11 : index
    %c0_93 = arith.constant 0 : index
    %73 = vector.load %arg12[%c11_91, %c11_92, %c0_93] : memref<32x32x32xf32, #tpu.memory_space<vmem>>, vector<16x16x32xf32>
    %74 = arith.truncf %73 : vector<16x16x32xf32> to vector<16x16x32xbf16>
    %75 = tpu.concatenate %58, %60, %62, %64, %66, %68, %70, %72, %74 in 2 : vector<16x16x32xbf16>, vector<16x16x32xbf16>, vector<16x16x32xbf16>, vector<16x16x32xbf16>, vector<16x16x32xbf16>, vector<16x16x32xbf16>, vector<16x16x32xbf16>, vector<16x16x32xbf16>, vector<16x16x32xbf16> -> vector<16x16x288xbf16>
    %76 = vector.shape_cast %75 : vector<16x16x288xbf16> to vector<256x288xbf16>
    %c0_94 = arith.constant 0 : index
    %c0_95 = arith.constant 0 : index
    %77 = vector.load %arg6[%c0_94, %c0_95] : memref<288x32xbf16, #tpu.memory_space<vmem>>, vector<288x32xbf16>
    %cst_96 = arith.constant dense<0.000000e+00> : vector<256x32xf32>
    %78 = tpu.matmul %76, %77, %cst_96 {dimension_numbers = #tpu.dot_dimension_numbers<[1], [0], [0], [1], [0, 0, 1, 1], [], []>} : vector<256x288xbf16>, vector<288x32xbf16>, vector<256x32xf32> -> vector<256x32xf32>
    %c4 = arith.constant 4 : index
    %c4_97 = arith.constant 4 : index
    %c0_98 = arith.constant 0 : index
    %79 = vector.load %arg12[%c4, %c4_97, %c0_98] : memref<32x32x32xf32, #tpu.memory_space<vmem>>, vector<16x16x32xf32>
    %80 = arith.truncf %79 : vector<16x16x32xf32> to vector<16x16x32xbf16>
    %c4_99 = arith.constant 4 : index
    %c8_100 = arith.constant 8 : index
    %c0_101 = arith.constant 0 : index
    %81 = vector.load %arg12[%c4_99, %c8_100, %c0_101] : memref<32x32x32xf32, #tpu.memory_space<vmem>>, vector<16x16x32xf32>
    %82 = arith.truncf %81 : vector<16x16x32xf32> to vector<16x16x32xbf16>
    %c4_102 = arith.constant 4 : index
    %c12 = arith.constant 12 : index
    %c0_103 = arith.constant 0 : index
    %83 = vector.load %arg12[%c4_102, %c12, %c0_103] : memref<32x32x32xf32, #tpu.memory_space<vmem>>, vector<16x16x32xf32>
    %84 = arith.truncf %83 : vector<16x16x32xf32> to vector<16x16x32xbf16>
    %c8_104 = arith.constant 8 : index
    %c4_105 = arith.constant 4 : index
    %c0_106 = arith.constant 0 : index
    %85 = vector.load %arg12[%c8_104, %c4_105, %c0_106] : memref<32x32x32xf32, #tpu.memory_space<vmem>>, vector<16x16x32xf32>
    %86 = arith.truncf %85 : vector<16x16x32xf32> to vector<16x16x32xbf16>
    %c8_107 = arith.constant 8 : index
    %c8_108 = arith.constant 8 : index
    %c0_109 = arith.constant 0 : index
    %87 = vector.load %arg12[%c8_107, %c8_108, %c0_109] : memref<32x32x32xf32, #tpu.memory_space<vmem>>, vector<16x16x32xf32>
    %88 = arith.truncf %87 : vector<16x16x32xf32> to vector<16x16x32xbf16>
    %c8_110 = arith.constant 8 : index
    %c12_111 = arith.constant 12 : index
    %c0_112 = arith.constant 0 : index
    %89 = vector.load %arg12[%c8_110, %c12_111, %c0_112] : memref<32x32x32xf32, #tpu.memory_space<vmem>>, vector<16x16x32xf32>
    %90 = arith.truncf %89 : vector<16x16x32xf32> to vector<16x16x32xbf16>
    %c12_113 = arith.constant 12 : index
    %c4_114 = arith.constant 4 : index
    %c0_115 = arith.constant 0 : index
    %91 = vector.load %arg12[%c12_113, %c4_114, %c0_115] : memref<32x32x32xf32, #tpu.memory_space<vmem>>, vector<16x16x32xf32>
    %92 = arith.truncf %91 : vector<16x16x32xf32> to vector<16x16x32xbf16>
    %c12_116 = arith.constant 12 : index
    %c8_117 = arith.constant 8 : index
    %c0_118 = arith.constant 0 : index
    %93 = vector.load %arg12[%c12_116, %c8_117, %c0_118] : memref<32x32x32xf32, #tpu.memory_space<vmem>>, vector<16x16x32xf32>
    %94 = arith.truncf %93 : vector<16x16x32xf32> to vector<16x16x32xbf16>
    %c12_119 = arith.constant 12 : index
    %c12_120 = arith.constant 12 : index
    %c0_121 = arith.constant 0 : index
    %95 = vector.load %arg12[%c12_119, %c12_120, %c0_121] : memref<32x32x32xf32, #tpu.memory_space<vmem>>, vector<16x16x32xf32>
    %96 = arith.truncf %95 : vector<16x16x32xf32> to vector<16x16x32xbf16>
    %97 = tpu.concatenate %80, %82, %84, %86, %88, %90, %92, %94, %96 in 2 : vector<16x16x32xbf16>, vector<16x16x32xbf16>, vector<16x16x32xbf16>, vector<16x16x32xbf16>, vector<16x16x32xbf16>, vector<16x16x32xbf16>, vector<16x16x32xbf16>, vector<16x16x32xbf16>, vector<16x16x32xbf16> -> vector<16x16x288xbf16>
    %98 = vector.shape_cast %97 : vector<16x16x288xbf16> to vector<256x288xbf16>
    %c0_122 = arith.constant 0 : index
    %c0_123 = arith.constant 0 : index
    %99 = vector.load %arg7[%c0_122, %c0_123] : memref<288x32xbf16, #tpu.memory_space<vmem>>, vector<288x32xbf16>
    %cst_124 = arith.constant dense<0.000000e+00> : vector<256x32xf32>
    %100 = tpu.matmul %98, %99, %cst_124 {dimension_numbers = #tpu.dot_dimension_numbers<[1], [0], [0], [1], [0, 0, 1, 1], [], []>} : vector<256x288xbf16>, vector<288x32xbf16>, vector<256x32xf32> -> vector<256x32xf32>
    %101 = tpu.concatenate %34, %56, %78, %100 in 1 : vector<256x32xf32>, vector<256x32xf32>, vector<256x32xf32>, vector<256x32xf32> -> vector<256x128xf32>
    %c0_125 = arith.constant 0 : index
    %c0_126 = arith.constant 0 : index
    %102 = vector.load %arg8[%c0_125, %c0_126] : memref<1x128xf32, #tpu.memory_space<vmem>>, vector<1x128xf32>
    %103 = vector.broadcast %102 : vector<1x128xf32> to vector<256x128xf32>
    %104 = arith.addf %101, %103 : vector<256x128xf32>
    %cst_127 = arith.constant 0.000000e+00 : f32
    %105 = vector.broadcast %cst_127 : f32 to vector<256x128xf32>
    %106 = arith.cmpf oge, %104, %105 : vector<256x128xf32>
    %cst_128 = arith.constant 2.000000e-01 : f32
    %107 = vector.broadcast %cst_128 : f32 to vector<256x128xf32>
    %108 = arith.mulf %107, %104 : vector<256x128xf32>
    %109 = arith.select %106, %104, %108 : vector<256x128xi1>, vector<256x128xf32>
    %110 = arith.truncf %109 : vector<256x128xf32> to vector<256x128xbf16>
    %c0_129 = arith.constant 0 : index
    %c0_130 = arith.constant 0 : index
    %111 = vector.load %arg9[%c0_129, %c0_130] : memref<128x32xbf16, #tpu.memory_space<vmem>>, vector<128x32xbf16>
    %cst_131 = arith.constant dense<0.000000e+00> : vector<256x32xf32>
    %112 = tpu.matmul %110, %111, %cst_131 {dimension_numbers = #tpu.dot_dimension_numbers<[1], [0], [0], [1], [0, 0, 1, 1], [], []>} : vector<256x128xbf16>, vector<128x32xbf16>, vector<256x32xf32> -> vector<256x32xf32>
    %c0_132 = arith.constant 0 : index
    %c0_133 = arith.constant 0 : index
    %113 = vector.load %arg10[%c0_132, %c0_133] : memref<1x32xf32, #tpu.memory_space<vmem>>, vector<1x32xf32>
    %114 = vector.broadcast %113 : vector<1x32xf32> to vector<256x32xf32>
    %115 = arith.addf %112, %114 : vector<256x32xf32>
    %116 = arith.addf %115, %2 : vector<256x32xf32>
    %117 = vector.shape_cast %116 : vector<256x32xf32> to vector<16x16x32xf32>
    %c0_134 = arith.constant 0 : index
    %c0_135 = arith.constant 0 : index
    %c0_136 = arith.constant 0 : index
    %c0_137 = arith.constant 0 : index
    %118 = vector.load %arg11[%c0_134, %c0_135, %c0_136, %c0_137] : memref<1x16x16x32xf32, #tpu.memory_space<vmem>>, vector<1x16x16x32xf32>
    %119 = vector.shape_cast %118 : vector<1x16x16x32xf32> to vector<16x16x32xf32>
    %120 = vector.shape_cast %117 : vector<16x16x32xf32> to vector<1x16x16x32xf32>
    tpu.vector_store %arg11[%c0_134, %c0_135, %c0_136, %c0_137], %120 {strides = array<i32>} : memref<1x16x16x32xf32, #tpu.memory_space<vmem>>, vector<1x16x16x32xf32>,
    return
  }
  func.func @transform_0(%arg0: i32) -> (i32, i32, i32, i32) {
    %c0_i32 = arith.constant 0 : i32
    %c0_i32_0 = arith.constant 0 : i32
    %c0_i32_1 = arith.constant 0 : i32
    %c0_i32_2 = arith.constant 0 : i32
    return %arg0, %c0_i32, %c0_i32_0, %c0_i32_1 : i32, i32, i32, i32
  }
  func.func @transform_1(%arg0: i32) -> (i32, i32) {
    %c0_i32 = arith.constant 0 : i32
    %c0_i32_0 = arith.constant 0 : i32
    %c0_i32_1 = arith.constant 0 : i32
    return %c0_i32, %c0_i32_0 : i32, i32
  }
  func.func @transform_2(%arg0: i32) -> (i32, i32) {
    %c0_i32 = arith.constant 0 : i32
    %c0_i32_0 = arith.constant 0 : i32
    %c0_i32_1 = arith.constant 0 : i32
    return %c0_i32, %c0_i32_0 : i32, i32
  }
  func.func @transform_3(%arg0: i32) -> (i32, i32) {
    %c0_i32 = arith.constant 0 : i32
    %c0_i32_0 = arith.constant 0 : i32
    %c0_i32_1 = arith.constant 0 : i32
    return %c0_i32, %c0_i32_0 : i32, i32
  }
  func.func @transform_4(%arg0: i32) -> (i32, i32) {
    %c0_i32 = arith.constant 0 : i32
    %c0_i32_0 = arith.constant 0 : i32
    %c0_i32_1 = arith.constant 0 : i32
    return %c0_i32, %c0_i32_0 : i32, i32
  }
  func.func @transform_5(%arg0: i32) -> (i32, i32) {
    %c0_i32 = arith.constant 0 : i32
    %c0_i32_0 = arith.constant 0 : i32
    %c0_i32_1 = arith.constant 0 : i32
    return %c0_i32, %c0_i32_0 : i32, i32
  }
  func.func @transform_6(%arg0: i32) -> (i32, i32) {
    %c0_i32 = arith.constant 0 : i32
    %c0_i32_0 = arith.constant 0 : i32
    %c0_i32_1 = arith.constant 0 : i32
    return %c0_i32, %c0_i32_0 : i32, i32
  }
  func.func @transform_7(%arg0: i32) -> (i32, i32) {
    %c0_i32 = arith.constant 0 : i32
    %c0_i32_0 = arith.constant 0 : i32
    %c0_i32_1 = arith.constant 0 : i32
    return %c0_i32, %c0_i32_0 : i32, i32
  }
  func.func @transform_8(%arg0: i32) -> (i32, i32) {
    %c0_i32 = arith.constant 0 : i32
    %c0_i32_0 = arith.constant 0 : i32
    %c0_i32_1 = arith.constant 0 : i32
    return %c0_i32, %c0_i32_0 : i32, i32
  }
  func.func @transform_9(%arg0: i32) -> (i32, i32) {
    %c0_i32 = arith.constant 0 : i32
    %c0_i32_0 = arith.constant 0 : i32
    %c0_i32_1 = arith.constant 0 : i32
    return %c0_i32, %c0_i32_0 : i32, i32
  }
  func.func @transform_10(%arg0: i32) -> (i32, i32, i32, i32) {
    %c0_i32 = arith.constant 0 : i32
    %c0_i32_0 = arith.constant 0 : i32
    %c0_i32_1 = arith.constant 0 : i32
    %c0_i32_2 = arith.constant 0 : i32
    return %arg0, %c0_i32, %c0_i32_0, %c0_i32_1 : i32, i32, i32, i32
  }
}

</mosaic_0001>

<llo_original>
// kernel: tpu_custom_call.1
$region0: #{tpu_custom_call.1}
  #allocation0 [shape = 'u32[]', space=smem, size = 0x4, offset = 0x4, fixed_abs, tag = 'smem constant byte address 0x4 - core index']
  #allocation1 [shape = 'u32[144,128]{1,0:T(1,128)}', space=vmem, size = 0x12000, scoped, tag = 'internal scratch']
  #allocation2 [shape = 'f32[32,32,32]{2,1,0:T(8,128)}', space=vmem, size = 0x80000, scoped, tag = 'scratch operand']
  %s0 = inlined_call_operand.vmem [shape: f32[2,16,16,32], index: 0, kind: input, shape index: {}]
  %s1 = inlined_call_operand.vmem [shape: bf16[32,32], index: 1, kind: input, shape index: {}]
  %s2 = inlined_call_operand.vmem [shape: f32[1,32], index: 2, kind: input, shape index: {}]
  %s3 = inlined_call_operand.vmem [shape: bf16[288,32], index: 3, kind: input, shape index: {}]
  %s4 = inlined_call_operand.vmem [shape: bf16[288,32], index: 4, kind: input, shape index: {}]
  %s5 = inlined_call_operand.vmem [shape: bf16[288,32], index: 5, kind: input, shape index: {}]
  %s6 = inlined_call_operand.vmem [shape: bf16[288,32], index: 6, kind: input, shape index: {}]
  %s7 = inlined_call_operand.vmem [shape: f32[1,128], index: 7, kind: input, shape index: {}]
  %s8 = inlined_call_operand.vmem [shape: bf16[128,32], index: 8, kind: input, shape index: {}]
  %s9 = inlined_call_operand.vmem [shape: f32[1,32], index: 9, kind: input, shape index: {}]
  %s10 = inlined_call_operand.hbm [shape: f32[2,16,16,32], index: 10, kind: output, shape index: {}]
  %s11 = sld [smem:[#allocation0]]
  $region73: #{tpu_custom_call.1} parent=0
    _
  %s13 = ssub.s32 1, %s11
  %s14 = scalar_select 0, %s13, %s11
  $region1: #{tpu_custom_call.1} parent=0
    #allocation3 [shape = 'u8[262144]{0}', space=vmem, size = 0x40000, scoped, tag = 'output window, operand 0']
    #allocation4 [shape = 's32[2]{0}', space=sflag, size = 0x8, scoped, tag = 'scoped memory for tpu_custom_call.1']
    %15 = vsyncpa [#allocation4], 0
    %s16 = scalar_lea.sflag [#allocation4], 1
    %17 = vsyncpa %s16, 0
    loop: start=0, step=1, limit=4
    $region2: #{tpu_custom_call.1} parent=1 // loop_pre_header
      _
    $region3: #{tpu_custom_call.1} parent=1 // loop_header
      %s19 = sphi 0, %s23
      %p20 = scmp.ge.s32.totalorder %s19, 4
      %s29 = sphi 0, %s31
      %s32 = sphi 0, %s29
      %s33 = sphi 0, %s32
      %s49 = sphi 0, %s33
      %s53 = sphi 0, %s53
      %s55 = sphi 0, %s53
      %s56 = sphi 0, %s55
      %s70 = sphi 0, %s56
      %s74 = sphi 0, %s74
      %s76 = sphi 0, %s74
      %s77 = sphi 0, %s76
      %s91 = sphi 0, %s77
      %s95 = sphi 0, %s95
      %s97 = sphi 0, %s95
      %s98 = sphi 0, %s97
      %s112 = sphi 0, %s98
      %s116 = sphi 0, %s116
      %s118 = sphi 0, %s116
      %s119 = sphi 0, %s118
      %s133 = sphi 0, %s119
      %s137 = sphi 0, %s137
      %s139 = sphi 0, %s137
      %s140 = sphi 0, %s139
      %s154 = sphi 0, %s140
      %s158 = sphi 0, %s158
      %s160 = sphi 0, %s158
      %s161 = sphi 0, %s160
      %s175 = sphi 0, %s161
      %s179 = sphi 0, %s179
      %s181 = sphi 0, %s179
      %s182 = sphi 0, %s181
      %s196 = sphi 0, %s182
      %s200 = sphi 0, %s200
      %s202 = sphi 0, %s200
      %s203 = sphi 0, %s202
      %s217 = sphi 0, %s203
      %s221 = sphi 0, %s221
      %s223 = sphi 0, %s221
      %s224 = sphi 0, %s223
      %s238 = sphi 0, %s224
      %s244 = sphi 0, %s246
      %s247 = sphi 0, %s244
      %s248 = sphi 0, %s247
      %s264 = sphi 0, %s248
    $region4: #{tpu_custom_call.1} parent=1 // loop_header_branch
      %22 = sbr.rel (%p20) target = $region8
    $region5: #{tpu_custom_call.1} parent=1 // loop_body
      %s24 = ssub.s32 %s19, 1
      %s25 = ssub.s32 %s19, 2
      %s26 = sadd.s32 %s19, 1
      %s27 = ssub.s32 %s19, %s26
      %p28 = scmp.eq.s32.totalorder %s27, 0
      %s30 = sadd.s32 %s29, 1
      %s31 = scalar_select %p28, %s29, %s30
      %p34 = pneg %p28
      %p35 = scmp.eq.s32.totalorder %s19, 1
      %p36 = por %p34, %p35
      %p37 = scmp.ne.s32.totalorder %s29, %s32
      %p38 = scmp.eq.s32.totalorder %s19, 0
      %p39 = por %p37, %p38
      %p40 = scmp.ne.s32.totalorder %s29, %s32
      %p41 = scmp.eq.s32.totalorder %s24, 1
      %p42 = por %p40, %p41
      %p43 = scmp.ne.s32.totalorder %s32, %s33
      %p44 = scmp.eq.s32.totalorder %s24, 0
      %p45 = por %p43, %p44
      %p46 = scmp.ne.s32.totalorder %s32, %s33
      %p47 = scmp.eq.s32.totalorder %s25, 1
      %p48 = por %p46, %p47
      %p50 = scmp.ne.s32.totalorder %s33, %s49
      %p51 = scmp.eq.s32.totalorder %s25, 0
      %p52 = por %p50, %p51
      %s54 = sadd.s32 %s53, 1
      %p57 = scmp.eq.s32.totalorder %s19, 1
      %p58 = scmp.ne.s32.totalorder %s53, %s55
      %p59 = scmp.eq.s32.totalorder %s19, 0
      %p60 = por %p58, %p59
      %p61 = scmp.ne.s32.totalorder %s53, %s55
      %p62 = scmp.eq.s32.totalorder %s24, 1
      %p63 = por %p61, %p62
      %p64 = scmp.ne.s32.totalorder %s55, %s56
      %p65 = scmp.eq.s32.totalorder %s24, 0
      %p66 = por %p64, %p65
      %p67 = scmp.ne.s32.totalorder %s55, %s56
      %p68 = scmp.eq.s32.totalorder %s25, 1
      %p69 = por %p67, %p68
      %p71 = scmp.ne.s32.totalorder %s56, %s70
      %p72 = scmp.eq.s32.totalorder %s25, 0
      %p73 = por %p71, %p72
      %s75 = sadd.s32 %s74, 1
      %p78 = scmp.eq.s32.totalorder %s19, 1
      %p79 = scmp.ne.s32.totalorder %s74, %s76
      %p80 = scmp.eq.s32.totalorder %s19, 0
      %p81 = por %p79, %p80
      %p82 = scmp.ne.s32.totalorder %s74, %s76
      %p83 = scmp.eq.s32.totalorder %s24, 1
      %p84 = por %p82, %p83
      %p85 = scmp.ne.s32.totalorder %s76, %s77
      %p86 = scmp.eq.s32.totalorder %s24, 0
      %p87 = por %p85, %p86
      %p88 = scmp.ne.s32.totalorder %s76, %s77
      %p89 = scmp.eq.s32.totalorder %s25, 1
      %p90 = por %p88, %p89
      %p92 = scmp.ne.s32.totalorder %s77, %s91
      %p93 = scmp.eq.s32.totalorder %s25, 0
      %p94 = por %p92, %p93
      %s96 = sadd.s32 %s95, 1
      %p99 = scmp.eq.s32.totalorder %s19, 1
      %p100 = scmp.ne.s32.totalorder %s95, %s97
      %p101 = scmp.eq.s32.totalorder %s19, 0
      %p102 = por %p100, %p101
      %p103 = scmp.ne.s32.totalorder %s95, %s97
      %p104 = scmp.eq.s32.totalorder %s24, 1
      %p105 = por %p103, %p104
      %p106 = scmp.ne.s32.totalorder %s97, %s98
      %p107 = scmp.eq.s32.totalorder %s24, 0
      %p108 = por %p106, %p107
      %p109 = scmp.ne.s32.totalorder %s97, %s98
      %p110 = scmp.eq.s32.totalorder %s25, 1
      %p111 = por %p109, %p110
      %p113 = scmp.ne.s32.totalorder %s98, %s112
      %p114 = scmp.eq.s32.totalorder %s25, 0
      %p115 = por %p113, %p114
      %s117 = sadd.s32 %s116, 1
      %p120 = scmp.eq.s32.totalorder %s19, 1
      %p121 = scmp.ne.s32.totalorder %s116, %s118
      %p122 = scmp.eq.s32.totalorder %s19, 0
      %p123 = por %p121, %p122
      %p124 = scmp.ne.s32.totalorder %s116, %s118
      %p125 = scmp.eq.s32.totalorder %s24, 1
      %p126 = por %p124, %p125
      %p127 = scmp.ne.s32.totalorder %s118, %s119
      %p128 = scmp.eq.s32.totalorder %s24, 0
      %p129 = por %p127, %p128
      %p130 = scmp.ne.s32.totalorder %s118, %s119
      %p131 = scmp.eq.s32.totalorder %s25, 1
      %p132 = por %p130, %p131
      %p134 = scmp.ne.s32.totalorder %s119, %s133
      %p135 = scmp.eq.s32.totalorder %s25, 0
      %p136 = por %p134, %p135
      %s138 = sadd.s32 %s137, 1
      %p141 = scmp.eq.s32.totalorder %s19, 1
      %p142 = scmp.ne.s32.totalorder %s137, %s139
      %p143 = scmp.eq.s32.totalorder %s19, 0
      %p144 = por %p142, %p143
      %p145 = scmp.ne.s32.totalorder %s137, %s139
      %p146 = scmp.eq.s32.totalorder %s24, 1
      %p147 = por %p145, %p146
      %p148 = scmp.ne.s32.totalorder %s139, %s140
      %p149 = scmp.eq.s32.totalorder %s24, 0
      %p150 = por %p148, %p149
      %p151 = scmp.ne.s32.totalorder %s139, %s140
      %p152 = scmp.eq.s32.totalorder %s25, 1
      %p153 = por %p151, %p152
      %p155 = scmp.ne.s32.totalorder %s140, %s154
      %p156 = scmp.eq.s32.totalorder %s25, 0
      %p157 = por %p155, %p156
      %s159 = sadd.s32 %s158, 1
      %p162 = scmp.eq.s32.totalorder %s19, 1
      %p163 = scmp.ne.s32.totalorder %s158, %s160
      %p164 = scmp.eq.s32.totalorder %s19, 0
      %p165 = por %p163, %p164
      %p166 = scmp.ne.s32.totalorder %s158, %s160
      %p167 = scmp.eq.s32.totalorder %s24, 1
      %p168 = por %p166, %p167
      %p169 = scmp.ne.s32.totalorder %s160, %s161
      %p170 = scmp.eq.s32.totalorder %s24, 0
      %p171 = por %p169, %p170
      %p172 = scmp.ne.s32.totalorder %s160, %s161
      %p173 = scmp.eq.s32.totalorder %s25, 1
      %p174 = por %p172, %p173
      %p176 = scmp.ne.s32.totalorder %s161, %s175
      %p177 = scmp.eq.s32.totalorder %s25, 0
      %p178 = por %p176, %p177
      %s180 = sadd.s32 %s179, 1
      %p183 = scmp.eq.s32.totalorder %s19, 1
      %p184 = scmp.ne.s32.totalorder %s179, %s181
      %p185 = scmp.eq.s32.totalorder %s19, 0
      %p186 = por %p184, %p185
      %p187 = scmp.ne.s32.totalorder %s179, %s181
      %p188 = scmp.eq.s32.totalorder %s24, 1
      %p189 = por %p187, %p188
      %p190 = scmp.ne.s32.totalorder %s181, %s182
      %p191 = scmp.eq.s32.totalorder %s24, 0
      %p192 = por %p190, %p191
      %p193 = scmp.ne.s32.totalorder %s181, %s182
      %p194 = scmp.eq.s32.totalorder %s25, 1
      %p195 = por %p193, %p194
      %p197 = scmp.ne.s32.totalorder %s182, %s196
      %p198 = scmp.eq.s32.totalorder %s25, 0
      %p199 = por %p197, %p198
      %s201 = sadd.s32 %s200, 1
      %p204 = scmp.eq.s32.totalorder %s19, 1
      %p205 = scmp.ne.s32.totalorder %s200, %s202
      %p206 = scmp.eq.s32.totalorder %s19, 0
      %p207 = por %p205, %p206
      %p208 = scmp.ne.s32.totalorder %s200, %s202
      %p209 = scmp.eq.s32.totalorder %s24, 1
      %p210 = por %p208, %p209
      %p211 = scmp.ne.s32.totalorder %s202, %s203
      %p212 = scmp.eq.s32.totalorder %s24, 0
      %p213 = por %p211, %p212
      %p214 = scmp.ne.s32.totalorder %s202, %s203
      %p215 = scmp.eq.s32.totalorder %s25, 1
      %p216 = por %p214, %p215
      %p218 = scmp.ne.s32.totalorder %s203, %s217
      %p219 = scmp.eq.s32.totalorder %s25, 0
      %p220 = por %p218, %p219
      %s222 = sadd.s32 %s221, 1
      %p225 = scmp.eq.s32.totalorder %s19, 1
      %p226 = scmp.ne.s32.totalorder %s221, %s223
      %p227 = scmp.eq.s32.totalorder %s19, 0
      %p228 = por %p226, %p227
      %p229 = scmp.ne.s32.totalorder %s221, %s223
      %p230 = scmp.eq.s32.totalorder %s24, 1
      %p231 = por %p229, %p230
      %p232 = scmp.ne.s32.totalorder %s223, %s224
      %p233 = scmp.eq.s32.totalorder %s24, 0
      %p234 = por %p232, %p233
      %p235 = scmp.ne.s32.totalorder %s223, %s224
      %p236 = scmp.eq.s32.totalorder %s25, 1
      %p237 = por %p235, %p236
      %p239 = scmp.ne.s32.totalorder %s224, %s238
      %p240 = scmp.eq.s32.totalorder %s25, 0
      %p241 = por %p239, %p240
      %s242 = ssub.s32 %s19, %s26
      %p243 = scmp.eq.s32.totalorder %s242, 0
      %s245 = sadd.s32 %s244, 1
      %s246 = scalar_select %p243, %s244, %s245
      %p249 = pneg %p243
      %p250 = scmp.eq.s32.totalorder %s19, 1
      %p251 = por %p249, %p250
      %p252 = scmp.ne.s32.totalorder %s244, %s247
      %p253 = scmp.eq.s32.totalorder %s19, 0
      %p254 = por %p252, %p253
      %p255 = scmp.ne.s32.totalorder %s244, %s247
      %p256 = scmp.eq.s32.totalorder %s24, 1
      %p257 = por %p255, %p256
      %p258 = scmp.ne.s32.totalorder %s247, %s248
      %p259 = scmp.eq.s32.totalorder %s24, 0
      %p260 = por %p258, %p259
      %p261 = scmp.ne.s32.totalorder %s247, %s248
      %p262 = scmp.eq.s32.totalorder %s25, 1
      %p263 = por %p261, %p262
      %p265 = scmp.ne.s32.totalorder %s248, %s264
      %p266 = scmp.eq.s32.totalorder %s25, 0
      %p267 = por %p265, %p266
      %p268 = scmp.le.s32.totalorder 1, %s19
      %p269 = scmp.lt.s32.totalorder %s19, 3
      %p270 = pnand %p268, %p269
      %p271 = pneg %p270
      // Predicated region
      $region9: #{tpu_custom_call.1} parent=5 // pred_check
        _
      $region10: #{tpu_custom_call.1} parent=5 // pred_check_branch
        %273 = sbr.rel (%p270) target = $region12
      $region11: #{tpu_custom_call.1} parent=5 // pred_region
        %s274 = ssub.s32 %s19, 1
        // Predicated region
        $region13: #{tpu_custom_call.1} parent=11 // pred_check
          %p275 = pneg %p66
        $region14: #{tpu_custom_call.1} parent=11 // pred_check_branch
          %277 = sbr.rel (%p275) target = $region16
        $region15: #{tpu_custom_call.1} parent=11 // pred_region
          _
        $region16: #{tpu_custom_call.1} parent=11 // pred_fallthru
          _
        // Predicated region
        $region17: #{tpu_custom_call.1} parent=11 // pred_check
          %p278 = pneg %p87
        $region18: #{tpu_custom_call.1} parent=11 // pred_check_branch
          %280 = sbr.rel (%p278) target = $region20
        $region19: #{tpu_custom_call.1} parent=11 // pred_region
          _
        $region20: #{tpu_custom_call.1} parent=11 // pred_fallthru
          _
        // Predicated region
        $region21: #{tpu_custom_call.1} parent=11 // pred_check
          %p281 = pneg %p108
        $region22: #{tpu_custom_call.1} parent=11 // pred_check_branch
          %283 = sbr.rel (%p281) target = $region24
        $region23: #{tpu_custom_call.1} parent=11 // pred_region
          _
        $region24: #{tpu_custom_call.1} parent=11 // pred_fallthru
          _
        // Predicated region
        $region25: #{tpu_custom_call.1} parent=11 // pred_check
          %p284 = pneg %p129
        $region26: #{tpu_custom_call.1} parent=11 // pred_check_branch
          %286 = sbr.rel (%p284) target = $region28
        $region27: #{tpu_custom_call.1} parent=11 // pred_region
          _
        $region28: #{tpu_custom_call.1} parent=11 // pred_fallthru
          _
        // Predicated region
        $region29: #{tpu_custom_call.1} parent=11 // pred_check
          %p287 = pneg %p150
        $region30: #{tpu_custom_call.1} parent=11 // pred_check_branch
          %289 = sbr.rel (%p287) target = $region32
        $region31: #{tpu_custom_call.1} parent=11 // pred_region
          _
        $region32: #{tpu_custom_call.1} parent=11 // pred_fallthru
          _
        // Predicated region
        $region33: #{tpu_custom_call.1} parent=11 // pred_check
          %p290 = pneg %p171
        $region34: #{tpu_custom_call.1} parent=11 // pred_check_branch
          %292 = sbr.rel (%p290) target = $region36
        $region35: #{tpu_custom_call.1} parent=11 // pred_region
          _
        $region36: #{tpu_custom_call.1} parent=11 // pred_fallthru
          _
        // Predicated region
        $region37: #{tpu_custom_call.1} parent=11 // pred_check
          %p293 = pneg %p192
        $region38: #{tpu_custom_call.1} parent=11 // pred_check_branch
          %295 = sbr.rel (%p293) target = $region40
        $region39: #{tpu_custom_call.1} parent=11 // pred_region
          _
        $region40: #{tpu_custom_call.1} parent=11 // pred_fallthru
          _
        // Predicated region
        $region41: #{tpu_custom_call.1} parent=11 // pred_check
          %p296 = pneg %p213
        $region42: #{tpu_custom_call.1} parent=11 // pred_check_branch
          %298 = sbr.rel (%p296) target = $region44
        $region43: #{tpu_custom_call.1} parent=11 // pred_region
          _
        $region44: #{tpu_custom_call.1} parent=11 // pred_fallthru
          _
        // Predicated region
        $region45: #{tpu_custom_call.1} parent=11 // pred_check
          %p299 = pneg %p234
        $region46: #{tpu_custom_call.1} parent=11 // pred_check_branch
          %301 = sbr.rel (%p299) target = $region48
        $region47: #{tpu_custom_call.1} parent=11 // pred_region
          _
        $region48: #{tpu_custom_call.1} parent=11 // pred_fallthru
          _
      $region12: #{tpu_custom_call.1} parent=5 // pred_fallthru
        _
      %p302 = scmp.lt.s32.totalorder %s19, 2
      // Predicated region
      $region49: #{tpu_custom_call.1} parent=5 // pred_check
        %p303 = pneg %p302
      $region50: #{tpu_custom_call.1} parent=5 // pred_check_branch
        %305 = sbr.rel (%p303) target = $region52
      $region51: #{tpu_custom_call.1} parent=5 // pred_region
        // Predicated region
        $region53: #{tpu_custom_call.1} parent=51 // pred_check
          %p306 = pneg %p39
        $region54: #{tpu_custom_call.1} parent=51 // pred_check_branch
          %308 = sbr.rel (%p306) target = $region56
        $region55: #{tpu_custom_call.1} parent=51 // pred_region
          %p309 = scmp.lt.s32.totalorder %s19, 1
          %s310 = scalar_select %p309, %s19, 1
          %s311 = smul.addr %s310, 32
          %s312 = smul.addr %s311, 8
          %s313 = scalar_lea.vmem %s0, %s312
        $region56: #{tpu_custom_call.1} parent=51 // pred_fallthru
          _
      $region52: #{tpu_custom_call.1} parent=5 // pred_fallthru
        _
      %p314 = scmp.le.s32.totalorder 1, %s19
      %p315 = scmp.lt.s32.totalorder %s19, 3
      %p316 = pnand %p314, %p315
      %p317 = pneg %p316
      // Predicated region
      $region57: #{tpu_custom_call.1} parent=5 // pred_check
        _
      $region58: #{tpu_custom_call.1} parent=5 // pred_check_branch
        %319 = sbr.rel (%p316) target = $region60
      $region59: #{tpu_custom_call.1} parent=5 // pred_region
        %s320 = ssub.s32 %s19, 1
        %p321 = scmp.lt.s32.totalorder %s24, 1
        %s322 = scalar_select %p321, %s24, 1
        %s323 = smul.addr %s322, 32
        %s324 = smul.addr %s323, 8
        %s325 = scalar_lea.vmem %s0, %s324
        %p326 = pneg %p45
        %p327 = pneg %p42
        %p328 = pneg %p66
        %p329 = pneg %p63
        %p330 = pneg %p87
        %p331 = pneg %p84
        %p332 = pneg %p108
        %p333 = pneg %p105
        %p334 = pneg %p129
        %p335 = pneg %p126
        %p336 = pneg %p150
        %p337 = pneg %p147
        %p338 = pneg %p171
        %p339 = pneg %p168
        %p340 = pneg %p192
        %p341 = pneg %p189
        %p342 = pneg %p213
        %p343 = pneg %p210
        %p344 = pneg %p234
        %p345 = pneg %p231
        %p346 = pneg %p260
        %p347 = pneg %p257
        %s348 = sand.u32 %s247, 1
        %s349 = scalar_lea.sflag [#allocation4], %s348
        %s350 = sand.u32 %s247, 1
        %s351 = smul.addr %s350, 256
        %s352 = scalar_lea.vmem [#allocation3], %s351
        %p353 = scmp.lt.s32.totalorder %s24, 1
        %s354 = scalar_select %p353, %s24, 1
        %s355 = smul.addr %s354, 32
        %s356 = smul.addr %s355, 8
        %s357 = scalar_lea.vmem %s0, %s356
        %v359 = vld [vmem:[%s357] sm:$0xff]
        %v360 = vld [vmem:[%s357 + $0x8] sm:$0xff]
        %v361 = vld [vmem:[%s357 + $0x10] sm:$0xff]
        %v362 = vld [vmem:[%s357 + $0x18] sm:$0xff]
        %v363 = vld [vmem:[%s357 + $0x20] sm:$0xff]
        %v364 = vld [vmem:[%s357 + $0x28] sm:$0xff]
        %v365 = vld [vmem:[%s357 + $0x30] sm:$0xff]
        %v366 = vld [vmem:[%s357 + $0x38] sm:$0xff]
        %v367 = vld [vmem:[%s357 + $0x40] sm:$0xff]
        %v368 = vld [vmem:[%s357 + $0x48] sm:$0xff]
        %v369 = vld [vmem:[%s357 + $0x50] sm:$0xff]
        %v370 = vld [vmem:[%s357 + $0x58] sm:$0xff]
        %v371 = vld [vmem:[%s357 + $0x60] sm:$0xff]
        %v372 = vld [vmem:[%s357 + $0x68] sm:$0xff]
        %v373 = vld [vmem:[%s357 + $0x70] sm:$0xff]
        %v374 = vld [vmem:[%s357 + $0x78] sm:$0xff]
        %v375 = vld [vmem:[%s357 + $0x80] sm:$0xff]
        %v376 = vld [vmem:[%s357 + $0x88] sm:$0xff]
        %v377 = vld [vmem:[%s357 + $0x90] sm:$0xff]
        %v378 = vld [vmem:[%s357 + $0x98] sm:$0xff]
        %v379 = vld [vmem:[%s357 + $0xa0] sm:$0xff]
        %v380 = vld [vmem:[%s357 + $0xa8] sm:$0xff]
        %v381 = vld [vmem:[%s357 + $0xb0] sm:$0xff]
        %v382 = vld [vmem:[%s357 + $0xb8] sm:$0xff]
        %v383 = vld [vmem:[%s357 + $0xc0] sm:$0xff]
        %v384 = vld [vmem:[%s357 + $0xc8] sm:$0xff]
        %v385 = vld [vmem:[%s357 + $0xd0] sm:$0xff]
        %v386 = vld [vmem:[%s357 + $0xd8] sm:$0xff]
        %v387 = vld [vmem:[%s357 + $0xe0] sm:$0xff]
        %v388 = vld [vmem:[%s357 + $0xe8] sm:$0xff]
        %v389 = vld [vmem:[%s357 + $0xf0] sm:$0xff]
        %v390 = vld [vmem:[%s357 + $0xf8] sm:$0xff]
        %v391 = vpack.c.bf16 %v360, %v359
        %v392 = vpack.c.bf16 %v362, %v361
        %v393 = vpack.c.bf16 %v364, %v363
        %v394 = vpack.c.bf16 %v366, %v365
        %v395 = vpack.c.bf16 %v368, %v367
        %v396 = vpack.c.bf16 %v370, %v369
        %v397 = vpack.c.bf16 %v372, %v371
        %v398 = vpack.c.bf16 %v374, %v373
        %v399 = vpack.c.bf16 %v376, %v375
        %v400 = vpack.c.bf16 %v378, %v377
        %v401 = vpack.c.bf16 %v380, %v379
        %v402 = vpack.c.bf16 %v382, %v381
        %v403 = vpack.c.bf16 %v384, %v383
        %v404 = vpack.c.bf16 %v386, %v385
        %v405 = vpack.c.bf16 %v388, %v387
        %v406 = vpack.c.bf16 %v390, %v389
        %v407 = vld [vmem:[%s1] sm:$0xf]
        %v408 = vld [vmem:[%s1 + $0x4] sm:$0xf]
        %v409 = vld [vmem:[%s1 + $0x8] sm:$0xf]
        %v410 = vld [vmem:[%s1 + $0xc] sm:$0xf]
        %v411 = vld [vmem:[%s2] sm:$0x1]
        %v413 = vlaneseq
        %v414 = vshrl.u32 %v413, 7
        %v415 = vsub.s32 0, %v414
        %v416 = vrot.slane %v411, %v415
        %v422 = vunpack.c.l.b16 %v407
        %v423 = vunpack.c.l.b16 %v408
        %v424 = vunpack.c.l.b16 %v409
        %v425 = vunpack.c.l.b16 %v410
        %v426 = vpack.c.b16 %v423, %v422
        %v427 = vpack.c.b16 %v425, %v424
        %vm430 = vcmask 261120
        %v432 = vsel %vm430, %v391, 0
        %v435 = vsel %vm430, %v392, 0
        %v438 = vsel %vm430, %v393, 0
        %v441 = vsel %vm430, %v394, 0
        %v444 = vsel %vm430, %v395, 0
        %v447 = vsel %vm430, %v396, 0
        %v450 = vsel %vm430, %v397, 0
        %v453 = vsel %vm430, %v398, 0
        %v456 = vsel %vm430, %v399, 0
        %v459 = vsel %vm430, %v400, 0
        %v462 = vsel %vm430, %v401, 0
        %v465 = vsel %vm430, %v402, 0
        %v468 = vsel %vm430, %v403, 0
        %v471 = vsel %vm430, %v404, 0
        %v474 = vsel %vm430, %v405, 0
        %v477 = vsel %vm430, %v406, 0
        %479 = vmatprep.subr.bf16.mxu0 0
        %480 = vmatpush1.bf16.msra.mxu0 0
        %481 = vmatprep.subr.bf16.mxu0 0
        %482 = vmatpush1.bf16.msra.mxu0 0
        %483 = vmatprep.subr.bf16.mxu0 0
        %484 = vmatpush1.bf16.msra.mxu0 0
        %485 = vmatprep.subr.bf16.mxu0 0
        %486 = vmatpush1.bf16.msra.mxu0 0
        %487 = vmatprep.subr.bf16.mxu0 0
        %488 = vmatpush1.bf16.msra.mxu0 0
        %489 = vmatprep.subr.bf16.mxu0 0
        %490 = vmatpush1.bf16.msra.mxu0 0
        %491 = vmatprep.subr.bf16.mxu0 0
        %492 = vmatpush1.bf16.msra.mxu0 %v427
        %493 = vmatprep.subr.bf16.mxu0 0
        %494 = vmatpush1.bf16.msra.mxu0 %v426
        %495 = vmatprep.subr.bf16.mxu0 0
        %496 = vmatpush2.bf16.msra.mxu0 0
        %497 = vmatprep.subr.bf16.mxu0 0
        %498 = vmatpush2.bf16.msra.mxu0 0
        %499 = vmatprep.subr.bf16.mxu0 0
        %500 = vmatpush2.bf16.msra.mxu0 0
        %501 = vmatprep.subr.bf16.mxu0 0
        %502 = vmatpush2.bf16.msra.mxu0 0
        %503 = vmatprep.subr.bf16.mxu0 0
        %504 = vmatpush2.bf16.msra.mxu0 0
        %505 = vmatprep.subr.bf16.mxu0 0
        %506 = vmatpush2.bf16.msra.mxu0 0
        %507 = vmatprep.subr.bf16.mxu0 0
        %508 = vmatpush2.bf16.msra.mxu0 0
        %509 = vmatprep.subr.bf16.mxu0 0
        %510 = vmatpush2.bf16.msra.mxu0 0
        %511 = vmatprep.mubr.bf16.mxu0 0
        %512 = vmatmul.mubr.bf16.gmra.mxu0 %v432
        %v513 = vpop.f32.mrf.mxu0
        %v514 = vadd.f32 %v416, %v513
        %v515 = vpop.f32.mrf.mxu0
        %v516 = vpop.f32.mrf.mxu0
        %v517 = vadd.f32 %v416, %v516
        %v518 = vpop.f32.mrf.mxu0
        %519 = vmatprep.mubr.bf16.mxu0 0
        %520 = vmatmul.mubr.bf16.gmra.mxu0 %v435
        %v521 = vpop.f32.mrf.mxu0
        %v522 = vadd.f32 %v416, %v521
        %v523 = vpop.f32.mrf.mxu0
        %v524 = vpop.f32.mrf.mxu0
        %v525 = vadd.f32 %v416, %v524
        %v526 = vpop.f32.mrf.mxu0
        %527 = vmatprep.mubr.bf16.mxu0 0
        %528 = vmatmul.mubr.bf16.gmra.mxu0 %v438
        %v529 = vpop.f32.mrf.mxu0
        %v530 = vadd.f32 %v416, %v529
        %v531 = vpop.f32.mrf.mxu0
        %v532 = vpop.f32.mrf.mxu0
        %v533 = vadd.f32 %v416, %v532
        %v534 = vpop.f32.mrf.mxu0
        %535 = vmatprep.mubr.bf16.mxu0 0
        %536 = vmatmul.mubr.bf16.gmra.mxu0 %v441
        %v537 = vpop.f32.mrf.mxu0
        %v538 = vadd.f32 %v416, %v537
        %v539 = vpop.f32.mrf.mxu0
        %v540 = vpop.f32.mrf.mxu0
        %v541 = vadd.f32 %v416, %v540
        %v542 = vpop.f32.mrf.mxu0
        %543 = vmatprep.mubr.bf16.mxu0 0
        %544 = vmatmul.mubr.bf16.gmra.mxu0 %v444
        %v545 = vpop.f32.mrf.mxu0
        %v546 = vadd.f32 %v416, %v545
        %v547 = vpop.f32.mrf.mxu0
        %v548 = vpop.f32.mrf.mxu0
        %v549 = vadd.f32 %v416, %v548
        %v550 = vpop.f32.mrf.mxu0
        %551 = vmatprep.mubr.bf16.mxu0 0
        %552 = vmatmul.mubr.bf16.gmra.mxu0 %v447
        %v553 = vpop.f32.mrf.mxu0
        %v554 = vadd.f32 %v416, %v553
        %v555 = vpop.f32.mrf.mxu0
        %v556 = vpop.f32.mrf.mxu0
        %v557 = vadd.f32 %v416, %v556
        %v558 = vpop.f32.mrf.mxu0
        %559 = vmatprep.mubr.bf16.mxu0 0
        %560 = vmatmul.mubr.bf16.gmra.mxu0 %v450
        %v561 = vpop.f32.mrf.mxu0
        %v562 = vadd.f32 %v416, %v561
        %v563 = vpop.f32.mrf.mxu0
        %v564 = vpop.f32.mrf.mxu0
        %v565 = vadd.f32 %v416, %v564
        %v566 = vpop.f32.mrf.mxu0
        %567 = vmatprep.mubr.bf16.mxu0 0
        %568 = vmatmul.mubr.bf16.gmra.mxu0 %v453
        %v569 = vpop.f32.mrf.mxu0
        %v570 = vadd.f32 %v416, %v569
        %v571 = vpop.f32.mrf.mxu0
        %v572 = vpop.f32.mrf.mxu0
        %v573 = vadd.f32 %v416, %v572
        %v574 = vpop.f32.mrf.mxu0
        %575 = vmatprep.mubr.bf16.mxu0 0
        %576 = vmatmul.mubr.bf16.gmra.mxu0 %v456
        %v577 = vpop.f32.mrf.mxu0
        %v578 = vadd.f32 %v416, %v577
        %v579 = vpop.f32.mrf.mxu0
        %v580 = vpop.f32.mrf.mxu0
        %v581 = vadd.f32 %v416, %v580
        %v582 = vpop.f32.mrf.mxu0
        %583 = vmatprep.mubr.bf16.mxu0 0
        %584 = vmatmul.mubr.bf16.gmra.mxu0 %v459
        %v585 = vpop.f32.mrf.mxu0
        %v586 = vadd.f32 %v416, %v585
        %v587 = vpop.f32.mrf.mxu0
        %v588 = vpop.f32.mrf.mxu0
        %v589 = vadd.f32 %v416, %v588
        %v590 = vpop.f32.mrf.mxu0
        %591 = vmatprep.mubr.bf16.mxu0 0
        %592 = vmatmul.mubr.bf16.gmra.mxu0 %v462
        %v593 = vpop.f32.mrf.mxu0
        %v594 = vadd.f32 %v416, %v593
        %v595 = vpop.f32.mrf.mxu0
        %v596 = vpop.f32.mrf.mxu0
        %v597 = vadd.f32 %v416, %v596
        %v598 = vpop.f32.mrf.mxu0
        %599 = vmatprep.mubr.bf16.mxu0 0
        %600 = vmatmul.mubr.bf16.gmra.mxu0 %v465
        %v601 = vpop.f32.mrf.mxu0
        %v602 = vadd.f32 %v416, %v601
        %v603 = vpop.f32.mrf.mxu0
        %v604 = vpop.f32.mrf.mxu0
        %v605 = vadd.f32 %v416, %v604
        %v606 = vpop.f32.mrf.mxu0
        %607 = vmatprep.mubr.bf16.mxu0 0
        %608 = vmatmul.mubr.bf16.gmra.mxu0 %v468
        %v609 = vpop.f32.mrf.mxu0
        %v610 = vadd.f32 %v416, %v609
        %v611 = vpop.f32.mrf.mxu0
        %v612 = vpop.f32.mrf.mxu0
        %v613 = vadd.f32 %v416, %v612
        %v614 = vpop.f32.mrf.mxu0
        %615 = vmatprep.mubr.bf16.mxu0 0
        %616 = vmatmul.mubr.bf16.gmra.mxu0 %v471
        %v617 = vpop.f32.mrf.mxu0
        %v618 = vadd.f32 %v416, %v617
        %v619 = vpop.f32.mrf.mxu0
        %v620 = vpop.f32.mrf.mxu0
        %v621 = vadd.f32 %v416, %v620
        %v622 = vpop.f32.mrf.mxu0
        %623 = vmatprep.mubr.bf16.mxu0 0
        %624 = vmatmul.mubr.bf16.gmra.mxu0 %v474
        %v625 = vpop.f32.mrf.mxu0
        %v626 = vadd.f32 %v416, %v625
        %v627 = vpop.f32.mrf.mxu0
        %v628 = vpop.f32.mrf.mxu0
        %v629 = vadd.f32 %v416, %v628
        %v630 = vpop.f32.mrf.mxu0
        %631 = vmatprep.mubr.bf16.mxu0 0
        %632 = vmatmul.mubr.bf16.gmra.mxu0 %v477
        %v633 = vpop.f32.mrf.mxu0
        %v634 = vadd.f32 %v416, %v633
        %v635 = vpop.f32.mrf.mxu0
        %v636 = vpop.f32.mrf.mxu0
        %v637 = vadd.f32 %v416, %v636
        %v638 = vpop.f32.mrf.mxu0
        %639 = vdwg.mxu0
        %640 = vst.msk [vmem:[#allocation2] sm:$0xff] %vm430, 0.0
        %641 = vst.msk [vmem:[#allocation2 + $0x8] sm:$0xff] %vm430, 0.0
        %642 = vst.msk [vmem:[#allocation2 + $0x10] sm:$0xff] %vm430, 0.0
        %643 = vst.msk [vmem:[#allocation2 + $0x18] sm:$0xff] %vm430, 0.0
        %644 = vst.msk [vmem:[#allocation2 + $0x20] sm:$0xff] %vm430, 0.0
        %645 = vst.msk [vmem:[#allocation2 + $0x28] sm:$0xff] %vm430, 0.0
        %646 = vst.msk [vmem:[#allocation2 + $0x30] sm:$0xff] %vm430, 0.0
        %647 = vst.msk [vmem:[#allocation2 + $0x38] sm:$0xff] %vm430, 0.0
        %648 = vst.msk [vmem:[#allocation2 + $0x40] sm:$0xff] %vm430, 0.0
        %649 = vst.msk [vmem:[#allocation2 + $0x48] sm:$0xff] %vm430, 0.0
        %650 = vst.msk [vmem:[#allocation2 + $0x50] sm:$0xff] %vm430, 0.0
        %651 = vst.msk [vmem:[#allocation2 + $0x58] sm:$0xff] %vm430, 0.0
        %652 = vst.msk [vmem:[#allocation2 + $0x60] sm:$0xff] %vm430, 0.0
        %653 = vst.msk [vmem:[#allocation2 + $0x68] sm:$0xff] %vm430, 0.0
        %654 = vst.msk [vmem:[#allocation2 + $0x70] sm:$0xff] %vm430, 0.0
        %655 = vst.msk [vmem:[#allocation2 + $0x78] sm:$0xff] %vm430, 0.0
        %656 = vst.msk [vmem:[#allocation2 + $0x80] sm:$0xff] %vm430, 0.0
        %657 = vst.msk [vmem:[#allocation2 + $0x88] sm:$0xff] %vm430, 0.0
        %658 = vst.msk [vmem:[#allocation2 + $0x90] sm:$0xff] %vm430, 0.0
        %659 = vst.msk [vmem:[#allocation2 + $0x98] sm:$0xff] %vm430, 0.0
        %660 = vst.msk [vmem:[#allocation2 + $0xa0] sm:$0xff] %vm430, 0.0
        %661 = vst.msk [vmem:[#allocation2 + $0xa8] sm:$0xff] %vm430, 0.0
        %662 = vst.msk [vmem:[#allocation2 + $0xb0] sm:$0xff] %vm430, 0.0
        %663 = vst.msk [vmem:[#allocation2 + $0xb8] sm:$0xff] %vm430, 0.0
        %664 = vst.msk [vmem:[#allocation2 + $0xc0] sm:$0xff] %vm430, 0.0
        %665 = vst.msk [vmem:[#allocation2 + $0xc8] sm:$0xff] %vm430, 0.0
        %666 = vst.msk [vmem:[#allocation2 + $0xd0] sm:$0xff] %vm430, 0.0
        %667 = vst.msk [vmem:[#allocation2 + $0xd8] sm:$0xff] %vm430, 0.0
        %668 = vst.msk [vmem:[#allocation2 + $0xe0] sm:$0xff] %vm430, 0.0
        %669 = vst.msk [vmem:[#allocation2 + $0xe8] sm:$0xff] %vm430, 0.0
        %670 = vst.msk [vmem:[#allocation2 + $0xf0] sm:$0xff] %vm430, 0.0
        %671 = vst.msk [vmem:[#allocation2 + $0xf8] sm:$0xff] %vm430, 0.0
        %672 = vst.msk [vmem:[#allocation2 + $0x100] sm:$0xff] %vm430, 0.0
        %673 = vst.msk [vmem:[#allocation2 + $0x108] sm:$0xff] %vm430, 0.0
        %674 = vst.msk [vmem:[#allocation2 + $0x110] sm:$0xff] %vm430, 0.0
        %675 = vst.msk [vmem:[#allocation2 + $0x118] sm:$0xff] %vm430, 0.0
        %676 = vst.msk [vmem:[#allocation2 + $0x120] sm:$0xff] %vm430, 0.0
        %677 = vst.msk [vmem:[#allocation2 + $0x128] sm:$0xff] %vm430, 0.0
        %678 = vst.msk [vmem:[#allocation2 + $0x130] sm:$0xff] %vm430, 0.0
        %679 = vst.msk [vmem:[#allocation2 + $0x138] sm:$0xff] %vm430, 0.0
        %680 = vst.msk [vmem:[#allocation2 + $0x140] sm:$0xff] %vm430, 0.0
        %681 = vst.msk [vmem:[#allocation2 + $0x148] sm:$0xff] %vm430, 0.0
        %682 = vst.msk [vmem:[#allocation2 + $0x150] sm:$0xff] %vm430, 0.0
        %683 = vst.msk [vmem:[#allocation2 + $0x158] sm:$0xff] %vm430, 0.0
        %684 = vst.msk [vmem:[#allocation2 + $0x160] sm:$0xff] %vm430, 0.0
        %685 = vst.msk [vmem:[#allocation2 + $0x168] sm:$0xff] %vm430, 0.0
        %686 = vst.msk [vmem:[#allocation2 + $0x170] sm:$0xff] %vm430, 0.0
        %687 = vst.msk [vmem:[#allocation2 + $0x178] sm:$0xff] %vm430, 0.0
        %688 = vst.msk [vmem:[#allocation2 + $0x180] sm:$0xff] %vm430, 0.0
        %689 = vst.msk [vmem:[#allocation2 + $0x188] sm:$0xff] %vm430, 0.0
        %690 = vst.msk [vmem:[#allocation2 + $0x190] sm:$0xff] %vm430, 0.0
        %691 = vst.msk [vmem:[#allocation2 + $0x198] sm:$0xff] %vm430, 0.0
        %692 = vst.msk [vmem:[#allocation2 + $0x1a0] sm:$0xff] %vm430, 0.0
        %693 = vst.msk [vmem:[#allocation2 + $0x1a8] sm:$0xff] %vm430, 0.0
        %694 = vst.msk [vmem:[#allocation2 + $0x1b0] sm:$0xff] %vm430, 0.0
        %695 = vst.msk [vmem:[#allocation2 + $0x1b8] sm:$0xff] %vm430, 0.0
        %696 = vst.msk [vmem:[#allocation2 + $0x1c0] sm:$0xff] %vm430, 0.0
        %697 = vst.msk [vmem:[#allocation2 + $0x1c8] sm:$0xff] %vm430, 0.0
        %698 = vst.msk [vmem:[#allocation2 + $0x1d0] sm:$0xff] %vm430, 0.0
        %699 = vst.msk [vmem:[#allocation2 + $0x1d8] sm:$0xff] %vm430, 0.0
        %700 = vst.msk [vmem:[#allocation2 + $0x1e0] sm:$0xff] %vm430, 0.0
        %701 = vst.msk [vmem:[#allocation2 + $0x1e8] sm:$0xff] %vm430, 0.0
        %702 = vst.msk [vmem:[#allocation2 + $0x1f0] sm:$0xff] %vm430, 0.0
        %703 = vst.msk [vmem:[#allocation2 + $0x1f8] sm:$0xff] %vm430, 0.0
        %704 = vst.msk [vmem:[#allocation2 + $0x200] sm:$0xff] %vm430, 0.0
        %705 = vst.msk [vmem:[#allocation2 + $0x208] sm:$0xff] %vm430, 0.0
        %706 = vst.msk [vmem:[#allocation2 + $0x210] sm:$0xff] %vm430, 0.0
        %707 = vst.msk [vmem:[#allocation2 + $0x218] sm:$0xff] %vm430, 0.0
        %708 = vst.msk [vmem:[#allocation2 + $0x220] sm:$0xff] %vm430, 0.0
        %709 = vst.msk [vmem:[#allocation2 + $0x228] sm:$0xff] %vm430, 0.0
        %710 = vst.msk [vmem:[#allocation2 + $0x230] sm:$0xff] %vm430, 0.0
        %711 = vst.msk [vmem:[#allocation2 + $0x238] sm:$0xff] %vm430, 0.0
        %712 = vst.msk [vmem:[#allocation2 + $0x240] sm:$0xff] %vm430, 0.0
        %713 = vst.msk [vmem:[#allocation2 + $0x248] sm:$0xff] %vm430, 0.0
        %714 = vst.msk [vmem:[#allocation2 + $0x250] sm:$0xff] %vm430, 0.0
        %715 = vst.msk [vmem:[#allocation2 + $0x258] sm:$0xff] %vm430, 0.0
        %716 = vst.msk [vmem:[#allocation2 + $0x260] sm:$0xff] %vm430, 0.0
        %717 = vst.msk [vmem:[#allocation2 + $0x268] sm:$0xff] %vm430, 0.0
        %718 = vst.msk [vmem:[#allocation2 + $0x270] sm:$0xff] %vm430, 0.0
        %719 = vst.msk [vmem:[#allocation2 + $0x278] sm:$0xff] %vm430, 0.0
        %720 = vst.msk [vmem:[#allocation2 + $0x280] sm:$0xff] %vm430, 0.0
        %721 = vst.msk [vmem:[#allocation2 + $0x288] sm:$0xff] %vm430, 0.0
        %722 = vst.msk [vmem:[#allocation2 + $0x290] sm:$0xff] %vm430, 0.0
        %723 = vst.msk [vmem:[#allocation2 + $0x298] sm:$0xff] %vm430, 0.0
        %724 = vst.msk [vmem:[#allocation2 + $0x2a0] sm:$0xff] %vm430, 0.0
        %725 = vst.msk [vmem:[#allocation2 + $0x2a8] sm:$0xff] %vm430, 0.0
        %726 = vst.msk [vmem:[#allocation2 + $0x2b0] sm:$0xff] %vm430, 0.0
        %727 = vst.msk [vmem:[#allocation2 + $0x2b8] sm:$0xff] %vm430, 0.0
        %728 = vst.msk [vmem:[#allocation2 + $0x2c0] sm:$0xff] %vm430, 0.0
        %729 = vst.msk [vmem:[#allocation2 + $0x2c8] sm:$0xff] %vm430, 0.0
        %730 = vst.msk [vmem:[#allocation2 + $0x2d0] sm:$0xff] %vm430, 0.0
        %731 = vst.msk [vmem:[#allocation2 + $0x2d8] sm:$0xff] %vm430, 0.0
        %732 = vst.msk [vmem:[#allocation2 + $0x2e0] sm:$0xff] %vm430, 0.0
        %733 = vst.msk [vmem:[#allocation2 + $0x2e8] sm:$0xff] %vm430, 0.0
        %734 = vst.msk [vmem:[#allocation2 + $0x2f0] sm:$0xff] %vm430, 0.0
        %735 = vst.msk [vmem:[#allocation2 + $0x2f8] sm:$0xff] %vm430, 0.0
        %736 = vst.msk [vmem:[#allocation2 + $0x300] sm:$0xff] %vm430, 0.0
        %737 = vst.msk [vmem:[#allocation2 + $0x308] sm:$0xff] %vm430, 0.0
        %738 = vst.msk [vmem:[#allocation2 + $0x310] sm:$0xff] %vm430, 0.0
        %739 = vst.msk [vmem:[#allocation2 + $0x318] sm:$0xff] %vm430, 0.0
        %740 = vst.msk [vmem:[#allocation2 + $0x320] sm:$0xff] %vm430, 0.0
        %741 = vst.msk [vmem:[#allocation2 + $0x328] sm:$0xff] %vm430, 0.0
        %742 = vst.msk [vmem:[#allocation2 + $0x330] sm:$0xff] %vm430, 0.0
        %743 = vst.msk [vmem:[#allocation2 + $0x338] sm:$0xff] %vm430, 0.0
        %744 = vst.msk [vmem:[#allocation2 + $0x340] sm:$0xff] %vm430, 0.0
        %745 = vst.msk [vmem:[#allocation2 + $0x348] sm:$0xff] %vm430, 0.0
        %746 = vst.msk [vmem:[#allocation2 + $0x350] sm:$0xff] %vm430, 0.0
        %747 = vst.msk [vmem:[#allocation2 + $0x358] sm:$0xff] %vm430, 0.0
        %748 = vst.msk [vmem:[#allocation2 + $0x360] sm:$0xff] %vm430, 0.0
        %749 = vst.msk [vmem:[#allocation2 + $0x368] sm:$0xff] %vm430, 0.0
        %750 = vst.msk [vmem:[#allocation2 + $0x370] sm:$0xff] %vm430, 0.0
        %751 = vst.msk [vmem:[#allocation2 + $0x378] sm:$0xff] %vm430, 0.0
        %752 = vst.msk [vmem:[#allocation2 + $0x380] sm:$0xff] %vm430, 0.0
        %753 = vst.msk [vmem:[#allocation2 + $0x388] sm:$0xff] %vm430, 0.0
        %754 = vst.msk [vmem:[#allocation2 + $0x390] sm:$0xff] %vm430, 0.0
        %755 = vst.msk [vmem:[#allocation2 + $0x398] sm:$0xff] %vm430, 0.0
        %756 = vst.msk [vmem:[#allocation2 + $0x3a0] sm:$0xff] %vm430, 0.0
        %757 = vst.msk [vmem:[#allocation2 + $0x3a8] sm:$0xff] %vm430, 0.0
        %758 = vst.msk [vmem:[#allocation2 + $0x3b0] sm:$0xff] %vm430, 0.0
        %759 = vst.msk [vmem:[#allocation2 + $0x3b8] sm:$0xff] %vm430, 0.0
        %760 = vst.msk [vmem:[#allocation2 + $0x3c0] sm:$0xff] %vm430, 0.0
        %761 = vst.msk [vmem:[#allocation2 + $0x3c8] sm:$0xff] %vm430, 0.0
        %762 = vst.msk [vmem:[#allocation2 + $0x3d0] sm:$0xff] %vm430, 0.0
        %763 = vst.msk [vmem:[#allocation2 + $0x3d8] sm:$0xff] %vm430, 0.0
        %764 = vst.msk [vmem:[#allocation2 + $0x3e0] sm:$0xff] %vm430, 0.0
        %765 = vst.msk [vmem:[#allocation2 + $0x3e8] sm:$0xff] %vm430, 0.0
        %766 = vst.msk [vmem:[#allocation2 + $0x3f0] sm:$0xff] %vm430, 0.0
        %767 = vst.msk [vmem:[#allocation2 + $0x3f8] sm:$0xff] %vm430, 0.0
        %s768 = scalar_lea.vmem [#allocation2], 256
        %769 = vst.msk [vmem:[%s768 + $0x8] sm:$0xff] %vm430, %v514
        %770 = vst.msk [vmem:[%s768 + $0x10] sm:$0xff] %vm430, %v517
        %771 = vst.msk [vmem:[%s768 + $0x28] sm:$0xff] %vm430, %v522
        %772 = vst.msk [vmem:[%s768 + $0x30] sm:$0xff] %vm430, %v525
        %773 = vst.msk [vmem:[%s768 + $0x48] sm:$0xff] %vm430, %v530
        %774 = vst.msk [vmem:[%s768 + $0x50] sm:$0xff] %vm430, %v533
        %775 = vst.msk [vmem:[%s768 + $0x68] sm:$0xff] %vm430, %v538
        %776 = vst.msk [vmem:[%s768 + $0x70] sm:$0xff] %vm430, %v541
        %777 = vst.msk [vmem:[%s768 + $0x88] sm:$0xff] %vm430, %v546
        %778 = vst.msk [vmem:[%s768 + $0x90] sm:$0xff] %vm430, %v549
        %779 = vst.msk [vmem:[%s768 + $0xa8] sm:$0xff] %vm430, %v554
        %780 = vst.msk [vmem:[%s768 + $0xb0] sm:$0xff] %vm430, %v557
        %781 = vst.msk [vmem:[%s768 + $0xc8] sm:$0xff] %vm430, %v562
        %782 = vst.msk [vmem:[%s768 + $0xd0] sm:$0xff] %vm430, %v565
        %783 = vst.msk [vmem:[%s768 + $0xe8] sm:$0xff] %vm430, %v570
        %784 = vst.msk [vmem:[%s768 + $0xf0] sm:$0xff] %vm430, %v573
        %785 = vst.msk [vmem:[%s768 + $0x108] sm:$0xff] %vm430, %v578
        %786 = vst.msk [vmem:[%s768 + $0x110] sm:$0xff] %vm430, %v581
        %787 = vst.msk [vmem:[%s768 + $0x128] sm:$0xff] %vm430, %v586
        %788 = vst.msk [vmem:[%s768 + $0x130] sm:$0xff] %vm430, %v589
        %789 = vst.msk [vmem:[%s768 + $0x148] sm:$0xff] %vm430, %v594
        %790 = vst.msk [vmem:[%s768 + $0x150] sm:$0xff] %vm430, %v597
        %791 = vst.msk [vmem:[%s768 + $0x168] sm:$0xff] %vm430, %v602
        %792 = vst.msk [vmem:[%s768 + $0x170] sm:$0xff] %vm430, %v605
        %793 = vst.msk [vmem:[%s768 + $0x188] sm:$0xff] %vm430, %v610
        %794 = vst.msk [vmem:[%s768 + $0x190] sm:$0xff] %vm430, %v613
        %795 = vst.msk [vmem:[%s768 + $0x1a8] sm:$0xff] %vm430, %v618
        %796 = vst.msk [vmem:[%s768 + $0x1b0] sm:$0xff] %vm430, %v621
        %797 = vst.msk [vmem:[%s768 + $0x1c8] sm:$0xff] %vm430, %v626
        %798 = vst.msk [vmem:[%s768 + $0x1d0] sm:$0xff] %vm430, %v629
        %799 = vst.msk [vmem:[%s768 + $0x1e8] sm:$0xff] %vm430, %v634
        %800 = vst.msk [vmem:[%s768 + $0x1f0] sm:$0xff] %vm430, %v637
        %s801 = scalar_lea.vmem [#allocation2], 224
        %v802 = vld [vmem:[%s801 + $0x7] sm:$0xff]
        %v803 = vld [vmem:[%s801 + $0xf] sm:$0xff]
        %v804 = vld [vmem:[%s801 + $0x27] sm:$0xff]
        %v805 = vld [vmem:[%s801 + $0x2f] sm:$0xff]
        %v806 = vld [vmem:[%s801 + $0x47] sm:$0xff]
        %v807 = vld [vmem:[%s801 + $0x4f] sm:$0xff]
        %v808 = vld [vmem:[%s801 + $0x67] sm:$0xff]
        %v809 = vld [vmem:[%s801 + $0x6f] sm:$0xff]
        %v810 = vld [vmem:[%s801 + $0x87] sm:$0xff]
        %v811 = vld [vmem:[%s801 + $0x8f] sm:$0xff]
        %v812 = vld [vmem:[%s801 + $0xa7] sm:$0xff]
        %v813 = vld [vmem:[%s801 + $0xaf] sm:$0xff]
        %v814 = vld [vmem:[%s801 + $0xc7] sm:$0xff]
        %v815 = vld [vmem:[%s801 + $0xcf] sm:$0xff]
        %v816 = vld [vmem:[%s801 + $0xe7] sm:$0xff]
        %v817 = vld [vmem:[%s801 + $0xef] sm:$0xff]
        %v818 = vld [vmem:[%s801 + $0x107] sm:$0xff]
        %v819 = vld [vmem:[%s801 + $0x10f] sm:$0xff]
        %v820 = vld [vmem:[%s801 + $0x127] sm:$0xff]
        %v821 = vld [vmem:[%s801 + $0x12f] sm:$0xff]
        %v822 = vld [vmem:[%s801 + $0x147] sm:$0xff]
        %v823 = vld [vmem:[%s801 + $0x14f] sm:$0xff]
        %v824 = vld [vmem:[%s801 + $0x167] sm:$0xff]
        %v825 = vld [vmem:[%s801 + $0x16f] sm:$0xff]
        %v826 = vld [vmem:[%s801 + $0x187] sm:$0xff]
        %v827 = vld [vmem:[%s801 + $0x18f] sm:$0xff]
        %v828 = vld [vmem:[%s801 + $0x1a7] sm:$0xff]
        %v829 = vld [vmem:[%s801 + $0x1af] sm:$0xff]
        %v830 = vld [vmem:[%s801 + $0x1c7] sm:$0xff]
        %v831 = vld [vmem:[%s801 + $0x1cf] sm:$0xff]
        %v832 = vld [vmem:[%s801 + $0x1e7] sm:$0xff]
        %v833 = vld [vmem:[%s801 + $0x1ef] sm:$0xff]
        %v834 = vpack.c.bf16 %v803, %v802
        %v835 = vpack.c.bf16 %v805, %v804
        %v836 = vpack.c.bf16 %v807, %v806
        %v837 = vpack.c.bf16 %v809, %v808
        %v838 = vpack.c.bf16 %v811, %v810
        %v839 = vpack.c.bf16 %v813, %v812
        %v840 = vpack.c.bf16 %v815, %v814
        %v841 = vpack.c.bf16 %v817, %v816
        %v842 = vpack.c.bf16 %v819, %v818
        %v843 = vpack.c.bf16 %v821, %v820
        %v844 = vpack.c.bf16 %v823, %v822
        %v845 = vpack.c.bf16 %v825, %v824
        %v846 = vpack.c.bf16 %v827, %v826
        %v847 = vpack.c.bf16 %v829, %v828
        %v848 = vpack.c.bf16 %v831, %v830
        %v849 = vpack.c.bf16 %v833, %v832
        %v850 = vld [vmem:[%s801 + $0x8] sm:$0xff]
        %v851 = vld [vmem:[%s801 + $0x10] sm:$0xff]
        %v852 = vld [vmem:[%s801 + $0x28] sm:$0xff]
        %v853 = vld [vmem:[%s801 + $0x30] sm:$0xff]
        %v854 = vld [vmem:[%s801 + $0x48] sm:$0xff]
        %v855 = vld [vmem:[%s801 + $0x50] sm:$0xff]
        %v856 = vld [vmem:[%s801 + $0x68] sm:$0xff]
        %v857 = vld [vmem:[%s801 + $0x70] sm:$0xff]
        %v858 = vld [vmem:[%s801 + $0x88] sm:$0xff]
        %v859 = vld [vmem:[%s801 + $0x90] sm:$0xff]
        %v860 = vld [vmem:[%s801 + $0xa8] sm:$0xff]
        %v861 = vld [vmem:[%s801 + $0xb0] sm:$0xff]
        %v862 = vld [vmem:[%s801 + $0xc8] sm:$0xff]
        %v863 = vld [vmem:[%s801 + $0xd0] sm:$0xff]
        %v864 = vld [vmem:[%s801 + $0xe8] sm:$0xff]
        %v865 = vld [vmem:[%s801 + $0xf0] sm:$0xff]
        %v866 = vld [vmem:[%s801 + $0x108] sm:$0xff]
        %v867 = vld [vmem:[%s801 + $0x110] sm:$0xff]
        %v868 = vld [vmem:[%s801 + $0x128] sm:$0xff]
        %v869 = vld [vmem:[%s801 + $0x130] sm:$0xff]
        %v870 = vld [vmem:[%s801 + $0x148] sm:$0xff]
        %v871 = vld [vmem:[%s801 + $0x150] sm:$0xff]
        %v872 = vld [vmem:[%s801 + $0x168] sm:$0xff]
        %v873 = vld [vmem:[%s801 + $0x170] sm:$0xff]
        %v874 = vld [vmem:[%s801 + $0x188] sm:$0xff]
        %v875 = vld [vmem:[%s801 + $0x190] sm:$0xff]
        %v876 = vld [vmem:[%s801 + $0x1a8] sm:$0xff]
        %v877 = vld [vmem:[%s801 + $0x1b0] sm:$0xff]
        %v878 = vld [vmem:[%s801 + $0x1c8] sm:$0xff]
        %v879 = vld [vmem:[%s801 + $0x1d0] sm:$0xff]
        %v880 = vld [vmem:[%s801 + $0x1e8] sm:$0xff]
        %v881 = vld [vmem:[%s801 + $0x1f0] sm:$0xff]
        %v882 = vpack.c.bf16 %v851, %v850
        %v883 = vpack.c.bf16 %v853, %v852
        %v884 = vpack.c.bf16 %v855, %v854
        %v885 = vpack.c.bf16 %v857, %v856
        %v886 = vpack.c.bf16 %v859, %v858
        %v887 = vpack.c.bf16 %v861, %v860
        %v888 = vpack.c.bf16 %v863, %v862
        %v889 = vpack.c.bf16 %v865, %v864
        %v890 = vpack.c.bf16 %v867, %v866
        %v891 = vpack.c.bf16 %v869, %v868
        %v892 = vpack.c.bf16 %v871, %v870
        %v893 = vpack.c.bf16 %v873, %v872
        %v894 = vpack.c.bf16 %v875, %v874
        %v895 = vpack.c.bf16 %v877, %v876
        %v896 = vpack.c.bf16 %v879, %v878
        %v897 = vpack.c.bf16 %v881, %v880
        %v898 = vld [vmem:[%s801 + $0x9] sm:$0xff]
        %v899 = vld [vmem:[%s801 + $0x11] sm:$0xff]
        %v900 = vld [vmem:[%s801 + $0x29] sm:$0xff]
        %v901 = vld [vmem:[%s801 + $0x31] sm:$0xff]
        %v902 = vld [vmem:[%s801 + $0x49] sm:$0xff]
        %v903 = vld [vmem:[%s801 + $0x51] sm:$0xff]
        %v904 = vld [vmem:[%s801 + $0x69] sm:$0xff]
        %v905 = vld [vmem:[%s801 + $0x71] sm:$0xff]
        %v906 = vld [vmem:[%s801 + $0x89] sm:$0xff]
        %v907 = vld [vmem:[%s801 + $0x91] sm:$0xff]
        %v908 = vld [vmem:[%s801 + $0xa9] sm:$0xff]
        %v909 = vld [vmem:[%s801 + $0xb1] sm:$0xff]
        %v910 = vld [vmem:[%s801 + $0xc9] sm:$0xff]
        %v911 = vld [vmem:[%s801 + $0xd1] sm:$0xff]
        %v912 = vld [vmem:[%s801 + $0xe9] sm:$0xff]
        %v913 = vld [vmem:[%s801 + $0xf1] sm:$0xff]
        %v914 = vld [vmem:[%s801 + $0x109] sm:$0xff]
        %v915 = vld [vmem:[%s801 + $0x111] sm:$0xff]
        %v916 = vld [vmem:[%s801 + $0x129] sm:$0xff]
        %v917 = vld [vmem:[%s801 + $0x131] sm:$0xff]
        %v918 = vld [vmem:[%s801 + $0x149] sm:$0xff]
        %v919 = vld [vmem:[%s801 + $0x151] sm:$0xff]
        %v920 = vld [vmem:[%s801 + $0x169] sm:$0xff]
        %v921 = vld [vmem:[%s801 + $0x171] sm:$0xff]
        %v922 = vld [vmem:[%s801 + $0x189] sm:$0xff]
        %v923 = vld [vmem:[%s801 + $0x191] sm:$0xff]
        %v924 = vld [vmem:[%s801 + $0x1a9] sm:$0xff]
        %v925 = vld [vmem:[%s801 + $0x1b1] sm:$0xff]
        %v926 = vld [vmem:[%s801 + $0x1c9] sm:$0xff]
        %v927 = vld [vmem:[%s801 + $0x1d1] sm:$0xff]
        %v928 = vld [vmem:[%s801 + $0x1e9] sm:$0xff]
        %v929 = vld [vmem:[%s801 + $0x1f1] sm:$0xff]
        %v930 = vpack.c.bf16 %v899, %v898
        %v931 = vpack.c.bf16 %v901, %v900
        %v932 = vpack.c.bf16 %v903, %v902
        %v933 = vpack.c.bf16 %v905, %v904
        %v934 = vpack.c.bf16 %v907, %v906
        %v935 = vpack.c.bf16 %v909, %v908
        %v936 = vpack.c.bf16 %v911, %v910
        %v937 = vpack.c.bf16 %v913, %v912
        %v938 = vpack.c.bf16 %v915, %v914
        %v939 = vpack.c.bf16 %v917, %v916
        %v940 = vpack.c.bf16 %v919, %v918
        %v941 = vpack.c.bf16 %v921, %v920
        %v942 = vpack.c.bf16 %v923, %v922
        %v943 = vpack.c.bf16 %v925, %v924
        %v944 = vpack.c.bf16 %v927, %v926
        %v945 = vpack.c.bf16 %v929, %v928
        %v946 = vld [vmem:[%s768 + $0x7] sm:$0xff]
        %v947 = vld [vmem:[%s768 + $0xf] sm:$0xff]
        %v948 = vld [vmem:[%s768 + $0x27] sm:$0xff]
        %v949 = vld [vmem:[%s768 + $0x2f] sm:$0xff]
        %v950 = vld [vmem:[%s768 + $0x47] sm:$0xff]
        %v951 = vld [vmem:[%s768 + $0x4f] sm:$0xff]
        %v952 = vld [vmem:[%s768 + $0x67] sm:$0xff]
        %v953 = vld [vmem:[%s768 + $0x6f] sm:$0xff]
        %v954 = vld [vmem:[%s768 + $0x87] sm:$0xff]
        %v955 = vld [vmem:[%s768 + $0x8f] sm:$0xff]
        %v956 = vld [vmem:[%s768 + $0xa7] sm:$0xff]
        %v957 = vld [vmem:[%s768 + $0xaf] sm:$0xff]
        %v958 = vld [vmem:[%s768 + $0xc7] sm:$0xff]
        %v959 = vld [vmem:[%s768 + $0xcf] sm:$0xff]
        %v960 = vld [vmem:[%s768 + $0xe7] sm:$0xff]
        %v961 = vld [vmem:[%s768 + $0xef] sm:$0xff]
        %v962 = vld [vmem:[%s768 + $0x107] sm:$0xff]
        %v963 = vld [vmem:[%s768 + $0x10f] sm:$0xff]
        %v964 = vld [vmem:[%s768 + $0x127] sm:$0xff]
        %v965 = vld [vmem:[%s768 + $0x12f] sm:$0xff]
        %v966 = vld [vmem:[%s768 + $0x147] sm:$0xff]
        %v967 = vld [vmem:[%s768 + $0x14f] sm:$0xff]
        %v968 = vld [vmem:[%s768 + $0x167] sm:$0xff]
        %v969 = vld [vmem:[%s768 + $0x16f] sm:$0xff]
        %v970 = vld [vmem:[%s768 + $0x187] sm:$0xff]
        %v971 = vld [vmem:[%s768 + $0x18f] sm:$0xff]
        %v972 = vld [vmem:[%s768 + $0x1a7] sm:$0xff]
        %v973 = vld [vmem:[%s768 + $0x1af] sm:$0xff]
        %v974 = vld [vmem:[%s768 + $0x1c7] sm:$0xff]
        %v975 = vld [vmem:[%s768 + $0x1cf] sm:$0xff]
        %v976 = vld [vmem:[%s768 + $0x1e7] sm:$0xff]
        %v977 = vld [vmem:[%s768 + $0x1ef] sm:$0xff]
        %v978 = vpack.c.bf16 %v947, %v946
        %v979 = vpack.c.bf16 %v949, %v948
        %v980 = vpack.c.bf16 %v951, %v950
        %v981 = vpack.c.bf16 %v953, %v952
        %v982 = vpack.c.bf16 %v955, %v954
        %v983 = vpack.c.bf16 %v957, %v956
        %v984 = vpack.c.bf16 %v959, %v958
        %v985 = vpack.c.bf16 %v961, %v960
        %v986 = vpack.c.bf16 %v963, %v962
        %v987 = vpack.c.bf16 %v965, %v964
        %v988 = vpack.c.bf16 %v967, %v966
        %v989 = vpack.c.bf16 %v969, %v968
        %v990 = vpack.c.bf16 %v971, %v970
        %v991 = vpack.c.bf16 %v973, %v972
        %v992 = vpack.c.bf16 %v975, %v974
        %v993 = vpack.c.bf16 %v977, %v976
        %v994 = vld [vmem:[%s768 + $0x8] sm:$0xff]
        %v995 = vld [vmem:[%s768 + $0x10] sm:$0xff]
        %v996 = vld [vmem:[%s768 + $0x28] sm:$0xff]
        %v997 = vld [vmem:[%s768 + $0x30] sm:$0xff]
        %v998 = vld [vmem:[%s768 + $0x48] sm:$0xff]
        %v999 = vld [vmem:[%s768 + $0x50] sm:$0xff]
        %v1000 = vld [vmem:[%s768 + $0x68] sm:$0xff]
        %v1001 = vld [vmem:[%s768 + $0x70] sm:$0xff]
        %v1002 = vld [vmem:[%s768 + $0x88] sm:$0xff]
        %v1003 = vld [vmem:[%s768 + $0x90] sm:$0xff]
        %v1004 = vld [vmem:[%s768 + $0xa8] sm:$0xff]
        %v1005 = vld [vmem:[%s768 + $0xb0] sm:$0xff]
        %v1006 = vld [vmem:[%s768 + $0xc8] sm:$0xff]
        %v1007 = vld [vmem:[%s768 + $0xd0] sm:$0xff]
        %v1008 = vld [vmem:[%s768 + $0xe8] sm:$0xff]
        %v1009 = vld [vmem:[%s768 + $0xf0] sm:$0xff]
        %v1010 = vld [vmem:[%s768 + $0x108] sm:$0xff]
        %v1011 = vld [vmem:[%s768 + $0x110] sm:$0xff]
        %v1012 = vld [vmem:[%s768 + $0x128] sm:$0xff]
        %v1013 = vld [vmem:[%s768 + $0x130] sm:$0xff]
        %v1014 = vld [vmem:[%s768 + $0x148] sm:$0xff]
        %v1015 = vld [vmem:[%s768 + $0x150] sm:$0xff]
        %v1016 = vld [vmem:[%s768 + $0x168] sm:$0xff]
        %v1017 = vld [vmem:[%s768 + $0x170] sm:$0xff]
        %v1018 = vld [vmem:[%s768 + $0x188] sm:$0xff]
        %v1019 = vld [vmem:[%s768 + $0x190] sm:$0xff]
        %v1020 = vld [vmem:[%s768 + $0x1a8] sm:$0xff]
        %v1021 = vld [vmem:[%s768 + $0x1b0] sm:$0xff]
        %v1022 = vld [vmem:[%s768 + $0x1c8] sm:$0xff]
        %v1023 = vld [vmem:[%s768 + $0x1d0] sm:$0xff]
        %v1024 = vld [vmem:[%s768 + $0x1e8] sm:$0xff]
        %v1025 = vld [vmem:[%s768 + $0x1f0] sm:$0xff]
        %v1026 = vpack.c.bf16 %v995, %v994
        %v1027 = vpack.c.bf16 %v997, %v996
        %v1028 = vpack.c.bf16 %v999, %v998
        %v1029 = vpack.c.bf16 %v1001, %v1000
        %v1030 = vpack.c.bf16 %v1003, %v1002
        %v1031 = vpack.c.bf16 %v1005, %v1004
        %v1032 = vpack.c.bf16 %v1007, %v1006
        %v1033 = vpack.c.bf16 %v1009, %v1008
        %v1034 = vpack.c.bf16 %v1011, %v1010
        %v1035 = vpack.c.bf16 %v1013, %v1012
        %v1036 = vpack.c.bf16 %v1015, %v1014
        %v1037 = vpack.c.bf16 %v1017, %v1016
        %v1038 = vpack.c.bf16 %v1019, %v1018
        %v1039 = vpack.c.bf16 %v1021, %v1020
        %v1040 = vpack.c.bf16 %v1023, %v1022
        %v1041 = vpack.c.bf16 %v1025, %v1024
        %v1042 = vld [vmem:[%s768 + $0x9] sm:$0xff]
        %v1043 = vld [vmem:[%s768 + $0x11] sm:$0xff]
        %v1044 = vld [vmem:[%s768 + $0x29] sm:$0xff]
        %v1045 = vld [vmem:[%s768 + $0x31] sm:$0xff]
        %v1046 = vld [vmem:[%s768 + $0x49] sm:$0xff]
        %v1047 = vld [vmem:[%s768 + $0x51] sm:$0xff]
        %v1048 = vld [vmem:[%s768 + $0x69] sm:$0xff]
        %v1049 = vld [vmem:[%s768 + $0x71] sm:$0xff]
        %v1050 = vld [vmem:[%s768 + $0x89] sm:$0xff]
        %v1051 = vld [vmem:[%s768 + $0x91] sm:$0xff]
        %v1052 = vld [vmem:[%s768 + $0xa9] sm:$0xff]
        %v1053 = vld [vmem:[%s768 + $0xb1] sm:$0xff]
        %v1054 = vld [vmem:[%s768 + $0xc9] sm:$0xff]
        %v1055 = vld [vmem:[%s768 + $0xd1] sm:$0xff]
        %v1056 = vld [vmem:[%s768 + $0xe9] sm:$0xff]
        %v1057 = vld [vmem:[%s768 + $0xf1] sm:$0xff]
        %v1058 = vld [vmem:[%s768 + $0x109] sm:$0xff]
        %v1059 = vld [vmem:[%s768 + $0x111] sm:$0xff]
        %v1060 = vld [vmem:[%s768 + $0x129] sm:$0xff]
        %v1061 = vld [vmem:[%s768 + $0x131] sm:$0xff]
        %v1062 = vld [vmem:[%s768 + $0x149] sm:$0xff]
        %v1063 = vld [vmem:[%s768 + $0x151] sm:$0xff]
        %v1064 = vld [vmem:[%s768 + $0x169] sm:$0xff]
        %v1065 = vld [vmem:[%s768 + $0x171] sm:$0xff]
        %v1066 = vld [vmem:[%s768 + $0x189] sm:$0xff]
        %v1067 = vld [vmem:[%s768 + $0x191] sm:$0xff]
        %v1068 = vld [vmem:[%s768 + $0x1a9] sm:$0xff]
        %v1069 = vld [vmem:[%s768 + $0x1b1] sm:$0xff]
        %v1070 = vld [vmem:[%s768 + $0x1c9] sm:$0xff]
        %v1071 = vld [vmem:[%s768 + $0x1d1] sm:$0xff]
        %v1072 = vld [vmem:[%s768 + $0x1e9] sm:$0xff]
        %v1073 = vld [vmem:[%s768 + $0x1f1] sm:$0xff]
        %v1074 = vpack.c.bf16 %v1043, %v1042
        %v1075 = vpack.c.bf16 %v1045, %v1044
        %v1076 = vpack.c.bf16 %v1047, %v1046
        %v1077 = vpack.c.bf16 %v1049, %v1048
        %v1078 = vpack.c.bf16 %v1051, %v1050
        %v1079 = vpack.c.bf16 %v1053, %v1052
        %v1080 = vpack.c.bf16 %v1055, %v1054
        %v1081 = vpack.c.bf16 %v1057, %v1056
        %v1082 = vpack.c.bf16 %v1059, %v1058
        %v1083 = vpack.c.bf16 %v1061, %v1060
        %v1084 = vpack.c.bf16 %v1063, %v1062
        %v1085 = vpack.c.bf16 %v1065, %v1064
        %v1086 = vpack.c.bf16 %v1067, %v1066
        %v1087 = vpack.c.bf16 %v1069, %v1068
        %v1088 = vpack.c.bf16 %v1071, %v1070
        %v1089 = vpack.c.bf16 %v1073, %v1072
        %s1090 = scalar_lea.vmem [#allocation2], 288
        %v1091 = vld [vmem:[%s1090 + $0x7] sm:$0xff]
        %v1092 = vld [vmem:[%s1090 + $0xf] sm:$0xff]
        %v1093 = vld [vmem:[%s1090 + $0x27] sm:$0xff]
        %v1094 = vld [vmem:[%s1090 + $0x2f] sm:$0xff]
        %v1095 = vld [vmem:[%s1090 + $0x47] sm:$0xff]
        %v1096 = vld [vmem:[%s1090 + $0x4f] sm:$0xff]
        %v1097 = vld [vmem:[%s1090 + $0x67] sm:$0xff]
        %v1098 = vld [vmem:[%s1090 + $0x6f] sm:$0xff]
        %v1099 = vld [vmem:[%s1090 + $0x87] sm:$0xff]
        %v1100 = vld [vmem:[%s1090 + $0x8f] sm:$0xff]
        %v1101 = vld [vmem:[%s1090 + $0xa7] sm:$0xff]
        %v1102 = vld [vmem:[%s1090 + $0xaf] sm:$0xff]
        %v1103 = vld [vmem:[%s1090 + $0xc7] sm:$0xff]
        %v1104 = vld [vmem:[%s1090 + $0xcf] sm:$0xff]
        %v1105 = vld [vmem:[%s1090 + $0xe7] sm:$0xff]
        %v1106 = vld [vmem:[%s1090 + $0xef] sm:$0xff]
        %v1107 = vld [vmem:[%s1090 + $0x107] sm:$0xff]
        %v1108 = vld [vmem:[%s1090 + $0x10f] sm:$0xff]
        %v1109 = vld [vmem:[%s1090 + $0x127] sm:$0xff]
        %v1110 = vld [vmem:[%s1090 + $0x12f] sm:$0xff]
        %v1111 = vld [vmem:[%s1090 + $0x147] sm:$0xff]
        %v1112 = vld [vmem:[%s1090 + $0x14f] sm:$0xff]
        %v1113 = vld [vmem:[%s1090 + $0x167] sm:$0xff]
        %v1114 = vld [vmem:[%s1090 + $0x16f] sm:$0xff]
        %v1115 = vld [vmem:[%s1090 + $0x187] sm:$0xff]
        %v1116 = vld [vmem:[%s1090 + $0x18f] sm:$0xff]
        %v1117 = vld [vmem:[%s1090 + $0x1a7] sm:$0xff]
        %v1118 = vld [vmem:[%s1090 + $0x1af] sm:$0xff]
        %v1119 = vld [vmem:[%s1090 + $0x1c7] sm:$0xff]
        %v1120 = vld [vmem:[%s1090 + $0x1cf] sm:$0xff]
        %v1121 = vld [vmem:[%s1090 + $0x1e7] sm:$0xff]
        %v1122 = vld [vmem:[%s1090 + $0x1ef] sm:$0xff]
        %v1123 = vpack.c.bf16 %v1092, %v1091
        %v1124 = vpack.c.bf16 %v1094, %v1093
        %v1125 = vpack.c.bf16 %v1096, %v1095
        %v1126 = vpack.c.bf16 %v1098, %v1097
        %v1127 = vpack.c.bf16 %v1100, %v1099
        %v1128 = vpack.c.bf16 %v1102, %v1101
        %v1129 = vpack.c.bf16 %v1104, %v1103
        %v1130 = vpack.c.bf16 %v1106, %v1105
        %v1131 = vpack.c.bf16 %v1108, %v1107
        %v1132 = vpack.c.bf16 %v1110, %v1109
        %v1133 = vpack.c.bf16 %v1112, %v1111
        %v1134 = vpack.c.bf16 %v1114, %v1113
        %v1135 = vpack.c.bf16 %v1116, %v1115
        %v1136 = vpack.c.bf16 %v1118, %v1117
        %v1137 = vpack.c.bf16 %v1120, %v1119
        %v1138 = vpack.c.bf16 %v1122, %v1121
        %v1139 = vld [vmem:[%s1090 + $0x8] sm:$0xff]
        %v1140 = vld [vmem:[%s1090 + $0x10] sm:$0xff]
        %v1141 = vld [vmem:[%s1090 + $0x28] sm:$0xff]
        %v1142 = vld [vmem:[%s1090 + $0x30] sm:$0xff]
        %v1143 = vld [vmem:[%s1090 + $0x48] sm:$0xff]
        %v1144 = vld [vmem:[%s1090 + $0x50] sm:$0xff]
        %v1145 = vld [vmem:[%s1090 + $0x68] sm:$0xff]
        %v1146 = vld [vmem:[%s1090 + $0x70] sm:$0xff]
        %v1147 = vld [vmem:[%s1090 + $0x88] sm:$0xff]
        %v1148 = vld [vmem:[%s1090 + $0x90] sm:$0xff]
        %v1149 = vld [vmem:[%s1090 + $0xa8] sm:$0xff]
        %v1150 = vld [vmem:[%s1090 + $0xb0] sm:$0xff]
        %v1151 = vld [vmem:[%s1090 + $0xc8] sm:$0xff]
        %v1152 = vld [vmem:[%s1090 + $0xd0] sm:$0xff]
        %v1153 = vld [vmem:[%s1090 + $0xe8] sm:$0xff]
        %v1154 = vld [vmem:[%s1090 + $0xf0] sm:$0xff]
        %v1155 = vld [vmem:[%s1090 + $0x108] sm:$0xff]
        %v1156 = vld [vmem:[%s1090 + $0x110] sm:$0xff]
        %v1157 = vld [vmem:[%s1090 + $0x128] sm:$0xff]
        %v1158 = vld [vmem:[%s1090 + $0x130] sm:$0xff]
        %v1159 = vld [vmem:[%s1090 + $0x148] sm:$0xff]
        %v1160 = vld [vmem:[%s1090 + $0x150] sm:$0xff]
        %v1161 = vld [vmem:[%s1090 + $0x168] sm:$0xff]
        %v1162 = vld [vmem:[%s1090 + $0x170] sm:$0xff]
        %v1163 = vld [vmem:[%s1090 + $0x188] sm:$0xff]
        %v1164 = vld [vmem:[%s1090 + $0x190] sm:$0xff]
        %v1165 = vld [vmem:[%s1090 + $0x1a8] sm:$0xff]
        %v1166 = vld [vmem:[%s1090 + $0x1b0] sm:$0xff]
        %v1167 = vld [vmem:[%s1090 + $0x1c8] sm:$0xff]
        %v1168 = vld [vmem:[%s1090 + $0x1d0] sm:$0xff]
        %v1169 = vld [vmem:[%s1090 + $0x1e8] sm:$0xff]
        %v1170 = vld [vmem:[%s1090 + $0x1f0] sm:$0xff]
        %v1171 = vpack.c.bf16 %v1140, %v1139
        %v1172 = vpack.c.bf16 %v1142, %v1141
        %v1173 = vpack.c.bf16 %v1144, %v1143
        %v1174 = vpack.c.bf16 %v1146, %v1145
        %v1175 = vpack.c.bf16 %v1148, %v1147
        %v1176 = vpack.c.bf16 %v1150, %v1149
        %v1177 = vpack.c.bf16 %v1152, %v1151
        %v1178 = vpack.c.bf16 %v1154, %v1153
        %v1179 = vpack.c.bf16 %v1156, %v1155
        %v1180 = vpack.c.bf16 %v1158, %v1157
        %v1181 = vpack.c.bf16 %v1160, %v1159
        %v1182 = vpack.c.bf16 %v1162, %v1161
        %v1183 = vpack.c.bf16 %v1164, %v1163
        %v1184 = vpack.c.bf16 %v1166, %v1165
        %v1185 = vpack.c.bf16 %v1168, %v1167
        %v1186 = vpack.c.bf16 %v1170, %v1169
        %v1187 = vld [vmem:[%s1090 + $0x9] sm:$0xff]
        %v1188 = vld [vmem:[%s1090 + $0x11] sm:$0xff]
        %v1189 = vld [vmem:[%s1090 + $0x29] sm:$0xff]
        %v1190 = vld [vmem:[%s1090 + $0x31] sm:$0xff]
        %v1191 = vld [vmem:[%s1090 + $0x49] sm:$0xff]
        %v1192 = vld [vmem:[%s1090 + $0x51] sm:$0xff]
        %v1193 = vld [vmem:[%s1090 + $0x69] sm:$0xff]
        %v1194 = vld [vmem:[%s1090 + $0x71] sm:$0xff]
        %v1195 = vld [vmem:[%s1090 + $0x89] sm:$0xff]
        %v1196 = vld [vmem:[%s1090 + $0x91] sm:$0xff]
        %v1197 = vld [vmem:[%s1090 + $0xa9] sm:$0xff]
        %v1198 = vld [vmem:[%s1090 + $0xb1] sm:$0xff]
        %v1199 = vld [vmem:[%s1090 + $0xc9] sm:$0xff]
        %v1200 = vld [vmem:[%s1090 + $0xd1] sm:$0xff]
        %v1201 = vld [vmem:[%s1090 + $0xe9] sm:$0xff]
        %v1202 = vld [vmem:[%s1090 + $0xf1] sm:$0xff]
        %v1203 = vld [vmem:[%s1090 + $0x109] sm:$0xff]
        %v1204 = vld [vmem:[%s1090 + $0x111] sm:$0xff]
        %v1205 = vld [vmem:[%s1090 + $0x129] sm:$0xff]
        %v1206 = vld [vmem:[%s1090 + $0x131] sm:$0xff]
        %v1207 = vld [vmem:[%s1090 + $0x149] sm:$0xff]
        %v1208 = vld [vmem:[%s1090 + $0x151] sm:$0xff]
        %v1209 = vld [vmem:[%s1090 + $0x169] sm:$0xff]
        %v1210 = vld [vmem:[%s1090 + $0x171] sm:$0xff]
        %v1211 = vld [vmem:[%s1090 + $0x189] sm:$0xff]
        %v1212 = vld [vmem:[%s1090 + $0x191] sm:$0xff]
        %v1213 = vld [vmem:[%s1090 + $0x1a9] sm:$0xff]
        %v1214 = vld [vmem:[%s1090 + $0x1b1] sm:$0xff]
        %v1215 = vld [vmem:[%s1090 + $0x1c9] sm:$0xff]
        %v1216 = vld [vmem:[%s1090 + $0x1d1] sm:$0xff]
        %v1217 = vld [vmem:[%s1090 + $0x1e9] sm:$0xff]
        %v1218 = vld [vmem:[%s1090 + $0x1f1] sm:$0xff]
        %v1219 = vpack.c.bf16 %v1188, %v1187
        %v1220 = vpack.c.bf16 %v1190, %v1189
        %v1221 = vpack.c.bf16 %v1192, %v1191
        %v1222 = vpack.c.bf16 %v1194, %v1193
        %v1223 = vpack.c.bf16 %v1196, %v1195
        %v1224 = vpack.c.bf16 %v1198, %v1197
        %v1225 = vpack.c.bf16 %v1200, %v1199
        %v1226 = vpack.c.bf16 %v1202, %v1201
        %v1227 = vpack.c.bf16 %v1204, %v1203
        %v1228 = vpack.c.bf16 %v1206, %v1205
        %v1229 = vpack.c.bf16 %v1208, %v1207
        %v1230 = vpack.c.bf16 %v1210, %v1209
        %v1231 = vpack.c.bf16 %v1212, %v1211
        %v1232 = vpack.c.bf16 %v1214, %v1213
        %v1233 = vpack.c.bf16 %v1216, %v1215
        %v1234 = vpack.c.bf16 %v1218, %v1217
        %1251 = vrot.lane.b32.xlu0 %v882, 32
        %v1252 = vpop.permute.xlu0 %1251
        %1253 = vrot.lane.b32.xlu0 %v883, 32
        %v1254 = vpop.permute.xlu0 %1253
        %1255 = vrot.lane.b32.xlu0 %v884, 32
        %v1256 = vpop.permute.xlu0 %1255
        %1257 = vrot.lane.b32.xlu0 %v885, 32
        %v1258 = vpop.permute.xlu0 %1257
        %1259 = vrot.lane.b32.xlu0 %v886, 32
        %v1260 = vpop.permute.xlu0 %1259
        %1261 = vrot.lane.b32.xlu0 %v887, 32
        %v1262 = vpop.permute.xlu0 %1261
        %1263 = vrot.lane.b32.xlu0 %v888, 32
        %v1264 = vpop.permute.xlu0 %1263
        %1265 = vrot.lane.b32.xlu0 %v889, 32
        %v1266 = vpop.permute.xlu0 %1265
        %1267 = vrot.lane.b32.xlu0 %v890, 32
        %v1268 = vpop.permute.xlu0 %1267
        %1269 = vrot.lane.b32.xlu0 %v891, 32
        %v1270 = vpop.permute.xlu0 %1269
        %1271 = vrot.lane.b32.xlu0 %v892, 32
        %v1272 = vpop.permute.xlu0 %1271
        %1273 = vrot.lane.b32.xlu0 %v893, 32
        %v1274 = vpop.permute.xlu0 %1273
        %1275 = vrot.lane.b32.xlu0 %v894, 32
        %v1276 = vpop.permute.xlu0 %1275
        %1277 = vrot.lane.b32.xlu0 %v895, 32
        %v1278 = vpop.permute.xlu0 %1277
        %1279 = vrot.lane.b32.xlu0 %v896, 32
        %v1280 = vpop.permute.xlu0 %1279
        %1281 = vrot.lane.b32.xlu0 %v897, 32
        %v1282 = vpop.permute.xlu0 %1281
        %1299 = vrot.lane.b32.xlu0 %v930, 64
        %v1300 = vpop.permute.xlu0 %1299
        %1301 = vrot.lane.b32.xlu0 %v931, 64
        %v1302 = vpop.permute.xlu0 %1301
        %1303 = vrot.lane.b32.xlu0 %v932, 64
        %v1304 = vpop.permute.xlu0 %1303
        %1305 = vrot.lane.b32.xlu0 %v933, 64
        %v1306 = vpop.permute.xlu0 %1305
        %1307 = vrot.lane.b32.xlu0 %v934, 64
        %v1308 = vpop.permute.xlu0 %1307
        %1309 = vrot.lane.b32.xlu0 %v935, 64
        %v1310 = vpop.permute.xlu0 %1309
        %1311 = vrot.lane.b32.xlu0 %v936, 64
        %v1312 = vpop.permute.xlu0 %1311
        %1313 = vrot.lane.b32.xlu0 %v937, 64
        %v1314 = vpop.permute.xlu0 %1313
        %1315 = vrot.lane.b32.xlu0 %v938, 64
        %v1316 = vpop.permute.xlu0 %1315
        %1317 = vrot.lane.b32.xlu0 %v939, 64
        %v1318 = vpop.permute.xlu0 %1317
        %1319 = vrot.lane.b32.xlu0 %v940, 64
        %v1320 = vpop.permute.xlu0 %1319
        %1321 = vrot.lane.b32.xlu0 %v941, 64
        %v1322 = vpop.permute.xlu0 %1321
        %1323 = vrot.lane.b32.xlu0 %v942, 64
        %v1324 = vpop.permute.xlu0 %1323
        %1325 = vrot.lane.b32.xlu0 %v943, 64
        %v1326 = vpop.permute.xlu0 %1325
        %1327 = vrot.lane.b32.xlu0 %v944, 64
        %v1328 = vpop.permute.xlu0 %1327
        %1329 = vrot.lane.b32.xlu0 %v945, 64
        %v1330 = vpop.permute.xlu0 %1329
        %1347 = vrot.lane.b32.xlu0 %v978, 96
        %v1348 = vpop.permute.xlu0 %1347
        %1349 = vrot.lane.b32.xlu0 %v979, 96
        %v1350 = vpop.permute.xlu0 %1349
        %1351 = vrot.lane.b32.xlu0 %v980, 96
        %v1352 = vpop.permute.xlu0 %1351
        %1353 = vrot.lane.b32.xlu0 %v981, 96
        %v1354 = vpop.permute.xlu0 %1353
        %1355 = vrot.lane.b32.xlu0 %v982, 96
        %v1356 = vpop.permute.xlu0 %1355
        %1357 = vrot.lane.b32.xlu0 %v983, 96
        %v1358 = vpop.permute.xlu0 %1357
        %1359 = vrot.lane.b32.xlu0 %v984, 96
        %v1360 = vpop.permute.xlu0 %1359
        %1361 = vrot.lane.b32.xlu0 %v985, 96
        %v1362 = vpop.permute.xlu0 %1361
        %1363 = vrot.lane.b32.xlu0 %v986, 96
        %v1364 = vpop.permute.xlu0 %1363
        %1365 = vrot.lane.b32.xlu0 %v987, 96
        %v1366 = vpop.permute.xlu0 %1365
        %1367 = vrot.lane.b32.xlu0 %v988, 96
        %v1368 = vpop.permute.xlu0 %1367
        %1369 = vrot.lane.b32.xlu0 %v989, 96
        %v1370 = vpop.permute.xlu0 %1369
        %1371 = vrot.lane.b32.xlu0 %v990, 96
        %v1372 = vpop.permute.xlu0 %1371
        %1373 = vrot.lane.b32.xlu0 %v991, 96
        %v1374 = vpop.permute.xlu0 %1373
        %1375 = vrot.lane.b32.xlu0 %v992, 96
        %v1376 = vpop.permute.xlu0 %1375
        %1377 = vrot.lane.b32.xlu0 %v993, 96
        %v1378 = vpop.permute.xlu0 %1377
        %1395 = vrot.lane.b32.xlu0 %v1074, 32
        %v1396 = vpop.permute.xlu0 %1395
        %1397 = vrot.lane.b32.xlu0 %v1075, 32
        %v1398 = vpop.permute.xlu0 %1397
        %1399 = vrot.lane.b32.xlu0 %v1076, 32
        %v1400 = vpop.permute.xlu0 %1399
        %1401 = vrot.lane.b32.xlu0 %v1077, 32
        %v1402 = vpop.permute.xlu0 %1401
        %1403 = vrot.lane.b32.xlu0 %v1078, 32
        %v1404 = vpop.permute.xlu0 %1403
        %1405 = vrot.lane.b32.xlu0 %v1079, 32
        %v1406 = vpop.permute.xlu0 %1405
        %1407 = vrot.lane.b32.xlu0 %v1080, 32
        %v1408 = vpop.permute.xlu0 %1407
        %1409 = vrot.lane.b32.xlu0 %v1081, 32
        %v1410 = vpop.permute.xlu0 %1409
        %1411 = vrot.lane.b32.xlu0 %v1082, 32
        %v1412 = vpop.permute.xlu0 %1411
        %1413 = vrot.lane.b32.xlu0 %v1083, 32
        %v1414 = vpop.permute.xlu0 %1413
        %1415 = vrot.lane.b32.xlu0 %v1084, 32
        %v1416 = vpop.permute.xlu0 %1415
        %1417 = vrot.lane.b32.xlu0 %v1085, 32
        %v1418 = vpop.permute.xlu0 %1417
        %1419 = vrot.lane.b32.xlu0 %v1086, 32
        %v1420 = vpop.permute.xlu0 %1419
        %1421 = vrot.lane.b32.xlu0 %v1087, 32
        %v1422 = vpop.permute.xlu0 %1421
        %1423 = vrot.lane.b32.xlu0 %v1088, 32
        %v1424 = vpop.permute.xlu0 %1423
        %1425 = vrot.lane.b32.xlu0 %v1089, 32
        %v1426 = vpop.permute.xlu0 %1425
        %1443 = vrot.lane.b32.xlu0 %v1123, 64
        %v1444 = vpop.permute.xlu0 %1443
        %1445 = vrot.lane.b32.xlu0 %v1124, 64
        %v1446 = vpop.permute.xlu0 %1445
        %1447 = vrot.lane.b32.xlu0 %v1125, 64
        %v1448 = vpop.permute.xlu0 %1447
        %1449 = vrot.lane.b32.xlu0 %v1126, 64
        %v1450 = vpop.permute.xlu0 %1449
        %1451 = vrot.lane.b32.xlu0 %v1127, 64
        %v1452 = vpop.permute.xlu0 %1451
        %1453 = vrot.lane.b32.xlu0 %v1128, 64
        %v1454 = vpop.permute.xlu0 %1453
        %1455 = vrot.lane.b32.xlu0 %v1129, 64
        %v1456 = vpop.permute.xlu0 %1455
        %1457 = vrot.lane.b32.xlu0 %v1130, 64
        %v1458 = vpop.permute.xlu0 %1457
        %1459 = vrot.lane.b32.xlu0 %v1131, 64
        %v1460 = vpop.permute.xlu0 %1459
        %1461 = vrot.lane.b32.xlu0 %v1132, 64
        %v1462 = vpop.permute.xlu0 %1461
        %1463 = vrot.lane.b32.xlu0 %v1133, 64
        %v1464 = vpop.permute.xlu0 %1463
        %1465 = vrot.lane.b32.xlu0 %v1134, 64
        %v1466 = vpop.permute.xlu0 %1465
        %1467 = vrot.lane.b32.xlu0 %v1135, 64
        %v1468 = vpop.permute.xlu0 %1467
        %1469 = vrot.lane.b32.xlu0 %v1136, 64
        %v1470 = vpop.permute.xlu0 %1469
        %1471 = vrot.lane.b32.xlu0 %v1137, 64
        %v1472 = vpop.permute.xlu0 %1471
        %1473 = vrot.lane.b32.xlu0 %v1138, 64
        %v1474 = vpop.permute.xlu0 %1473
        %1491 = vrot.lane.b32.xlu0 %v1171, 96
        %v1492 = vpop.permute.xlu0 %1491
        %1493 = vrot.lane.b32.xlu0 %v1172, 96
        %v1494 = vpop.permute.xlu0 %1493
        %1495 = vrot.lane.b32.xlu0 %v1173, 96
        %v1496 = vpop.permute.xlu0 %1495
        %1497 = vrot.lane.b32.xlu0 %v1174, 96
        %v1498 = vpop.permute.xlu0 %1497
        %1499 = vrot.lane.b32.xlu0 %v1175, 96
        %v1500 = vpop.permute.xlu0 %1499
        %1501 = vrot.lane.b32.xlu0 %v1176, 96
        %v1502 = vpop.permute.xlu0 %1501
        %1503 = vrot.lane.b32.xlu0 %v1177, 96
        %v1504 = vpop.permute.xlu0 %1503
        %1505 = vrot.lane.b32.xlu0 %v1178, 96
        %v1506 = vpop.permute.xlu0 %1505
        %1507 = vrot.lane.b32.xlu0 %v1179, 96
        %v1508 = vpop.permute.xlu0 %1507
        %1509 = vrot.lane.b32.xlu0 %v1180, 96
        %v1510 = vpop.permute.xlu0 %1509
        %1511 = vrot.lane.b32.xlu0 %v1181, 96
        %v1512 = vpop.permute.xlu0 %1511
        %1513 = vrot.lane.b32.xlu0 %v1182, 96
        %v1514 = vpop.permute.xlu0 %1513
        %1515 = vrot.lane.b32.xlu0 %v1183, 96
        %v1516 = vpop.permute.xlu0 %1515
        %1517 = vrot.lane.b32.xlu0 %v1184, 96
        %v1518 = vpop.permute.xlu0 %1517
        %1519 = vrot.lane.b32.xlu0 %v1185, 96
        %v1520 = vpop.permute.xlu0 %1519
        %1521 = vrot.lane.b32.xlu0 %v1186, 96
        %v1522 = vpop.permute.xlu0 %1521
        %v1525 = vsel %vm430, %v834, %v1252
        %v1528 = vsel %vm430, %v835, %v1254
        %v1531 = vsel %vm430, %v836, %v1256
        %v1534 = vsel %vm430, %v837, %v1258
        %v1537 = vsel %vm430, %v838, %v1260
        %v1540 = vsel %vm430, %v839, %v1262
        %v1543 = vsel %vm430, %v840, %v1264
        %v1546 = vsel %vm430, %v841, %v1266
        %v1549 = vsel %vm430, %v842, %v1268
        %v1552 = vsel %vm430, %v843, %v1270
        %v1555 = vsel %vm430, %v844, %v1272
        %v1558 = vsel %vm430, %v845, %v1274
        %v1561 = vsel %vm430, %v846, %v1276
        %v1564 = vsel %vm430, %v847, %v1278
        %v1567 = vsel %vm430, %v848, %v1280
        %v1570 = vsel %vm430, %v849, %v1282
        %vm1571 = vcmask 523264
        %v1573 = vsel %vm1571, %v1525, %v1300
        %v1575 = vsel %vm1571, %v1528, %v1302
        %v1577 = vsel %vm1571, %v1531, %v1304
        %v1579 = vsel %vm1571, %v1534, %v1306
        %v1581 = vsel %vm1571, %v1537, %v1308
        %v1583 = vsel %vm1571, %v1540, %v1310
        %v1585 = vsel %vm1571, %v1543, %v1312
        %v1587 = vsel %vm1571, %v1546, %v1314
        %v1589 = vsel %vm1571, %v1549, %v1316
        %v1591 = vsel %vm1571, %v1552, %v1318
        %v1593 = vsel %vm1571, %v1555, %v1320
        %v1595 = vsel %vm1571, %v1558, %v1322
        %v1597 = vsel %vm1571, %v1561, %v1324
        %v1599 = vsel %vm1571, %v1564, %v1326
        %v1601 = vsel %vm1571, %v1567, %v1328
        %v1603 = vsel %vm1571, %v1570, %v1330
        %vm1604 = vcmask 785408
        %v1606 = vsel %vm1604, %v1573, %v1348
        %v1609 = vsel %vm1604, %v1575, %v1350
        %v1612 = vsel %vm1604, %v1577, %v1352
        %v1615 = vsel %vm1604, %v1579, %v1354
        %v1618 = vsel %vm1604, %v1581, %v1356
        %v1621 = vsel %vm1604, %v1583, %v1358
        %v1624 = vsel %vm1604, %v1585, %v1360
        %v1627 = vsel %vm1604, %v1587, %v1362
        %v1630 = vsel %vm1604, %v1589, %v1364
        %v1633 = vsel %vm1604, %v1591, %v1366
        %v1636 = vsel %vm1604, %v1593, %v1368
        %v1639 = vsel %vm1604, %v1595, %v1370
        %v1642 = vsel %vm1604, %v1597, %v1372
        %v1645 = vsel %vm1604, %v1599, %v1374
        %v1648 = vsel %vm1604, %v1601, %v1376
        %v1651 = vsel %vm1604, %v1603, %v1378
        %v1655 = vsel %vm430, %v1026, %v1396
        %v1658 = vsel %vm430, %v1027, %v1398
        %v1661 = vsel %vm430, %v1028, %v1400
        %v1664 = vsel %vm430, %v1029, %v1402
        %v1667 = vsel %vm430, %v1030, %v1404
        %v1670 = vsel %vm430, %v1031, %v1406
        %v1673 = vsel %vm430, %v1032, %v1408
        %v1676 = vsel %vm430, %v1033, %v1410
        %v1679 = vsel %vm430, %v1034, %v1412
        %v1682 = vsel %vm430, %v1035, %v1414
        %v1685 = vsel %vm430, %v1036, %v1416
        %v1688 = vsel %vm430, %v1037, %v1418
        %v1691 = vsel %vm430, %v1038, %v1420
        %v1694 = vsel %vm430, %v1039, %v1422
        %v1697 = vsel %vm430, %v1040, %v1424
        %v1700 = vsel %vm430, %v1041, %v1426
        %v1702 = vsel %vm1571, %v1655, %v1444
        %v1704 = vsel %vm1571, %v1658, %v1446
        %v1706 = vsel %vm1571, %v1661, %v1448
        %v1708 = vsel %vm1571, %v1664, %v1450
        %v1710 = vsel %vm1571, %v1667, %v1452
        %v1712 = vsel %vm1571, %v1670, %v1454
        %v1714 = vsel %vm1571, %v1673, %v1456
        %v1716 = vsel %vm1571, %v1676, %v1458
        %v1718 = vsel %vm1571, %v1679, %v1460
        %v1720 = vsel %vm1571, %v1682, %v1462
        %v1722 = vsel %vm1571, %v1685, %v1464
        %v1724 = vsel %vm1571, %v1688, %v1466
        %v1726 = vsel %vm1571, %v1691, %v1468
        %v1728 = vsel %vm1571, %v1694, %v1470
        %v1730 = vsel %vm1571, %v1697, %v1472
        %v1732 = vsel %vm1571, %v1700, %v1474
        %v1734 = vsel %vm1604, %v1702, %v1492
        %v1737 = vsel %vm1604, %v1704, %v1494
        %v1740 = vsel %vm1604, %v1706, %v1496
        %v1743 = vsel %vm1604, %v1708, %v1498
        %v1746 = vsel %vm1604, %v1710, %v1500
        %v1749 = vsel %vm1604, %v1712, %v1502
        %v1752 = vsel %vm1604, %v1714, %v1504
        %v1755 = vsel %vm1604, %v1716, %v1506
        %v1758 = vsel %vm1604, %v1718, %v1508
        %v1761 = vsel %vm1604, %v1720, %v1510
        %v1764 = vsel %vm1604, %v1722, %v1512
        %v1767 = vsel %vm1604, %v1724, %v1514
        %v1770 = vsel %vm1604, %v1726, %v1516
        %v1773 = vsel %vm1604, %v1728, %v1518
        %v1776 = vsel %vm1604, %v1730, %v1520
        %v1779 = vsel %vm1604, %v1732, %v1522
        %v1781 = vld [vmem:[%s3] sm:$0xf]
        %v1782 = vld [vmem:[%s3 + $0x4] sm:$0xf]
        %v1783 = vld [vmem:[%s3 + $0x8] sm:$0xf]
        %v1784 = vld [vmem:[%s3 + $0xc] sm:$0xf]
        %v1785 = vld [vmem:[%s3 + $0x10] sm:$0xf]
        %v1786 = vld [vmem:[%s3 + $0x14] sm:$0xf]
        %v1787 = vld [vmem:[%s3 + $0x18] sm:$0xf]
        %v1788 = vld [vmem:[%s3 + $0x1c] sm:$0xf]
        %v1789 = vld [vmem:[%s3 + $0x20] sm:$0xf]
        %v1790 = vld [vmem:[%s3 + $0x24] sm:$0xf]
        %v1791 = vld [vmem:[%s3 + $0x28] sm:$0xf]
        %v1792 = vld [vmem:[%s3 + $0x2c] sm:$0xf]
        %v1793 = vld [vmem:[%s3 + $0x30] sm:$0xf]
        %v1794 = vld [vmem:[%s3 + $0x34] sm:$0xf]
        %v1795 = vld [vmem:[%s3 + $0x38] sm:$0xf]
        %v1796 = vld [vmem:[%s3 + $0x3c] sm:$0xf]
        %v1797 = vld [vmem:[%s3 + $0x40] sm:$0xf]
        %v1798 = vld [vmem:[%s3 + $0x44] sm:$0xf]
        %v1799 = vld [vmem:[%s3 + $0x48] sm:$0xf]
        %v1800 = vld [vmem:[%s3 + $0x4c] sm:$0xf]
        %v1801 = vld [vmem:[%s3 + $0x50] sm:$0xf]
        %v1802 = vld [vmem:[%s3 + $0x54] sm:$0xf]
        %v1803 = vld [vmem:[%s3 + $0x58] sm:$0xf]
        %v1804 = vld [vmem:[%s3 + $0x5c] sm:$0xf]
        %v1805 = vld [vmem:[%s3 + $0x60] sm:$0xf]
        %v1806 = vld [vmem:[%s3 + $0x64] sm:$0xf]
        %v1807 = vld [vmem:[%s3 + $0x68] sm:$0xf]
        %v1808 = vld [vmem:[%s3 + $0x6c] sm:$0xf]
        %v1809 = vld [vmem:[%s3 + $0x70] sm:$0xf]
        %v1810 = vld [vmem:[%s3 + $0x74] sm:$0xf]
        %v1811 = vld [vmem:[%s3 + $0x78] sm:$0xf]
        %v1812 = vld [vmem:[%s3 + $0x7c] sm:$0xf]
        %v1813 = vld [vmem:[%s3 + $0x80] sm:$0xf]
        %v1814 = vld [vmem:[%s3 + $0x84] sm:$0xf]
        %v1815 = vld [vmem:[%s3 + $0x88] sm:$0xf]
        %v1816 = vld [vmem:[%s3 + $0x8c] sm:$0xf]
        %v1853 = vunpack.c.l.b16 %v1781
        %v1854 = vunpack.c.l.b16 %v1782
        %v1855 = vunpack.c.l.b16 %v1783
        %v1856 = vunpack.c.l.b16 %v1784
        %v1857 = vunpack.c.l.b16 %v1785
        %v1858 = vunpack.c.l.b16 %v1786
        %v1859 = vunpack.c.l.b16 %v1787
        %v1860 = vunpack.c.l.b16 %v1788
        %v1861 = vunpack.c.l.b16 %v1789
        %v1862 = vunpack.c.l.b16 %v1790
        %v1863 = vunpack.c.l.b16 %v1791
        %v1864 = vunpack.c.l.b16 %v1792
        %v1865 = vunpack.c.l.b16 %v1793
        %v1866 = vunpack.c.l.b16 %v1794
        %v1867 = vunpack.c.l.b16 %v1795
        %v1868 = vunpack.c.l.b16 %v1796
        %v1869 = vunpack.c.l.b16 %v1797
        %v1870 = vunpack.c.l.b16 %v1798
        %v1871 = vunpack.c.l.b16 %v1799
        %v1872 = vunpack.c.l.b16 %v1800
        %v1873 = vunpack.c.l.b16 %v1801
        %v1874 = vunpack.c.l.b16 %v1802
        %v1875 = vunpack.c.l.b16 %v1803
        %v1876 = vunpack.c.l.b16 %v1804
        %v1877 = vunpack.c.l.b16 %v1805
        %v1878 = vunpack.c.l.b16 %v1806
        %v1879 = vunpack.c.l.b16 %v1807
        %v1880 = vunpack.c.l.b16 %v1808
        %v1881 = vunpack.c.l.b16 %v1809
        %v1882 = vunpack.c.l.b16 %v1810
        %v1883 = vunpack.c.l.b16 %v1811
        %v1884 = vunpack.c.l.b16 %v1812
        %v1885 = vunpack.c.l.b16 %v1813
        %v1886 = vunpack.c.l.b16 %v1814
        %v1887 = vunpack.c.l.b16 %v1815
        %v1888 = vunpack.c.l.b16 %v1816
        %v1889 = vpack.c.b16 %v1854, %v1853
        %v1890 = vpack.c.b16 %v1856, %v1855
        %v1891 = vpack.c.b16 %v1858, %v1857
        %v1892 = vpack.c.b16 %v1860, %v1859
        %v1893 = vpack.c.b16 %v1862, %v1861
        %v1894 = vpack.c.b16 %v1864, %v1863
        %v1895 = vpack.c.b16 %v1866, %v1865
        %v1896 = vpack.c.b16 %v1868, %v1867
        %v1897 = vpack.c.b16 %v1870, %v1869
        %v1898 = vpack.c.b16 %v1872, %v1871
        %v1899 = vpack.c.b16 %v1874, %v1873
        %v1900 = vpack.c.b16 %v1876, %v1875
        %v1901 = vpack.c.b16 %v1878, %v1877
        %v1902 = vpack.c.b16 %v1880, %v1879
        %v1903 = vpack.c.b16 %v1882, %v1881
        %v1904 = vpack.c.b16 %v1884, %v1883
        %v1905 = vpack.c.b16 %v1886, %v1885
        %v1906 = vpack.c.b16 %v1888, %v1887
        %v1926 = vsel %vm430, %v1219, 0
        %v1929 = vsel %vm430, %v1220, 0
        %v1932 = vsel %vm430, %v1221, 0
        %v1935 = vsel %vm430, %v1222, 0
        %v1938 = vsel %vm430, %v1223, 0
        %v1941 = vsel %vm430, %v1224, 0
        %v1944 = vsel %vm430, %v1225, 0
        %v1947 = vsel %vm430, %v1226, 0
        %v1950 = vsel %vm430, %v1227, 0
        %v1953 = vsel %vm430, %v1228, 0
        %v1956 = vsel %vm430, %v1229, 0
        %v1959 = vsel %vm430, %v1230, 0
        %v1962 = vsel %vm430, %v1231, 0
        %v1965 = vsel %vm430, %v1232, 0
        %v1968 = vsel %vm430, %v1233, 0
        %v1971 = vsel %vm430, %v1234, 0
        %1973 = vmatprep.subr.bf16.mxu0 0
        %1974 = vmatpush1.bf16.msra.mxu0 %v1896
        %1975 = vmatprep.subr.bf16.mxu0 0
        %1976 = vmatpush1.bf16.msra.mxu0 %v1895
        %1977 = vmatprep.subr.bf16.mxu0 0
        %1978 = vmatpush1.bf16.msra.mxu0 %v1894
        %1979 = vmatprep.subr.bf16.mxu0 0
        %1980 = vmatpush1.bf16.msra.mxu0 %v1893
        %1981 = vmatprep.subr.bf16.mxu0 0
        %1982 = vmatpush1.bf16.msra.mxu0 %v1892
        %1983 = vmatprep.subr.bf16.mxu0 0
        %1984 = vmatpush1.bf16.msra.mxu0 %v1891
        %1985 = vmatprep.subr.bf16.mxu0 0
        %1986 = vmatpush1.bf16.msra.mxu0 %v1890
        %1987 = vmatprep.subr.bf16.mxu0 0
        %1988 = vmatpush1.bf16.msra.mxu0 %v1889
        %1989 = vmatprep.subr.bf16.mxu0 0
        %1990 = vmatpush2.bf16.msra.mxu0 %v1904
        %1991 = vmatprep.subr.bf16.mxu0 0
        %1992 = vmatpush2.bf16.msra.mxu0 %v1903
        %1993 = vmatprep.subr.bf16.mxu0 0
        %1994 = vmatpush2.bf16.msra.mxu0 %v1902
        %1995 = vmatprep.subr.bf16.mxu0 0
        %1996 = vmatpush2.bf16.msra.mxu0 %v1901
        %1997 = vmatprep.subr.bf16.mxu0 0
        %1998 = vmatpush2.bf16.msra.mxu0 %v1900
        %1999 = vmatprep.subr.bf16.mxu0 0
        %2000 = vmatpush2.bf16.msra.mxu0 %v1899
        %2001 = vmatprep.subr.bf16.mxu0 0
        %2002 = vmatpush2.bf16.msra.mxu0 %v1898
        %2003 = vmatprep.subr.bf16.mxu0 0
        %2004 = vmatpush2.bf16.msra.mxu0 %v1897
        %2005 = vmatprep.mubr.bf16.mxu0 %v1734
        %2006 = vmatmul.mubr.bf16.gmra.mxu0 %v1606
        %v2007 = vpop.f32.mrf.mxu0
        %v2008 = vadd.f32 0.0, %v2007
        %v2009 = vpop.f32.mrf.mxu0
        %v2010 = vpop.f32.mrf.mxu0
        %v2011 = vadd.f32 0.0, %v2010
        %v2012 = vpop.f32.mrf.mxu0
        %2013 = vmatprep.mubr.bf16.mxu0 %v1737
        %2014 = vmatmul.mubr.bf16.gmra.mxu0 %v1609
        %v2015 = vpop.f32.mrf.mxu0
        %v2016 = vadd.f32 0.0, %v2015
        %v2017 = vpop.f32.mrf.mxu0
        %v2018 = vpop.f32.mrf.mxu0
        %v2019 = vadd.f32 0.0, %v2018
        %v2020 = vpop.f32.mrf.mxu0
        %2021 = vmatprep.mubr.bf16.mxu0 %v1740
        %2022 = vmatmul.mubr.bf16.gmra.mxu0 %v1612
        %v2023 = vpop.f32.mrf.mxu0
        %v2024 = vadd.f32 0.0, %v2023
        %v2025 = vpop.f32.mrf.mxu0
        %v2026 = vpop.f32.mrf.mxu0
        %v2027 = vadd.f32 0.0, %v2026
        %v2028 = vpop.f32.mrf.mxu0
        %2029 = vmatprep.mubr.bf16.mxu0 %v1743
        %2030 = vmatmul.mubr.bf16.gmra.mxu0 %v1615
        %v2031 = vpop.f32.mrf.mxu0
        %v2032 = vadd.f32 0.0, %v2031
        %v2033 = vpop.f32.mrf.mxu0
        %v2034 = vpop.f32.mrf.mxu0
        %v2035 = vadd.f32 0.0, %v2034
        %v2036 = vpop.f32.mrf.mxu0
        %2037 = vmatprep.mubr.bf16.mxu0 %v1746
        %2038 = vmatmul.mubr.bf16.gmra.mxu0 %v1618
        %v2039 = vpop.f32.mrf.mxu0
        %v2040 = vadd.f32 0.0, %v2039
        %v2041 = vpop.f32.mrf.mxu0
        %v2042 = vpop.f32.mrf.mxu0
        %v2043 = vadd.f32 0.0, %v2042
        %v2044 = vpop.f32.mrf.mxu0
        %2045 = vmatprep.mubr.bf16.mxu0 %v1749
        %2046 = vmatmul.mubr.bf16.gmra.mxu0 %v1621
        %v2047 = vpop.f32.mrf.mxu0
        %v2048 = vadd.f32 0.0, %v2047
        %v2049 = vpop.f32.mrf.mxu0
        %v2050 = vpop.f32.mrf.mxu0
        %v2051 = vadd.f32 0.0, %v2050
        %v2052 = vpop.f32.mrf.mxu0
        %2053 = vmatprep.mubr.bf16.mxu0 %v1752
        %2054 = vmatmul.mubr.bf16.gmra.mxu0 %v1624
        %v2055 = vpop.f32.mrf.mxu0
        %v2056 = vadd.f32 0.0, %v2055
        %v2057 = vpop.f32.mrf.mxu0
        %v2058 = vpop.f32.mrf.mxu0
        %v2059 = vadd.f32 0.0, %v2058
        %v2060 = vpop.f32.mrf.mxu0
        %2061 = vmatprep.mubr.bf16.mxu0 %v1755
        %2062 = vmatmul.mubr.bf16.gmra.mxu0 %v1627
        %v2063 = vpop.f32.mrf.mxu0
        %v2064 = vadd.f32 0.0, %v2063
        %v2065 = vpop.f32.mrf.mxu0
        %v2066 = vpop.f32.mrf.mxu0
        %v2067 = vadd.f32 0.0, %v2066
        %v2068 = vpop.f32.mrf.mxu0
        %2069 = vmatprep.mubr.bf16.mxu0 %v1758
        %2070 = vmatmul.mubr.bf16.gmra.mxu0 %v1630
        %v2071 = vpop.f32.mrf.mxu0
        %v2072 = vadd.f32 0.0, %v2071
        %v2073 = vpop.f32.mrf.mxu0
        %v2074 = vpop.f32.mrf.mxu0
        %v2075 = vadd.f32 0.0, %v2074
        %v2076 = vpop.f32.mrf.mxu0
        %2077 = vmatprep.mubr.bf16.mxu0 %v1761
        %2078 = vmatmul.mubr.bf16.gmra.mxu0 %v1633
        %v2079 = vpop.f32.mrf.mxu0
        %v2080 = vadd.f32 0.0, %v2079
        %v2081 = vpop.f32.mrf.mxu0
        %v2082 = vpop.f32.mrf.mxu0
        %v2083 = vadd.f32 0.0, %v2082
        %v2084 = vpop.f32.mrf.mxu0
        %2085 = vmatprep.mubr.bf16.mxu0 %v1764
        %2086 = vmatmul.mubr.bf16.gmra.mxu0 %v1636
        %v2087 = vpop.f32.mrf.mxu0
        %v2088 = vadd.f32 0.0, %v2087
        %v2089 = vpop.f32.mrf.mxu0
        %v2090 = vpop.f32.mrf.mxu0
        %v2091 = vadd.f32 0.0, %v2090
        %v2092 = vpop.f32.mrf.mxu0
        %2093 = vmatprep.mubr.bf16.mxu0 %v1767
        %2094 = vmatmul.mubr.bf16.gmra.mxu0 %v1639
        %v2095 = vpop.f32.mrf.mxu0
        %v2096 = vadd.f32 0.0, %v2095
        %v2097 = vpop.f32.mrf.mxu0
        %v2098 = vpop.f32.mrf.mxu0
        %v2099 = vadd.f32 0.0, %v2098
        %v2100 = vpop.f32.mrf.mxu0
        %2101 = vmatprep.mubr.bf16.mxu0 %v1770
        %2102 = vmatmul.mubr.bf16.gmra.mxu0 %v1642
        %v2103 = vpop.f32.mrf.mxu0
        %v2104 = vadd.f32 0.0, %v2103
        %v2105 = vpop.f32.mrf.mxu0
        %v2106 = vpop.f32.mrf.mxu0
        %v2107 = vadd.f32 0.0, %v2106
        %v2108 = vpop.f32.mrf.mxu0
        %2109 = vmatprep.mubr.bf16.mxu0 %v1773
        %2110 = vmatmul.mubr.bf16.gmra.mxu0 %v1645
        %v2111 = vpop.f32.mrf.mxu0
        %v2112 = vadd.f32 0.0, %v2111
        %v2113 = vpop.f32.mrf.mxu0
        %v2114 = vpop.f32.mrf.mxu0
        %v2115 = vadd.f32 0.0, %v2114
        %v2116 = vpop.f32.mrf.mxu0
        %2117 = vmatprep.mubr.bf16.mxu0 %v1776
        %2118 = vmatmul.mubr.bf16.gmra.mxu0 %v1648
        %v2119 = vpop.f32.mrf.mxu0
        %v2120 = vadd.f32 0.0, %v2119
        %v2121 = vpop.f32.mrf.mxu0
        %v2122 = vpop.f32.mrf.mxu0
        %v2123 = vadd.f32 0.0, %v2122
        %v2124 = vpop.f32.mrf.mxu0
        %2125 = vmatprep.mubr.bf16.mxu0 %v1779
        %2126 = vmatmul.mubr.bf16.gmra.mxu0 %v1651
        %v2127 = vpop.f32.mrf.mxu0
        %v2128 = vadd.f32 0.0, %v2127
        %v2129 = vpop.f32.mrf.mxu0
        %v2130 = vpop.f32.mrf.mxu0
        %v2131 = vadd.f32 0.0, %v2130
        %v2132 = vpop.f32.mrf.mxu0
        %2133 = vdwg.mxu0
        %2134 = vmatprep.subr.bf16.mxu0 0
        %2135 = vmatpush1.bf16.msra.mxu0 0
        %2136 = vmatprep.subr.bf16.mxu0 0
        %2137 = vmatpush1.bf16.msra.mxu0 0
        %2138 = vmatprep.subr.bf16.mxu0 0
        %2139 = vmatpush1.bf16.msra.mxu0 0
        %2140 = vmatprep.subr.bf16.mxu0 0
        %2141 = vmatpush1.bf16.msra.mxu0 0
        %2142 = vmatprep.subr.bf16.mxu0 0
        %2143 = vmatpush1.bf16.msra.mxu0 0
        %2144 = vmatprep.subr.bf16.mxu0 0
        %2145 = vmatpush1.bf16.msra.mxu0 0
        %2146 = vmatprep.subr.bf16.mxu0 0
        %2147 = vmatpush1.bf16.msra.mxu0 %v1906
        %2148 = vmatprep.subr.bf16.mxu0 0
        %2149 = vmatpush1.bf16.msra.mxu0 %v1905
        %2150 = vmatprep.subr.bf16.mxu0 0
        %2151 = vmatpush2.bf16.msra.mxu0 0
        %2152 = vmatprep.subr.bf16.mxu0 0
        %2153 = vmatpush2.bf16.msra.mxu0 0
        %2154 = vmatprep.subr.bf16.mxu0 0
        %2155 = vmatpush2.bf16.msra.mxu0 0
        %2156 = vmatprep.subr.bf16.mxu0 0
        %2157 = vmatpush2.bf16.msra.mxu0 0
        %2158 = vmatprep.subr.bf16.mxu0 0
        %2159 = vmatpush2.bf16.msra.mxu0 0
        %2160 = vmatprep.subr.bf16.mxu0 0
        %2161 = vmatpush2.bf16.msra.mxu0 0
        %2162 = vmatprep.subr.bf16.mxu0 0
        %2163 = vmatpush2.bf16.msra.mxu0 0
        %2164 = vmatprep.subr.bf16.mxu0 0
        %2165 = vmatpush2.bf16.msra.mxu0 0
        %2166 = vmatprep.mubr.bf16.mxu0 0
        %2167 = vmatmul.mubr.bf16.gmra.mxu0 %v1926
        %v2168 = vpop.f32.mrf.mxu0
        %v2169 = vadd.f32 %v2008, %v2168
        %v2170 = vpop.f32.mrf.mxu0
        %v2171 = vpop.f32.mrf.mxu0
        %v2172 = vadd.f32 %v2011, %v2171
        %v2173 = vpop.f32.mrf.mxu0
        %2174 = vmatprep.mubr.bf16.mxu0 0
        %2175 = vmatmul.mubr.bf16.gmra.mxu0 %v1929
        %v2176 = vpop.f32.mrf.mxu0
        %v2177 = vadd.f32 %v2016, %v2176
        %v2178 = vpop.f32.mrf.mxu0
        %v2179 = vpop.f32.mrf.mxu0
        %v2180 = vadd.f32 %v2019, %v2179
        %v2181 = vpop.f32.mrf.mxu0
        %2182 = vmatprep.mubr.bf16.mxu0 0
        %2183 = vmatmul.mubr.bf16.gmra.mxu0 %v1932
        %v2184 = vpop.f32.mrf.mxu0
        %v2185 = vadd.f32 %v2024, %v2184
        %v2186 = vpop.f32.mrf.mxu0
        %v2187 = vpop.f32.mrf.mxu0
        %v2188 = vadd.f32 %v2027, %v2187
        %v2189 = vpop.f32.mrf.mxu0
        %2190 = vmatprep.mubr.bf16.mxu0 0
        %2191 = vmatmul.mubr.bf16.gmra.mxu0 %v1935
        %v2192 = vpop.f32.mrf.mxu0
        %v2193 = vadd.f32 %v2032, %v2192
        %v2194 = vpop.f32.mrf.mxu0
        %v2195 = vpop.f32.mrf.mxu0
        %v2196 = vadd.f32 %v2035, %v2195
        %v2197 = vpop.f32.mrf.mxu0
        %2198 = vmatprep.mubr.bf16.mxu0 0
        %2199 = vmatmul.mubr.bf16.gmra.mxu0 %v1938
        %v2200 = vpop.f32.mrf.mxu0
        %v2201 = vadd.f32 %v2040, %v2200
        %v2202 = vpop.f32.mrf.mxu0
        %v2203 = vpop.f32.mrf.mxu0
        %v2204 = vadd.f32 %v2043, %v2203
        %v2205 = vpop.f32.mrf.mxu0
        %2206 = vmatprep.mubr.bf16.mxu0 0
        %2207 = vmatmul.mubr.bf16.gmra.mxu0 %v1941
        %v2208 = vpop.f32.mrf.mxu0
        %v2209 = vadd.f32 %v2048, %v2208
        %v2210 = vpop.f32.mrf.mxu0
        %v2211 = vpop.f32.mrf.mxu0
        %v2212 = vadd.f32 %v2051, %v2211
        %v2213 = vpop.f32.mrf.mxu0
        %2214 = vmatprep.mubr.bf16.mxu0 0
        %2215 = vmatmul.mubr.bf16.gmra.mxu0 %v1944
        %v2216 = vpop.f32.mrf.mxu0
        %v2217 = vadd.f32 %v2056, %v2216
        %v2218 = vpop.f32.mrf.mxu0
        %v2219 = vpop.f32.mrf.mxu0
        %v2220 = vadd.f32 %v2059, %v2219
        %v2221 = vpop.f32.mrf.mxu0
        %2222 = vmatprep.mubr.bf16.mxu0 0
        %2223 = vmatmul.mubr.bf16.gmra.mxu0 %v1947
        %v2224 = vpop.f32.mrf.mxu0
        %v2225 = vadd.f32 %v2064, %v2224
        %v2226 = vpop.f32.mrf.mxu0
        %v2227 = vpop.f32.mrf.mxu0
        %v2228 = vadd.f32 %v2067, %v2227
        %v2229 = vpop.f32.mrf.mxu0
        %2230 = vmatprep.mubr.bf16.mxu0 0
        %2231 = vmatmul.mubr.bf16.gmra.mxu0 %v1950
        %v2232 = vpop.f32.mrf.mxu0
        %v2233 = vadd.f32 %v2072, %v2232
        %v2234 = vpop.f32.mrf.mxu0
        %v2235 = vpop.f32.mrf.mxu0
        %v2236 = vadd.f32 %v2075, %v2235
        %v2237 = vpop.f32.mrf.mxu0
        %2238 = vmatprep.mubr.bf16.mxu0 0
        %2239 = vmatmul.mubr.bf16.gmra.mxu0 %v1953
        %v2240 = vpop.f32.mrf.mxu0
        %v2241 = vadd.f32 %v2080, %v2240
        %v2242 = vpop.f32.mrf.mxu0
        %v2243 = vpop.f32.mrf.mxu0
        %v2244 = vadd.f32 %v2083, %v2243
        %v2245 = vpop.f32.mrf.mxu0
        %2246 = vmatprep.mubr.bf16.mxu0 0
        %2247 = vmatmul.mubr.bf16.gmra.mxu0 %v1956
        %v2248 = vpop.f32.mrf.mxu0
        %v2249 = vadd.f32 %v2088, %v2248
        %v2250 = vpop.f32.mrf.mxu0
        %v2251 = vpop.f32.mrf.mxu0
        %v2252 = vadd.f32 %v2091, %v2251
        %v2253 = vpop.f32.mrf.mxu0
        %2254 = vmatprep.mubr.bf16.mxu0 0
        %2255 = vmatmul.mubr.bf16.gmra.mxu0 %v1959
        %v2256 = vpop.f32.mrf.mxu0
        %v2257 = vadd.f32 %v2096, %v2256
        %v2258 = vpop.f32.mrf.mxu0
        %v2259 = vpop.f32.mrf.mxu0
        %v2260 = vadd.f32 %v2099, %v2259
        %v2261 = vpop.f32.mrf.mxu0
        %2262 = vmatprep.mubr.bf16.mxu0 0
        %2263 = vmatmul.mubr.bf16.gmra.mxu0 %v1962
        %v2264 = vpop.f32.mrf.mxu0
        %v2265 = vadd.f32 %v2104, %v2264
        %v2266 = vpop.f32.mrf.mxu0
        %v2267 = vpop.f32.mrf.mxu0
        %v2268 = vadd.f32 %v2107, %v2267
        %v2269 = vpop.f32.mrf.mxu0
        %2270 = vmatprep.mubr.bf16.mxu0 0
        %2271 = vmatmul.mubr.bf16.gmra.mxu0 %v1965
        %v2272 = vpop.f32.mrf.mxu0
        %v2273 = vadd.f32 %v2112, %v2272
        %v2274 = vpop.f32.mrf.mxu0
        %v2275 = vpop.f32.mrf.mxu0
        %v2276 = vadd.f32 %v2115, %v2275
        %v2277 = vpop.f32.mrf.mxu0
        %2278 = vmatprep.mubr.bf16.mxu0 0
        %2279 = vmatmul.mubr.bf16.gmra.mxu0 %v1968
        %v2280 = vpop.f32.mrf.mxu0
        %v2281 = vadd.f32 %v2120, %v2280
        %v2282 = vpop.f32.mrf.mxu0
        %v2283 = vpop.f32.mrf.mxu0
        %v2284 = vadd.f32 %v2123, %v2283
        %v2285 = vpop.f32.mrf.mxu0
        %2286 = vmatprep.mubr.bf16.mxu0 0
        %2287 = vmatmul.mubr.bf16.gmra.mxu0 %v1971
        %v2288 = vpop.f32.mrf.mxu0
        %v2289 = vadd.f32 %v2128, %v2288
        %v2290 = vpop.f32.mrf.mxu0
        %v2291 = vpop.f32.mrf.mxu0
        %v2292 = vadd.f32 %v2131, %v2291
        %v2293 = vpop.f32.mrf.mxu0
        %2294 = vdwg.mxu0
        %s2295 = scalar_lea.vmem [#allocation2], 192
        %v2296 = vld [vmem:[%s2295 + $0x6] sm:$0xff]
        %v2297 = vld [vmem:[%s2295 + $0xe] sm:$0xff]
        %v2298 = vld [vmem:[%s2295 + $0x26] sm:$0xff]
        %v2299 = vld [vmem:[%s2295 + $0x2e] sm:$0xff]
        %v2300 = vld [vmem:[%s2295 + $0x46] sm:$0xff]
        %v2301 = vld [vmem:[%s2295 + $0x4e] sm:$0xff]
        %v2302 = vld [vmem:[%s2295 + $0x66] sm:$0xff]
        %v2303 = vld [vmem:[%s2295 + $0x6e] sm:$0xff]
        %v2304 = vld [vmem:[%s2295 + $0x86] sm:$0xff]
        %v2305 = vld [vmem:[%s2295 + $0x8e] sm:$0xff]
        %v2306 = vld [vmem:[%s2295 + $0xa6] sm:$0xff]
        %v2307 = vld [vmem:[%s2295 + $0xae] sm:$0xff]
        %v2308 = vld [vmem:[%s2295 + $0xc6] sm:$0xff]
        %v2309 = vld [vmem:[%s2295 + $0xce] sm:$0xff]
        %v2310 = vld [vmem:[%s2295 + $0xe6] sm:$0xff]
        %v2311 = vld [vmem:[%s2295 + $0xee] sm:$0xff]
        %v2312 = vld [vmem:[%s2295 + $0x106] sm:$0xff]
        %v2313 = vld [vmem:[%s2295 + $0x10e] sm:$0xff]
        %v2314 = vld [vmem:[%s2295 + $0x126] sm:$0xff]
        %v2315 = vld [vmem:[%s2295 + $0x12e] sm:$0xff]
        %v2316 = vld [vmem:[%s2295 + $0x146] sm:$0xff]
        %v2317 = vld [vmem:[%s2295 + $0x14e] sm:$0xff]
        %v2318 = vld [vmem:[%s2295 + $0x166] sm:$0xff]
        %v2319 = vld [vmem:[%s2295 + $0x16e] sm:$0xff]
        %v2320 = vld [vmem:[%s2295 + $0x186] sm:$0xff]
        %v2321 = vld [vmem:[%s2295 + $0x18e] sm:$0xff]
        %v2322 = vld [vmem:[%s2295 + $0x1a6] sm:$0xff]
        %v2323 = vld [vmem:[%s2295 + $0x1ae] sm:$0xff]
        %v2324 = vld [vmem:[%s2295 + $0x1c6] sm:$0xff]
        %v2325 = vld [vmem:[%s2295 + $0x1ce] sm:$0xff]
        %v2326 = vld [vmem:[%s2295 + $0x1e6] sm:$0xff]
        %v2327 = vld [vmem:[%s2295 + $0x1ee] sm:$0xff]
        %v2328 = vpack.c.bf16 %v2297, %v2296
        %v2329 = vpack.c.bf16 %v2299, %v2298
        %v2330 = vpack.c.bf16 %v2301, %v2300
        %v2331 = vpack.c.bf16 %v2303, %v2302
        %v2332 = vpack.c.bf16 %v2305, %v2304
        %v2333 = vpack.c.bf16 %v2307, %v2306
        %v2334 = vpack.c.bf16 %v2309, %v2308
        %v2335 = vpack.c.bf16 %v2311, %v2310
        %v2336 = vpack.c.bf16 %v2313, %v2312
        %v2337 = vpack.c.bf16 %v2315, %v2314
        %v2338 = vpack.c.bf16 %v2317, %v2316
        %v2339 = vpack.c.bf16 %v2319, %v2318
        %v2340 = vpack.c.bf16 %v2321, %v2320
        %v2341 = vpack.c.bf16 %v2323, %v2322
        %v2342 = vpack.c.bf16 %v2325, %v2324
        %v2343 = vpack.c.bf16 %v2327, %v2326
        %v2344 = vld [vmem:[%s2295 + $0x8] sm:$0xff]
        %v2345 = vld [vmem:[%s2295 + $0x10] sm:$0xff]
        %v2346 = vld [vmem:[%s2295 + $0x28] sm:$0xff]
        %v2347 = vld [vmem:[%s2295 + $0x30] sm:$0xff]
        %v2348 = vld [vmem:[%s2295 + $0x48] sm:$0xff]
        %v2349 = vld [vmem:[%s2295 + $0x50] sm:$0xff]
        %v2350 = vld [vmem:[%s2295 + $0x68] sm:$0xff]
        %v2351 = vld [vmem:[%s2295 + $0x70] sm:$0xff]
        %v2352 = vld [vmem:[%s2295 + $0x88] sm:$0xff]
        %v2353 = vld [vmem:[%s2295 + $0x90] sm:$0xff]
        %v2354 = vld [vmem:[%s2295 + $0xa8] sm:$0xff]
        %v2355 = vld [vmem:[%s2295 + $0xb0] sm:$0xff]
        %v2356 = vld [vmem:[%s2295 + $0xc8] sm:$0xff]
        %v2357 = vld [vmem:[%s2295 + $0xd0] sm:$0xff]
        %v2358 = vld [vmem:[%s2295 + $0xe8] sm:$0xff]
        %v2359 = vld [vmem:[%s2295 + $0xf0] sm:$0xff]
        %v2360 = vld [vmem:[%s2295 + $0x108] sm:$0xff]
        %v2361 = vld [vmem:[%s2295 + $0x110] sm:$0xff]
        %v2362 = vld [vmem:[%s2295 + $0x128] sm:$0xff]
        %v2363 = vld [vmem:[%s2295 + $0x130] sm:$0xff]
        %v2364 = vld [vmem:[%s2295 + $0x148] sm:$0xff]
        %v2365 = vld [vmem:[%s2295 + $0x150] sm:$0xff]
        %v2366 = vld [vmem:[%s2295 + $0x168] sm:$0xff]
        %v2367 = vld [vmem:[%s2295 + $0x170] sm:$0xff]
        %v2368 = vld [vmem:[%s2295 + $0x188] sm:$0xff]
        %v2369 = vld [vmem:[%s2295 + $0x190] sm:$0xff]
        %v2370 = vld [vmem:[%s2295 + $0x1a8] sm:$0xff]
        %v2371 = vld [vmem:[%s2295 + $0x1b0] sm:$0xff]
        %v2372 = vld [vmem:[%s2295 + $0x1c8] sm:$0xff]
        %v2373 = vld [vmem:[%s2295 + $0x1d0] sm:$0xff]
        %v2374 = vld [vmem:[%s2295 + $0x1e8] sm:$0xff]
        %v2375 = vld [vmem:[%s2295 + $0x1f0] sm:$0xff]
        %v2376 = vpack.c.bf16 %v2345, %v2344
        %v2377 = vpack.c.bf16 %v2347, %v2346
        %v2378 = vpack.c.bf16 %v2349, %v2348
        %v2379 = vpack.c.bf16 %v2351, %v2350
        %v2380 = vpack.c.bf16 %v2353, %v2352
        %v2381 = vpack.c.bf16 %v2355, %v2354
        %v2382 = vpack.c.bf16 %v2357, %v2356
        %v2383 = vpack.c.bf16 %v2359, %v2358
        %v2384 = vpack.c.bf16 %v2361, %v2360
        %v2385 = vpack.c.bf16 %v2363, %v2362
        %v2386 = vpack.c.bf16 %v2365, %v2364
        %v2387 = vpack.c.bf16 %v2367, %v2366
        %v2388 = vpack.c.bf16 %v2369, %v2368
        %v2389 = vpack.c.bf16 %v2371, %v2370
        %v2390 = vpack.c.bf16 %v2373, %v2372
        %v2391 = vpack.c.bf16 %v2375, %v2374
        %v2392 = vld [vmem:[%s2295 + $0xa] sm:$0xff]
        %v2393 = vld [vmem:[%s2295 + $0x12] sm:$0xff]
        %v2394 = vld [vmem:[%s2295 + $0x2a] sm:$0xff]
        %v2395 = vld [vmem:[%s2295 + $0x32] sm:$0xff]
        %v2396 = vld [vmem:[%s2295 + $0x4a] sm:$0xff]
        %v2397 = vld [vmem:[%s2295 + $0x52] sm:$0xff]
        %v2398 = vld [vmem:[%s2295 + $0x6a] sm:$0xff]
        %v2399 = vld [vmem:[%s2295 + $0x72] sm:$0xff]
        %v2400 = vld [vmem:[%s2295 + $0x8a] sm:$0xff]
        %v2401 = vld [vmem:[%s2295 + $0x92] sm:$0xff]
        %v2402 = vld [vmem:[%s2295 + $0xaa] sm:$0xff]
        %v2403 = vld [vmem:[%s2295 + $0xb2] sm:$0xff]
        %v2404 = vld [vmem:[%s2295 + $0xca] sm:$0xff]
        %v2405 = vld [vmem:[%s2295 + $0xd2] sm:$0xff]
        %v2406 = vld [vmem:[%s2295 + $0xea] sm:$0xff]
        %v2407 = vld [vmem:[%s2295 + $0xf2] sm:$0xff]
        %v2408 = vld [vmem:[%s2295 + $0x10a] sm:$0xff]
        %v2409 = vld [vmem:[%s2295 + $0x112] sm:$0xff]
        %v2410 = vld [vmem:[%s2295 + $0x12a] sm:$0xff]
        %v2411 = vld [vmem:[%s2295 + $0x132] sm:$0xff]
        %v2412 = vld [vmem:[%s2295 + $0x14a] sm:$0xff]
        %v2413 = vld [vmem:[%s2295 + $0x152] sm:$0xff]
        %v2414 = vld [vmem:[%s2295 + $0x16a] sm:$0xff]
        %v2415 = vld [vmem:[%s2295 + $0x172] sm:$0xff]
        %v2416 = vld [vmem:[%s2295 + $0x18a] sm:$0xff]
        %v2417 = vld [vmem:[%s2295 + $0x192] sm:$0xff]
        %v2418 = vld [vmem:[%s2295 + $0x1aa] sm:$0xff]
        %v2419 = vld [vmem:[%s2295 + $0x1b2] sm:$0xff]
        %v2420 = vld [vmem:[%s2295 + $0x1ca] sm:$0xff]
        %v2421 = vld [vmem:[%s2295 + $0x1d2] sm:$0xff]
        %v2422 = vld [vmem:[%s2295 + $0x1ea] sm:$0xff]
        %v2423 = vld [vmem:[%s2295 + $0x1f2] sm:$0xff]
        %v2424 = vpack.c.bf16 %v2393, %v2392
        %v2425 = vpack.c.bf16 %v2395, %v2394
        %v2426 = vpack.c.bf16 %v2397, %v2396
        %v2427 = vpack.c.bf16 %v2399, %v2398
        %v2428 = vpack.c.bf16 %v2401, %v2400
        %v2429 = vpack.c.bf16 %v2403, %v2402
        %v2430 = vpack.c.bf16 %v2405, %v2404
        %v2431 = vpack.c.bf16 %v2407, %v2406
        %v2432 = vpack.c.bf16 %v2409, %v2408
        %v2433 = vpack.c.bf16 %v2411, %v2410
        %v2434 = vpack.c.bf16 %v2413, %v2412
        %v2435 = vpack.c.bf16 %v2415, %v2414
        %v2436 = vpack.c.bf16 %v2417, %v2416
        %v2437 = vpack.c.bf16 %v2419, %v2418
        %v2438 = vpack.c.bf16 %v2421, %v2420
        %v2439 = vpack.c.bf16 %v2423, %v2422
        %v2440 = vld [vmem:[%s768 + $0x6] sm:$0xff]
        %v2441 = vld [vmem:[%s768 + $0xe] sm:$0xff]
        %v2442 = vld [vmem:[%s768 + $0x26] sm:$0xff]
        %v2443 = vld [vmem:[%s768 + $0x2e] sm:$0xff]
        %v2444 = vld [vmem:[%s768 + $0x46] sm:$0xff]
        %v2445 = vld [vmem:[%s768 + $0x4e] sm:$0xff]
        %v2446 = vld [vmem:[%s768 + $0x66] sm:$0xff]
        %v2447 = vld [vmem:[%s768 + $0x6e] sm:$0xff]
        %v2448 = vld [vmem:[%s768 + $0x86] sm:$0xff]
        %v2449 = vld [vmem:[%s768 + $0x8e] sm:$0xff]
        %v2450 = vld [vmem:[%s768 + $0xa6] sm:$0xff]
        %v2451 = vld [vmem:[%s768 + $0xae] sm:$0xff]
        %v2452 = vld [vmem:[%s768 + $0xc6] sm:$0xff]
        %v2453 = vld [vmem:[%s768 + $0xce] sm:$0xff]
        %v2454 = vld [vmem:[%s768 + $0xe6] sm:$0xff]
        %v2455 = vld [vmem:[%s768 + $0xee] sm:$0xff]
        %v2456 = vld [vmem:[%s768 + $0x106] sm:$0xff]
        %v2457 = vld [vmem:[%s768 + $0x10e] sm:$0xff]
        %v2458 = vld [vmem:[%s768 + $0x126] sm:$0xff]
        %v2459 = vld [vmem:[%s768 + $0x12e] sm:$0xff]
        %v2460 = vld [vmem:[%s768 + $0x146] sm:$0xff]
        %v2461 = vld [vmem:[%s768 + $0x14e] sm:$0xff]
        %v2462 = vld [vmem:[%s768 + $0x166] sm:$0xff]
        %v2463 = vld [vmem:[%s768 + $0x16e] sm:$0xff]
        %v2464 = vld [vmem:[%s768 + $0x186] sm:$0xff]
        %v2465 = vld [vmem:[%s768 + $0x18e] sm:$0xff]
        %v2466 = vld [vmem:[%s768 + $0x1a6] sm:$0xff]
        %v2467 = vld [vmem:[%s768 + $0x1ae] sm:$0xff]
        %v2468 = vld [vmem:[%s768 + $0x1c6] sm:$0xff]
        %v2469 = vld [vmem:[%s768 + $0x1ce] sm:$0xff]
        %v2470 = vld [vmem:[%s768 + $0x1e6] sm:$0xff]
        %v2471 = vld [vmem:[%s768 + $0x1ee] sm:$0xff]
        %v2472 = vpack.c.bf16 %v2441, %v2440
        %v2473 = vpack.c.bf16 %v2443, %v2442
        %v2474 = vpack.c.bf16 %v2445, %v2444
        %v2475 = vpack.c.bf16 %v2447, %v2446
        %v2476 = vpack.c.bf16 %v2449, %v2448
        %v2477 = vpack.c.bf16 %v2451, %v2450
        %v2478 = vpack.c.bf16 %v2453, %v2452
        %v2479 = vpack.c.bf16 %v2455, %v2454
        %v2480 = vpack.c.bf16 %v2457, %v2456
        %v2481 = vpack.c.bf16 %v2459, %v2458
        %v2482 = vpack.c.bf16 %v2461, %v2460
        %v2483 = vpack.c.bf16 %v2463, %v2462
        %v2484 = vpack.c.bf16 %v2465, %v2464
        %v2485 = vpack.c.bf16 %v2467, %v2466
        %v2486 = vpack.c.bf16 %v2469, %v2468
        %v2487 = vpack.c.bf16 %v2471, %v2470
        %v2488 = vld [vmem:[%s768 + $0xa] sm:$0xff]
        %v2489 = vld [vmem:[%s768 + $0x12] sm:$0xff]
        %v2490 = vld [vmem:[%s768 + $0x2a] sm:$0xff]
        %v2491 = vld [vmem:[%s768 + $0x32] sm:$0xff]
        %v2492 = vld [vmem:[%s768 + $0x4a] sm:$0xff]
        %v2493 = vld [vmem:[%s768 + $0x52] sm:$0xff]
        %v2494 = vld [vmem:[%s768 + $0x6a] sm:$0xff]
        %v2495 = vld [vmem:[%s768 + $0x72] sm:$0xff]
        %v2496 = vld [vmem:[%s768 + $0x8a] sm:$0xff]
        %v2497 = vld [vmem:[%s768 + $0x92] sm:$0xff]
        %v2498 = vld [vmem:[%s768 + $0xaa] sm:$0xff]
        %v2499 = vld [vmem:[%s768 + $0xb2] sm:$0xff]
        %v2500 = vld [vmem:[%s768 + $0xca] sm:$0xff]
        %v2501 = vld [vmem:[%s768 + $0xd2] sm:$0xff]
        %v2502 = vld [vmem:[%s768 + $0xea] sm:$0xff]
        %v2503 = vld [vmem:[%s768 + $0xf2] sm:$0xff]
        %v2504 = vld [vmem:[%s768 + $0x10a] sm:$0xff]
        %v2505 = vld [vmem:[%s768 + $0x112] sm:$0xff]
        %v2506 = vld [vmem:[%s768 + $0x12a] sm:$0xff]
        %v2507 = vld [vmem:[%s768 + $0x132] sm:$0xff]
        %v2508 = vld [vmem:[%s768 + $0x14a] sm:$0xff]
        %v2509 = vld [vmem:[%s768 + $0x152] sm:$0xff]
        %v2510 = vld [vmem:[%s768 + $0x16a] sm:$0xff]
        %v2511 = vld [vmem:[%s768 + $0x172] sm:$0xff]
        %v2512 = vld [vmem:[%s768 + $0x18a] sm:$0xff]
        %v2513 = vld [vmem:[%s768 + $0x192] sm:$0xff]
        %v2514 = vld [vmem:[%s768 + $0x1aa] sm:$0xff]
        %v2515 = vld [vmem:[%s768 + $0x1b2] sm:$0xff]
        %v2516 = vld [vmem:[%s768 + $0x1ca] sm:$0xff]
        %v2517 = vld [vmem:[%s768 + $0x1d2] sm:$0xff]
        %v2518 = vld [vmem:[%s768 + $0x1ea] sm:$0xff]
        %v2519 = vld [vmem:[%s768 + $0x1f2] sm:$0xff]
        %v2520 = vpack.c.bf16 %v2489, %v2488
        %v2521 = vpack.c.bf16 %v2491, %v2490
        %v2522 = vpack.c.bf16 %v2493, %v2492
        %v2523 = vpack.c.bf16 %v2495, %v2494
        %v2524 = vpack.c.bf16 %v2497, %v2496
        %v2525 = vpack.c.bf16 %v2499, %v2498
        %v2526 = vpack.c.bf16 %v2501, %v2500
        %v2527 = vpack.c.bf16 %v2503, %v2502
        %v2528 = vpack.c.bf16 %v2505, %v2504
        %v2529 = vpack.c.bf16 %v2507, %v2506
        %v2530 = vpack.c.bf16 %v2509, %v2508
        %v2531 = vpack.c.bf16 %v2511, %v2510
        %v2532 = vpack.c.bf16 %v2513, %v2512
        %v2533 = vpack.c.bf16 %v2515, %v2514
        %v2534 = vpack.c.bf16 %v2517, %v2516
        %v2535 = vpack.c.bf16 %v2519, %v2518
        %s2536 = scalar_lea.vmem [#allocation2], 320
        %v2537 = vld [vmem:[%s2536 + $0x6] sm:$0xff]
        %v2538 = vld [vmem:[%s2536 + $0xe] sm:$0xff]
        %v2539 = vld [vmem:[%s2536 + $0x26] sm:$0xff]
        %v2540 = vld [vmem:[%s2536 + $0x2e] sm:$0xff]
        %v2541 = vld [vmem:[%s2536 + $0x46] sm:$0xff]
        %v2542 = vld [vmem:[%s2536 + $0x4e] sm:$0xff]
        %v2543 = vld [vmem:[%s2536 + $0x66] sm:$0xff]
        %v2544 = vld [vmem:[%s2536 + $0x6e] sm:$0xff]
        %v2545 = vld [vmem:[%s2536 + $0x86] sm:$0xff]
        %v2546 = vld [vmem:[%s2536 + $0x8e] sm:$0xff]
        %v2547 = vld [vmem:[%s2536 + $0xa6] sm:$0xff]
        %v2548 = vld [vmem:[%s2536 + $0xae] sm:$0xff]
        %v2549 = vld [vmem:[%s2536 + $0xc6] sm:$0xff]
        %v2550 = vld [vmem:[%s2536 + $0xce] sm:$0xff]
        %v2551 = vld [vmem:[%s2536 + $0xe6] sm:$0xff]
        %v2552 = vld [vmem:[%s2536 + $0xee] sm:$0xff]
        %v2553 = vld [vmem:[%s2536 + $0x106] sm:$0xff]
        %v2554 = vld [vmem:[%s2536 + $0x10e] sm:$0xff]
        %v2555 = vld [vmem:[%s2536 + $0x126] sm:$0xff]
        %v2556 = vld [vmem:[%s2536 + $0x12e] sm:$0xff]
        %v2557 = vld [vmem:[%s2536 + $0x146] sm:$0xff]
        %v2558 = vld [vmem:[%s2536 + $0x14e] sm:$0xff]
        %v2559 = vld [vmem:[%s2536 + $0x166] sm:$0xff]
        %v2560 = vld [vmem:[%s2536 + $0x16e] sm:$0xff]
        %v2561 = vld [vmem:[%s2536 + $0x186] sm:$0xff]
        %v2562 = vld [vmem:[%s2536 + $0x18e] sm:$0xff]
        %v2563 = vld [vmem:[%s2536 + $0x1a6] sm:$0xff]
        %v2564 = vld [vmem:[%s2536 + $0x1ae] sm:$0xff]
        %v2565 = vld [vmem:[%s2536 + $0x1c6] sm:$0xff]
        %v2566 = vld [vmem:[%s2536 + $0x1ce] sm:$0xff]
        %v2567 = vld [vmem:[%s2536 + $0x1e6] sm:$0xff]
        %v2568 = vld [vmem:[%s2536 + $0x1ee] sm:$0xff]
        %v2569 = vpack.c.bf16 %v2538, %v2537
        %v2570 = vpack.c.bf16 %v2540, %v2539
        %v2571 = vpack.c.bf16 %v2542, %v2541
        %v2572 = vpack.c.bf16 %v2544, %v2543
        %v2573 = vpack.c.bf16 %v2546, %v2545
        %v2574 = vpack.c.bf16 %v2548, %v2547
        %v2575 = vpack.c.bf16 %v2550, %v2549
        %v2576 = vpack.c.bf16 %v2552, %v2551
        %v2577 = vpack.c.bf16 %v2554, %v2553
        %v2578 = vpack.c.bf16 %v2556, %v2555
        %v2579 = vpack.c.bf16 %v2558, %v2557
        %v2580 = vpack.c.bf16 %v2560, %v2559
        %v2581 = vpack.c.bf16 %v2562, %v2561
        %v2582 = vpack.c.bf16 %v2564, %v2563
        %v2583 = vpack.c.bf16 %v2566, %v2565
        %v2584 = vpack.c.bf16 %v2568, %v2567
        %v2585 = vld [vmem:[%s2536 + $0x8] sm:$0xff]
        %v2586 = vld [vmem:[%s2536 + $0x10] sm:$0xff]
        %v2587 = vld [vmem:[%s2536 + $0x28] sm:$0xff]
        %v2588 = vld [vmem:[%s2536 + $0x30] sm:$0xff]
        %v2589 = vld [vmem:[%s2536 + $0x48] sm:$0xff]
        %v2590 = vld [vmem:[%s2536 + $0x50] sm:$0xff]
        %v2591 = vld [vmem:[%s2536 + $0x68] sm:$0xff]
        %v2592 = vld [vmem:[%s2536 + $0x70] sm:$0xff]
        %v2593 = vld [vmem:[%s2536 + $0x88] sm:$0xff]
        %v2594 = vld [vmem:[%s2536 + $0x90] sm:$0xff]
        %v2595 = vld [vmem:[%s2536 + $0xa8] sm:$0xff]
        %v2596 = vld [vmem:[%s2536 + $0xb0] sm:$0xff]
        %v2597 = vld [vmem:[%s2536 + $0xc8] sm:$0xff]
        %v2598 = vld [vmem:[%s2536 + $0xd0] sm:$0xff]
        %v2599 = vld [vmem:[%s2536 + $0xe8] sm:$0xff]
        %v2600 = vld [vmem:[%s2536 + $0xf0] sm:$0xff]
        %v2601 = vld [vmem:[%s2536 + $0x108] sm:$0xff]
        %v2602 = vld [vmem:[%s2536 + $0x110] sm:$0xff]
        %v2603 = vld [vmem:[%s2536 + $0x128] sm:$0xff]
        %v2604 = vld [vmem:[%s2536 + $0x130] sm:$0xff]
        %v2605 = vld [vmem:[%s2536 + $0x148] sm:$0xff]
        %v2606 = vld [vmem:[%s2536 + $0x150] sm:$0xff]
        %v2607 = vld [vmem:[%s2536 + $0x168] sm:$0xff]
        %v2608 = vld [vmem:[%s2536 + $0x170] sm:$0xff]
        %v2609 = vld [vmem:[%s2536 + $0x188] sm:$0xff]
        %v2610 = vld [vmem:[%s2536 + $0x190] sm:$0xff]
        %v2611 = vld [vmem:[%s2536 + $0x1a8] sm:$0xff]
        %v2612 = vld [vmem:[%s2536 + $0x1b0] sm:$0xff]
        %v2613 = vld [vmem:[%s2536 + $0x1c8] sm:$0xff]
        %v2614 = vld [vmem:[%s2536 + $0x1d0] sm:$0xff]
        %v2615 = vld [vmem:[%s2536 + $0x1e8] sm:$0xff]
        %v2616 = vld [vmem:[%s2536 + $0x1f0] sm:$0xff]
        %v2617 = vpack.c.bf16 %v2586, %v2585
        %v2618 = vpack.c.bf16 %v2588, %v2587
        %v2619 = vpack.c.bf16 %v2590, %v2589
        %v2620 = vpack.c.bf16 %v2592, %v2591
        %v2621 = vpack.c.bf16 %v2594, %v2593
        %v2622 = vpack.c.bf16 %v2596, %v2595
        %v2623 = vpack.c.bf16 %v2598, %v2597
        %v2624 = vpack.c.bf16 %v2600, %v2599
        %v2625 = vpack.c.bf16 %v2602, %v2601
        %v2626 = vpack.c.bf16 %v2604, %v2603
        %v2627 = vpack.c.bf16 %v2606, %v2605
        %v2628 = vpack.c.bf16 %v2608, %v2607
        %v2629 = vpack.c.bf16 %v2610, %v2609
        %v2630 = vpack.c.bf16 %v2612, %v2611
        %v2631 = vpack.c.bf16 %v2614, %v2613
        %v2632 = vpack.c.bf16 %v2616, %v2615
        %v2633 = vld [vmem:[%s2536 + $0xa] sm:$0xff]
        %v2634 = vld [vmem:[%s2536 + $0x12] sm:$0xff]
        %v2635 = vld [vmem:[%s2536 + $0x2a] sm:$0xff]
        %v2636 = vld [vmem:[%s2536 + $0x32] sm:$0xff]
        %v2637 = vld [vmem:[%s2536 + $0x4a] sm:$0xff]
        %v2638 = vld [vmem:[%s2536 + $0x52] sm:$0xff]
        %v2639 = vld [vmem:[%s2536 + $0x6a] sm:$0xff]
        %v2640 = vld [vmem:[%s2536 + $0x72] sm:$0xff]
        %v2641 = vld [vmem:[%s2536 + $0x8a] sm:$0xff]
        %v2642 = vld [vmem:[%s2536 + $0x92] sm:$0xff]
        %v2643 = vld [vmem:[%s2536 + $0xaa] sm:$0xff]
        %v2644 = vld [vmem:[%s2536 + $0xb2] sm:$0xff]
        %v2645 = vld [vmem:[%s2536 + $0xca] sm:$0xff]
        %v2646 = vld [vmem:[%s2536 + $0xd2] sm:$0xff]
        %v2647 = vld [vmem:[%s2536 + $0xea] sm:$0xff]
        %v2648 = vld [vmem:[%s2536 + $0xf2] sm:$0xff]
        %v2649 = vld [vmem:[%s2536 + $0x10a] sm:$0xff]
        %v2650 = vld [vmem:[%s2536 + $0x112] sm:$0xff]
        %v2651 = vld [vmem:[%s2536 + $0x12a] sm:$0xff]
        %v2652 = vld [vmem:[%s2536 + $0x132] sm:$0xff]
        %v2653 = vld [vmem:[%s2536 + $0x14a] sm:$0xff]
        %v2654 = vld [vmem:[%s2536 + $0x152] sm:$0xff]
        %v2655 = vld [vmem:[%s2536 + $0x16a] sm:$0xff]
        %v2656 = vld [vmem:[%s2536 + $0x172] sm:$0xff]
        %v2657 = vld [vmem:[%s2536 + $0x18a] sm:$0xff]
        %v2658 = vld [vmem:[%s2536 + $0x192] sm:$0xff]
        %v2659 = vld [vmem:[%s2536 + $0x1aa] sm:$0xff]
        %v2660 = vld [vmem:[%s2536 + $0x1b2] sm:$0xff]
        %v2661 = vld [vmem:[%s2536 + $0x1ca] sm:$0xff]
        %v2662 = vld [vmem:[%s2536 + $0x1d2] sm:$0xff]
        %v2663 = vld [vmem:[%s2536 + $0x1ea] sm:$0xff]
        %v2664 = vld [vmem:[%s2536 + $0x1f2] sm:$0xff]
        %v2665 = vpack.c.bf16 %v2634, %v2633
        %v2666 = vpack.c.bf16 %v2636, %v2635
        %v2667 = vpack.c.bf16 %v2638, %v2637
        %v2668 = vpack.c.bf16 %v2640, %v2639
        %v2669 = vpack.c.bf16 %v2642, %v2641
        %v2670 = vpack.c.bf16 %v2644, %v2643
        %v2671 = vpack.c.bf16 %v2646, %v2645
        %v2672 = vpack.c.bf16 %v2648, %v2647
        %v2673 = vpack.c.bf16 %v2650, %v2649
        %v2674 = vpack.c.bf16 %v2652, %v2651
        %v2675 = vpack.c.bf16 %v2654, %v2653
        %v2676 = vpack.c.bf16 %v2656, %v2655
        %v2677 = vpack.c.bf16 %v2658, %v2657
        %v2678 = vpack.c.bf16 %v2660, %v2659
        %v2679 = vpack.c.bf16 %v2662, %v2661
        %v2680 = vpack.c.bf16 %v2664, %v2663
        %2697 = vrot.lane.b32.xlu0 %v2376, 32
        %v2698 = vpop.permute.xlu0 %2697
        %2699 = vrot.lane.b32.xlu0 %v2377, 32
        %v2700 = vpop.permute.xlu0 %2699
        %2701 = vrot.lane.b32.xlu0 %v2378, 32
        %v2702 = vpop.permute.xlu0 %2701
        %2703 = vrot.lane.b32.xlu0 %v2379, 32
        %v2704 = vpop.permute.xlu0 %2703
        %2705 = vrot.lane.b32.xlu0 %v2380, 32
        %v2706 = vpop.permute.xlu0 %2705
        %2707 = vrot.lane.b32.xlu0 %v2381, 32
        %v2708 = vpop.permute.xlu0 %2707
        %2709 = vrot.lane.b32.xlu0 %v2382, 32
        %v2710 = vpop.permute.xlu0 %2709
        %2711 = vrot.lane.b32.xlu0 %v2383, 32
        %v2712 = vpop.permute.xlu0 %2711
        %2713 = vrot.lane.b32.xlu0 %v2384, 32
        %v2714 = vpop.permute.xlu0 %2713
        %2715 = vrot.lane.b32.xlu0 %v2385, 32
        %v2716 = vpop.permute.xlu0 %2715
        %2717 = vrot.lane.b32.xlu0 %v2386, 32
        %v2718 = vpop.permute.xlu0 %2717
        %2719 = vrot.lane.b32.xlu0 %v2387, 32
        %v2720 = vpop.permute.xlu0 %2719
        %2721 = vrot.lane.b32.xlu0 %v2388, 32
        %v2722 = vpop.permute.xlu0 %2721
        %2723 = vrot.lane.b32.xlu0 %v2389, 32
        %v2724 = vpop.permute.xlu0 %2723
        %2725 = vrot.lane.b32.xlu0 %v2390, 32
        %v2726 = vpop.permute.xlu0 %2725
        %2727 = vrot.lane.b32.xlu0 %v2391, 32
        %v2728 = vpop.permute.xlu0 %2727
        %2745 = vrot.lane.b32.xlu0 %v2424, 64
        %v2746 = vpop.permute.xlu0 %2745
        %2747 = vrot.lane.b32.xlu0 %v2425, 64
        %v2748 = vpop.permute.xlu0 %2747
        %2749 = vrot.lane.b32.xlu0 %v2426, 64
        %v2750 = vpop.permute.xlu0 %2749
        %2751 = vrot.lane.b32.xlu0 %v2427, 64
        %v2752 = vpop.permute.xlu0 %2751
        %2753 = vrot.lane.b32.xlu0 %v2428, 64
        %v2754 = vpop.permute.xlu0 %2753
        %2755 = vrot.lane.b32.xlu0 %v2429, 64
        %v2756 = vpop.permute.xlu0 %2755
        %2757 = vrot.lane.b32.xlu0 %v2430, 64
        %v2758 = vpop.permute.xlu0 %2757
        %2759 = vrot.lane.b32.xlu0 %v2431, 64
        %v2760 = vpop.permute.xlu0 %2759
        %2761 = vrot.lane.b32.xlu0 %v2432, 64
        %v2762 = vpop.permute.xlu0 %2761
        %2763 = vrot.lane.b32.xlu0 %v2433, 64
        %v2764 = vpop.permute.xlu0 %2763
        %2765 = vrot.lane.b32.xlu0 %v2434, 64
        %v2766 = vpop.permute.xlu0 %2765
        %2767 = vrot.lane.b32.xlu0 %v2435, 64
        %v2768 = vpop.permute.xlu0 %2767
        %2769 = vrot.lane.b32.xlu0 %v2436, 64
        %v2770 = vpop.permute.xlu0 %2769
        %2771 = vrot.lane.b32.xlu0 %v2437, 64
        %v2772 = vpop.permute.xlu0 %2771
        %2773 = vrot.lane.b32.xlu0 %v2438, 64
        %v2774 = vpop.permute.xlu0 %2773
        %2775 = vrot.lane.b32.xlu0 %v2439, 64
        %v2776 = vpop.permute.xlu0 %2775
        %2793 = vrot.lane.b32.xlu0 %v2472, 96
        %v2794 = vpop.permute.xlu0 %2793
        %2795 = vrot.lane.b32.xlu0 %v2473, 96
        %v2796 = vpop.permute.xlu0 %2795
        %2797 = vrot.lane.b32.xlu0 %v2474, 96
        %v2798 = vpop.permute.xlu0 %2797
        %2799 = vrot.lane.b32.xlu0 %v2475, 96
        %v2800 = vpop.permute.xlu0 %2799
        %2801 = vrot.lane.b32.xlu0 %v2476, 96
        %v2802 = vpop.permute.xlu0 %2801
        %2803 = vrot.lane.b32.xlu0 %v2477, 96
        %v2804 = vpop.permute.xlu0 %2803
        %2805 = vrot.lane.b32.xlu0 %v2478, 96
        %v2806 = vpop.permute.xlu0 %2805
        %2807 = vrot.lane.b32.xlu0 %v2479, 96
        %v2808 = vpop.permute.xlu0 %2807
        %2809 = vrot.lane.b32.xlu0 %v2480, 96
        %v2810 = vpop.permute.xlu0 %2809
        %2811 = vrot.lane.b32.xlu0 %v2481, 96
        %v2812 = vpop.permute.xlu0 %2811
        %2813 = vrot.lane.b32.xlu0 %v2482, 96
        %v2814 = vpop.permute.xlu0 %2813
        %2815 = vrot.lane.b32.xlu0 %v2483, 96
        %v2816 = vpop.permute.xlu0 %2815
        %2817 = vrot.lane.b32.xlu0 %v2484, 96
        %v2818 = vpop.permute.xlu0 %2817
        %2819 = vrot.lane.b32.xlu0 %v2485, 96
        %v2820 = vpop.permute.xlu0 %2819
        %2821 = vrot.lane.b32.xlu0 %v2486, 96
        %v2822 = vpop.permute.xlu0 %2821
        %2823 = vrot.lane.b32.xlu0 %v2487, 96
        %v2824 = vpop.permute.xlu0 %2823
        %2841 = vrot.lane.b32.xlu0 %v2520, 32
        %v2842 = vpop.permute.xlu0 %2841
        %2843 = vrot.lane.b32.xlu0 %v2521, 32
        %v2844 = vpop.permute.xlu0 %2843
        %2845 = vrot.lane.b32.xlu0 %v2522, 32
        %v2846 = vpop.permute.xlu0 %2845
        %2847 = vrot.lane.b32.xlu0 %v2523, 32
        %v2848 = vpop.permute.xlu0 %2847
        %2849 = vrot.lane.b32.xlu0 %v2524, 32
        %v2850 = vpop.permute.xlu0 %2849
        %2851 = vrot.lane.b32.xlu0 %v2525, 32
        %v2852 = vpop.permute.xlu0 %2851
        %2853 = vrot.lane.b32.xlu0 %v2526, 32
        %v2854 = vpop.permute.xlu0 %2853
        %2855 = vrot.lane.b32.xlu0 %v2527, 32
        %v2856 = vpop.permute.xlu0 %2855
        %2857 = vrot.lane.b32.xlu0 %v2528, 32
        %v2858 = vpop.permute.xlu0 %2857
        %2859 = vrot.lane.b32.xlu0 %v2529, 32
        %v2860 = vpop.permute.xlu0 %2859
        %2861 = vrot.lane.b32.xlu0 %v2530, 32
        %v2862 = vpop.permute.xlu0 %2861
        %2863 = vrot.lane.b32.xlu0 %v2531, 32
        %v2864 = vpop.permute.xlu0 %2863
        %2865 = vrot.lane.b32.xlu0 %v2532, 32
        %v2866 = vpop.permute.xlu0 %2865
        %2867 = vrot.lane.b32.xlu0 %v2533, 32
        %v2868 = vpop.permute.xlu0 %2867
        %2869 = vrot.lane.b32.xlu0 %v2534, 32
        %v2870 = vpop.permute.xlu0 %2869
        %2871 = vrot.lane.b32.xlu0 %v2535, 32
        %v2872 = vpop.permute.xlu0 %2871
        %2889 = vrot.lane.b32.xlu0 %v2569, 64
        %v2890 = vpop.permute.xlu0 %2889
        %2891 = vrot.lane.b32.xlu0 %v2570, 64
        %v2892 = vpop.permute.xlu0 %2891
        %2893 = vrot.lane.b32.xlu0 %v2571, 64
        %v2894 = vpop.permute.xlu0 %2893
        %2895 = vrot.lane.b32.xlu0 %v2572, 64
        %v2896 = vpop.permute.xlu0 %2895
        %2897 = vrot.lane.b32.xlu0 %v2573, 64
        %v2898 = vpop.permute.xlu0 %2897
        %2899 = vrot.lane.b32.xlu0 %v2574, 64
        %v2900 = vpop.permute.xlu0 %2899
        %2901 = vrot.lane.b32.xlu0 %v2575, 64
        %v2902 = vpop.permute.xlu0 %2901
        %2903 = vrot.lane.b32.xlu0 %v2576, 64
        %v2904 = vpop.permute.xlu0 %2903
        %2905 = vrot.lane.b32.xlu0 %v2577, 64
        %v2906 = vpop.permute.xlu0 %2905
        %2907 = vrot.lane.b32.xlu0 %v2578, 64
        %v2908 = vpop.permute.xlu0 %2907
        %2909 = vrot.lane.b32.xlu0 %v2579, 64
        %v2910 = vpop.permute.xlu0 %2909
        %2911 = vrot.lane.b32.xlu0 %v2580, 64
        %v2912 = vpop.permute.xlu0 %2911
        %2913 = vrot.lane.b32.xlu0 %v2581, 64
        %v2914 = vpop.permute.xlu0 %2913
        %2915 = vrot.lane.b32.xlu0 %v2582, 64
        %v2916 = vpop.permute.xlu0 %2915
        %2917 = vrot.lane.b32.xlu0 %v2583, 64
        %v2918 = vpop.permute.xlu0 %2917
        %2919 = vrot.lane.b32.xlu0 %v2584, 64
        %v2920 = vpop.permute.xlu0 %2919
        %2937 = vrot.lane.b32.xlu0 %v2617, 96
        %v2938 = vpop.permute.xlu0 %2937
        %2939 = vrot.lane.b32.xlu0 %v2618, 96
        %v2940 = vpop.permute.xlu0 %2939
        %2941 = vrot.lane.b32.xlu0 %v2619, 96
        %v2942 = vpop.permute.xlu0 %2941
        %2943 = vrot.lane.b32.xlu0 %v2620, 96
        %v2944 = vpop.permute.xlu0 %2943
        %2945 = vrot.lane.b32.xlu0 %v2621, 96
        %v2946 = vpop.permute.xlu0 %2945
        %2947 = vrot.lane.b32.xlu0 %v2622, 96
        %v2948 = vpop.permute.xlu0 %2947
        %2949 = vrot.lane.b32.xlu0 %v2623, 96
        %v2950 = vpop.permute.xlu0 %2949
        %2951 = vrot.lane.b32.xlu0 %v2624, 96
        %v2952 = vpop.permute.xlu0 %2951
        %2953 = vrot.lane.b32.xlu0 %v2625, 96
        %v2954 = vpop.permute.xlu0 %2953
        %2955 = vrot.lane.b32.xlu0 %v2626, 96
        %v2956 = vpop.permute.xlu0 %2955
        %2957 = vrot.lane.b32.xlu0 %v2627, 96
        %v2958 = vpop.permute.xlu0 %2957
        %2959 = vrot.lane.b32.xlu0 %v2628, 96
        %v2960 = vpop.permute.xlu0 %2959
        %2961 = vrot.lane.b32.xlu0 %v2629, 96
        %v2962 = vpop.permute.xlu0 %2961
        %2963 = vrot.lane.b32.xlu0 %v2630, 96
        %v2964 = vpop.permute.xlu0 %2963
        %2965 = vrot.lane.b32.xlu0 %v2631, 96
        %v2966 = vpop.permute.xlu0 %2965
        %2967 = vrot.lane.b32.xlu0 %v2632, 96
        %v2968 = vpop.permute.xlu0 %2967
        %v2971 = vsel %vm430, %v2328, %v2698
        %v2974 = vsel %vm430, %v2329, %v2700
        %v2977 = vsel %vm430, %v2330, %v2702
        %v2980 = vsel %vm430, %v2331, %v2704
        %v2983 = vsel %vm430, %v2332, %v2706
        %v2986 = vsel %vm430, %v2333, %v2708
        %v2989 = vsel %vm430, %v2334, %v2710
        %v2992 = vsel %vm430, %v2335, %v2712
        %v2995 = vsel %vm430, %v2336, %v2714
        %v2998 = vsel %vm430, %v2337, %v2716
        %v3001 = vsel %vm430, %v2338, %v2718
        %v3004 = vsel %vm430, %v2339, %v2720
        %v3007 = vsel %vm430, %v2340, %v2722
        %v3010 = vsel %vm430, %v2341, %v2724
        %v3013 = vsel %vm430, %v2342, %v2726
        %v3016 = vsel %vm430, %v2343, %v2728
        %v3018 = vsel %vm1571, %v2971, %v2746
        %v3020 = vsel %vm1571, %v2974, %v2748
        %v3022 = vsel %vm1571, %v2977, %v2750
        %v3024 = vsel %vm1571, %v2980, %v2752
        %v3026 = vsel %vm1571, %v2983, %v2754
        %v3028 = vsel %vm1571, %v2986, %v2756
        %v3030 = vsel %vm1571, %v2989, %v2758
        %v3032 = vsel %vm1571, %v2992, %v2760
        %v3034 = vsel %vm1571, %v2995, %v2762
        %v3036 = vsel %vm1571, %v2998, %v2764
        %v3038 = vsel %vm1571, %v3001, %v2766
        %v3040 = vsel %vm1571, %v3004, %v2768
        %v3042 = vsel %vm1571, %v3007, %v2770
        %v3044 = vsel %vm1571, %v3010, %v2772
        %v3046 = vsel %vm1571, %v3013, %v2774
        %v3048 = vsel %vm1571, %v3016, %v2776
        %v3050 = vsel %vm1604, %v3018, %v2794
        %v3053 = vsel %vm1604, %v3020, %v2796
        %v3056 = vsel %vm1604, %v3022, %v2798
        %v3059 = vsel %vm1604, %v3024, %v2800
        %v3062 = vsel %vm1604, %v3026, %v2802
        %v3065 = vsel %vm1604, %v3028, %v2804
        %v3068 = vsel %vm1604, %v3030, %v2806
        %v3071 = vsel %vm1604, %v3032, %v2808
        %v3074 = vsel %vm1604, %v3034, %v2810
        %v3077 = vsel %vm1604, %v3036, %v2812
        %v3080 = vsel %vm1604, %v3038, %v2814
        %v3083 = vsel %vm1604, %v3040, %v2816
        %v3086 = vsel %vm1604, %v3042, %v2818
        %v3089 = vsel %vm1604, %v3044, %v2820
        %v3092 = vsel %vm1604, %v3046, %v2822
        %v3095 = vsel %vm1604, %v3048, %v2824
        %v3098 = vsel %vm430, %v1026, %v2842
        %v3100 = vsel %vm430, %v1027, %v2844
        %v3102 = vsel %vm430, %v1028, %v2846
        %v3104 = vsel %vm430, %v1029, %v2848
        %v3106 = vsel %vm430, %v1030, %v2850
        %v3108 = vsel %vm430, %v1031, %v2852
        %v3110 = vsel %vm430, %v1032, %v2854
        %v3112 = vsel %vm430, %v1033, %v2856
        %v3114 = vsel %vm430, %v1034, %v2858
        %v3116 = vsel %vm430, %v1035, %v2860
        %v3118 = vsel %vm430, %v1036, %v2862
        %v3120 = vsel %vm430, %v1037, %v2864
        %v3122 = vsel %vm430, %v1038, %v2866
        %v3124 = vsel %vm430, %v1039, %v2868
        %v3126 = vsel %vm430, %v1040, %v2870
        %v3128 = vsel %vm430, %v1041, %v2872
        %v3130 = vsel %vm1571, %v3098, %v2890
        %v3132 = vsel %vm1571, %v3100, %v2892
        %v3134 = vsel %vm1571, %v3102, %v2894
        %v3136 = vsel %vm1571, %v3104, %v2896
        %v3138 = vsel %vm1571, %v3106, %v2898
        %v3140 = vsel %vm1571, %v3108, %v2900
        %v3142 = vsel %vm1571, %v3110, %v2902
        %v3144 = vsel %vm1571, %v3112, %v2904
        %v3146 = vsel %vm1571, %v3114, %v2906
        %v3148 = vsel %vm1571, %v3116, %v2908
        %v3150 = vsel %vm1571, %v3118, %v2910
        %v3152 = vsel %vm1571, %v3120, %v2912
        %v3154 = vsel %vm1571, %v3122, %v2914
        %v3156 = vsel %vm1571, %v3124, %v2916
        %v3158 = vsel %vm1571, %v3126, %v2918
        %v3160 = vsel %vm1571, %v3128, %v2920
        %v3162 = vsel %vm1604, %v3130, %v2938
        %v3165 = vsel %vm1604, %v3132, %v2940
        %v3168 = vsel %vm1604, %v3134, %v2942
        %v3171 = vsel %vm1604, %v3136, %v2944
        %v3174 = vsel %vm1604, %v3138, %v2946
        %v3177 = vsel %vm1604, %v3140, %v2948
        %v3180 = vsel %vm1604, %v3142, %v2950
        %v3183 = vsel %vm1604, %v3144, %v2952
        %v3186 = vsel %vm1604, %v3146, %v2954
        %v3189 = vsel %vm1604, %v3148, %v2956
        %v3192 = vsel %vm1604, %v3150, %v2958
        %v3195 = vsel %vm1604, %v3152, %v2960
        %v3198 = vsel %vm1604, %v3154, %v2962
        %v3201 = vsel %vm1604, %v3156, %v2964
        %v3204 = vsel %vm1604, %v3158, %v2966
        %v3207 = vsel %vm1604, %v3160, %v2968
        %v3209 = vld [vmem:[%s4] sm:$0xf]
        %v3210 = vld [vmem:[%s4 + $0x4] sm:$0xf]
        %v3211 = vld [vmem:[%s4 + $0x8] sm:$0xf]
        %v3212 = vld [vmem:[%s4 + $0xc] sm:$0xf]
        %v3213 = vld [vmem:[%s4 + $0x10] sm:$0xf]
        %v3214 = vld [vmem:[%s4 + $0x14] sm:$0xf]
        %v3215 = vld [vmem:[%s4 + $0x18] sm:$0xf]
        %v3216 = vld [vmem:[%s4 + $0x1c] sm:$0xf]
        %v3217 = vld [vmem:[%s4 + $0x20] sm:$0xf]
        %v3218 = vld [vmem:[%s4 + $0x24] sm:$0xf]
        %v3219 = vld [vmem:[%s4 + $0x28] sm:$0xf]
        %v3220 = vld [vmem:[%s4 + $0x2c] sm:$0xf]
        %v3221 = vld [vmem:[%s4 + $0x30] sm:$0xf]
        %v3222 = vld [vmem:[%s4 + $0x34] sm:$0xf]
        %v3223 = vld [vmem:[%s4 + $0x38] sm:$0xf]
        %v3224 = vld [vmem:[%s4 + $0x3c] sm:$0xf]
        %v3225 = vld [vmem:[%s4 + $0x40] sm:$0xf]
        %v3226 = vld [vmem:[%s4 + $0x44] sm:$0xf]
        %v3227 = vld [vmem:[%s4 + $0x48] sm:$0xf]
        %v3228 = vld [vmem:[%s4 + $0x4c] sm:$0xf]
        %v3229 = vld [vmem:[%s4 + $0x50] sm:$0xf]
        %v3230 = vld [vmem:[%s4 + $0x54] sm:$0xf]
        %v3231 = vld [vmem:[%s4 + $0x58] sm:$0xf]
        %v3232 = vld [vmem:[%s4 + $0x5c] sm:$0xf]
        %v3233 = vld [vmem:[%s4 + $0x60] sm:$0xf]
        %v3234 = vld [vmem:[%s4 + $0x64] sm:$0xf]
        %v3235 = vld [vmem:[%s4 + $0x68] sm:$0xf]
        %v3236 = vld [vmem:[%s4 + $0x6c] sm:$0xf]
        %v3237 = vld [vmem:[%s4 + $0x70] sm:$0xf]
        %v3238 = vld [vmem:[%s4 + $0x74] sm:$0xf]
        %v3239 = vld [vmem:[%s4 + $0x78] sm:$0xf]
        %v3240 = vld [vmem:[%s4 + $0x7c] sm:$0xf]
        %v3241 = vld [vmem:[%s4 + $0x80] sm:$0xf]
        %v3242 = vld [vmem:[%s4 + $0x84] sm:$0xf]
        %v3243 = vld [vmem:[%s4 + $0x88] sm:$0xf]
        %v3244 = vld [vmem:[%s4 + $0x8c] sm:$0xf]
        %v3281 = vunpack.c.l.b16 %v3209
        %v3282 = vunpack.c.l.b16 %v3210
        %v3283 = vunpack.c.l.b16 %v3211
        %v3284 = vunpack.c.l.b16 %v3212
        %v3285 = vunpack.c.l.b16 %v3213
        %v3286 = vunpack.c.l.b16 %v3214
        %v3287 = vunpack.c.l.b16 %v3215
        %v3288 = vunpack.c.l.b16 %v3216
        %v3289 = vunpack.c.l.b16 %v3217
        %v3290 = vunpack.c.l.b16 %v3218
        %v3291 = vunpack.c.l.b16 %v3219
        %v3292 = vunpack.c.l.b16 %v3220
        %v3293 = vunpack.c.l.b16 %v3221
        %v3294 = vunpack.c.l.b16 %v3222
        %v3295 = vunpack.c.l.b16 %v3223
        %v3296 = vunpack.c.l.b16 %v3224
        %v3297 = vunpack.c.l.b16 %v3225
        %v3298 = vunpack.c.l.b16 %v3226
        %v3299 = vunpack.c.l.b16 %v3227
        %v3300 = vunpack.c.l.b16 %v3228
        %v3301 = vunpack.c.l.b16 %v3229
        %v3302 = vunpack.c.l.b16 %v3230
        %v3303 = vunpack.c.l.b16 %v3231
        %v3304 = vunpack.c.l.b16 %v3232
        %v3305 = vunpack.c.l.b16 %v3233
        %v3306 = vunpack.c.l.b16 %v3234
        %v3307 = vunpack.c.l.b16 %v3235
        %v3308 = vunpack.c.l.b16 %v3236
        %v3309 = vunpack.c.l.b16 %v3237
        %v3310 = vunpack.c.l.b16 %v3238
        %v3311 = vunpack.c.l.b16 %v3239
        %v3312 = vunpack.c.l.b16 %v3240
        %v3313 = vunpack.c.l.b16 %v3241
        %v3314 = vunpack.c.l.b16 %v3242
        %v3315 = vunpack.c.l.b16 %v3243
        %v3316 = vunpack.c.l.b16 %v3244
        %v3317 = vpack.c.b16 %v3282, %v3281
        %v3318 = vpack.c.b16 %v3284, %v3283
        %v3319 = vpack.c.b16 %v3286, %v3285
        %v3320 = vpack.c.b16 %v3288, %v3287
        %v3321 = vpack.c.b16 %v3290, %v3289
        %v3322 = vpack.c.b16 %v3292, %v3291
        %v3323 = vpack.c.b16 %v3294, %v3293
        %v3324 = vpack.c.b16 %v3296, %v3295
        %v3325 = vpack.c.b16 %v3298, %v3297
        %v3326 = vpack.c.b16 %v3300, %v3299
        %v3327 = vpack.c.b16 %v3302, %v3301
        %v3328 = vpack.c.b16 %v3304, %v3303
        %v3329 = vpack.c.b16 %v3306, %v3305
        %v3330 = vpack.c.b16 %v3308, %v3307
        %v3331 = vpack.c.b16 %v3310, %v3309
        %v3332 = vpack.c.b16 %v3312, %v3311
        %v3333 = vpack.c.b16 %v3314, %v3313
        %v3334 = vpack.c.b16 %v3316, %v3315
        %v3354 = vsel %vm430, %v2665, 0
        %v3357 = vsel %vm430, %v2666, 0
        %v3360 = vsel %vm430, %v2667, 0
        %v3363 = vsel %vm430, %v2668, 0
        %v3366 = vsel %vm430, %v2669, 0
        %v3369 = vsel %vm430, %v2670, 0
        %v3372 = vsel %vm430, %v2671, 0
        %v3375 = vsel %vm430, %v2672, 0
        %v3378 = vsel %vm430, %v2673, 0
        %v3381 = vsel %vm430, %v2674, 0
        %v3384 = vsel %vm430, %v2675, 0
        %v3387 = vsel %vm430, %v2676, 0
        %v3390 = vsel %vm430, %v2677, 0
        %v3393 = vsel %vm430, %v2678, 0
        %v3396 = vsel %vm430, %v2679, 0
        %v3399 = vsel %vm430, %v2680, 0
        %3401 = vmatprep.subr.bf16.mxu0 0
        %3402 = vmatpush1.bf16.msra.mxu0 %v3324
        %3403 = vmatprep.subr.bf16.mxu0 0
        %3404 = vmatpush1.bf16.msra.mxu0 %v3323
        %3405 = vmatprep.subr.bf16.mxu0 0
        %3406 = vmatpush1.bf16.msra.mxu0 %v3322
        %3407 = vmatprep.subr.bf16.mxu0 0
        %3408 = vmatpush1.bf16.msra.mxu0 %v3321
        %3409 = vmatprep.subr.bf16.mxu0 0
        %3410 = vmatpush1.bf16.msra.mxu0 %v3320
        %3411 = vmatprep.subr.bf16.mxu0 0
        %3412 = vmatpush1.bf16.msra.mxu0 %v3319
        %3413 = vmatprep.subr.bf16.mxu0 0
        %3414 = vmatpush1.bf16.msra.mxu0 %v3318
        %3415 = vmatprep.subr.bf16.mxu0 0
        %3416 = vmatpush1.bf16.msra.mxu0 %v3317
        %3417 = vmatprep.subr.bf16.mxu0 0
        %3418 = vmatpush2.bf16.msra.mxu0 %v3332
        %3419 = vmatprep.subr.bf16.mxu0 0
        %3420 = vmatpush2.bf16.msra.mxu0 %v3331
        %3421 = vmatprep.subr.bf16.mxu0 0
        %3422 = vmatpush2.bf16.msra.mxu0 %v3330
        %3423 = vmatprep.subr.bf16.mxu0 0
        %3424 = vmatpush2.bf16.msra.mxu0 %v3329
        %3425 = vmatprep.subr.bf16.mxu0 0
        %3426 = vmatpush2.bf16.msra.mxu0 %v3328
        %3427 = vmatprep.subr.bf16.mxu0 0
        %3428 = vmatpush2.bf16.msra.mxu0 %v3327
        %3429 = vmatprep.subr.bf16.mxu0 0
        %3430 = vmatpush2.bf16.msra.mxu0 %v3326
        %3431 = vmatprep.subr.bf16.mxu0 0
        %3432 = vmatpush2.bf16.msra.mxu0 %v3325
        %3433 = vmatprep.mubr.bf16.mxu0 %v3162
        %3434 = vmatmul.mubr.bf16.gmra.mxu0 %v3050
        %v3435 = vpop.f32.mrf.mxu0
        %v3436 = vadd.f32 0.0, %v3435
        %v3437 = vpop.f32.mrf.mxu0
        %v3438 = vpop.f32.mrf.mxu0
        %v3439 = vadd.f32 0.0, %v3438
        %v3440 = vpop.f32.mrf.mxu0
        %3441 = vmatprep.mubr.bf16.mxu0 %v3165
        %3442 = vmatmul.mubr.bf16.gmra.mxu0 %v3053
        %v3443 = vpop.f32.mrf.mxu0
        %v3444 = vadd.f32 0.0, %v3443
        %v3445 = vpop.f32.mrf.mxu0
        %v3446 = vpop.f32.mrf.mxu0
        %v3447 = vadd.f32 0.0, %v3446
        %v3448 = vpop.f32.mrf.mxu0
        %3449 = vmatprep.mubr.bf16.mxu0 %v3168
        %3450 = vmatmul.mubr.bf16.gmra.mxu0 %v3056
        %v3451 = vpop.f32.mrf.mxu0
        %v3452 = vadd.f32 0.0, %v3451
        %v3453 = vpop.f32.mrf.mxu0
        %v3454 = vpop.f32.mrf.mxu0
        %v3455 = vadd.f32 0.0, %v3454
        %v3456 = vpop.f32.mrf.mxu0
        %3457 = vmatprep.mubr.bf16.mxu0 %v3171
        %3458 = vmatmul.mubr.bf16.gmra.mxu0 %v3059
        %v3459 = vpop.f32.mrf.mxu0
        %v3460 = vadd.f32 0.0, %v3459
        %v3461 = vpop.f32.mrf.mxu0
        %v3462 = vpop.f32.mrf.mxu0
        %v3463 = vadd.f32 0.0, %v3462
        %v3464 = vpop.f32.mrf.mxu0
        %3465 = vmatprep.mubr.bf16.mxu0 %v3174
        %3466 = vmatmul.mubr.bf16.gmra.mxu0 %v3062
        %v3467 = vpop.f32.mrf.mxu0
        %v3468 = vadd.f32 0.0, %v3467
        %v3469 = vpop.f32.mrf.mxu0
        %v3470 = vpop.f32.mrf.mxu0
        %v3471 = vadd.f32 0.0, %v3470
        %v3472 = vpop.f32.mrf.mxu0
        %3473 = vmatprep.mubr.bf16.mxu0 %v3177
        %3474 = vmatmul.mubr.bf16.gmra.mxu0 %v3065
        %v3475 = vpop.f32.mrf.mxu0
        %v3476 = vadd.f32 0.0, %v3475
        %v3477 = vpop.f32.mrf.mxu0
        %v3478 = vpop.f32.mrf.mxu0
        %v3479 = vadd.f32 0.0, %v3478
        %v3480 = vpop.f32.mrf.mxu0
        %3481 = vmatprep.mubr.bf16.mxu0 %v3180
        %3482 = vmatmul.mubr.bf16.gmra.mxu0 %v3068
        %v3483 = vpop.f32.mrf.mxu0
        %v3484 = vadd.f32 0.0, %v3483
        %v3485 = vpop.f32.mrf.mxu0
        %v3486 = vpop.f32.mrf.mxu0
        %v3487 = vadd.f32 0.0, %v3486
        %v3488 = vpop.f32.mrf.mxu0
        %3489 = vmatprep.mubr.bf16.mxu0 %v3183
        %3490 = vmatmul.mubr.bf16.gmra.mxu0 %v3071
        %v3491 = vpop.f32.mrf.mxu0
        %v3492 = vadd.f32 0.0, %v3491
        %v3493 = vpop.f32.mrf.mxu0
        %v3494 = vpop.f32.mrf.mxu0
        %v3495 = vadd.f32 0.0, %v3494
        %v3496 = vpop.f32.mrf.mxu0
        %3497 = vmatprep.mubr.bf16.mxu0 %v3186
        %3498 = vmatmul.mubr.bf16.gmra.mxu0 %v3074
        %v3499 = vpop.f32.mrf.mxu0
        %v3500 = vadd.f32 0.0, %v3499
        %v3501 = vpop.f32.mrf.mxu0
        %v3502 = vpop.f32.mrf.mxu0
        %v3503 = vadd.f32 0.0, %v3502
        %v3504 = vpop.f32.mrf.mxu0
        %3505 = vmatprep.mubr.bf16.mxu0 %v3189
        %3506 = vmatmul.mubr.bf16.gmra.mxu0 %v3077
        %v3507 = vpop.f32.mrf.mxu0
        %v3508 = vadd.f32 0.0, %v3507
        %v3509 = vpop.f32.mrf.mxu0
        %v3510 = vpop.f32.mrf.mxu0
        %v3511 = vadd.f32 0.0, %v3510
        %v3512 = vpop.f32.mrf.mxu0
        %3513 = vmatprep.mubr.bf16.mxu0 %v3192
        %3514 = vmatmul.mubr.bf16.gmra.mxu0 %v3080
        %v3515 = vpop.f32.mrf.mxu0
        %v3516 = vadd.f32 0.0, %v3515
        %v3517 = vpop.f32.mrf.mxu0
        %v3518 = vpop.f32.mrf.mxu0
        %v3519 = vadd.f32 0.0, %v3518
        %v3520 = vpop.f32.mrf.mxu0
        %3521 = vmatprep.mubr.bf16.mxu0 %v3195
        %3522 = vmatmul.mubr.bf16.gmra.mxu0 %v3083
        %v3523 = vpop.f32.mrf.mxu0
        %v3524 = vadd.f32 0.0, %v3523
        %v3525 = vpop.f32.mrf.mxu0
        %v3526 = vpop.f32.mrf.mxu0
        %v3527 = vadd.f32 0.0, %v3526
        %v3528 = vpop.f32.mrf.mxu0
        %3529 = vmatprep.mubr.bf16.mxu0 %v3198
        %3530 = vmatmul.mubr.bf16.gmra.mxu0 %v3086
        %v3531 = vpop.f32.mrf.mxu0
        %v3532 = vadd.f32 0.0, %v3531
        %v3533 = vpop.f32.mrf.mxu0
        %v3534 = vpop.f32.mrf.mxu0
        %v3535 = vadd.f32 0.0, %v3534
        %v3536 = vpop.f32.mrf.mxu0
        %3537 = vmatprep.mubr.bf16.mxu0 %v3201
        %3538 = vmatmul.mubr.bf16.gmra.mxu0 %v3089
        %v3539 = vpop.f32.mrf.mxu0
        %v3540 = vadd.f32 0.0, %v3539
        %v3541 = vpop.f32.mrf.mxu0
        %v3542 = vpop.f32.mrf.mxu0
        %v3543 = vadd.f32 0.0, %v3542
        %v3544 = vpop.f32.mrf.mxu0
        %3545 = vmatprep.mubr.bf16.mxu0 %v3204
        %3546 = vmatmul.mubr.bf16.gmra.mxu0 %v3092
        %v3547 = vpop.f32.mrf.mxu0
        %v3548 = vadd.f32 0.0, %v3547
        %v3549 = vpop.f32.mrf.mxu0
        %v3550 = vpop.f32.mrf.mxu0
        %v3551 = vadd.f32 0.0, %v3550
        %v3552 = vpop.f32.mrf.mxu0
        %3553 = vmatprep.mubr.bf16.mxu0 %v3207
        %3554 = vmatmul.mubr.bf16.gmra.mxu0 %v3095
        %v3555 = vpop.f32.mrf.mxu0
        %v3556 = vadd.f32 0.0, %v3555
        %v3557 = vpop.f32.mrf.mxu0
        %v3558 = vpop.f32.mrf.mxu0
        %v3559 = vadd.f32 0.0, %v3558
        %v3560 = vpop.f32.mrf.mxu0
        %3561 = vdwg.mxu0
        %3562 = vmatprep.subr.bf16.mxu0 0
        %3563 = vmatpush1.bf16.msra.mxu0 0
        %3564 = vmatprep.subr.bf16.mxu0 0
        %3565 = vmatpush1.bf16.msra.mxu0 0
        %3566 = vmatprep.subr.bf16.mxu0 0
        %3567 = vmatpush1.bf16.msra.mxu0 0
        %3568 = vmatprep.subr.bf16.mxu0 0
        %3569 = vmatpush1.bf16.msra.mxu0 0
        %3570 = vmatprep.subr.bf16.mxu0 0
        %3571 = vmatpush1.bf16.msra.mxu0 0
        %3572 = vmatprep.subr.bf16.mxu0 0
        %3573 = vmatpush1.bf16.msra.mxu0 0
        %3574 = vmatprep.subr.bf16.mxu0 0
        %3575 = vmatpush1.bf16.msra.mxu0 %v3334
        %3576 = vmatprep.subr.bf16.mxu0 0
        %3577 = vmatpush1.bf16.msra.mxu0 %v3333
        %3578 = vmatprep.subr.bf16.mxu0 0
        %3579 = vmatpush2.bf16.msra.mxu0 0
        %3580 = vmatprep.subr.bf16.mxu0 0
        %3581 = vmatpush2.bf16.msra.mxu0 0
        %3582 = vmatprep.subr.bf16.mxu0 0
        %3583 = vmatpush2.bf16.msra.mxu0 0
        %3584 = vmatprep.subr.bf16.mxu0 0
        %3585 = vmatpush2.bf16.msra.mxu0 0
        %3586 = vmatprep.subr.bf16.mxu0 0
        %3587 = vmatpush2.bf16.msra.mxu0 0
        %3588 = vmatprep.subr.bf16.mxu0 0
        %3589 = vmatpush2.bf16.msra.mxu0 0
        %3590 = vmatprep.subr.bf16.mxu0 0
        %3591 = vmatpush2.bf16.msra.mxu0 0
        %3592 = vmatprep.subr.bf16.mxu0 0
        %3593 = vmatpush2.bf16.msra.mxu0 0
        %3594 = vmatprep.mubr.bf16.mxu0 0
        %3595 = vmatmul.mubr.bf16.gmra.mxu0 %v3354
        %v3596 = vpop.f32.mrf.mxu0
        %v3597 = vadd.f32 %v3436, %v3596
        %v3598 = vpop.f32.mrf.mxu0
        %v3599 = vpop.f32.mrf.mxu0
        %v3600 = vadd.f32 %v3439, %v3599
        %v3601 = vpop.f32.mrf.mxu0
        %3602 = vmatprep.mubr.bf16.mxu0 0
        %3603 = vmatmul.mubr.bf16.gmra.mxu0 %v3357
        %v3604 = vpop.f32.mrf.mxu0
        %v3605 = vadd.f32 %v3444, %v3604
        %v3606 = vpop.f32.mrf.mxu0
        %v3607 = vpop.f32.mrf.mxu0
        %v3608 = vadd.f32 %v3447, %v3607
        %v3609 = vpop.f32.mrf.mxu0
        %3610 = vmatprep.mubr.bf16.mxu0 0
        %3611 = vmatmul.mubr.bf16.gmra.mxu0 %v3360
        %v3612 = vpop.f32.mrf.mxu0
        %v3613 = vadd.f32 %v3452, %v3612
        %v3614 = vpop.f32.mrf.mxu0
        %v3615 = vpop.f32.mrf.mxu0
        %v3616 = vadd.f32 %v3455, %v3615
        %v3617 = vpop.f32.mrf.mxu0
        %3618 = vmatprep.mubr.bf16.mxu0 0
        %3619 = vmatmul.mubr.bf16.gmra.mxu0 %v3363
        %v3620 = vpop.f32.mrf.mxu0
        %v3621 = vadd.f32 %v3460, %v3620
        %v3622 = vpop.f32.mrf.mxu0
        %v3623 = vpop.f32.mrf.mxu0
        %v3624 = vadd.f32 %v3463, %v3623
        %v3625 = vpop.f32.mrf.mxu0
        %3626 = vmatprep.mubr.bf16.mxu0 0
        %3627 = vmatmul.mubr.bf16.gmra.mxu0 %v3366
        %v3628 = vpop.f32.mrf.mxu0
        %v3629 = vadd.f32 %v3468, %v3628
        %v3630 = vpop.f32.mrf.mxu0
        %v3631 = vpop.f32.mrf.mxu0
        %v3632 = vadd.f32 %v3471, %v3631
        %v3633 = vpop.f32.mrf.mxu0
        %3634 = vmatprep.mubr.bf16.mxu0 0
        %3635 = vmatmul.mubr.bf16.gmra.mxu0 %v3369
        %v3636 = vpop.f32.mrf.mxu0
        %v3637 = vadd.f32 %v3476, %v3636
        %v3638 = vpop.f32.mrf.mxu0
        %v3639 = vpop.f32.mrf.mxu0
        %v3640 = vadd.f32 %v3479, %v3639
        %v3641 = vpop.f32.mrf.mxu0
        %3642 = vmatprep.mubr.bf16.mxu0 0
        %3643 = vmatmul.mubr.bf16.gmra.mxu0 %v3372
        %v3644 = vpop.f32.mrf.mxu0
        %v3645 = vadd.f32 %v3484, %v3644
        %v3646 = vpop.f32.mrf.mxu0
        %v3647 = vpop.f32.mrf.mxu0
        %v3648 = vadd.f32 %v3487, %v3647
        %v3649 = vpop.f32.mrf.mxu0
        %3650 = vmatprep.mubr.bf16.mxu0 0
        %3651 = vmatmul.mubr.bf16.gmra.mxu0 %v3375
        %v3652 = vpop.f32.mrf.mxu0
        %v3653 = vadd.f32 %v3492, %v3652
        %v3654 = vpop.f32.mrf.mxu0
        %v3655 = vpop.f32.mrf.mxu0
        %v3656 = vadd.f32 %v3495, %v3655
        %v3657 = vpop.f32.mrf.mxu0
        %3658 = vmatprep.mubr.bf16.mxu0 0
        %3659 = vmatmul.mubr.bf16.gmra.mxu0 %v3378
        %v3660 = vpop.f32.mrf.mxu0
        %v3661 = vadd.f32 %v3500, %v3660
        %v3662 = vpop.f32.mrf.mxu0
        %v3663 = vpop.f32.mrf.mxu0
        %v3664 = vadd.f32 %v3503, %v3663
        %v3665 = vpop.f32.mrf.mxu0
        %3666 = vmatprep.mubr.bf16.mxu0 0
        %3667 = vmatmul.mubr.bf16.gmra.mxu0 %v3381
        %v3668 = vpop.f32.mrf.mxu0
        %v3669 = vadd.f32 %v3508, %v3668
        %v3670 = vpop.f32.mrf.mxu0
        %v3671 = vpop.f32.mrf.mxu0
        %v3672 = vadd.f32 %v3511, %v3671
        %v3673 = vpop.f32.mrf.mxu0
        %3674 = vmatprep.mubr.bf16.mxu0 0
        %3675 = vmatmul.mubr.bf16.gmra.mxu0 %v3384
        %v3676 = vpop.f32.mrf.mxu0
        %v3677 = vadd.f32 %v3516, %v3676
        %v3678 = vpop.f32.mrf.mxu0
        %v3679 = vpop.f32.mrf.mxu0
        %v3680 = vadd.f32 %v3519, %v3679
        %v3681 = vpop.f32.mrf.mxu0
        %3682 = vmatprep.mubr.bf16.mxu0 0
        %3683 = vmatmul.mubr.bf16.gmra.mxu0 %v3387
        %v3684 = vpop.f32.mrf.mxu0
        %v3685 = vadd.f32 %v3524, %v3684
        %v3686 = vpop.f32.mrf.mxu0
        %v3687 = vpop.f32.mrf.mxu0
        %v3688 = vadd.f32 %v3527, %v3687
        %v3689 = vpop.f32.mrf.mxu0
        %3690 = vmatprep.mubr.bf16.mxu0 0
        %3691 = vmatmul.mubr.bf16.gmra.mxu0 %v3390
        %v3692 = vpop.f32.mrf.mxu0
        %v3693 = vadd.f32 %v3532, %v3692
        %v3694 = vpop.f32.mrf.mxu0
        %v3695 = vpop.f32.mrf.mxu0
        %v3696 = vadd.f32 %v3535, %v3695
        %v3697 = vpop.f32.mrf.mxu0
        %3698 = vmatprep.mubr.bf16.mxu0 0
        %3699 = vmatmul.mubr.bf16.gmra.mxu0 %v3393
        %v3700 = vpop.f32.mrf.mxu0
        %v3701 = vadd.f32 %v3540, %v3700
        %v3702 = vpop.f32.mrf.mxu0
        %v3703 = vpop.f32.mrf.mxu0
        %v3704 = vadd.f32 %v3543, %v3703
        %v3705 = vpop.f32.mrf.mxu0
        %3706 = vmatprep.mubr.bf16.mxu0 0
        %3707 = vmatmul.mubr.bf16.gmra.mxu0 %v3396
        %v3708 = vpop.f32.mrf.mxu0
        %v3709 = vadd.f32 %v3548, %v3708
        %v3710 = vpop.f32.mrf.mxu0
        %v3711 = vpop.f32.mrf.mxu0
        %v3712 = vadd.f32 %v3551, %v3711
        %v3713 = vpop.f32.mrf.mxu0
        %3714 = vmatprep.mubr.bf16.mxu0 0
        %3715 = vmatmul.mubr.bf16.gmra.mxu0 %v3399
        %v3716 = vpop.f32.mrf.mxu0
        %v3717 = vadd.f32 %v3556, %v3716
        %v3718 = vpop.f32.mrf.mxu0
        %v3719 = vpop.f32.mrf.mxu0
        %v3720 = vadd.f32 %v3559, %v3719
        %v3721 = vpop.f32.mrf.mxu0
        %3722 = vdwg.mxu0
        %s3723 = scalar_lea.vmem [#allocation2], 160
        %v3724 = vld [vmem:[%s3723 + $0x5] sm:$0xff]
        %v3725 = vld [vmem:[%s3723 + $0xd] sm:$0xff]
        %v3726 = vld [vmem:[%s3723 + $0x25] sm:$0xff]
        %v3727 = vld [vmem:[%s3723 + $0x2d] sm:$0xff]
        %v3728 = vld [vmem:[%s3723 + $0x45] sm:$0xff]
        %v3729 = vld [vmem:[%s3723 + $0x4d] sm:$0xff]
        %v3730 = vld [vmem:[%s3723 + $0x65] sm:$0xff]
        %v3731 = vld [vmem:[%s3723 + $0x6d] sm:$0xff]
        %v3732 = vld [vmem:[%s3723 + $0x85] sm:$0xff]
        %v3733 = vld [vmem:[%s3723 + $0x8d] sm:$0xff]
        %v3734 = vld [vmem:[%s3723 + $0xa5] sm:$0xff]
        %v3735 = vld [vmem:[%s3723 + $0xad] sm:$0xff]
        %v3736 = vld [vmem:[%s3723 + $0xc5] sm:$0xff]
        %v3737 = vld [vmem:[%s3723 + $0xcd] sm:$0xff]
        %v3738 = vld [vmem:[%s3723 + $0xe5] sm:$0xff]
        %v3739 = vld [vmem:[%s3723 + $0xed] sm:$0xff]
        %v3740 = vld [vmem:[%s3723 + $0x105] sm:$0xff]
        %v3741 = vld [vmem:[%s3723 + $0x10d] sm:$0xff]
        %v3742 = vld [vmem:[%s3723 + $0x125] sm:$0xff]
        %v3743 = vld [vmem:[%s3723 + $0x12d] sm:$0xff]
        %v3744 = vld [vmem:[%s3723 + $0x145] sm:$0xff]
        %v3745 = vld [vmem:[%s3723 + $0x14d] sm:$0xff]
        %v3746 = vld [vmem:[%s3723 + $0x165] sm:$0xff]
        %v3747 = vld [vmem:[%s3723 + $0x16d] sm:$0xff]
        %v3748 = vld [vmem:[%s3723 + $0x185] sm:$0xff]
        %v3749 = vld [vmem:[%s3723 + $0x18d] sm:$0xff]
        %v3750 = vld [vmem:[%s3723 + $0x1a5] sm:$0xff]
        %v3751 = vld [vmem:[%s3723 + $0x1ad] sm:$0xff]
        %v3752 = vld [vmem:[%s3723 + $0x1c5] sm:$0xff]
        %v3753 = vld [vmem:[%s3723 + $0x1cd] sm:$0xff]
        %v3754 = vld [vmem:[%s3723 + $0x1e5] sm:$0xff]
        %v3755 = vld [vmem:[%s3723 + $0x1ed] sm:$0xff]
        %v3756 = vpack.c.bf16 %v3725, %v3724
        %v3757 = vpack.c.bf16 %v3727, %v3726
        %v3758 = vpack.c.bf16 %v3729, %v3728
        %v3759 = vpack.c.bf16 %v3731, %v3730
        %v3760 = vpack.c.bf16 %v3733, %v3732
        %v3761 = vpack.c.bf16 %v3735, %v3734
        %v3762 = vpack.c.bf16 %v3737, %v3736
        %v3763 = vpack.c.bf16 %v3739, %v3738
        %v3764 = vpack.c.bf16 %v3741, %v3740
        %v3765 = vpack.c.bf16 %v3743, %v3742
        %v3766 = vpack.c.bf16 %v3745, %v3744
        %v3767 = vpack.c.bf16 %v3747, %v3746
        %v3768 = vpack.c.bf16 %v3749, %v3748
        %v3769 = vpack.c.bf16 %v3751, %v3750
        %v3770 = vpack.c.bf16 %v3753, %v3752
        %v3771 = vpack.c.bf16 %v3755, %v3754
        %v3772 = vld [vmem:[%s3723 + $0x8] sm:$0xff]
        %v3773 = vld [vmem:[%s3723 + $0x10] sm:$0xff]
        %v3774 = vld [vmem:[%s3723 + $0x28] sm:$0xff]
        %v3775 = vld [vmem:[%s3723 + $0x30] sm:$0xff]
        %v3776 = vld [vmem:[%s3723 + $0x48] sm:$0xff]
        %v3777 = vld [vmem:[%s3723 + $0x50] sm:$0xff]
        %v3778 = vld [vmem:[%s3723 + $0x68] sm:$0xff]
        %v3779 = vld [vmem:[%s3723 + $0x70] sm:$0xff]
        %v3780 = vld [vmem:[%s3723 + $0x88] sm:$0xff]
        %v3781 = vld [vmem:[%s3723 + $0x90] sm:$0xff]
        %v3782 = vld [vmem:[%s3723 + $0xa8] sm:$0xff]
        %v3783 = vld [vmem:[%s3723 + $0xb0] sm:$0xff]
        %v3784 = vld [vmem:[%s3723 + $0xc8] sm:$0xff]
        %v3785 = vld [vmem:[%s3723 + $0xd0] sm:$0xff]
        %v3786 = vld [vmem:[%s3723 + $0xe8] sm:$0xff]
        %v3787 = vld [vmem:[%s3723 + $0xf0] sm:$0xff]
        %v3788 = vld [vmem:[%s3723 + $0x108] sm:$0xff]
        %v3789 = vld [vmem:[%s3723 + $0x110] sm:$0xff]
        %v3790 = vld [vmem:[%s3723 + $0x128] sm:$0xff]
        %v3791 = vld [vmem:[%s3723 + $0x130] sm:$0xff]
        %v3792 = vld [vmem:[%s3723 + $0x148] sm:$0xff]
        %v3793 = vld [vmem:[%s3723 + $0x150] sm:$0xff]
        %v3794 = vld [vmem:[%s3723 + $0x168] sm:$0xff]
        %v3795 = vld [vmem:[%s3723 + $0x170] sm:$0xff]
        %v3796 = vld [vmem:[%s3723 + $0x188] sm:$0xff]
        %v3797 = vld [vmem:[%s3723 + $0x190] sm:$0xff]
        %v3798 = vld [vmem:[%s3723 + $0x1a8] sm:$0xff]
        %v3799 = vld [vmem:[%s3723 + $0x1b0] sm:$0xff]
        %v3800 = vld [vmem:[%s3723 + $0x1c8] sm:$0xff]
        %v3801 = vld [vmem:[%s3723 + $0x1d0] sm:$0xff]
        %v3802 = vld [vmem:[%s3723 + $0x1e8] sm:$0xff]
        %v3803 = vld [vmem:[%s3723 + $0x1f0] sm:$0xff]
        %v3804 = vpack.c.bf16 %v3773, %v3772
        %v3805 = vpack.c.bf16 %v3775, %v3774
        %v3806 = vpack.c.bf16 %v3777, %v3776
        %v3807 = vpack.c.bf16 %v3779, %v3778
        %v3808 = vpack.c.bf16 %v3781, %v3780
        %v3809 = vpack.c.bf16 %v3783, %v3782
        %v3810 = vpack.c.bf16 %v3785, %v3784
        %v3811 = vpack.c.bf16 %v3787, %v3786
        %v3812 = vpack.c.bf16 %v3789, %v3788
        %v3813 = vpack.c.bf16 %v3791, %v3790
        %v3814 = vpack.c.bf16 %v3793, %v3792
        %v3815 = vpack.c.bf16 %v3795, %v3794
        %v3816 = vpack.c.bf16 %v3797, %v3796
        %v3817 = vpack.c.bf16 %v3799, %v3798
        %v3818 = vpack.c.bf16 %v3801, %v3800
        %v3819 = vpack.c.bf16 %v3803, %v3802
        %v3820 = vld [vmem:[%s3723 + $0xb] sm:$0xff]
        %v3821 = vld [vmem:[%s3723 + $0x13] sm:$0xff]
        %v3822 = vld [vmem:[%s3723 + $0x2b] sm:$0xff]
        %v3823 = vld [vmem:[%s3723 + $0x33] sm:$0xff]
        %v3824 = vld [vmem:[%s3723 + $0x4b] sm:$0xff]
        %v3825 = vld [vmem:[%s3723 + $0x53] sm:$0xff]
        %v3826 = vld [vmem:[%s3723 + $0x6b] sm:$0xff]
        %v3827 = vld [vmem:[%s3723 + $0x73] sm:$0xff]
        %v3828 = vld [vmem:[%s3723 + $0x8b] sm:$0xff]
        %v3829 = vld [vmem:[%s3723 + $0x93] sm:$0xff]
        %v3830 = vld [vmem:[%s3723 + $0xab] sm:$0xff]
        %v3831 = vld [vmem:[%s3723 + $0xb3] sm:$0xff]
        %v3832 = vld [vmem:[%s3723 + $0xcb] sm:$0xff]
        %v3833 = vld [vmem:[%s3723 + $0xd3] sm:$0xff]
        %v3834 = vld [vmem:[%s3723 + $0xeb] sm:$0xff]
        %v3835 = vld [vmem:[%s3723 + $0xf3] sm:$0xff]
        %v3836 = vld [vmem:[%s3723 + $0x10b] sm:$0xff]
        %v3837 = vld [vmem:[%s3723 + $0x113] sm:$0xff]
        %v3838 = vld [vmem:[%s3723 + $0x12b] sm:$0xff]
        %v3839 = vld [vmem:[%s3723 + $0x133] sm:$0xff]
        %v3840 = vld [vmem:[%s3723 + $0x14b] sm:$0xff]
        %v3841 = vld [vmem:[%s3723 + $0x153] sm:$0xff]
        %v3842 = vld [vmem:[%s3723 + $0x16b] sm:$0xff]
        %v3843 = vld [vmem:[%s3723 + $0x173] sm:$0xff]
        %v3844 = vld [vmem:[%s3723 + $0x18b] sm:$0xff]
        %v3845 = vld [vmem:[%s3723 + $0x193] sm:$0xff]
        %v3846 = vld [vmem:[%s3723 + $0x1ab] sm:$0xff]
        %v3847 = vld [vmem:[%s3723 + $0x1b3] sm:$0xff]
        %v3848 = vld [vmem:[%s3723 + $0x1cb] sm:$0xff]
        %v3849 = vld [vmem:[%s3723 + $0x1d3] sm:$0xff]
        %v3850 = vld [vmem:[%s3723 + $0x1eb] sm:$0xff]
        %v3851 = vld [vmem:[%s3723 + $0x1f3] sm:$0xff]
        %v3852 = vpack.c.bf16 %v3821, %v3820
        %v3853 = vpack.c.bf16 %v3823, %v3822
        %v3854 = vpack.c.bf16 %v3825, %v3824
        %v3855 = vpack.c.bf16 %v3827, %v3826
        %v3856 = vpack.c.bf16 %v3829, %v3828
        %v3857 = vpack.c.bf16 %v3831, %v3830
        %v3858 = vpack.c.bf16 %v3833, %v3832
        %v3859 = vpack.c.bf16 %v3835, %v3834
        %v3860 = vpack.c.bf16 %v3837, %v3836
        %v3861 = vpack.c.bf16 %v3839, %v3838
        %v3862 = vpack.c.bf16 %v3841, %v3840
        %v3863 = vpack.c.bf16 %v3843, %v3842
        %v3864 = vpack.c.bf16 %v3845, %v3844
        %v3865 = vpack.c.bf16 %v3847, %v3846
        %v3866 = vpack.c.bf16 %v3849, %v3848
        %v3867 = vpack.c.bf16 %v3851, %v3850
        %v3868 = vld [vmem:[%s768 + $0x5] sm:$0xff]
        %v3869 = vld [vmem:[%s768 + $0xd] sm:$0xff]
        %v3870 = vld [vmem:[%s768 + $0x25] sm:$0xff]
        %v3871 = vld [vmem:[%s768 + $0x2d] sm:$0xff]
        %v3872 = vld [vmem:[%s768 + $0x45] sm:$0xff]
        %v3873 = vld [vmem:[%s768 + $0x4d] sm:$0xff]
        %v3874 = vld [vmem:[%s768 + $0x65] sm:$0xff]
        %v3875 = vld [vmem:[%s768 + $0x6d] sm:$0xff]
        %v3876 = vld [vmem:[%s768 + $0x85] sm:$0xff]
        %v3877 = vld [vmem:[%s768 + $0x8d] sm:$0xff]
        %v3878 = vld [vmem:[%s768 + $0xa5] sm:$0xff]
        %v3879 = vld [vmem:[%s768 + $0xad] sm:$0xff]
        %v3880 = vld [vmem:[%s768 + $0xc5] sm:$0xff]
        %v3881 = vld [vmem:[%s768 + $0xcd] sm:$0xff]
        %v3882 = vld [vmem:[%s768 + $0xe5] sm:$0xff]
        %v3883 = vld [vmem:[%s768 + $0xed] sm:$0xff]
        %v3884 = vld [vmem:[%s768 + $0x105] sm:$0xff]
        %v3885 = vld [vmem:[%s768 + $0x10d] sm:$0xff]
        %v3886 = vld [vmem:[%s768 + $0x125] sm:$0xff]
        %v3887 = vld [vmem:[%s768 + $0x12d] sm:$0xff]
        %v3888 = vld [vmem:[%s768 + $0x145] sm:$0xff]
        %v3889 = vld [vmem:[%s768 + $0x14d] sm:$0xff]
        %v3890 = vld [vmem:[%s768 + $0x165] sm:$0xff]
        %v3891 = vld [vmem:[%s768 + $0x16d] sm:$0xff]
        %v3892 = vld [vmem:[%s768 + $0x185] sm:$0xff]
        %v3893 = vld [vmem:[%s768 + $0x18d] sm:$0xff]
        %v3894 = vld [vmem:[%s768 + $0x1a5] sm:$0xff]
        %v3895 = vld [vmem:[%s768 + $0x1ad] sm:$0xff]
        %v3896 = vld [vmem:[%s768 + $0x1c5] sm:$0xff]
        %v3897 = vld [vmem:[%s768 + $0x1cd] sm:$0xff]
        %v3898 = vld [vmem:[%s768 + $0x1e5] sm:$0xff]
        %v3899 = vld [vmem:[%s768 + $0x1ed] sm:$0xff]
        %v3900 = vpack.c.bf16 %v3869, %v3868
        %v3901 = vpack.c.bf16 %v3871, %v3870
        %v3902 = vpack.c.bf16 %v3873, %v3872
        %v3903 = vpack.c.bf16 %v3875, %v3874
        %v3904 = vpack.c.bf16 %v3877, %v3876
        %v3905 = vpack.c.bf16 %v3879, %v3878
        %v3906 = vpack.c.bf16 %v3881, %v3880
        %v3907 = vpack.c.bf16 %v3883, %v3882
        %v3908 = vpack.c.bf16 %v3885, %v3884
        %v3909 = vpack.c.bf16 %v3887, %v3886
        %v3910 = vpack.c.bf16 %v3889, %v3888
        %v3911 = vpack.c.bf16 %v3891, %v3890
        %v3912 = vpack.c.bf16 %v3893, %v3892
        %v3913 = vpack.c.bf16 %v3895, %v3894
        %v3914 = vpack.c.bf16 %v3897, %v3896
        %v3915 = vpack.c.bf16 %v3899, %v3898
        %v3916 = vld [vmem:[%s768 + $0xb] sm:$0xff]
        %v3917 = vld [vmem:[%s768 + $0x13] sm:$0xff]
        %v3918 = vld [vmem:[%s768 + $0x2b] sm:$0xff]
        %v3919 = vld [vmem:[%s768 + $0x33] sm:$0xff]
        %v3920 = vld [vmem:[%s768 + $0x4b] sm:$0xff]
        %v3921 = vld [vmem:[%s768 + $0x53] sm:$0xff]
        %v3922 = vld [vmem:[%s768 + $0x6b] sm:$0xff]
        %v3923 = vld [vmem:[%s768 + $0x73] sm:$0xff]
        %v3924 = vld [vmem:[%s768 + $0x8b] sm:$0xff]
        %v3925 = vld [vmem:[%s768 + $0x93] sm:$0xff]
        %v3926 = vld [vmem:[%s768 + $0xab] sm:$0xff]
        %v3927 = vld [vmem:[%s768 + $0xb3] sm:$0xff]
        %v3928 = vld [vmem:[%s768 + $0xcb] sm:$0xff]
        %v3929 = vld [vmem:[%s768 + $0xd3] sm:$0xff]
        %v3930 = vld [vmem:[%s768 + $0xeb] sm:$0xff]
        %v3931 = vld [vmem:[%s768 + $0xf3] sm:$0xff]
        %v3932 = vld [vmem:[%s768 + $0x10b] sm:$0xff]
        %v3933 = vld [vmem:[%s768 + $0x113] sm:$0xff]
        %v3934 = vld [vmem:[%s768 + $0x12b] sm:$0xff]
        %v3935 = vld [vmem:[%s768 + $0x133] sm:$0xff]
        %v3936 = vld [vmem:[%s768 + $0x14b] sm:$0xff]
        %v3937 = vld [vmem:[%s768 + $0x153] sm:$0xff]
        %v3938 = vld [vmem:[%s768 + $0x16b] sm:$0xff]
        %v3939 = vld [vmem:[%s768 + $0x173] sm:$0xff]
        %v3940 = vld [vmem:[%s768 + $0x18b] sm:$0xff]
        %v3941 = vld [vmem:[%s768 + $0x193] sm:$0xff]
        %v3942 = vld [vmem:[%s768 + $0x1ab] sm:$0xff]
        %v3943 = vld [vmem:[%s768 + $0x1b3] sm:$0xff]
        %v3944 = vld [vmem:[%s768 + $0x1cb] sm:$0xff]
        %v3945 = vld [vmem:[%s768 + $0x1d3] sm:$0xff]
        %v3946 = vld [vmem:[%s768 + $0x1eb] sm:$0xff]
        %v3947 = vld [vmem:[%s768 + $0x1f3] sm:$0xff]
        %v3948 = vpack.c.bf16 %v3917, %v3916
        %v3949 = vpack.c.bf16 %v3919, %v3918
        %v3950 = vpack.c.bf16 %v3921, %v3920
        %v3951 = vpack.c.bf16 %v3923, %v3922
        %v3952 = vpack.c.bf16 %v3925, %v3924
        %v3953 = vpack.c.bf16 %v3927, %v3926
        %v3954 = vpack.c.bf16 %v3929, %v3928
        %v3955 = vpack.c.bf16 %v3931, %v3930
        %v3956 = vpack.c.bf16 %v3933, %v3932
        %v3957 = vpack.c.bf16 %v3935, %v3934
        %v3958 = vpack.c.bf16 %v3937, %v3936
        %v3959 = vpack.c.bf16 %v3939, %v3938
        %v3960 = vpack.c.bf16 %v3941, %v3940
        %v3961 = vpack.c.bf16 %v3943, %v3942
        %v3962 = vpack.c.bf16 %v3945, %v3944
        %v3963 = vpack.c.bf16 %v3947, %v3946
        %s3964 = scalar_lea.vmem [#allocation2], 352
        %v3965 = vld [vmem:[%s3964 + $0x5] sm:$0xff]
        %v3966 = vld [vmem:[%s3964 + $0xd] sm:$0xff]
        %v3967 = vld [vmem:[%s3964 + $0x25] sm:$0xff]
        %v3968 = vld [vmem:[%s3964 + $0x2d] sm:$0xff]
        %v3969 = vld [vmem:[%s3964 + $0x45] sm:$0xff]
        %v3970 = vld [vmem:[%s3964 + $0x4d] sm:$0xff]
        %v3971 = vld [vmem:[%s3964 + $0x65] sm:$0xff]
        %v3972 = vld [vmem:[%s3964 + $0x6d] sm:$0xff]
        %v3973 = vld [vmem:[%s3964 + $0x85] sm:$0xff]
        %v3974 = vld [vmem:[%s3964 + $0x8d] sm:$0xff]
        %v3975 = vld [vmem:[%s3964 + $0xa5] sm:$0xff]
        %v3976 = vld [vmem:[%s3964 + $0xad] sm:$0xff]
        %v3977 = vld [vmem:[%s3964 + $0xc5] sm:$0xff]
        %v3978 = vld [vmem:[%s3964 + $0xcd] sm:$0xff]
        %v3979 = vld [vmem:[%s3964 + $0xe5] sm:$0xff]
        %v3980 = vld [vmem:[%s3964 + $0xed] sm:$0xff]
        %v3981 = vld [vmem:[%s3964 + $0x105] sm:$0xff]
        %v3982 = vld [vmem:[%s3964 + $0x10d] sm:$0xff]
        %v3983 = vld [vmem:[%s3964 + $0x125] sm:$0xff]
        %v3984 = vld [vmem:[%s3964 + $0x12d] sm:$0xff]
        %v3985 = vld [vmem:[%s3964 + $0x145] sm:$0xff]
        %v3986 = vld [vmem:[%s3964 + $0x14d] sm:$0xff]
        %v3987 = vld [vmem:[%s3964 + $0x165] sm:$0xff]
        %v3988 = vld [vmem:[%s3964 + $0x16d] sm:$0xff]
        %v3989 = vld [vmem:[%s3964 + $0x185] sm:$0xff]
        %v3990 = vld [vmem:[%s3964 + $0x18d] sm:$0xff]
        %v3991 = vld [vmem:[%s3964 + $0x1a5] sm:$0xff]
        %v3992 = vld [vmem:[%s3964 + $0x1ad] sm:$0xff]
        %v3993 = vld [vmem:[%s3964 + $0x1c5] sm:$0xff]
        %v3994 = vld [vmem:[%s3964 + $0x1cd] sm:$0xff]
        %v3995 = vld [vmem:[%s3964 + $0x1e5] sm:$0xff]
        %v3996 = vld [vmem:[%s3964 + $0x1ed] sm:$0xff]
        %v3997 = vpack.c.bf16 %v3966, %v3965
        %v3998 = vpack.c.bf16 %v3968, %v3967
        %v3999 = vpack.c.bf16 %v3970, %v3969
        %v4000 = vpack.c.bf16 %v3972, %v3971
        %v4001 = vpack.c.bf16 %v3974, %v3973
        %v4002 = vpack.c.bf16 %v3976, %v3975
        %v4003 = vpack.c.bf16 %v3978, %v3977
        %v4004 = vpack.c.bf16 %v3980, %v3979
        %v4005 = vpack.c.bf16 %v3982, %v3981
        %v4006 = vpack.c.bf16 %v3984, %v3983
        %v4007 = vpack.c.bf16 %v3986, %v3985
        %v4008 = vpack.c.bf16 %v3988, %v3987
        %v4009 = vpack.c.bf16 %v3990, %v3989
        %v4010 = vpack.c.bf16 %v3992, %v3991
        %v4011 = vpack.c.bf16 %v3994, %v3993
        %v4012 = vpack.c.bf16 %v3996, %v3995
        %v4013 = vld [vmem:[%s3964 + $0x8] sm:$0xff]
        %v4014 = vld [vmem:[%s3964 + $0x10] sm:$0xff]
        %v4015 = vld [vmem:[%s3964 + $0x28] sm:$0xff]
        %v4016 = vld [vmem:[%s3964 + $0x30] sm:$0xff]
        %v4017 = vld [vmem:[%s3964 + $0x48] sm:$0xff]
        %v4018 = vld [vmem:[%s3964 + $0x50] sm:$0xff]
        %v4019 = vld [vmem:[%s3964 + $0x68] sm:$0xff]
        %v4020 = vld [vmem:[%s3964 + $0x70] sm:$0xff]
        %v4021 = vld [vmem:[%s3964 + $0x88] sm:$0xff]
        %v4022 = vld [vmem:[%s3964 + $0x90] sm:$0xff]
        %v4023 = vld [vmem:[%s3964 + $0xa8] sm:$0xff]
        %v4024 = vld [vmem:[%s3964 + $0xb0] sm:$0xff]
        %v4025 = vld [vmem:[%s3964 + $0xc8] sm:$0xff]
        %v4026 = vld [vmem:[%s3964 + $0xd0] sm:$0xff]
        %v4027 = vld [vmem:[%s3964 + $0xe8] sm:$0xff]
        %v4028 = vld [vmem:[%s3964 + $0xf0] sm:$0xff]
        %v4029 = vld [vmem:[%s3964 + $0x108] sm:$0xff]
        %v4030 = vld [vmem:[%s3964 + $0x110] sm:$0xff]
        %v4031 = vld [vmem:[%s3964 + $0x128] sm:$0xff]
        %v4032 = vld [vmem:[%s3964 + $0x130] sm:$0xff]
        %v4033 = vld [vmem:[%s3964 + $0x148] sm:$0xff]
        %v4034 = vld [vmem:[%s3964 + $0x150] sm:$0xff]
        %v4035 = vld [vmem:[%s3964 + $0x168] sm:$0xff]
        %v4036 = vld [vmem:[%s3964 + $0x170] sm:$0xff]
        %v4037 = vld [vmem:[%s3964 + $0x188] sm:$0xff]
        %v4038 = vld [vmem:[%s3964 + $0x190] sm:$0xff]
        %v4039 = vld [vmem:[%s3964 + $0x1a8] sm:$0xff]
        %v4040 = vld [vmem:[%s3964 + $0x1b0] sm:$0xff]
        %v4041 = vld [vmem:[%s3964 + $0x1c8] sm:$0xff]
        %v4042 = vld [vmem:[%s3964 + $0x1d0] sm:$0xff]
        %v4043 = vld [vmem:[%s3964 + $0x1e8] sm:$0xff]
        %v4044 = vld [vmem:[%s3964 + $0x1f0] sm:$0xff]
        %v4045 = vpack.c.bf16 %v4014, %v4013
        %v4046 = vpack.c.bf16 %v4016, %v4015
        %v4047 = vpack.c.bf16 %v4018, %v4017
        %v4048 = vpack.c.bf16 %v4020, %v4019
        %v4049 = vpack.c.bf16 %v4022, %v4021
        %v4050 = vpack.c.bf16 %v4024, %v4023
        %v4051 = vpack.c.bf16 %v4026, %v4025
        %v4052 = vpack.c.bf16 %v4028, %v4027
        %v4053 = vpack.c.bf16 %v4030, %v4029
        %v4054 = vpack.c.bf16 %v4032, %v4031
        %v4055 = vpack.c.bf16 %v4034, %v4033
        %v4056 = vpack.c.bf16 %v4036, %v4035
        %v4057 = vpack.c.bf16 %v4038, %v4037
        %v4058 = vpack.c.bf16 %v4040, %v4039
        %v4059 = vpack.c.bf16 %v4042, %v4041
        %v4060 = vpack.c.bf16 %v4044, %v4043
        %v4061 = vld [vmem:[%s3964 + $0xb] sm:$0xff]
        %v4062 = vld [vmem:[%s3964 + $0x13] sm:$0xff]
        %v4063 = vld [vmem:[%s3964 + $0x2b] sm:$0xff]
        %v4064 = vld [vmem:[%s3964 + $0x33] sm:$0xff]
        %v4065 = vld [vmem:[%s3964 + $0x4b] sm:$0xff]
        %v4066 = vld [vmem:[%s3964 + $0x53] sm:$0xff]
        %v4067 = vld [vmem:[%s3964 + $0x6b] sm:$0xff]
        %v4068 = vld [vmem:[%s3964 + $0x73] sm:$0xff]
        %v4069 = vld [vmem:[%s3964 + $0x8b] sm:$0xff]
        %v4070 = vld [vmem:[%s3964 + $0x93] sm:$0xff]
        %v4071 = vld [vmem:[%s3964 + $0xab] sm:$0xff]
        %v4072 = vld [vmem:[%s3964 + $0xb3] sm:$0xff]
        %v4073 = vld [vmem:[%s3964 + $0xcb] sm:$0xff]
        %v4074 = vld [vmem:[%s3964 + $0xd3] sm:$0xff]
        %v4075 = vld [vmem:[%s3964 + $0xeb] sm:$0xff]
        %v4076 = vld [vmem:[%s3964 + $0xf3] sm:$0xff]
        %v4077 = vld [vmem:[%s3964 + $0x10b] sm:$0xff]
        %v4078 = vld [vmem:[%s3964 + $0x113] sm:$0xff]
        %v4079 = vld [vmem:[%s3964 + $0x12b] sm:$0xff]
        %v4080 = vld [vmem:[%s3964 + $0x133] sm:$0xff]
        %v4081 = vld [vmem:[%s3964 + $0x14b] sm:$0xff]
        %v4082 = vld [vmem:[%s3964 + $0x153] sm:$0xff]
        %v4083 = vld [vmem:[%s3964 + $0x16b] sm:$0xff]
        %v4084 = vld [vmem:[%s3964 + $0x173] sm:$0xff]
        %v4085 = vld [vmem:[%s3964 + $0x18b] sm:$0xff]
        %v4086 = vld [vmem:[%s3964 + $0x193] sm:$0xff]
        %v4087 = vld [vmem:[%s3964 + $0x1ab] sm:$0xff]
        %v4088 = vld [vmem:[%s3964 + $0x1b3] sm:$0xff]
        %v4089 = vld [vmem:[%s3964 + $0x1cb] sm:$0xff]
        %v4090 = vld [vmem:[%s3964 + $0x1d3] sm:$0xff]
        %v4091 = vld [vmem:[%s3964 + $0x1eb] sm:$0xff]
        %v4092 = vld [vmem:[%s3964 + $0x1f3] sm:$0xff]
        %v4093 = vpack.c.bf16 %v4062, %v4061
        %v4094 = vpack.c.bf16 %v4064, %v4063
        %v4095 = vpack.c.bf16 %v4066, %v4065
        %v4096 = vpack.c.bf16 %v4068, %v4067
        %v4097 = vpack.c.bf16 %v4070, %v4069
        %v4098 = vpack.c.bf16 %v4072, %v4071
        %v4099 = vpack.c.bf16 %v4074, %v4073
        %v4100 = vpack.c.bf16 %v4076, %v4075
        %v4101 = vpack.c.bf16 %v4078, %v4077
        %v4102 = vpack.c.bf16 %v4080, %v4079
        %v4103 = vpack.c.bf16 %v4082, %v4081
        %v4104 = vpack.c.bf16 %v4084, %v4083
        %v4105 = vpack.c.bf16 %v4086, %v4085
        %v4106 = vpack.c.bf16 %v4088, %v4087
        %v4107 = vpack.c.bf16 %v4090, %v4089
        %v4108 = vpack.c.bf16 %v4092, %v4091
        %4125 = vrot.lane.b32.xlu0 %v3804, 32
        %v4126 = vpop.permute.xlu0 %4125
        %4127 = vrot.lane.b32.xlu0 %v3805, 32
        %v4128 = vpop.permute.xlu0 %4127
        %4129 = vrot.lane.b32.xlu0 %v3806, 32
        %v4130 = vpop.permute.xlu0 %4129
        %4131 = vrot.lane.b32.xlu0 %v3807, 32
        %v4132 = vpop.permute.xlu0 %4131
        %4133 = vrot.lane.b32.xlu0 %v3808, 32
        %v4134 = vpop.permute.xlu0 %4133
        %4135 = vrot.lane.b32.xlu0 %v3809, 32
        %v4136 = vpop.permute.xlu0 %4135
        %4137 = vrot.lane.b32.xlu0 %v3810, 32
        %v4138 = vpop.permute.xlu0 %4137
        %4139 = vrot.lane.b32.xlu0 %v3811, 32
        %v4140 = vpop.permute.xlu0 %4139
        %4141 = vrot.lane.b32.xlu0 %v3812, 32
        %v4142 = vpop.permute.xlu0 %4141
        %4143 = vrot.lane.b32.xlu0 %v3813, 32
        %v4144 = vpop.permute.xlu0 %4143
        %4145 = vrot.lane.b32.xlu0 %v3814, 32
        %v4146 = vpop.permute.xlu0 %4145
        %4147 = vrot.lane.b32.xlu0 %v3815, 32
        %v4148 = vpop.permute.xlu0 %4147
        %4149 = vrot.lane.b32.xlu0 %v3816, 32
        %v4150 = vpop.permute.xlu0 %4149
        %4151 = vrot.lane.b32.xlu0 %v3817, 32
        %v4152 = vpop.permute.xlu0 %4151
        %4153 = vrot.lane.b32.xlu0 %v3818, 32
        %v4154 = vpop.permute.xlu0 %4153
        %4155 = vrot.lane.b32.xlu0 %v3819, 32
        %v4156 = vpop.permute.xlu0 %4155
        %4173 = vrot.lane.b32.xlu0 %v3852, 64
        %v4174 = vpop.permute.xlu0 %4173
        %4175 = vrot.lane.b32.xlu0 %v3853, 64
        %v4176 = vpop.permute.xlu0 %4175
        %4177 = vrot.lane.b32.xlu0 %v3854, 64
        %v4178 = vpop.permute.xlu0 %4177
        %4179 = vrot.lane.b32.xlu0 %v3855, 64
        %v4180 = vpop.permute.xlu0 %4179
        %4181 = vrot.lane.b32.xlu0 %v3856, 64
        %v4182 = vpop.permute.xlu0 %4181
        %4183 = vrot.lane.b32.xlu0 %v3857, 64
        %v4184 = vpop.permute.xlu0 %4183
        %4185 = vrot.lane.b32.xlu0 %v3858, 64
        %v4186 = vpop.permute.xlu0 %4185
        %4187 = vrot.lane.b32.xlu0 %v3859, 64
        %v4188 = vpop.permute.xlu0 %4187
        %4189 = vrot.lane.b32.xlu0 %v3860, 64
        %v4190 = vpop.permute.xlu0 %4189
        %4191 = vrot.lane.b32.xlu0 %v3861, 64
        %v4192 = vpop.permute.xlu0 %4191
        %4193 = vrot.lane.b32.xlu0 %v3862, 64
        %v4194 = vpop.permute.xlu0 %4193
        %4195 = vrot.lane.b32.xlu0 %v3863, 64
        %v4196 = vpop.permute.xlu0 %4195
        %4197 = vrot.lane.b32.xlu0 %v3864, 64
        %v4198 = vpop.permute.xlu0 %4197
        %4199 = vrot.lane.b32.xlu0 %v3865, 64
        %v4200 = vpop.permute.xlu0 %4199
        %4201 = vrot.lane.b32.xlu0 %v3866, 64
        %v4202 = vpop.permute.xlu0 %4201
        %4203 = vrot.lane.b32.xlu0 %v3867, 64
        %v4204 = vpop.permute.xlu0 %4203
        %4221 = vrot.lane.b32.xlu0 %v3900, 96
        %v4222 = vpop.permute.xlu0 %4221
        %4223 = vrot.lane.b32.xlu0 %v3901, 96
        %v4224 = vpop.permute.xlu0 %4223
        %4225 = vrot.lane.b32.xlu0 %v3902, 96
        %v4226 = vpop.permute.xlu0 %4225
        %4227 = vrot.lane.b32.xlu0 %v3903, 96
        %v4228 = vpop.permute.xlu0 %4227
        %4229 = vrot.lane.b32.xlu0 %v3904, 96
        %v4230 = vpop.permute.xlu0 %4229
        %4231 = vrot.lane.b32.xlu0 %v3905, 96
        %v4232 = vpop.permute.xlu0 %4231
        %4233 = vrot.lane.b32.xlu0 %v3906, 96
        %v4234 = vpop.permute.xlu0 %4233
        %4235 = vrot.lane.b32.xlu0 %v3907, 96
        %v4236 = vpop.permute.xlu0 %4235
        %4237 = vrot.lane.b32.xlu0 %v3908, 96
        %v4238 = vpop.permute.xlu0 %4237
        %4239 = vrot.lane.b32.xlu0 %v3909, 96
        %v4240 = vpop.permute.xlu0 %4239
        %4241 = vrot.lane.b32.xlu0 %v3910, 96
        %v4242 = vpop.permute.xlu0 %4241
        %4243 = vrot.lane.b32.xlu0 %v3911, 96
        %v4244 = vpop.permute.xlu0 %4243
        %4245 = vrot.lane.b32.xlu0 %v3912, 96
        %v4246 = vpop.permute.xlu0 %4245
        %4247 = vrot.lane.b32.xlu0 %v3913, 96
        %v4248 = vpop.permute.xlu0 %4247
        %4249 = vrot.lane.b32.xlu0 %v3914, 96
        %v4250 = vpop.permute.xlu0 %4249
        %4251 = vrot.lane.b32.xlu0 %v3915, 96
        %v4252 = vpop.permute.xlu0 %4251
        %4269 = vrot.lane.b32.xlu0 %v3948, 32
        %v4270 = vpop.permute.xlu0 %4269
        %4271 = vrot.lane.b32.xlu0 %v3949, 32
        %v4272 = vpop.permute.xlu0 %4271
        %4273 = vrot.lane.b32.xlu0 %v3950, 32
        %v4274 = vpop.permute.xlu0 %4273
        %4275 = vrot.lane.b32.xlu0 %v3951, 32
        %v4276 = vpop.permute.xlu0 %4275
        %4277 = vrot.lane.b32.xlu0 %v3952, 32
        %v4278 = vpop.permute.xlu0 %4277
        %4279 = vrot.lane.b32.xlu0 %v3953, 32
        %v4280 = vpop.permute.xlu0 %4279
        %4281 = vrot.lane.b32.xlu0 %v3954, 32
        %v4282 = vpop.permute.xlu0 %4281
        %4283 = vrot.lane.b32.xlu0 %v3955, 32
        %v4284 = vpop.permute.xlu0 %4283
        %4285 = vrot.lane.b32.xlu0 %v3956, 32
        %v4286 = vpop.permute.xlu0 %4285
        %4287 = vrot.lane.b32.xlu0 %v3957, 32
        %v4288 = vpop.permute.xlu0 %4287
        %4289 = vrot.lane.b32.xlu0 %v3958, 32
        %v4290 = vpop.permute.xlu0 %4289
        %4291 = vrot.lane.b32.xlu0 %v3959, 32
        %v4292 = vpop.permute.xlu0 %4291
        %4293 = vrot.lane.b32.xlu0 %v3960, 32
        %v4294 = vpop.permute.xlu0 %4293
        %4295 = vrot.lane.b32.xlu0 %v3961, 32
        %v4296 = vpop.permute.xlu0 %4295
        %4297 = vrot.lane.b32.xlu0 %v3962, 32
        %v4298 = vpop.permute.xlu0 %4297
        %4299 = vrot.lane.b32.xlu0 %v3963, 32
        %v4300 = vpop.permute.xlu0 %4299
        %4317 = vrot.lane.b32.xlu0 %v3997, 64
        %v4318 = vpop.permute.xlu0 %4317
        %4319 = vrot.lane.b32.xlu0 %v3998, 64
        %v4320 = vpop.permute.xlu0 %4319
        %4321 = vrot.lane.b32.xlu0 %v3999, 64
        %v4322 = vpop.permute.xlu0 %4321
        %4323 = vrot.lane.b32.xlu0 %v4000, 64
        %v4324 = vpop.permute.xlu0 %4323
        %4325 = vrot.lane.b32.xlu0 %v4001, 64
        %v4326 = vpop.permute.xlu0 %4325
        %4327 = vrot.lane.b32.xlu0 %v4002, 64
        %v4328 = vpop.permute.xlu0 %4327
        %4329 = vrot.lane.b32.xlu0 %v4003, 64
        %v4330 = vpop.permute.xlu0 %4329
        %4331 = vrot.lane.b32.xlu0 %v4004, 64
        %v4332 = vpop.permute.xlu0 %4331
        %4333 = vrot.lane.b32.xlu0 %v4005, 64
        %v4334 = vpop.permute.xlu0 %4333
        %4335 = vrot.lane.b32.xlu0 %v4006, 64
        %v4336 = vpop.permute.xlu0 %4335
        %4337 = vrot.lane.b32.xlu0 %v4007, 64
        %v4338 = vpop.permute.xlu0 %4337
        %4339 = vrot.lane.b32.xlu0 %v4008, 64
        %v4340 = vpop.permute.xlu0 %4339
        %4341 = vrot.lane.b32.xlu0 %v4009, 64
        %v4342 = vpop.permute.xlu0 %4341
        %4343 = vrot.lane.b32.xlu0 %v4010, 64
        %v4344 = vpop.permute.xlu0 %4343
        %4345 = vrot.lane.b32.xlu0 %v4011, 64
        %v4346 = vpop.permute.xlu0 %4345
        %4347 = vrot.lane.b32.xlu0 %v4012, 64
        %v4348 = vpop.permute.xlu0 %4347
        %4365 = vrot.lane.b32.xlu0 %v4045, 96
        %v4366 = vpop.permute.xlu0 %4365
        %4367 = vrot.lane.b32.xlu0 %v4046, 96
        %v4368 = vpop.permute.xlu0 %4367
        %4369 = vrot.lane.b32.xlu0 %v4047, 96
        %v4370 = vpop.permute.xlu0 %4369
        %4371 = vrot.lane.b32.xlu0 %v4048, 96
        %v4372 = vpop.permute.xlu0 %4371
        %4373 = vrot.lane.b32.xlu0 %v4049, 96
        %v4374 = vpop.permute.xlu0 %4373
        %4375 = vrot.lane.b32.xlu0 %v4050, 96
        %v4376 = vpop.permute.xlu0 %4375
        %4377 = vrot.lane.b32.xlu0 %v4051, 96
        %v4378 = vpop.permute.xlu0 %4377
        %4379 = vrot.lane.b32.xlu0 %v4052, 96
        %v4380 = vpop.permute.xlu0 %4379
        %4381 = vrot.lane.b32.xlu0 %v4053, 96
        %v4382 = vpop.permute.xlu0 %4381
        %4383 = vrot.lane.b32.xlu0 %v4054, 96
        %v4384 = vpop.permute.xlu0 %4383
        %4385 = vrot.lane.b32.xlu0 %v4055, 96
        %v4386 = vpop.permute.xlu0 %4385
        %4387 = vrot.lane.b32.xlu0 %v4056, 96
        %v4388 = vpop.permute.xlu0 %4387
        %4389 = vrot.lane.b32.xlu0 %v4057, 96
        %v4390 = vpop.permute.xlu0 %4389
        %4391 = vrot.lane.b32.xlu0 %v4058, 96
        %v4392 = vpop.permute.xlu0 %4391
        %4393 = vrot.lane.b32.xlu0 %v4059, 96
        %v4394 = vpop.permute.xlu0 %4393
        %4395 = vrot.lane.b32.xlu0 %v4060, 96
        %v4396 = vpop.permute.xlu0 %4395
        %v4399 = vsel %vm430, %v3756, %v4126
        %v4402 = vsel %vm430, %v3757, %v4128
        %v4405 = vsel %vm430, %v3758, %v4130
        %v4408 = vsel %vm430, %v3759, %v4132
        %v4411 = vsel %vm430, %v3760, %v4134
        %v4414 = vsel %vm430, %v3761, %v4136
        %v4417 = vsel %vm430, %v3762, %v4138
        %v4420 = vsel %vm430, %v3763, %v4140
        %v4423 = vsel %vm430, %v3764, %v4142
        %v4426 = vsel %vm430, %v3765, %v4144
        %v4429 = vsel %vm430, %v3766, %v4146
        %v4432 = vsel %vm430, %v3767, %v4148
        %v4435 = vsel %vm430, %v3768, %v4150
        %v4438 = vsel %vm430, %v3769, %v4152
        %v4441 = vsel %vm430, %v3770, %v4154
        %v4444 = vsel %vm430, %v3771, %v4156
        %v4446 = vsel %vm1571, %v4399, %v4174
        %v4448 = vsel %vm1571, %v4402, %v4176
        %v4450 = vsel %vm1571, %v4405, %v4178
        %v4452 = vsel %vm1571, %v4408, %v4180
        %v4454 = vsel %vm1571, %v4411, %v4182
        %v4456 = vsel %vm1571, %v4414, %v4184
        %v4458 = vsel %vm1571, %v4417, %v4186
        %v4460 = vsel %vm1571, %v4420, %v4188
        %v4462 = vsel %vm1571, %v4423, %v4190
        %v4464 = vsel %vm1571, %v4426, %v4192
        %v4466 = vsel %vm1571, %v4429, %v4194
        %v4468 = vsel %vm1571, %v4432, %v4196
        %v4470 = vsel %vm1571, %v4435, %v4198
        %v4472 = vsel %vm1571, %v4438, %v4200
        %v4474 = vsel %vm1571, %v4441, %v4202
        %v4476 = vsel %vm1571, %v4444, %v4204
        %v4478 = vsel %vm1604, %v4446, %v4222
        %v4481 = vsel %vm1604, %v4448, %v4224
        %v4484 = vsel %vm1604, %v4450, %v4226
        %v4487 = vsel %vm1604, %v4452, %v4228
        %v4490 = vsel %vm1604, %v4454, %v4230
        %v4493 = vsel %vm1604, %v4456, %v4232
        %v4496 = vsel %vm1604, %v4458, %v4234
        %v4499 = vsel %vm1604, %v4460, %v4236
        %v4502 = vsel %vm1604, %v4462, %v4238
        %v4505 = vsel %vm1604, %v4464, %v4240
        %v4508 = vsel %vm1604, %v4466, %v4242
        %v4511 = vsel %vm1604, %v4468, %v4244
        %v4514 = vsel %vm1604, %v4470, %v4246
        %v4517 = vsel %vm1604, %v4472, %v4248
        %v4520 = vsel %vm1604, %v4474, %v4250
        %v4523 = vsel %vm1604, %v4476, %v4252
        %v4526 = vsel %vm430, %v1026, %v4270
        %v4528 = vsel %vm430, %v1027, %v4272
        %v4530 = vsel %vm430, %v1028, %v4274
        %v4532 = vsel %vm430, %v1029, %v4276
        %v4534 = vsel %vm430, %v1030, %v4278
        %v4536 = vsel %vm430, %v1031, %v4280
        %v4538 = vsel %vm430, %v1032, %v4282
        %v4540 = vsel %vm430, %v1033, %v4284
        %v4542 = vsel %vm430, %v1034, %v4286
        %v4544 = vsel %vm430, %v1035, %v4288
        %v4546 = vsel %vm430, %v1036, %v4290
        %v4548 = vsel %vm430, %v1037, %v4292
        %v4550 = vsel %vm430, %v1038, %v4294
        %v4552 = vsel %vm430, %v1039, %v4296
        %v4554 = vsel %vm430, %v1040, %v4298
        %v4556 = vsel %vm430, %v1041, %v4300
        %v4558 = vsel %vm1571, %v4526, %v4318
        %v4560 = vsel %vm1571, %v4528, %v4320
        %v4562 = vsel %vm1571, %v4530, %v4322
        %v4564 = vsel %vm1571, %v4532, %v4324
        %v4566 = vsel %vm1571, %v4534, %v4326
        %v4568 = vsel %vm1571, %v4536, %v4328
        %v4570 = vsel %vm1571, %v4538, %v4330
        %v4572 = vsel %vm1571, %v4540, %v4332
        %v4574 = vsel %vm1571, %v4542, %v4334
        %v4576 = vsel %vm1571, %v4544, %v4336
        %v4578 = vsel %vm1571, %v4546, %v4338
        %v4580 = vsel %vm1571, %v4548, %v4340
        %v4582 = vsel %vm1571, %v4550, %v4342
        %v4584 = vsel %vm1571, %v4552, %v4344
        %v4586 = vsel %vm1571, %v4554, %v4346
        %v4588 = vsel %vm1571, %v4556, %v4348
        %v4590 = vsel %vm1604, %v4558, %v4366
        %v4593 = vsel %vm1604, %v4560, %v4368
        %v4596 = vsel %vm1604, %v4562, %v4370
        %v4599 = vsel %vm1604, %v4564, %v4372
        %v4602 = vsel %vm1604, %v4566, %v4374
        %v4605 = vsel %vm1604, %v4568, %v4376
        %v4608 = vsel %vm1604, %v4570, %v4378
        %v4611 = vsel %vm1604, %v4572, %v4380
        %v4614 = vsel %vm1604, %v4574, %v4382
        %v4617 = vsel %vm1604, %v4576, %v4384
        %v4620 = vsel %vm1604, %v4578, %v4386
        %v4623 = vsel %vm1604, %v4580, %v4388
        %v4626 = vsel %vm1604, %v4582, %v4390
        %v4629 = vsel %vm1604, %v4584, %v4392
        %v4632 = vsel %vm1604, %v4586, %v4394
        %v4635 = vsel %vm1604, %v4588, %v4396
        %v4637 = vld [vmem:[%s5] sm:$0xf]
        %v4638 = vld [vmem:[%s5 + $0x4] sm:$0xf]
        %v4639 = vld [vmem:[%s5 + $0x8] sm:$0xf]
        %v4640 = vld [vmem:[%s5 + $0xc] sm:$0xf]
        %v4641 = vld [vmem:[%s5 + $0x10] sm:$0xf]
        %v4642 = vld [vmem:[%s5 + $0x14] sm:$0xf]
        %v4643 = vld [vmem:[%s5 + $0x18] sm:$0xf]
        %v4644 = vld [vmem:[%s5 + $0x1c] sm:$0xf]
        %v4645 = vld [vmem:[%s5 + $0x20] sm:$0xf]
        %v4646 = vld [vmem:[%s5 + $0x24] sm:$0xf]
        %v4647 = vld [vmem:[%s5 + $0x28] sm:$0xf]
        %v4648 = vld [vmem:[%s5 + $0x2c] sm:$0xf]
        %v4649 = vld [vmem:[%s5 + $0x30] sm:$0xf]
        %v4650 = vld [vmem:[%s5 + $0x34] sm:$0xf]
        %v4651 = vld [vmem:[%s5 + $0x38] sm:$0xf]
        %v4652 = vld [vmem:[%s5 + $0x3c] sm:$0xf]
        %v4653 = vld [vmem:[%s5 + $0x40] sm:$0xf]
        %v4654 = vld [vmem:[%s5 + $0x44] sm:$0xf]
        %v4655 = vld [vmem:[%s5 + $0x48] sm:$0xf]
        %v4656 = vld [vmem:[%s5 + $0x4c] sm:$0xf]
        %v4657 = vld [vmem:[%s5 + $0x50] sm:$0xf]
        %v4658 = vld [vmem:[%s5 + $0x54] sm:$0xf]
        %v4659 = vld [vmem:[%s5 + $0x58] sm:$0xf]
        %v4660 = vld [vmem:[%s5 + $0x5c] sm:$0xf]
        %v4661 = vld [vmem:[%s5 + $0x60] sm:$0xf]
        %v4662 = vld [vmem:[%s5 + $0x64] sm:$0xf]
        %v4663 = vld [vmem:[%s5 + $0x68] sm:$0xf]
        %v4664 = vld [vmem:[%s5 + $0x6c] sm:$0xf]
        %v4665 = vld [vmem:[%s5 + $0x70] sm:$0xf]
        %v4666 = vld [vmem:[%s5 + $0x74] sm:$0xf]
        %v4667 = vld [vmem:[%s5 + $0x78] sm:$0xf]
        %v4668 = vld [vmem:[%s5 + $0x7c] sm:$0xf]
        %v4669 = vld [vmem:[%s5 + $0x80] sm:$0xf]
        %v4670 = vld [vmem:[%s5 + $0x84] sm:$0xf]
        %v4671 = vld [vmem:[%s5 + $0x88] sm:$0xf]
        %v4672 = vld [vmem:[%s5 + $0x8c] sm:$0xf]
        %v4709 = vunpack.c.l.b16 %v4637
        %v4710 = vunpack.c.l.b16 %v4638
        %v4711 = vunpack.c.l.b16 %v4639
        %v4712 = vunpack.c.l.b16 %v4640
        %v4713 = vunpack.c.l.b16 %v4641
        %v4714 = vunpack.c.l.b16 %v4642
        %v4715 = vunpack.c.l.b16 %v4643
        %v4716 = vunpack.c.l.b16 %v4644
        %v4717 = vunpack.c.l.b16 %v4645
        %v4718 = vunpack.c.l.b16 %v4646
        %v4719 = vunpack.c.l.b16 %v4647
        %v4720 = vunpack.c.l.b16 %v4648
        %v4721 = vunpack.c.l.b16 %v4649
        %v4722 = vunpack.c.l.b16 %v4650
        %v4723 = vunpack.c.l.b16 %v4651
        %v4724 = vunpack.c.l.b16 %v4652
        %v4725 = vunpack.c.l.b16 %v4653
        %v4726 = vunpack.c.l.b16 %v4654
        %v4727 = vunpack.c.l.b16 %v4655
        %v4728 = vunpack.c.l.b16 %v4656
        %v4729 = vunpack.c.l.b16 %v4657
        %v4730 = vunpack.c.l.b16 %v4658
        %v4731 = vunpack.c.l.b16 %v4659
        %v4732 = vunpack.c.l.b16 %v4660
        %v4733 = vunpack.c.l.b16 %v4661
        %v4734 = vunpack.c.l.b16 %v4662
        %v4735 = vunpack.c.l.b16 %v4663
        %v4736 = vunpack.c.l.b16 %v4664
        %v4737 = vunpack.c.l.b16 %v4665
        %v4738 = vunpack.c.l.b16 %v4666
        %v4739 = vunpack.c.l.b16 %v4667
        %v4740 = vunpack.c.l.b16 %v4668
        %v4741 = vunpack.c.l.b16 %v4669
        %v4742 = vunpack.c.l.b16 %v4670
        %v4743 = vunpack.c.l.b16 %v4671
        %v4744 = vunpack.c.l.b16 %v4672
        %v4745 = vpack.c.b16 %v4710, %v4709
        %v4746 = vpack.c.b16 %v4712, %v4711
        %v4747 = vpack.c.b16 %v4714, %v4713
        %v4748 = vpack.c.b16 %v4716, %v4715
        %v4749 = vpack.c.b16 %v4718, %v4717
        %v4750 = vpack.c.b16 %v4720, %v4719
        %v4751 = vpack.c.b16 %v4722, %v4721
        %v4752 = vpack.c.b16 %v4724, %v4723
        %v4753 = vpack.c.b16 %v4726, %v4725
        %v4754 = vpack.c.b16 %v4728, %v4727
        %v4755 = vpack.c.b16 %v4730, %v4729
        %v4756 = vpack.c.b16 %v4732, %v4731
        %v4757 = vpack.c.b16 %v4734, %v4733
        %v4758 = vpack.c.b16 %v4736, %v4735
        %v4759 = vpack.c.b16 %v4738, %v4737
        %v4760 = vpack.c.b16 %v4740, %v4739
        %v4761 = vpack.c.b16 %v4742, %v4741
        %v4762 = vpack.c.b16 %v4744, %v4743
        %v4782 = vsel %vm430, %v4093, 0
        %v4785 = vsel %vm430, %v4094, 0
        %v4788 = vsel %vm430, %v4095, 0
        %v4791 = vsel %vm430, %v4096, 0
        %v4794 = vsel %vm430, %v4097, 0
        %v4797 = vsel %vm430, %v4098, 0
        %v4800 = vsel %vm430, %v4099, 0
        %v4803 = vsel %vm430, %v4100, 0
        %v4806 = vsel %vm430, %v4101, 0
        %v4809 = vsel %vm430, %v4102, 0
        %v4812 = vsel %vm430, %v4103, 0
        %v4815 = vsel %vm430, %v4104, 0
        %v4818 = vsel %vm430, %v4105, 0
        %v4821 = vsel %vm430, %v4106, 0
        %v4824 = vsel %vm430, %v4107, 0
        %v4827 = vsel %vm430, %v4108, 0
        %4829 = vmatprep.subr.bf16.mxu0 0
        %4830 = vmatpush1.bf16.msra.mxu0 %v4752
        %4831 = vmatprep.subr.bf16.mxu0 0
        %4832 = vmatpush1.bf16.msra.mxu0 %v4751
        %4833 = vmatprep.subr.bf16.mxu0 0
        %4834 = vmatpush1.bf16.msra.mxu0 %v4750
        %4835 = vmatprep.subr.bf16.mxu0 0
        %4836 = vmatpush1.bf16.msra.mxu0 %v4749
        %4837 = vmatprep.subr.bf16.mxu0 0
        %4838 = vmatpush1.bf16.msra.mxu0 %v4748
        %4839 = vmatprep.subr.bf16.mxu0 0
        %4840 = vmatpush1.bf16.msra.mxu0 %v4747
        %4841 = vmatprep.subr.bf16.mxu0 0
        %4842 = vmatpush1.bf16.msra.mxu0 %v4746
        %4843 = vmatprep.subr.bf16.mxu0 0
        %4844 = vmatpush1.bf16.msra.mxu0 %v4745
        %4845 = vmatprep.subr.bf16.mxu0 0
        %4846 = vmatpush2.bf16.msra.mxu0 %v4760
        %4847 = vmatprep.subr.bf16.mxu0 0
        %4848 = vmatpush2.bf16.msra.mxu0 %v4759
        %4849 = vmatprep.subr.bf16.mxu0 0
        %4850 = vmatpush2.bf16.msra.mxu0 %v4758
        %4851 = vmatprep.subr.bf16.mxu0 0
        %4852 = vmatpush2.bf16.msra.mxu0 %v4757
        %4853 = vmatprep.subr.bf16.mxu0 0
        %4854 = vmatpush2.bf16.msra.mxu0 %v4756
        %4855 = vmatprep.subr.bf16.mxu0 0
        %4856 = vmatpush2.bf16.msra.mxu0 %v4755
        %4857 = vmatprep.subr.bf16.mxu0 0
        %4858 = vmatpush2.bf16.msra.mxu0 %v4754
        %4859 = vmatprep.subr.bf16.mxu0 0
        %4860 = vmatpush2.bf16.msra.mxu0 %v4753
        %4861 = vmatprep.mubr.bf16.mxu0 %v4590
        %4862 = vmatmul.mubr.bf16.gmra.mxu0 %v4478
        %v4863 = vpop.f32.mrf.mxu0
        %v4864 = vadd.f32 0.0, %v4863
        %v4865 = vpop.f32.mrf.mxu0
        %v4866 = vpop.f32.mrf.mxu0
        %v4867 = vadd.f32 0.0, %v4866
        %v4868 = vpop.f32.mrf.mxu0
        %4869 = vmatprep.mubr.bf16.mxu0 %v4593
        %4870 = vmatmul.mubr.bf16.gmra.mxu0 %v4481
        %v4871 = vpop.f32.mrf.mxu0
        %v4872 = vadd.f32 0.0, %v4871
        %v4873 = vpop.f32.mrf.mxu0
        %v4874 = vpop.f32.mrf.mxu0
        %v4875 = vadd.f32 0.0, %v4874
        %v4876 = vpop.f32.mrf.mxu0
        %4877 = vmatprep.mubr.bf16.mxu0 %v4596
        %4878 = vmatmul.mubr.bf16.gmra.mxu0 %v4484
        %v4879 = vpop.f32.mrf.mxu0
        %v4880 = vadd.f32 0.0, %v4879
        %v4881 = vpop.f32.mrf.mxu0
        %v4882 = vpop.f32.mrf.mxu0
        %v4883 = vadd.f32 0.0, %v4882
        %v4884 = vpop.f32.mrf.mxu0
        %4885 = vmatprep.mubr.bf16.mxu0 %v4599
        %4886 = vmatmul.mubr.bf16.gmra.mxu0 %v4487
        %v4887 = vpop.f32.mrf.mxu0
        %v4888 = vadd.f32 0.0, %v4887
        %v4889 = vpop.f32.mrf.mxu0
        %v4890 = vpop.f32.mrf.mxu0
        %v4891 = vadd.f32 0.0, %v4890
        %v4892 = vpop.f32.mrf.mxu0
        %4893 = vmatprep.mubr.bf16.mxu0 %v4602
        %4894 = vmatmul.mubr.bf16.gmra.mxu0 %v4490
        %v4895 = vpop.f32.mrf.mxu0
        %v4896 = vadd.f32 0.0, %v4895
        %v4897 = vpop.f32.mrf.mxu0
        %v4898 = vpop.f32.mrf.mxu0
        %v4899 = vadd.f32 0.0, %v4898
        %v4900 = vpop.f32.mrf.mxu0
        %4901 = vmatprep.mubr.bf16.mxu0 %v4605
        %4902 = vmatmul.mubr.bf16.gmra.mxu0 %v4493
        %v4903 = vpop.f32.mrf.mxu0
        %v4904 = vadd.f32 0.0, %v4903
        %v4905 = vpop.f32.mrf.mxu0
        %v4906 = vpop.f32.mrf.mxu0
        %v4907 = vadd.f32 0.0, %v4906
        %v4908 = vpop.f32.mrf.mxu0
        %4909 = vmatprep.mubr.bf16.mxu0 %v4608
        %4910 = vmatmul.mubr.bf16.gmra.mxu0 %v4496
        %v4911 = vpop.f32.mrf.mxu0
        %v4912 = vadd.f32 0.0, %v4911
        %v4913 = vpop.f32.mrf.mxu0
        %v4914 = vpop.f32.mrf.mxu0
        %v4915 = vadd.f32 0.0, %v4914
        %v4916 = vpop.f32.mrf.mxu0
        %4917 = vmatprep.mubr.bf16.mxu0 %v4611
        %4918 = vmatmul.mubr.bf16.gmra.mxu0 %v4499
        %v4919 = vpop.f32.mrf.mxu0
        %v4920 = vadd.f32 0.0, %v4919
        %v4921 = vpop.f32.mrf.mxu0
        %v4922 = vpop.f32.mrf.mxu0
        %v4923 = vadd.f32 0.0, %v4922
        %v4924 = vpop.f32.mrf.mxu0
        %4925 = vmatprep.mubr.bf16.mxu0 %v4614
        %4926 = vmatmul.mubr.bf16.gmra.mxu0 %v4502
        %v4927 = vpop.f32.mrf.mxu0
        %v4928 = vadd.f32 0.0, %v4927
        %v4929 = vpop.f32.mrf.mxu0
        %v4930 = vpop.f32.mrf.mxu0
        %v4931 = vadd.f32 0.0, %v4930
        %v4932 = vpop.f32.mrf.mxu0
        %4933 = vmatprep.mubr.bf16.mxu0 %v4617
        %4934 = vmatmul.mubr.bf16.gmra.mxu0 %v4505
        %v4935 = vpop.f32.mrf.mxu0
        %v4936 = vadd.f32 0.0, %v4935
        %v4937 = vpop.f32.mrf.mxu0
        %v4938 = vpop.f32.mrf.mxu0
        %v4939 = vadd.f32 0.0, %v4938
        %v4940 = vpop.f32.mrf.mxu0
        %4941 = vmatprep.mubr.bf16.mxu0 %v4620
        %4942 = vmatmul.mubr.bf16.gmra.mxu0 %v4508
        %v4943 = vpop.f32.mrf.mxu0
        %v4944 = vadd.f32 0.0, %v4943
        %v4945 = vpop.f32.mrf.mxu0
        %v4946 = vpop.f32.mrf.mxu0
        %v4947 = vadd.f32 0.0, %v4946
        %v4948 = vpop.f32.mrf.mxu0
        %4949 = vmatprep.mubr.bf16.mxu0 %v4623
        %4950 = vmatmul.mubr.bf16.gmra.mxu0 %v4511
        %v4951 = vpop.f32.mrf.mxu0
        %v4952 = vadd.f32 0.0, %v4951
        %v4953 = vpop.f32.mrf.mxu0
        %v4954 = vpop.f32.mrf.mxu0
        %v4955 = vadd.f32 0.0, %v4954
        %v4956 = vpop.f32.mrf.mxu0
        %4957 = vmatprep.mubr.bf16.mxu0 %v4626
        %4958 = vmatmul.mubr.bf16.gmra.mxu0 %v4514
        %v4959 = vpop.f32.mrf.mxu0
        %v4960 = vadd.f32 0.0, %v4959
        %v4961 = vpop.f32.mrf.mxu0
        %v4962 = vpop.f32.mrf.mxu0
        %v4963 = vadd.f32 0.0, %v4962
        %v4964 = vpop.f32.mrf.mxu0
        %4965 = vmatprep.mubr.bf16.mxu0 %v4629
        %4966 = vmatmul.mubr.bf16.gmra.mxu0 %v4517
        %v4967 = vpop.f32.mrf.mxu0
        %v4968 = vadd.f32 0.0, %v4967
        %v4969 = vpop.f32.mrf.mxu0
        %v4970 = vpop.f32.mrf.mxu0
        %v4971 = vadd.f32 0.0, %v4970
        %v4972 = vpop.f32.mrf.mxu0
        %4973 = vmatprep.mubr.bf16.mxu0 %v4632
        %4974 = vmatmul.mubr.bf16.gmra.mxu0 %v4520
        %v4975 = vpop.f32.mrf.mxu0
        %v4976 = vadd.f32 0.0, %v4975
        %v4977 = vpop.f32.mrf.mxu0
        %v4978 = vpop.f32.mrf.mxu0
        %v4979 = vadd.f32 0.0, %v4978
        %v4980 = vpop.f32.mrf.mxu0
        %4981 = vmatprep.mubr.bf16.mxu0 %v4635
        %4982 = vmatmul.mubr.bf16.gmra.mxu0 %v4523
        %v4983 = vpop.f32.mrf.mxu0
        %v4984 = vadd.f32 0.0, %v4983
        %v4985 = vpop.f32.mrf.mxu0
        %v4986 = vpop.f32.mrf.mxu0
        %v4987 = vadd.f32 0.0, %v4986
        %v4988 = vpop.f32.mrf.mxu0
        %4989 = vdwg.mxu0
        %4990 = vmatprep.subr.bf16.mxu0 0
        %4991 = vmatpush1.bf16.msra.mxu0 0
        %4992 = vmatprep.subr.bf16.mxu0 0
        %4993 = vmatpush1.bf16.msra.mxu0 0
        %4994 = vmatprep.subr.bf16.mxu0 0
        %4995 = vmatpush1.bf16.msra.mxu0 0
        %4996 = vmatprep.subr.bf16.mxu0 0
        %4997 = vmatpush1.bf16.msra.mxu0 0
        %4998 = vmatprep.subr.bf16.mxu0 0
        %4999 = vmatpush1.bf16.msra.mxu0 0
        %5000 = vmatprep.subr.bf16.mxu0 0
        %5001 = vmatpush1.bf16.msra.mxu0 0
        %5002 = vmatprep.subr.bf16.mxu0 0
        %5003 = vmatpush1.bf16.msra.mxu0 %v4762
        %5004 = vmatprep.subr.bf16.mxu0 0
        %5005 = vmatpush1.bf16.msra.mxu0 %v4761
        %5006 = vmatprep.subr.bf16.mxu0 0
        %5007 = vmatpush2.bf16.msra.mxu0 0
        %5008 = vmatprep.subr.bf16.mxu0 0
        %5009 = vmatpush2.bf16.msra.mxu0 0
        %5010 = vmatprep.subr.bf16.mxu0 0
        %5011 = vmatpush2.bf16.msra.mxu0 0
        %5012 = vmatprep.subr.bf16.mxu0 0
        %5013 = vmatpush2.bf16.msra.mxu0 0
        %5014 = vmatprep.subr.bf16.mxu0 0
        %5015 = vmatpush2.bf16.msra.mxu0 0
        %5016 = vmatprep.subr.bf16.mxu0 0
        %5017 = vmatpush2.bf16.msra.mxu0 0
        %5018 = vmatprep.subr.bf16.mxu0 0
        %5019 = vmatpush2.bf16.msra.mxu0 0
        %5020 = vmatprep.subr.bf16.mxu0 0
        %5021 = vmatpush2.bf16.msra.mxu0 0
        %5022 = vmatprep.mubr.bf16.mxu0 0
        %5023 = vmatmul.mubr.bf16.gmra.mxu0 %v4782
        %v5024 = vpop.f32.mrf.mxu0
        %v5025 = vadd.f32 %v4864, %v5024
        %v5026 = vpop.f32.mrf.mxu0
        %v5027 = vpop.f32.mrf.mxu0
        %v5028 = vadd.f32 %v4867, %v5027
        %v5029 = vpop.f32.mrf.mxu0
        %5030 = vmatprep.mubr.bf16.mxu0 0
        %5031 = vmatmul.mubr.bf16.gmra.mxu0 %v4785
        %v5032 = vpop.f32.mrf.mxu0
        %v5033 = vadd.f32 %v4872, %v5032
        %v5034 = vpop.f32.mrf.mxu0
        %v5035 = vpop.f32.mrf.mxu0
        %v5036 = vadd.f32 %v4875, %v5035
        %v5037 = vpop.f32.mrf.mxu0
        %5038 = vmatprep.mubr.bf16.mxu0 0
        %5039 = vmatmul.mubr.bf16.gmra.mxu0 %v4788
        %v5040 = vpop.f32.mrf.mxu0
        %v5041 = vadd.f32 %v4880, %v5040
        %v5042 = vpop.f32.mrf.mxu0
        %v5043 = vpop.f32.mrf.mxu0
        %v5044 = vadd.f32 %v4883, %v5043
        %v5045 = vpop.f32.mrf.mxu0
        %5046 = vmatprep.mubr.bf16.mxu0 0
        %5047 = vmatmul.mubr.bf16.gmra.mxu0 %v4791
        %v5048 = vpop.f32.mrf.mxu0
        %v5049 = vadd.f32 %v4888, %v5048
        %v5050 = vpop.f32.mrf.mxu0
        %v5051 = vpop.f32.mrf.mxu0
        %v5052 = vadd.f32 %v4891, %v5051
        %v5053 = vpop.f32.mrf.mxu0
        %5054 = vmatprep.mubr.bf16.mxu0 0
        %5055 = vmatmul.mubr.bf16.gmra.mxu0 %v4794
        %v5056 = vpop.f32.mrf.mxu0
        %v5057 = vadd.f32 %v4896, %v5056
        %v5058 = vpop.f32.mrf.mxu0
        %v5059 = vpop.f32.mrf.mxu0
        %v5060 = vadd.f32 %v4899, %v5059
        %v5061 = vpop.f32.mrf.mxu0
        %5062 = vmatprep.mubr.bf16.mxu0 0
        %5063 = vmatmul.mubr.bf16.gmra.mxu0 %v4797
        %v5064 = vpop.f32.mrf.mxu0
        %v5065 = vadd.f32 %v4904, %v5064
        %v5066 = vpop.f32.mrf.mxu0
        %v5067 = vpop.f32.mrf.mxu0
        %v5068 = vadd.f32 %v4907, %v5067
        %v5069 = vpop.f32.mrf.mxu0
        %5070 = vmatprep.mubr.bf16.mxu0 0
        %5071 = vmatmul.mubr.bf16.gmra.mxu0 %v4800
        %v5072 = vpop.f32.mrf.mxu0
        %v5073 = vadd.f32 %v4912, %v5072
        %v5074 = vpop.f32.mrf.mxu0
        %v5075 = vpop.f32.mrf.mxu0
        %v5076 = vadd.f32 %v4915, %v5075
        %v5077 = vpop.f32.mrf.mxu0
        %5078 = vmatprep.mubr.bf16.mxu0 0
        %5079 = vmatmul.mubr.bf16.gmra.mxu0 %v4803
        %v5080 = vpop.f32.mrf.mxu0
        %v5081 = vadd.f32 %v4920, %v5080
        %v5082 = vpop.f32.mrf.mxu0
        %v5083 = vpop.f32.mrf.mxu0
        %v5084 = vadd.f32 %v4923, %v5083
        %v5085 = vpop.f32.mrf.mxu0
        %5086 = vmatprep.mubr.bf16.mxu0 0
        %5087 = vmatmul.mubr.bf16.gmra.mxu0 %v4806
        %v5088 = vpop.f32.mrf.mxu0
        %v5089 = vadd.f32 %v4928, %v5088
        %v5090 = vpop.f32.mrf.mxu0
        %v5091 = vpop.f32.mrf.mxu0
        %v5092 = vadd.f32 %v4931, %v5091
        %v5093 = vpop.f32.mrf.mxu0
        %5094 = vmatprep.mubr.bf16.mxu0 0
        %5095 = vmatmul.mubr.bf16.gmra.mxu0 %v4809
        %v5096 = vpop.f32.mrf.mxu0
        %v5097 = vadd.f32 %v4936, %v5096
        %v5098 = vpop.f32.mrf.mxu0
        %v5099 = vpop.f32.mrf.mxu0
        %v5100 = vadd.f32 %v4939, %v5099
        %v5101 = vpop.f32.mrf.mxu0
        %5102 = vmatprep.mubr.bf16.mxu0 0
        %5103 = vmatmul.mubr.bf16.gmra.mxu0 %v4812
        %v5104 = vpop.f32.mrf.mxu0
        %v5105 = vadd.f32 %v4944, %v5104
        %v5106 = vpop.f32.mrf.mxu0
        %v5107 = vpop.f32.mrf.mxu0
        %v5108 = vadd.f32 %v4947, %v5107
        %v5109 = vpop.f32.mrf.mxu0
        %5110 = vmatprep.mubr.bf16.mxu0 0
        %5111 = vmatmul.mubr.bf16.gmra.mxu0 %v4815
        %v5112 = vpop.f32.mrf.mxu0
        %v5113 = vadd.f32 %v4952, %v5112
        %v5114 = vpop.f32.mrf.mxu0
        %v5115 = vpop.f32.mrf.mxu0
        %v5116 = vadd.f32 %v4955, %v5115
        %v5117 = vpop.f32.mrf.mxu0
        %5118 = vmatprep.mubr.bf16.mxu0 0
        %5119 = vmatmul.mubr.bf16.gmra.mxu0 %v4818
        %v5120 = vpop.f32.mrf.mxu0
        %v5121 = vadd.f32 %v4960, %v5120
        %v5122 = vpop.f32.mrf.mxu0
        %v5123 = vpop.f32.mrf.mxu0
        %v5124 = vadd.f32 %v4963, %v5123
        %v5125 = vpop.f32.mrf.mxu0
        %5126 = vmatprep.mubr.bf16.mxu0 0
        %5127 = vmatmul.mubr.bf16.gmra.mxu0 %v4821
        %v5128 = vpop.f32.mrf.mxu0
        %v5129 = vadd.f32 %v4968, %v5128
        %v5130 = vpop.f32.mrf.mxu0
        %v5131 = vpop.f32.mrf.mxu0
        %v5132 = vadd.f32 %v4971, %v5131
        %v5133 = vpop.f32.mrf.mxu0
        %5134 = vmatprep.mubr.bf16.mxu0 0
        %5135 = vmatmul.mubr.bf16.gmra.mxu0 %v4824
        %v5136 = vpop.f32.mrf.mxu0
        %v5137 = vadd.f32 %v4976, %v5136
        %v5138 = vpop.f32.mrf.mxu0
        %v5139 = vpop.f32.mrf.mxu0
        %v5140 = vadd.f32 %v4979, %v5139
        %v5141 = vpop.f32.mrf.mxu0
        %5142 = vmatprep.mubr.bf16.mxu0 0
        %5143 = vmatmul.mubr.bf16.gmra.mxu0 %v4827
        %v5144 = vpop.f32.mrf.mxu0
        %v5145 = vadd.f32 %v4984, %v5144
        %v5146 = vpop.f32.mrf.mxu0
        %v5147 = vpop.f32.mrf.mxu0
        %v5148 = vadd.f32 %v4987, %v5147
        %v5149 = vpop.f32.mrf.mxu0
        %5150 = vdwg.mxu0
        %s5151 = scalar_lea.vmem [#allocation2], 128
        %v5152 = vld [vmem:[%s5151 + $0x4] sm:$0xff]
        %v5153 = vld [vmem:[%s5151 + $0xc] sm:$0xff]
        %v5154 = vld [vmem:[%s5151 + $0x24] sm:$0xff]
        %v5155 = vld [vmem:[%s5151 + $0x2c] sm:$0xff]
        %v5156 = vld [vmem:[%s5151 + $0x44] sm:$0xff]
        %v5157 = vld [vmem:[%s5151 + $0x4c] sm:$0xff]
        %v5158 = vld [vmem:[%s5151 + $0x64] sm:$0xff]
        %v5159 = vld [vmem:[%s5151 + $0x6c] sm:$0xff]
        %v5160 = vld [vmem:[%s5151 + $0x84] sm:$0xff]
        %v5161 = vld [vmem:[%s5151 + $0x8c] sm:$0xff]
        %v5162 = vld [vmem:[%s5151 + $0xa4] sm:$0xff]
        %v5163 = vld [vmem:[%s5151 + $0xac] sm:$0xff]
        %v5164 = vld [vmem:[%s5151 + $0xc4] sm:$0xff]
        %v5165 = vld [vmem:[%s5151 + $0xcc] sm:$0xff]
        %v5166 = vld [vmem:[%s5151 + $0xe4] sm:$0xff]
        %v5167 = vld [vmem:[%s5151 + $0xec] sm:$0xff]
        %v5168 = vld [vmem:[%s5151 + $0x104] sm:$0xff]
        %v5169 = vld [vmem:[%s5151 + $0x10c] sm:$0xff]
        %v5170 = vld [vmem:[%s5151 + $0x124] sm:$0xff]
        %v5171 = vld [vmem:[%s5151 + $0x12c] sm:$0xff]
        %v5172 = vld [vmem:[%s5151 + $0x144] sm:$0xff]
        %v5173 = vld [vmem:[%s5151 + $0x14c] sm:$0xff]
        %v5174 = vld [vmem:[%s5151 + $0x164] sm:$0xff]
        %v5175 = vld [vmem:[%s5151 + $0x16c] sm:$0xff]
        %v5176 = vld [vmem:[%s5151 + $0x184] sm:$0xff]
        %v5177 = vld [vmem:[%s5151 + $0x18c] sm:$0xff]
        %v5178 = vld [vmem:[%s5151 + $0x1a4] sm:$0xff]
        %v5179 = vld [vmem:[%s5151 + $0x1ac] sm:$0xff]
        %v5180 = vld [vmem:[%s5151 + $0x1c4] sm:$0xff]
        %v5181 = vld [vmem:[%s5151 + $0x1cc] sm:$0xff]
        %v5182 = vld [vmem:[%s5151 + $0x1e4] sm:$0xff]
        %v5183 = vld [vmem:[%s5151 + $0x1ec] sm:$0xff]
        %v5184 = vpack.c.bf16 %v5153, %v5152
        %v5185 = vpack.c.bf16 %v5155, %v5154
        %v5186 = vpack.c.bf16 %v5157, %v5156
        %v5187 = vpack.c.bf16 %v5159, %v5158
        %v5188 = vpack.c.bf16 %v5161, %v5160
        %v5189 = vpack.c.bf16 %v5163, %v5162
        %v5190 = vpack.c.bf16 %v5165, %v5164
        %v5191 = vpack.c.bf16 %v5167, %v5166
        %v5192 = vpack.c.bf16 %v5169, %v5168
        %v5193 = vpack.c.bf16 %v5171, %v5170
        %v5194 = vpack.c.bf16 %v5173, %v5172
        %v5195 = vpack.c.bf16 %v5175, %v5174
        %v5196 = vpack.c.bf16 %v5177, %v5176
        %v5197 = vpack.c.bf16 %v5179, %v5178
        %v5198 = vpack.c.bf16 %v5181, %v5180
        %v5199 = vpack.c.bf16 %v5183, %v5182
        %v5200 = vld [vmem:[%s5151 + $0x8] sm:$0xff]
        %v5201 = vld [vmem:[%s5151 + $0x10] sm:$0xff]
        %v5202 = vld [vmem:[%s5151 + $0x28] sm:$0xff]
        %v5203 = vld [vmem:[%s5151 + $0x30] sm:$0xff]
        %v5204 = vld [vmem:[%s5151 + $0x48] sm:$0xff]
        %v5205 = vld [vmem:[%s5151 + $0x50] sm:$0xff]
        %v5206 = vld [vmem:[%s5151 + $0x68] sm:$0xff]
        %v5207 = vld [vmem:[%s5151 + $0x70] sm:$0xff]
        %v5208 = vld [vmem:[%s5151 + $0x88] sm:$0xff]
        %v5209 = vld [vmem:[%s5151 + $0x90] sm:$0xff]
        %v5210 = vld [vmem:[%s5151 + $0xa8] sm:$0xff]
        %v5211 = vld [vmem:[%s5151 + $0xb0] sm:$0xff]
        %v5212 = vld [vmem:[%s5151 + $0xc8] sm:$0xff]
        %v5213 = vld [vmem:[%s5151 + $0xd0] sm:$0xff]
        %v5214 = vld [vmem:[%s5151 + $0xe8] sm:$0xff]
        %v5215 = vld [vmem:[%s5151 + $0xf0] sm:$0xff]
        %v5216 = vld [vmem:[%s5151 + $0x108] sm:$0xff]
        %v5217 = vld [vmem:[%s5151 + $0x110] sm:$0xff]
        %v5218 = vld [vmem:[%s5151 + $0x128] sm:$0xff]
        %v5219 = vld [vmem:[%s5151 + $0x130] sm:$0xff]
        %v5220 = vld [vmem:[%s5151 + $0x148] sm:$0xff]
        %v5221 = vld [vmem:[%s5151 + $0x150] sm:$0xff]
        %v5222 = vld [vmem:[%s5151 + $0x168] sm:$0xff]
        %v5223 = vld [vmem:[%s5151 + $0x170] sm:$0xff]
        %v5224 = vld [vmem:[%s5151 + $0x188] sm:$0xff]
        %v5225 = vld [vmem:[%s5151 + $0x190] sm:$0xff]
        %v5226 = vld [vmem:[%s5151 + $0x1a8] sm:$0xff]
        %v5227 = vld [vmem:[%s5151 + $0x1b0] sm:$0xff]
        %v5228 = vld [vmem:[%s5151 + $0x1c8] sm:$0xff]
        %v5229 = vld [vmem:[%s5151 + $0x1d0] sm:$0xff]
        %v5230 = vld [vmem:[%s5151 + $0x1e8] sm:$0xff]
        %v5231 = vld [vmem:[%s5151 + $0x1f0] sm:$0xff]
        %v5232 = vpack.c.bf16 %v5201, %v5200
        %v5233 = vpack.c.bf16 %v5203, %v5202
        %v5234 = vpack.c.bf16 %v5205, %v5204
        %v5235 = vpack.c.bf16 %v5207, %v5206
        %v5236 = vpack.c.bf16 %v5209, %v5208
        %v5237 = vpack.c.bf16 %v5211, %v5210
        %v5238 = vpack.c.bf16 %v5213, %v5212
        %v5239 = vpack.c.bf16 %v5215, %v5214
        %v5240 = vpack.c.bf16 %v5217, %v5216
        %v5241 = vpack.c.bf16 %v5219, %v5218
        %v5242 = vpack.c.bf16 %v5221, %v5220
        %v5243 = vpack.c.bf16 %v5223, %v5222
        %v5244 = vpack.c.bf16 %v5225, %v5224
        %v5245 = vpack.c.bf16 %v5227, %v5226
        %v5246 = vpack.c.bf16 %v5229, %v5228
        %v5247 = vpack.c.bf16 %v5231, %v5230
        %v5248 = vld [vmem:[%s5151 + $0x14] sm:$0xff]
        %v5249 = vld [vmem:[%s5151 + $0x34] sm:$0xff]
        %v5250 = vld [vmem:[%s5151 + $0x54] sm:$0xff]
        %v5251 = vld [vmem:[%s5151 + $0x74] sm:$0xff]
        %v5252 = vld [vmem:[%s5151 + $0x94] sm:$0xff]
        %v5253 = vld [vmem:[%s5151 + $0xb4] sm:$0xff]
        %v5254 = vld [vmem:[%s5151 + $0xd4] sm:$0xff]
        %v5255 = vld [vmem:[%s5151 + $0xf4] sm:$0xff]
        %v5256 = vld [vmem:[%s5151 + $0x114] sm:$0xff]
        %v5257 = vld [vmem:[%s5151 + $0x134] sm:$0xff]
        %v5258 = vld [vmem:[%s5151 + $0x154] sm:$0xff]
        %v5259 = vld [vmem:[%s5151 + $0x174] sm:$0xff]
        %v5260 = vld [vmem:[%s5151 + $0x194] sm:$0xff]
        %v5261 = vld [vmem:[%s5151 + $0x1b4] sm:$0xff]
        %v5262 = vld [vmem:[%s5151 + $0x1d4] sm:$0xff]
        %v5263 = vld [vmem:[%s5151 + $0x1f4] sm:$0xff]
        %v5264 = vpack.c.bf16 %v5248, %v5153
        %v5265 = vpack.c.bf16 %v5249, %v5155
        %v5266 = vpack.c.bf16 %v5250, %v5157
        %v5267 = vpack.c.bf16 %v5251, %v5159
        %v5268 = vpack.c.bf16 %v5252, %v5161
        %v5269 = vpack.c.bf16 %v5253, %v5163
        %v5270 = vpack.c.bf16 %v5254, %v5165
        %v5271 = vpack.c.bf16 %v5255, %v5167
        %v5272 = vpack.c.bf16 %v5256, %v5169
        %v5273 = vpack.c.bf16 %v5257, %v5171
        %v5274 = vpack.c.bf16 %v5258, %v5173
        %v5275 = vpack.c.bf16 %v5259, %v5175
        %v5276 = vpack.c.bf16 %v5260, %v5177
        %v5277 = vpack.c.bf16 %v5261, %v5179
        %v5278 = vpack.c.bf16 %v5262, %v5181
        %v5279 = vpack.c.bf16 %v5263, %v5183
        %v5280 = vld [vmem:[%s768 + $0x4] sm:$0xff]
        %v5281 = vld [vmem:[%s768 + $0xc] sm:$0xff]
        %v5282 = vld [vmem:[%s768 + $0x24] sm:$0xff]
        %v5283 = vld [vmem:[%s768 + $0x2c] sm:$0xff]
        %v5284 = vld [vmem:[%s768 + $0x44] sm:$0xff]
        %v5285 = vld [vmem:[%s768 + $0x4c] sm:$0xff]
        %v5286 = vld [vmem:[%s768 + $0x64] sm:$0xff]
        %v5287 = vld [vmem:[%s768 + $0x6c] sm:$0xff]
        %v5288 = vld [vmem:[%s768 + $0x84] sm:$0xff]
        %v5289 = vld [vmem:[%s768 + $0x8c] sm:$0xff]
        %v5290 = vld [vmem:[%s768 + $0xa4] sm:$0xff]
        %v5291 = vld [vmem:[%s768 + $0xac] sm:$0xff]
        %v5292 = vld [vmem:[%s768 + $0xc4] sm:$0xff]
        %v5293 = vld [vmem:[%s768 + $0xcc] sm:$0xff]
        %v5294 = vld [vmem:[%s768 + $0xe4] sm:$0xff]
        %v5295 = vld [vmem:[%s768 + $0xec] sm:$0xff]
        %v5296 = vld [vmem:[%s768 + $0x104] sm:$0xff]
        %v5297 = vld [vmem:[%s768 + $0x10c] sm:$0xff]
        %v5298 = vld [vmem:[%s768 + $0x124] sm:$0xff]
        %v5299 = vld [vmem:[%s768 + $0x12c] sm:$0xff]
        %v5300 = vld [vmem:[%s768 + $0x144] sm:$0xff]
        %v5301 = vld [vmem:[%s768 + $0x14c] sm:$0xff]
        %v5302 = vld [vmem:[%s768 + $0x164] sm:$0xff]
        %v5303 = vld [vmem:[%s768 + $0x16c] sm:$0xff]
        %v5304 = vld [vmem:[%s768 + $0x184] sm:$0xff]
        %v5305 = vld [vmem:[%s768 + $0x18c] sm:$0xff]
        %v5306 = vld [vmem:[%s768 + $0x1a4] sm:$0xff]
        %v5307 = vld [vmem:[%s768 + $0x1ac] sm:$0xff]
        %v5308 = vld [vmem:[%s768 + $0x1c4] sm:$0xff]
        %v5309 = vld [vmem:[%s768 + $0x1cc] sm:$0xff]
        %v5310 = vld [vmem:[%s768 + $0x1e4] sm:$0xff]
        %v5311 = vld [vmem:[%s768 + $0x1ec] sm:$0xff]
        %v5312 = vpack.c.bf16 %v5281, %v5280
        %v5313 = vpack.c.bf16 %v5283, %v5282
        %v5314 = vpack.c.bf16 %v5285, %v5284
        %v5315 = vpack.c.bf16 %v5287, %v5286
        %v5316 = vpack.c.bf16 %v5289, %v5288
        %v5317 = vpack.c.bf16 %v5291, %v5290
        %v5318 = vpack.c.bf16 %v5293, %v5292
        %v5319 = vpack.c.bf16 %v5295, %v5294
        %v5320 = vpack.c.bf16 %v5297, %v5296
        %v5321 = vpack.c.bf16 %v5299, %v5298
        %v5322 = vpack.c.bf16 %v5301, %v5300
        %v5323 = vpack.c.bf16 %v5303, %v5302
        %v5324 = vpack.c.bf16 %v5305, %v5304
        %v5325 = vpack.c.bf16 %v5307, %v5306
        %v5326 = vpack.c.bf16 %v5309, %v5308
        %v5327 = vpack.c.bf16 %v5311, %v5310
        %v5328 = vld [vmem:[%s768 + $0x14] sm:$0xff]
        %v5329 = vld [vmem:[%s768 + $0x34] sm:$0xff]
        %v5330 = vld [vmem:[%s768 + $0x54] sm:$0xff]
        %v5331 = vld [vmem:[%s768 + $0x74] sm:$0xff]
        %v5332 = vld [vmem:[%s768 + $0x94] sm:$0xff]
        %v5333 = vld [vmem:[%s768 + $0xb4] sm:$0xff]
        %v5334 = vld [vmem:[%s768 + $0xd4] sm:$0xff]
        %v5335 = vld [vmem:[%s768 + $0xf4] sm:$0xff]
        %v5336 = vld [vmem:[%s768 + $0x114] sm:$0xff]
        %v5337 = vld [vmem:[%s768 + $0x134] sm:$0xff]
        %v5338 = vld [vmem:[%s768 + $0x154] sm:$0xff]
        %v5339 = vld [vmem:[%s768 + $0x174] sm:$0xff]
        %v5340 = vld [vmem:[%s768 + $0x194] sm:$0xff]
        %v5341 = vld [vmem:[%s768 + $0x1b4] sm:$0xff]
        %v5342 = vld [vmem:[%s768 + $0x1d4] sm:$0xff]
        %v5343 = vld [vmem:[%s768 + $0x1f4] sm:$0xff]
        %v5344 = vpack.c.bf16 %v5328, %v5281
        %v5345 = vpack.c.bf16 %v5329, %v5283
        %v5346 = vpack.c.bf16 %v5330, %v5285
        %v5347 = vpack.c.bf16 %v5331, %v5287
        %v5348 = vpack.c.bf16 %v5332, %v5289
        %v5349 = vpack.c.bf16 %v5333, %v5291
        %v5350 = vpack.c.bf16 %v5334, %v5293
        %v5351 = vpack.c.bf16 %v5335, %v5295
        %v5352 = vpack.c.bf16 %v5336, %v5297
        %v5353 = vpack.c.bf16 %v5337, %v5299
        %v5354 = vpack.c.bf16 %v5338, %v5301
        %v5355 = vpack.c.bf16 %v5339, %v5303
        %v5356 = vpack.c.bf16 %v5340, %v5305
        %v5357 = vpack.c.bf16 %v5341, %v5307
        %v5358 = vpack.c.bf16 %v5342, %v5309
        %v5359 = vpack.c.bf16 %v5343, %v5311
        %s5360 = scalar_lea.vmem [#allocation2], 384
        %v5361 = vld [vmem:[%s5360 + $0x4] sm:$0xff]
        %v5362 = vld [vmem:[%s5360 + $0xc] sm:$0xff]
        %v5363 = vld [vmem:[%s5360 + $0x24] sm:$0xff]
        %v5364 = vld [vmem:[%s5360 + $0x2c] sm:$0xff]
        %v5365 = vld [vmem:[%s5360 + $0x44] sm:$0xff]
        %v5366 = vld [vmem:[%s5360 + $0x4c] sm:$0xff]
        %v5367 = vld [vmem:[%s5360 + $0x64] sm:$0xff]
        %v5368 = vld [vmem:[%s5360 + $0x6c] sm:$0xff]
        %v5369 = vld [vmem:[%s5360 + $0x84] sm:$0xff]
        %v5370 = vld [vmem:[%s5360 + $0x8c] sm:$0xff]
        %v5371 = vld [vmem:[%s5360 + $0xa4] sm:$0xff]
        %v5372 = vld [vmem:[%s5360 + $0xac] sm:$0xff]
        %v5373 = vld [vmem:[%s5360 + $0xc4] sm:$0xff]
        %v5374 = vld [vmem:[%s5360 + $0xcc] sm:$0xff]
        %v5375 = vld [vmem:[%s5360 + $0xe4] sm:$0xff]
        %v5376 = vld [vmem:[%s5360 + $0xec] sm:$0xff]
        %v5377 = vld [vmem:[%s5360 + $0x104] sm:$0xff]
        %v5378 = vld [vmem:[%s5360 + $0x10c] sm:$0xff]
        %v5379 = vld [vmem:[%s5360 + $0x124] sm:$0xff]
        %v5380 = vld [vmem:[%s5360 + $0x12c] sm:$0xff]
        %v5381 = vld [vmem:[%s5360 + $0x144] sm:$0xff]
        %v5382 = vld [vmem:[%s5360 + $0x14c] sm:$0xff]
        %v5383 = vld [vmem:[%s5360 + $0x164] sm:$0xff]
        %v5384 = vld [vmem:[%s5360 + $0x16c] sm:$0xff]
        %v5385 = vld [vmem:[%s5360 + $0x184] sm:$0xff]
        %v5386 = vld [vmem:[%s5360 + $0x18c] sm:$0xff]
        %v5387 = vld [vmem:[%s5360 + $0x1a4] sm:$0xff]
        %v5388 = vld [vmem:[%s5360 + $0x1ac] sm:$0xff]
        %v5389 = vld [vmem:[%s5360 + $0x1c4] sm:$0xff]
        %v5390 = vld [vmem:[%s5360 + $0x1cc] sm:$0xff]
        %v5391 = vld [vmem:[%s5360 + $0x1e4] sm:$0xff]
        %v5392 = vld [vmem:[%s5360 + $0x1ec] sm:$0xff]
        %v5393 = vpack.c.bf16 %v5362, %v5361
        %v5394 = vpack.c.bf16 %v5364, %v5363
        %v5395 = vpack.c.bf16 %v5366, %v5365
        %v5396 = vpack.c.bf16 %v5368, %v5367
        %v5397 = vpack.c.bf16 %v5370, %v5369
        %v5398 = vpack.c.bf16 %v5372, %v5371
        %v5399 = vpack.c.bf16 %v5374, %v5373
        %v5400 = vpack.c.bf16 %v5376, %v5375
        %v5401 = vpack.c.bf16 %v5378, %v5377
        %v5402 = vpack.c.bf16 %v5380, %v5379
        %v5403 = vpack.c.bf16 %v5382, %v5381
        %v5404 = vpack.c.bf16 %v5384, %v5383
        %v5405 = vpack.c.bf16 %v5386, %v5385
        %v5406 = vpack.c.bf16 %v5388, %v5387
        %v5407 = vpack.c.bf16 %v5390, %v5389
        %v5408 = vpack.c.bf16 %v5392, %v5391
        %v5409 = vld [vmem:[%s5360 + $0x8] sm:$0xff]
        %v5410 = vld [vmem:[%s5360 + $0x10] sm:$0xff]
        %v5411 = vld [vmem:[%s5360 + $0x28] sm:$0xff]
        %v5412 = vld [vmem:[%s5360 + $0x30] sm:$0xff]
        %v5413 = vld [vmem:[%s5360 + $0x48] sm:$0xff]
        %v5414 = vld [vmem:[%s5360 + $0x50] sm:$0xff]
        %v5415 = vld [vmem:[%s5360 + $0x68] sm:$0xff]
        %v5416 = vld [vmem:[%s5360 + $0x70] sm:$0xff]
        %v5417 = vld [vmem:[%s5360 + $0x88] sm:$0xff]
        %v5418 = vld [vmem:[%s5360 + $0x90] sm:$0xff]
        %v5419 = vld [vmem:[%s5360 + $0xa8] sm:$0xff]
        %v5420 = vld [vmem:[%s5360 + $0xb0] sm:$0xff]
        %v5421 = vld [vmem:[%s5360 + $0xc8] sm:$0xff]
        %v5422 = vld [vmem:[%s5360 + $0xd0] sm:$0xff]
        %v5423 = vld [vmem:[%s5360 + $0xe8] sm:$0xff]
        %v5424 = vld [vmem:[%s5360 + $0xf0] sm:$0xff]
        %v5425 = vld [vmem:[%s5360 + $0x108] sm:$0xff]
        %v5426 = vld [vmem:[%s5360 + $0x110] sm:$0xff]
        %v5427 = vld [vmem:[%s5360 + $0x128] sm:$0xff]
        %v5428 = vld [vmem:[%s5360 + $0x130] sm:$0xff]
        %v5429 = vld [vmem:[%s5360 + $0x148] sm:$0xff]
        %v5430 = vld [vmem:[%s5360 + $0x150] sm:$0xff]
        %v5431 = vld [vmem:[%s5360 + $0x168] sm:$0xff]
        %v5432 = vld [vmem:[%s5360 + $0x170] sm:$0xff]
        %v5433 = vld [vmem:[%s5360 + $0x188] sm:$0xff]
        %v5434 = vld [vmem:[%s5360 + $0x190] sm:$0xff]
        %v5435 = vld [vmem:[%s5360 + $0x1a8] sm:$0xff]
        %v5436 = vld [vmem:[%s5360 + $0x1b0] sm:$0xff]
        %v5437 = vld [vmem:[%s5360 + $0x1c8] sm:$0xff]
        %v5438 = vld [vmem:[%s5360 + $0x1d0] sm:$0xff]
        %v5439 = vld [vmem:[%s5360 + $0x1e8] sm:$0xff]
        %v5440 = vld [vmem:[%s5360 + $0x1f0] sm:$0xff]
        %v5441 = vpack.c.bf16 %v5410, %v5409
        %v5442 = vpack.c.bf16 %v5412, %v5411
        %v5443 = vpack.c.bf16 %v5414, %v5413
        %v5444 = vpack.c.bf16 %v5416, %v5415
        %v5445 = vpack.c.bf16 %v5418, %v5417
        %v5446 = vpack.c.bf16 %v5420, %v5419
        %v5447 = vpack.c.bf16 %v5422, %v5421
        %v5448 = vpack.c.bf16 %v5424, %v5423
        %v5449 = vpack.c.bf16 %v5426, %v5425
        %v5450 = vpack.c.bf16 %v5428, %v5427
        %v5451 = vpack.c.bf16 %v5430, %v5429
        %v5452 = vpack.c.bf16 %v5432, %v5431
        %v5453 = vpack.c.bf16 %v5434, %v5433
        %v5454 = vpack.c.bf16 %v5436, %v5435
        %v5455 = vpack.c.bf16 %v5438, %v5437
        %v5456 = vpack.c.bf16 %v5440, %v5439
        %v5457 = vld [vmem:[%s5360 + $0x14] sm:$0xff]
        %v5458 = vld [vmem:[%s5360 + $0x34] sm:$0xff]
        %v5459 = vld [vmem:[%s5360 + $0x54] sm:$0xff]
        %v5460 = vld [vmem:[%s5360 + $0x74] sm:$0xff]
        %v5461 = vld [vmem:[%s5360 + $0x94] sm:$0xff]
        %v5462 = vld [vmem:[%s5360 + $0xb4] sm:$0xff]
        %v5463 = vld [vmem:[%s5360 + $0xd4] sm:$0xff]
        %v5464 = vld [vmem:[%s5360 + $0xf4] sm:$0xff]
        %v5465 = vld [vmem:[%s5360 + $0x114] sm:$0xff]
        %v5466 = vld [vmem:[%s5360 + $0x134] sm:$0xff]
        %v5467 = vld [vmem:[%s5360 + $0x154] sm:$0xff]
        %v5468 = vld [vmem:[%s5360 + $0x174] sm:$0xff]
        %v5469 = vld [vmem:[%s5360 + $0x194] sm:$0xff]
        %v5470 = vld [vmem:[%s5360 + $0x1b4] sm:$0xff]
        %v5471 = vld [vmem:[%s5360 + $0x1d4] sm:$0xff]
        %v5472 = vld [vmem:[%s5360 + $0x1f4] sm:$0xff]
        %v5473 = vpack.c.bf16 %v5457, %v5362
        %v5474 = vpack.c.bf16 %v5458, %v5364
        %v5475 = vpack.c.bf16 %v5459, %v5366
        %v5476 = vpack.c.bf16 %v5460, %v5368
        %v5477 = vpack.c.bf16 %v5461, %v5370
        %v5478 = vpack.c.bf16 %v5462, %v5372
        %v5479 = vpack.c.bf16 %v5463, %v5374
        %v5480 = vpack.c.bf16 %v5464, %v5376
        %v5481 = vpack.c.bf16 %v5465, %v5378
        %v5482 = vpack.c.bf16 %v5466, %v5380
        %v5483 = vpack.c.bf16 %v5467, %v5382
        %v5484 = vpack.c.bf16 %v5468, %v5384
        %v5485 = vpack.c.bf16 %v5469, %v5386
        %v5486 = vpack.c.bf16 %v5470, %v5388
        %v5487 = vpack.c.bf16 %v5471, %v5390
        %v5488 = vpack.c.bf16 %v5472, %v5392
        %5505 = vrot.lane.b32.xlu0 %v5232, 32
        %v5506 = vpop.permute.xlu0 %5505
        %5507 = vrot.lane.b32.xlu0 %v5233, 32
        %v5508 = vpop.permute.xlu0 %5507
        %5509 = vrot.lane.b32.xlu0 %v5234, 32
        %v5510 = vpop.permute.xlu0 %5509
        %5511 = vrot.lane.b32.xlu0 %v5235, 32
        %v5512 = vpop.permute.xlu0 %5511
        %5513 = vrot.lane.b32.xlu0 %v5236, 32
        %v5514 = vpop.permute.xlu0 %5513
        %5515 = vrot.lane.b32.xlu0 %v5237, 32
        %v5516 = vpop.permute.xlu0 %5515
        %5517 = vrot.lane.b32.xlu0 %v5238, 32
        %v5518 = vpop.permute.xlu0 %5517
        %5519 = vrot.lane.b32.xlu0 %v5239, 32
        %v5520 = vpop.permute.xlu0 %5519
        %5521 = vrot.lane.b32.xlu0 %v5240, 32
        %v5522 = vpop.permute.xlu0 %5521
        %5523 = vrot.lane.b32.xlu0 %v5241, 32
        %v5524 = vpop.permute.xlu0 %5523
        %5525 = vrot.lane.b32.xlu0 %v5242, 32
        %v5526 = vpop.permute.xlu0 %5525
        %5527 = vrot.lane.b32.xlu0 %v5243, 32
        %v5528 = vpop.permute.xlu0 %5527
        %5529 = vrot.lane.b32.xlu0 %v5244, 32
        %v5530 = vpop.permute.xlu0 %5529
        %5531 = vrot.lane.b32.xlu0 %v5245, 32
        %v5532 = vpop.permute.xlu0 %5531
        %5533 = vrot.lane.b32.xlu0 %v5246, 32
        %v5534 = vpop.permute.xlu0 %5533
        %5535 = vrot.lane.b32.xlu0 %v5247, 32
        %v5536 = vpop.permute.xlu0 %5535
        %5553 = vrot.lane.b32.xlu0 %v5264, 64
        %v5554 = vpop.permute.xlu0 %5553
        %5555 = vrot.lane.b32.xlu0 %v5265, 64
        %v5556 = vpop.permute.xlu0 %5555
        %5557 = vrot.lane.b32.xlu0 %v5266, 64
        %v5558 = vpop.permute.xlu0 %5557
        %5559 = vrot.lane.b32.xlu0 %v5267, 64
        %v5560 = vpop.permute.xlu0 %5559
        %5561 = vrot.lane.b32.xlu0 %v5268, 64
        %v5562 = vpop.permute.xlu0 %5561
        %5563 = vrot.lane.b32.xlu0 %v5269, 64
        %v5564 = vpop.permute.xlu0 %5563
        %5565 = vrot.lane.b32.xlu0 %v5270, 64
        %v5566 = vpop.permute.xlu0 %5565
        %5567 = vrot.lane.b32.xlu0 %v5271, 64
        %v5568 = vpop.permute.xlu0 %5567
        %5569 = vrot.lane.b32.xlu0 %v5272, 64
        %v5570 = vpop.permute.xlu0 %5569
        %5571 = vrot.lane.b32.xlu0 %v5273, 64
        %v5572 = vpop.permute.xlu0 %5571
        %5573 = vrot.lane.b32.xlu0 %v5274, 64
        %v5574 = vpop.permute.xlu0 %5573
        %5575 = vrot.lane.b32.xlu0 %v5275, 64
        %v5576 = vpop.permute.xlu0 %5575
        %5577 = vrot.lane.b32.xlu0 %v5276, 64
        %v5578 = vpop.permute.xlu0 %5577
        %5579 = vrot.lane.b32.xlu0 %v5277, 64
        %v5580 = vpop.permute.xlu0 %5579
        %5581 = vrot.lane.b32.xlu0 %v5278, 64
        %v5582 = vpop.permute.xlu0 %5581
        %5583 = vrot.lane.b32.xlu0 %v5279, 64
        %v5584 = vpop.permute.xlu0 %5583
        %5601 = vrot.lane.b32.xlu0 %v5312, 96
        %v5602 = vpop.permute.xlu0 %5601
        %5603 = vrot.lane.b32.xlu0 %v5313, 96
        %v5604 = vpop.permute.xlu0 %5603
        %5605 = vrot.lane.b32.xlu0 %v5314, 96
        %v5606 = vpop.permute.xlu0 %5605
        %5607 = vrot.lane.b32.xlu0 %v5315, 96
        %v5608 = vpop.permute.xlu0 %5607
        %5609 = vrot.lane.b32.xlu0 %v5316, 96
        %v5610 = vpop.permute.xlu0 %5609
        %5611 = vrot.lane.b32.xlu0 %v5317, 96
        %v5612 = vpop.permute.xlu0 %5611
        %5613 = vrot.lane.b32.xlu0 %v5318, 96
        %v5614 = vpop.permute.xlu0 %5613
        %5615 = vrot.lane.b32.xlu0 %v5319, 96
        %v5616 = vpop.permute.xlu0 %5615
        %5617 = vrot.lane.b32.xlu0 %v5320, 96
        %v5618 = vpop.permute.xlu0 %5617
        %5619 = vrot.lane.b32.xlu0 %v5321, 96
        %v5620 = vpop.permute.xlu0 %5619
        %5621 = vrot.lane.b32.xlu0 %v5322, 96
        %v5622 = vpop.permute.xlu0 %5621
        %5623 = vrot.lane.b32.xlu0 %v5323, 96
        %v5624 = vpop.permute.xlu0 %5623
        %5625 = vrot.lane.b32.xlu0 %v5324, 96
        %v5626 = vpop.permute.xlu0 %5625
        %5627 = vrot.lane.b32.xlu0 %v5325, 96
        %v5628 = vpop.permute.xlu0 %5627
        %5629 = vrot.lane.b32.xlu0 %v5326, 96
        %v5630 = vpop.permute.xlu0 %5629
        %5631 = vrot.lane.b32.xlu0 %v5327, 96
        %v5632 = vpop.permute.xlu0 %5631
        %5649 = vrot.lane.b32.xlu0 %v5344, 32
        %v5650 = vpop.permute.xlu0 %5649
        %5651 = vrot.lane.b32.xlu0 %v5345, 32
        %v5652 = vpop.permute.xlu0 %5651
        %5653 = vrot.lane.b32.xlu0 %v5346, 32
        %v5654 = vpop.permute.xlu0 %5653
        %5655 = vrot.lane.b32.xlu0 %v5347, 32
        %v5656 = vpop.permute.xlu0 %5655
        %5657 = vrot.lane.b32.xlu0 %v5348, 32
        %v5658 = vpop.permute.xlu0 %5657
        %5659 = vrot.lane.b32.xlu0 %v5349, 32
        %v5660 = vpop.permute.xlu0 %5659
        %5661 = vrot.lane.b32.xlu0 %v5350, 32
        %v5662 = vpop.permute.xlu0 %5661
        %5663 = vrot.lane.b32.xlu0 %v5351, 32
        %v5664 = vpop.permute.xlu0 %5663
        %5665 = vrot.lane.b32.xlu0 %v5352, 32
        %v5666 = vpop.permute.xlu0 %5665
        %5667 = vrot.lane.b32.xlu0 %v5353, 32
        %v5668 = vpop.permute.xlu0 %5667
        %5669 = vrot.lane.b32.xlu0 %v5354, 32
        %v5670 = vpop.permute.xlu0 %5669
        %5671 = vrot.lane.b32.xlu0 %v5355, 32
        %v5672 = vpop.permute.xlu0 %5671
        %5673 = vrot.lane.b32.xlu0 %v5356, 32
        %v5674 = vpop.permute.xlu0 %5673
        %5675 = vrot.lane.b32.xlu0 %v5357, 32
        %v5676 = vpop.permute.xlu0 %5675
        %5677 = vrot.lane.b32.xlu0 %v5358, 32
        %v5678 = vpop.permute.xlu0 %5677
        %5679 = vrot.lane.b32.xlu0 %v5359, 32
        %v5680 = vpop.permute.xlu0 %5679
        %5697 = vrot.lane.b32.xlu0 %v5393, 64
        %v5698 = vpop.permute.xlu0 %5697
        %5699 = vrot.lane.b32.xlu0 %v5394, 64
        %v5700 = vpop.permute.xlu0 %5699
        %5701 = vrot.lane.b32.xlu0 %v5395, 64
        %v5702 = vpop.permute.xlu0 %5701
        %5703 = vrot.lane.b32.xlu0 %v5396, 64
        %v5704 = vpop.permute.xlu0 %5703
        %5705 = vrot.lane.b32.xlu0 %v5397, 64
        %v5706 = vpop.permute.xlu0 %5705
        %5707 = vrot.lane.b32.xlu0 %v5398, 64
        %v5708 = vpop.permute.xlu0 %5707
        %5709 = vrot.lane.b32.xlu0 %v5399, 64
        %v5710 = vpop.permute.xlu0 %5709
        %5711 = vrot.lane.b32.xlu0 %v5400, 64
        %v5712 = vpop.permute.xlu0 %5711
        %5713 = vrot.lane.b32.xlu0 %v5401, 64
        %v5714 = vpop.permute.xlu0 %5713
        %5715 = vrot.lane.b32.xlu0 %v5402, 64
        %v5716 = vpop.permute.xlu0 %5715
        %5717 = vrot.lane.b32.xlu0 %v5403, 64
        %v5718 = vpop.permute.xlu0 %5717
        %5719 = vrot.lane.b32.xlu0 %v5404, 64
        %v5720 = vpop.permute.xlu0 %5719
        %5721 = vrot.lane.b32.xlu0 %v5405, 64
        %v5722 = vpop.permute.xlu0 %5721
        %5723 = vrot.lane.b32.xlu0 %v5406, 64
        %v5724 = vpop.permute.xlu0 %5723
        %5725 = vrot.lane.b32.xlu0 %v5407, 64
        %v5726 = vpop.permute.xlu0 %5725
        %5727 = vrot.lane.b32.xlu0 %v5408, 64
        %v5728 = vpop.permute.xlu0 %5727
        %5745 = vrot.lane.b32.xlu0 %v5441, 96
        %v5746 = vpop.permute.xlu0 %5745
        %5747 = vrot.lane.b32.xlu0 %v5442, 96
        %v5748 = vpop.permute.xlu0 %5747
        %5749 = vrot.lane.b32.xlu0 %v5443, 96
        %v5750 = vpop.permute.xlu0 %5749
        %5751 = vrot.lane.b32.xlu0 %v5444, 96
        %v5752 = vpop.permute.xlu0 %5751
        %5753 = vrot.lane.b32.xlu0 %v5445, 96
        %v5754 = vpop.permute.xlu0 %5753
        %5755 = vrot.lane.b32.xlu0 %v5446, 96
        %v5756 = vpop.permute.xlu0 %5755
        %5757 = vrot.lane.b32.xlu0 %v5447, 96
        %v5758 = vpop.permute.xlu0 %5757
        %5759 = vrot.lane.b32.xlu0 %v5448, 96
        %v5760 = vpop.permute.xlu0 %5759
        %5761 = vrot.lane.b32.xlu0 %v5449, 96
        %v5762 = vpop.permute.xlu0 %5761
        %5763 = vrot.lane.b32.xlu0 %v5450, 96
        %v5764 = vpop.permute.xlu0 %5763
        %5765 = vrot.lane.b32.xlu0 %v5451, 96
        %v5766 = vpop.permute.xlu0 %5765
        %5767 = vrot.lane.b32.xlu0 %v5452, 96
        %v5768 = vpop.permute.xlu0 %5767
        %5769 = vrot.lane.b32.xlu0 %v5453, 96
        %v5770 = vpop.permute.xlu0 %5769
        %5771 = vrot.lane.b32.xlu0 %v5454, 96
        %v5772 = vpop.permute.xlu0 %5771
        %5773 = vrot.lane.b32.xlu0 %v5455, 96
        %v5774 = vpop.permute.xlu0 %5773
        %5775 = vrot.lane.b32.xlu0 %v5456, 96
        %v5776 = vpop.permute.xlu0 %5775
        %v5779 = vsel %vm430, %v5184, %v5506
        %v5782 = vsel %vm430, %v5185, %v5508
        %v5785 = vsel %vm430, %v5186, %v5510
        %v5788 = vsel %vm430, %v5187, %v5512
        %v5791 = vsel %vm430, %v5188, %v5514
        %v5794 = vsel %vm430, %v5189, %v5516
        %v5797 = vsel %vm430, %v5190, %v5518
        %v5800 = vsel %vm430, %v5191, %v5520
        %v5803 = vsel %vm430, %v5192, %v5522
        %v5806 = vsel %vm430, %v5193, %v5524
        %v5809 = vsel %vm430, %v5194, %v5526
        %v5812 = vsel %vm430, %v5195, %v5528
        %v5815 = vsel %vm430, %v5196, %v5530
        %v5818 = vsel %vm430, %v5197, %v5532
        %v5821 = vsel %vm430, %v5198, %v5534
        %v5824 = vsel %vm430, %v5199, %v5536
        %v5826 = vsel %vm1571, %v5779, %v5554
        %v5828 = vsel %vm1571, %v5782, %v5556
        %v5830 = vsel %vm1571, %v5785, %v5558
        %v5832 = vsel %vm1571, %v5788, %v5560
        %v5834 = vsel %vm1571, %v5791, %v5562
        %v5836 = vsel %vm1571, %v5794, %v5564
        %v5838 = vsel %vm1571, %v5797, %v5566
        %v5840 = vsel %vm1571, %v5800, %v5568
        %v5842 = vsel %vm1571, %v5803, %v5570
        %v5844 = vsel %vm1571, %v5806, %v5572
        %v5846 = vsel %vm1571, %v5809, %v5574
        %v5848 = vsel %vm1571, %v5812, %v5576
        %v5850 = vsel %vm1571, %v5815, %v5578
        %v5852 = vsel %vm1571, %v5818, %v5580
        %v5854 = vsel %vm1571, %v5821, %v5582
        %v5856 = vsel %vm1571, %v5824, %v5584
        %v5858 = vsel %vm1604, %v5826, %v5602
        %v5861 = vsel %vm1604, %v5828, %v5604
        %v5864 = vsel %vm1604, %v5830, %v5606
        %v5867 = vsel %vm1604, %v5832, %v5608
        %v5870 = vsel %vm1604, %v5834, %v5610
        %v5873 = vsel %vm1604, %v5836, %v5612
        %v5876 = vsel %vm1604, %v5838, %v5614
        %v5879 = vsel %vm1604, %v5840, %v5616
        %v5882 = vsel %vm1604, %v5842, %v5618
        %v5885 = vsel %vm1604, %v5844, %v5620
        %v5888 = vsel %vm1604, %v5846, %v5622
        %v5891 = vsel %vm1604, %v5848, %v5624
        %v5894 = vsel %vm1604, %v5850, %v5626
        %v5897 = vsel %vm1604, %v5852, %v5628
        %v5900 = vsel %vm1604, %v5854, %v5630
        %v5903 = vsel %vm1604, %v5856, %v5632
        %v5906 = vsel %vm430, %v1026, %v5650
        %v5908 = vsel %vm430, %v1027, %v5652
        %v5910 = vsel %vm430, %v1028, %v5654
        %v5912 = vsel %vm430, %v1029, %v5656
        %v5914 = vsel %vm430, %v1030, %v5658
        %v5916 = vsel %vm430, %v1031, %v5660
        %v5918 = vsel %vm430, %v1032, %v5662
        %v5920 = vsel %vm430, %v1033, %v5664
        %v5922 = vsel %vm430, %v1034, %v5666
        %v5924 = vsel %vm430, %v1035, %v5668
        %v5926 = vsel %vm430, %v1036, %v5670
        %v5928 = vsel %vm430, %v1037, %v5672
        %v5930 = vsel %vm430, %v1038, %v5674
        %v5932 = vsel %vm430, %v1039, %v5676
        %v5934 = vsel %vm430, %v1040, %v5678
        %v5936 = vsel %vm430, %v1041, %v5680
        %v5938 = vsel %vm1571, %v5906, %v5698
        %v5940 = vsel %vm1571, %v5908, %v5700
        %v5942 = vsel %vm1571, %v5910, %v5702
        %v5944 = vsel %vm1571, %v5912, %v5704
        %v5946 = vsel %vm1571, %v5914, %v5706
        %v5948 = vsel %vm1571, %v5916, %v5708
        %v5950 = vsel %vm1571, %v5918, %v5710
        %v5952 = vsel %vm1571, %v5920, %v5712
        %v5954 = vsel %vm1571, %v5922, %v5714
        %v5956 = vsel %vm1571, %v5924, %v5716
        %v5958 = vsel %vm1571, %v5926, %v5718
        %v5960 = vsel %vm1571, %v5928, %v5720
        %v5962 = vsel %vm1571, %v5930, %v5722
        %v5964 = vsel %vm1571, %v5932, %v5724
        %v5966 = vsel %vm1571, %v5934, %v5726
        %v5968 = vsel %vm1571, %v5936, %v5728
        %v5970 = vsel %vm1604, %v5938, %v5746
        %v5973 = vsel %vm1604, %v5940, %v5748
        %v5976 = vsel %vm1604, %v5942, %v5750
        %v5979 = vsel %vm1604, %v5944, %v5752
        %v5982 = vsel %vm1604, %v5946, %v5754
        %v5985 = vsel %vm1604, %v5948, %v5756
        %v5988 = vsel %vm1604, %v5950, %v5758
        %v5991 = vsel %vm1604, %v5952, %v5760
        %v5994 = vsel %vm1604, %v5954, %v5762
        %v5997 = vsel %vm1604, %v5956, %v5764
        %v6000 = vsel %vm1604, %v5958, %v5766
        %v6003 = vsel %vm1604, %v5960, %v5768
        %v6006 = vsel %vm1604, %v5962, %v5770
        %v6009 = vsel %vm1604, %v5964, %v5772
        %v6012 = vsel %vm1604, %v5966, %v5774
        %v6015 = vsel %vm1604, %v5968, %v5776
        %v6017 = vld [vmem:[%s6] sm:$0xf]
        %v6018 = vld [vmem:[%s6 + $0x4] sm:$0xf]
        %v6019 = vld [vmem:[%s6 + $0x8] sm:$0xf]
        %v6020 = vld [vmem:[%s6 + $0xc] sm:$0xf]
        %v6021 = vld [vmem:[%s6 + $0x10] sm:$0xf]
        %v6022 = vld [vmem:[%s6 + $0x14] sm:$0xf]
        %v6023 = vld [vmem:[%s6 + $0x18] sm:$0xf]
        %v6024 = vld [vmem:[%s6 + $0x1c] sm:$0xf]
        %v6025 = vld [vmem:[%s6 + $0x20] sm:$0xf]
        %v6026 = vld [vmem:[%s6 + $0x24] sm:$0xf]
        %v6027 = vld [vmem:[%s6 + $0x28] sm:$0xf]
        %v6028 = vld [vmem:[%s6 + $0x2c] sm:$0xf]
        %v6029 = vld [vmem:[%s6 + $0x30] sm:$0xf]
        %v6030 = vld [vmem:[%s6 + $0x34] sm:$0xf]
        %v6031 = vld [vmem:[%s6 + $0x38] sm:$0xf]
        %v6032 = vld [vmem:[%s6 + $0x3c] sm:$0xf]
        %v6033 = vld [vmem:[%s6 + $0x40] sm:$0xf]
        %v6034 = vld [vmem:[%s6 + $0x44] sm:$0xf]
        %v6035 = vld [vmem:[%s6 + $0x48] sm:$0xf]
        %v6036 = vld [vmem:[%s6 + $0x4c] sm:$0xf]
        %v6037 = vld [vmem:[%s6 + $0x50] sm:$0xf]
        %v6038 = vld [vmem:[%s6 + $0x54] sm:$0xf]
        %v6039 = vld [vmem:[%s6 + $0x58] sm:$0xf]
        %v6040 = vld [vmem:[%s6 + $0x5c] sm:$0xf]
        %v6041 = vld [vmem:[%s6 + $0x60] sm:$0xf]
        %v6042 = vld [vmem:[%s6 + $0x64] sm:$0xf]
        %v6043 = vld [vmem:[%s6 + $0x68] sm:$0xf]
        %v6044 = vld [vmem:[%s6 + $0x6c] sm:$0xf]
        %v6045 = vld [vmem:[%s6 + $0x70] sm:$0xf]
        %v6046 = vld [vmem:[%s6 + $0x74] sm:$0xf]
        %v6047 = vld [vmem:[%s6 + $0x78] sm:$0xf]
        %v6048 = vld [vmem:[%s6 + $0x7c] sm:$0xf]
        %v6049 = vld [vmem:[%s6 + $0x80] sm:$0xf]
        %v6050 = vld [vmem:[%s6 + $0x84] sm:$0xf]
        %v6051 = vld [vmem:[%s6 + $0x88] sm:$0xf]
        %v6052 = vld [vmem:[%s6 + $0x8c] sm:$0xf]
        %v6089 = vunpack.c.l.b16 %v6017
        %v6090 = vunpack.c.l.b16 %v6018
        %v6091 = vunpack.c.l.b16 %v6019
        %v6092 = vunpack.c.l.b16 %v6020
        %v6093 = vunpack.c.l.b16 %v6021
        %v6094 = vunpack.c.l.b16 %v6022
        %v6095 = vunpack.c.l.b16 %v6023
        %v6096 = vunpack.c.l.b16 %v6024
        %v6097 = vunpack.c.l.b16 %v6025
        %v6098 = vunpack.c.l.b16 %v6026
        %v6099 = vunpack.c.l.b16 %v6027
        %v6100 = vunpack.c.l.b16 %v6028
        %v6101 = vunpack.c.l.b16 %v6029
        %v6102 = vunpack.c.l.b16 %v6030
        %v6103 = vunpack.c.l.b16 %v6031
        %v6104 = vunpack.c.l.b16 %v6032
        %v6105 = vunpack.c.l.b16 %v6033
        %v6106 = vunpack.c.l.b16 %v6034
        %v6107 = vunpack.c.l.b16 %v6035
        %v6108 = vunpack.c.l.b16 %v6036
        %v6109 = vunpack.c.l.b16 %v6037
        %v6110 = vunpack.c.l.b16 %v6038
        %v6111 = vunpack.c.l.b16 %v6039
        %v6112 = vunpack.c.l.b16 %v6040
        %v6113 = vunpack.c.l.b16 %v6041
        %v6114 = vunpack.c.l.b16 %v6042
        %v6115 = vunpack.c.l.b16 %v6043
        %v6116 = vunpack.c.l.b16 %v6044
        %v6117 = vunpack.c.l.b16 %v6045
        %v6118 = vunpack.c.l.b16 %v6046
        %v6119 = vunpack.c.l.b16 %v6047
        %v6120 = vunpack.c.l.b16 %v6048
        %v6121 = vunpack.c.l.b16 %v6049
        %v6122 = vunpack.c.l.b16 %v6050
        %v6123 = vunpack.c.l.b16 %v6051
        %v6124 = vunpack.c.l.b16 %v6052
        %v6125 = vpack.c.b16 %v6090, %v6089
        %v6126 = vpack.c.b16 %v6092, %v6091
        %v6127 = vpack.c.b16 %v6094, %v6093
        %v6128 = vpack.c.b16 %v6096, %v6095
        %v6129 = vpack.c.b16 %v6098, %v6097
        %v6130 = vpack.c.b16 %v6100, %v6099
        %v6131 = vpack.c.b16 %v6102, %v6101
        %v6132 = vpack.c.b16 %v6104, %v6103
        %v6133 = vpack.c.b16 %v6106, %v6105
        %v6134 = vpack.c.b16 %v6108, %v6107
        %v6135 = vpack.c.b16 %v6110, %v6109
        %v6136 = vpack.c.b16 %v6112, %v6111
        %v6137 = vpack.c.b16 %v6114, %v6113
        %v6138 = vpack.c.b16 %v6116, %v6115
        %v6139 = vpack.c.b16 %v6118, %v6117
        %v6140 = vpack.c.b16 %v6120, %v6119
        %v6141 = vpack.c.b16 %v6122, %v6121
        %v6142 = vpack.c.b16 %v6124, %v6123
        %v6162 = vsel %vm430, %v5473, 0
        %v6165 = vsel %vm430, %v5474, 0
        %v6168 = vsel %vm430, %v5475, 0
        %v6171 = vsel %vm430, %v5476, 0
        %v6174 = vsel %vm430, %v5477, 0
        %v6177 = vsel %vm430, %v5478, 0
        %v6180 = vsel %vm430, %v5479, 0
        %v6183 = vsel %vm430, %v5480, 0
        %v6186 = vsel %vm430, %v5481, 0
        %v6189 = vsel %vm430, %v5482, 0
        %v6192 = vsel %vm430, %v5483, 0
        %v6195 = vsel %vm430, %v5484, 0
        %v6198 = vsel %vm430, %v5485, 0
        %v6201 = vsel %vm430, %v5486, 0
        %v6204 = vsel %vm430, %v5487, 0
        %v6207 = vsel %vm430, %v5488, 0
        %6209 = vmatprep.subr.bf16.mxu0 0
        %6210 = vmatpush1.bf16.msra.mxu0 %v6132
        %6211 = vmatprep.subr.bf16.mxu0 0
        %6212 = vmatpush1.bf16.msra.mxu0 %v6131
        %6213 = vmatprep.subr.bf16.mxu0 0
        %6214 = vmatpush1.bf16.msra.mxu0 %v6130
        %6215 = vmatprep.subr.bf16.mxu0 0
        %6216 = vmatpush1.bf16.msra.mxu0 %v6129
        %6217 = vmatprep.subr.bf16.mxu0 0
        %6218 = vmatpush1.bf16.msra.mxu0 %v6128
        %6219 = vmatprep.subr.bf16.mxu0 0
        %6220 = vmatpush1.bf16.msra.mxu0 %v6127
        %6221 = vmatprep.subr.bf16.mxu0 0
        %6222 = vmatpush1.bf16.msra.mxu0 %v6126
        %6223 = vmatprep.subr.bf16.mxu0 0
        %6224 = vmatpush1.bf16.msra.mxu0 %v6125
        %6225 = vmatprep.subr.bf16.mxu0 0
        %6226 = vmatpush2.bf16.msra.mxu0 %v6140
        %6227 = vmatprep.subr.bf16.mxu0 0
        %6228 = vmatpush2.bf16.msra.mxu0 %v6139
        %6229 = vmatprep.subr.bf16.mxu0 0
        %6230 = vmatpush2.bf16.msra.mxu0 %v6138
        %6231 = vmatprep.subr.bf16.mxu0 0
        %6232 = vmatpush2.bf16.msra.mxu0 %v6137
        %6233 = vmatprep.subr.bf16.mxu0 0
        %6234 = vmatpush2.bf16.msra.mxu0 %v6136
        %6235 = vmatprep.subr.bf16.mxu0 0
        %6236 = vmatpush2.bf16.msra.mxu0 %v6135
        %6237 = vmatprep.subr.bf16.mxu0 0
        %6238 = vmatpush2.bf16.msra.mxu0 %v6134
        %6239 = vmatprep.subr.bf16.mxu0 0
        %6240 = vmatpush2.bf16.msra.mxu0 %v6133
        %6241 = vmatprep.mubr.bf16.mxu0 %v5970
        %6242 = vmatmul.mubr.bf16.gmra.mxu0 %v5858
        %v6243 = vpop.f32.mrf.mxu0
        %v6244 = vadd.f32 0.0, %v6243
        %v6245 = vpop.f32.mrf.mxu0
        %v6246 = vpop.f32.mrf.mxu0
        %v6247 = vadd.f32 0.0, %v6246
        %v6248 = vpop.f32.mrf.mxu0
        %6249 = vmatprep.mubr.bf16.mxu0 %v5973
        %6250 = vmatmul.mubr.bf16.gmra.mxu0 %v5861
        %v6251 = vpop.f32.mrf.mxu0
        %v6252 = vadd.f32 0.0, %v6251
        %v6253 = vpop.f32.mrf.mxu0
        %v6254 = vpop.f32.mrf.mxu0
        %v6255 = vadd.f32 0.0, %v6254
        %v6256 = vpop.f32.mrf.mxu0
        %6257 = vmatprep.mubr.bf16.mxu0 %v5976
        %6258 = vmatmul.mubr.bf16.gmra.mxu0 %v5864
        %v6259 = vpop.f32.mrf.mxu0
        %v6260 = vadd.f32 0.0, %v6259
        %v6261 = vpop.f32.mrf.mxu0
        %v6262 = vpop.f32.mrf.mxu0
        %v6263 = vadd.f32 0.0, %v6262
        %v6264 = vpop.f32.mrf.mxu0
        %6265 = vmatprep.mubr.bf16.mxu0 %v5979
        %6266 = vmatmul.mubr.bf16.gmra.mxu0 %v5867
        %v6267 = vpop.f32.mrf.mxu0
        %v6268 = vadd.f32 0.0, %v6267
        %v6269 = vpop.f32.mrf.mxu0
        %v6270 = vpop.f32.mrf.mxu0
        %v6271 = vadd.f32 0.0, %v6270
        %v6272 = vpop.f32.mrf.mxu0
        %6273 = vmatprep.mubr.bf16.mxu0 %v5982
        %6274 = vmatmul.mubr.bf16.gmra.mxu0 %v5870
        %v6275 = vpop.f32.mrf.mxu0
        %v6276 = vadd.f32 0.0, %v6275
        %v6277 = vpop.f32.mrf.mxu0
        %v6278 = vpop.f32.mrf.mxu0
        %v6279 = vadd.f32 0.0, %v6278
        %v6280 = vpop.f32.mrf.mxu0
        %6281 = vmatprep.mubr.bf16.mxu0 %v5985
        %6282 = vmatmul.mubr.bf16.gmra.mxu0 %v5873
        %v6283 = vpop.f32.mrf.mxu0
        %v6284 = vadd.f32 0.0, %v6283
        %v6285 = vpop.f32.mrf.mxu0
        %v6286 = vpop.f32.mrf.mxu0
        %v6287 = vadd.f32 0.0, %v6286
        %v6288 = vpop.f32.mrf.mxu0
        %6289 = vmatprep.mubr.bf16.mxu0 %v5988
        %6290 = vmatmul.mubr.bf16.gmra.mxu0 %v5876
        %v6291 = vpop.f32.mrf.mxu0
        %v6292 = vadd.f32 0.0, %v6291
        %v6293 = vpop.f32.mrf.mxu0
        %v6294 = vpop.f32.mrf.mxu0
        %v6295 = vadd.f32 0.0, %v6294
        %v6296 = vpop.f32.mrf.mxu0
        %6297 = vmatprep.mubr.bf16.mxu0 %v5991
        %6298 = vmatmul.mubr.bf16.gmra.mxu0 %v5879
        %v6299 = vpop.f32.mrf.mxu0
        %v6300 = vadd.f32 0.0, %v6299
        %v6301 = vpop.f32.mrf.mxu0
        %v6302 = vpop.f32.mrf.mxu0
        %v6303 = vadd.f32 0.0, %v6302
        %v6304 = vpop.f32.mrf.mxu0
        %6305 = vmatprep.mubr.bf16.mxu0 %v5994
        %6306 = vmatmul.mubr.bf16.gmra.mxu0 %v5882
        %v6307 = vpop.f32.mrf.mxu0
        %v6308 = vadd.f32 0.0, %v6307
        %v6309 = vpop.f32.mrf.mxu0
        %v6310 = vpop.f32.mrf.mxu0
        %v6311 = vadd.f32 0.0, %v6310
        %v6312 = vpop.f32.mrf.mxu0
        %6313 = vmatprep.mubr.bf16.mxu0 %v5997
        %6314 = vmatmul.mubr.bf16.gmra.mxu0 %v5885
        %v6315 = vpop.f32.mrf.mxu0
        %v6316 = vadd.f32 0.0, %v6315
        %v6317 = vpop.f32.mrf.mxu0
        %v6318 = vpop.f32.mrf.mxu0
        %v6319 = vadd.f32 0.0, %v6318
        %v6320 = vpop.f32.mrf.mxu0
        %6321 = vmatprep.mubr.bf16.mxu0 %v6000
        %6322 = vmatmul.mubr.bf16.gmra.mxu0 %v5888
        %v6323 = vpop.f32.mrf.mxu0
        %v6324 = vadd.f32 0.0, %v6323
        %v6325 = vpop.f32.mrf.mxu0
        %v6326 = vpop.f32.mrf.mxu0
        %v6327 = vadd.f32 0.0, %v6326
        %v6328 = vpop.f32.mrf.mxu0
        %6329 = vmatprep.mubr.bf16.mxu0 %v6003
        %6330 = vmatmul.mubr.bf16.gmra.mxu0 %v5891
        %v6331 = vpop.f32.mrf.mxu0
        %v6332 = vadd.f32 0.0, %v6331
        %v6333 = vpop.f32.mrf.mxu0
        %v6334 = vpop.f32.mrf.mxu0
        %v6335 = vadd.f32 0.0, %v6334
        %v6336 = vpop.f32.mrf.mxu0
        %6337 = vmatprep.mubr.bf16.mxu0 %v6006
        %6338 = vmatmul.mubr.bf16.gmra.mxu0 %v5894
        %v6339 = vpop.f32.mrf.mxu0
        %v6340 = vadd.f32 0.0, %v6339
        %v6341 = vpop.f32.mrf.mxu0
        %v6342 = vpop.f32.mrf.mxu0
        %v6343 = vadd.f32 0.0, %v6342
        %v6344 = vpop.f32.mrf.mxu0
        %6345 = vmatprep.mubr.bf16.mxu0 %v6009
        %6346 = vmatmul.mubr.bf16.gmra.mxu0 %v5897
        %v6347 = vpop.f32.mrf.mxu0
        %v6348 = vadd.f32 0.0, %v6347
        %v6349 = vpop.f32.mrf.mxu0
        %v6350 = vpop.f32.mrf.mxu0
        %v6351 = vadd.f32 0.0, %v6350
        %v6352 = vpop.f32.mrf.mxu0
        %6353 = vmatprep.mubr.bf16.mxu0 %v6012
        %6354 = vmatmul.mubr.bf16.gmra.mxu0 %v5900
        %v6355 = vpop.f32.mrf.mxu0
        %v6356 = vadd.f32 0.0, %v6355
        %v6357 = vpop.f32.mrf.mxu0
        %v6358 = vpop.f32.mrf.mxu0
        %v6359 = vadd.f32 0.0, %v6358
        %v6360 = vpop.f32.mrf.mxu0
        %6361 = vmatprep.mubr.bf16.mxu0 %v6015
        %6362 = vmatmul.mubr.bf16.gmra.mxu0 %v5903
        %v6363 = vpop.f32.mrf.mxu0
        %v6364 = vadd.f32 0.0, %v6363
        %v6365 = vpop.f32.mrf.mxu0
        %v6366 = vpop.f32.mrf.mxu0
        %v6367 = vadd.f32 0.0, %v6366
        %v6368 = vpop.f32.mrf.mxu0
        %6369 = vdwg.mxu0
        %6370 = vmatprep.subr.bf16.mxu0 0
        %6371 = vmatpush1.bf16.msra.mxu0 0
        %6372 = vmatprep.subr.bf16.mxu0 0
        %6373 = vmatpush1.bf16.msra.mxu0 0
        %6374 = vmatprep.subr.bf16.mxu0 0
        %6375 = vmatpush1.bf16.msra.mxu0 0
        %6376 = vmatprep.subr.bf16.mxu0 0
        %6377 = vmatpush1.bf16.msra.mxu0 0
        %6378 = vmatprep.subr.bf16.mxu0 0
        %6379 = vmatpush1.bf16.msra.mxu0 0
        %6380 = vmatprep.subr.bf16.mxu0 0
        %6381 = vmatpush1.bf16.msra.mxu0 0
        %6382 = vmatprep.subr.bf16.mxu0 0
        %6383 = vmatpush1.bf16.msra.mxu0 %v6142
        %6384 = vmatprep.subr.bf16.mxu0 0
        %6385 = vmatpush1.bf16.msra.mxu0 %v6141
        %6386 = vmatprep.subr.bf16.mxu0 0
        %6387 = vmatpush2.bf16.msra.mxu0 0
        %6388 = vmatprep.subr.bf16.mxu0 0
        %6389 = vmatpush2.bf16.msra.mxu0 0
        %6390 = vmatprep.subr.bf16.mxu0 0
        %6391 = vmatpush2.bf16.msra.mxu0 0
        %6392 = vmatprep.subr.bf16.mxu0 0
        %6393 = vmatpush2.bf16.msra.mxu0 0
        %6394 = vmatprep.subr.bf16.mxu0 0
        %6395 = vmatpush2.bf16.msra.mxu0 0
        %6396 = vmatprep.subr.bf16.mxu0 0
        %6397 = vmatpush2.bf16.msra.mxu0 0
        %6398 = vmatprep.subr.bf16.mxu0 0
        %6399 = vmatpush2.bf16.msra.mxu0 0
        %6400 = vmatprep.subr.bf16.mxu0 0
        %6401 = vmatpush2.bf16.msra.mxu0 0
        %6402 = vmatprep.mubr.bf16.mxu0 0
        %6403 = vmatmul.mubr.bf16.gmra.mxu0 %v6162
        %v6404 = vpop.f32.mrf.mxu0
        %v6405 = vadd.f32 %v6244, %v6404
        %v6406 = vpop.f32.mrf.mxu0
        %v6407 = vpop.f32.mrf.mxu0
        %v6408 = vadd.f32 %v6247, %v6407
        %v6409 = vpop.f32.mrf.mxu0
        %6410 = vmatprep.mubr.bf16.mxu0 0
        %6411 = vmatmul.mubr.bf16.gmra.mxu0 %v6165
        %v6412 = vpop.f32.mrf.mxu0
        %v6413 = vadd.f32 %v6252, %v6412
        %v6414 = vpop.f32.mrf.mxu0
        %v6415 = vpop.f32.mrf.mxu0
        %v6416 = vadd.f32 %v6255, %v6415
        %v6417 = vpop.f32.mrf.mxu0
        %6418 = vmatprep.mubr.bf16.mxu0 0
        %6419 = vmatmul.mubr.bf16.gmra.mxu0 %v6168
        %v6420 = vpop.f32.mrf.mxu0
        %v6421 = vadd.f32 %v6260, %v6420
        %v6422 = vpop.f32.mrf.mxu0
        %v6423 = vpop.f32.mrf.mxu0
        %v6424 = vadd.f32 %v6263, %v6423
        %v6425 = vpop.f32.mrf.mxu0
        %6426 = vmatprep.mubr.bf16.mxu0 0
        %6427 = vmatmul.mubr.bf16.gmra.mxu0 %v6171
        %v6428 = vpop.f32.mrf.mxu0
        %v6429 = vadd.f32 %v6268, %v6428
        %v6430 = vpop.f32.mrf.mxu0
        %v6431 = vpop.f32.mrf.mxu0
        %v6432 = vadd.f32 %v6271, %v6431
        %v6433 = vpop.f32.mrf.mxu0
        %6434 = vmatprep.mubr.bf16.mxu0 0
        %6435 = vmatmul.mubr.bf16.gmra.mxu0 %v6174
        %v6436 = vpop.f32.mrf.mxu0
        %v6437 = vadd.f32 %v6276, %v6436
        %v6438 = vpop.f32.mrf.mxu0
        %v6439 = vpop.f32.mrf.mxu0
        %v6440 = vadd.f32 %v6279, %v6439
        %v6441 = vpop.f32.mrf.mxu0
        %6442 = vmatprep.mubr.bf16.mxu0 0
        %6443 = vmatmul.mubr.bf16.gmra.mxu0 %v6177
        %v6444 = vpop.f32.mrf.mxu0
        %v6445 = vadd.f32 %v6284, %v6444
        %v6446 = vpop.f32.mrf.mxu0
        %v6447 = vpop.f32.mrf.mxu0
        %v6448 = vadd.f32 %v6287, %v6447
        %v6449 = vpop.f32.mrf.mxu0
        %6450 = vmatprep.mubr.bf16.mxu0 0
        %6451 = vmatmul.mubr.bf16.gmra.mxu0 %v6180
        %v6452 = vpop.f32.mrf.mxu0
        %v6453 = vadd.f32 %v6292, %v6452
        %v6454 = vpop.f32.mrf.mxu0
        %v6455 = vpop.f32.mrf.mxu0
        %v6456 = vadd.f32 %v6295, %v6455
        %v6457 = vpop.f32.mrf.mxu0
        %6458 = vmatprep.mubr.bf16.mxu0 0
        %6459 = vmatmul.mubr.bf16.gmra.mxu0 %v6183
        %v6460 = vpop.f32.mrf.mxu0
        %v6461 = vadd.f32 %v6300, %v6460
        %v6462 = vpop.f32.mrf.mxu0
        %v6463 = vpop.f32.mrf.mxu0
        %v6464 = vadd.f32 %v6303, %v6463
        %v6465 = vpop.f32.mrf.mxu0
        %6466 = vmatprep.mubr.bf16.mxu0 0
        %6467 = vmatmul.mubr.bf16.gmra.mxu0 %v6186
        %v6468 = vpop.f32.mrf.mxu0
        %v6469 = vadd.f32 %v6308, %v6468
        %v6470 = vpop.f32.mrf.mxu0
        %v6471 = vpop.f32.mrf.mxu0
        %v6472 = vadd.f32 %v6311, %v6471
        %v6473 = vpop.f32.mrf.mxu0
        %6474 = vmatprep.mubr.bf16.mxu0 0
        %6475 = vmatmul.mubr.bf16.gmra.mxu0 %v6189
        %v6476 = vpop.f32.mrf.mxu0
        %v6477 = vadd.f32 %v6316, %v6476
        %v6478 = vpop.f32.mrf.mxu0
        %v6479 = vpop.f32.mrf.mxu0
        %v6480 = vadd.f32 %v6319, %v6479
        %v6481 = vpop.f32.mrf.mxu0
        %6482 = vmatprep.mubr.bf16.mxu0 0
        %6483 = vmatmul.mubr.bf16.gmra.mxu0 %v6192
        %v6484 = vpop.f32.mrf.mxu0
        %v6485 = vadd.f32 %v6324, %v6484
        %v6486 = vpop.f32.mrf.mxu0
        %v6487 = vpop.f32.mrf.mxu0
        %v6488 = vadd.f32 %v6327, %v6487
        %v6489 = vpop.f32.mrf.mxu0
        %6490 = vmatprep.mubr.bf16.mxu0 0
        %6491 = vmatmul.mubr.bf16.gmra.mxu0 %v6195
        %v6492 = vpop.f32.mrf.mxu0
        %v6493 = vadd.f32 %v6332, %v6492
        %v6494 = vpop.f32.mrf.mxu0
        %v6495 = vpop.f32.mrf.mxu0
        %v6496 = vadd.f32 %v6335, %v6495
        %v6497 = vpop.f32.mrf.mxu0
        %6498 = vmatprep.mubr.bf16.mxu0 0
        %6499 = vmatmul.mubr.bf16.gmra.mxu0 %v6198
        %v6500 = vpop.f32.mrf.mxu0
        %v6501 = vadd.f32 %v6340, %v6500
        %v6502 = vpop.f32.mrf.mxu0
        %v6503 = vpop.f32.mrf.mxu0
        %v6504 = vadd.f32 %v6343, %v6503
        %v6505 = vpop.f32.mrf.mxu0
        %6506 = vmatprep.mubr.bf16.mxu0 0
        %6507 = vmatmul.mubr.bf16.gmra.mxu0 %v6201
        %v6508 = vpop.f32.mrf.mxu0
        %v6509 = vadd.f32 %v6348, %v6508
        %v6510 = vpop.f32.mrf.mxu0
        %v6511 = vpop.f32.mrf.mxu0
        %v6512 = vadd.f32 %v6351, %v6511
        %v6513 = vpop.f32.mrf.mxu0
        %6514 = vmatprep.mubr.bf16.mxu0 0
        %6515 = vmatmul.mubr.bf16.gmra.mxu0 %v6204
        %v6516 = vpop.f32.mrf.mxu0
        %v6517 = vadd.f32 %v6356, %v6516
        %v6518 = vpop.f32.mrf.mxu0
        %v6519 = vpop.f32.mrf.mxu0
        %v6520 = vadd.f32 %v6359, %v6519
        %v6521 = vpop.f32.mrf.mxu0
        %6522 = vmatprep.mubr.bf16.mxu0 0
        %6523 = vmatmul.mubr.bf16.gmra.mxu0 %v6207
        %v6524 = vpop.f32.mrf.mxu0
        %v6525 = vadd.f32 %v6364, %v6524
        %v6526 = vpop.f32.mrf.mxu0
        %v6527 = vpop.f32.mrf.mxu0
        %v6528 = vadd.f32 %v6367, %v6527
        %v6529 = vpop.f32.mrf.mxu0
        %6530 = vdwg.mxu0
        %6563 = vrot.lane.b32.xlu0 %v3597, 32
        %v6564 = vpop.permute.xlu0 %6563
        %6565 = vrot.lane.b32.xlu0 %v3600, 32
        %v6566 = vpop.permute.xlu0 %6565
        %6567 = vrot.lane.b32.xlu0 %v3605, 32
        %v6568 = vpop.permute.xlu0 %6567
        %6569 = vrot.lane.b32.xlu0 %v3608, 32
        %v6570 = vpop.permute.xlu0 %6569
        %6571 = vrot.lane.b32.xlu0 %v3613, 32
        %v6572 = vpop.permute.xlu0 %6571
        %6573 = vrot.lane.b32.xlu0 %v3616, 32
        %v6574 = vpop.permute.xlu0 %6573
        %6575 = vrot.lane.b32.xlu0 %v3621, 32
        %v6576 = vpop.permute.xlu0 %6575
        %6577 = vrot.lane.b32.xlu0 %v3624, 32
        %v6578 = vpop.permute.xlu0 %6577
        %6579 = vrot.lane.b32.xlu0 %v3629, 32
        %v6580 = vpop.permute.xlu0 %6579
        %6581 = vrot.lane.b32.xlu0 %v3632, 32
        %v6582 = vpop.permute.xlu0 %6581
        %6583 = vrot.lane.b32.xlu0 %v3637, 32
        %v6584 = vpop.permute.xlu0 %6583
        %6585 = vrot.lane.b32.xlu0 %v3640, 32
        %v6586 = vpop.permute.xlu0 %6585
        %6587 = vrot.lane.b32.xlu0 %v3645, 32
        %v6588 = vpop.permute.xlu0 %6587
        %6589 = vrot.lane.b32.xlu0 %v3648, 32
        %v6590 = vpop.permute.xlu0 %6589
        %6591 = vrot.lane.b32.xlu0 %v3653, 32
        %v6592 = vpop.permute.xlu0 %6591
        %6593 = vrot.lane.b32.xlu0 %v3656, 32
        %v6594 = vpop.permute.xlu0 %6593
        %6595 = vrot.lane.b32.xlu0 %v3661, 32
        %v6596 = vpop.permute.xlu0 %6595
        %6597 = vrot.lane.b32.xlu0 %v3664, 32
        %v6598 = vpop.permute.xlu0 %6597
        %6599 = vrot.lane.b32.xlu0 %v3669, 32
        %v6600 = vpop.permute.xlu0 %6599
        %6601 = vrot.lane.b32.xlu0 %v3672, 32
        %v6602 = vpop.permute.xlu0 %6601
        %6603 = vrot.lane.b32.xlu0 %v3677, 32
        %v6604 = vpop.permute.xlu0 %6603
        %6605 = vrot.lane.b32.xlu0 %v3680, 32
        %v6606 = vpop.permute.xlu0 %6605
        %6607 = vrot.lane.b32.xlu0 %v3685, 32
        %v6608 = vpop.permute.xlu0 %6607
        %6609 = vrot.lane.b32.xlu0 %v3688, 32
        %v6610 = vpop.permute.xlu0 %6609
        %6611 = vrot.lane.b32.xlu0 %v3693, 32
        %v6612 = vpop.permute.xlu0 %6611
        %6613 = vrot.lane.b32.xlu0 %v3696, 32
        %v6614 = vpop.permute.xlu0 %6613
        %6615 = vrot.lane.b32.xlu0 %v3701, 32
        %v6616 = vpop.permute.xlu0 %6615
        %6617 = vrot.lane.b32.xlu0 %v3704, 32
        %v6618 = vpop.permute.xlu0 %6617
        %6619 = vrot.lane.b32.xlu0 %v3709, 32
        %v6620 = vpop.permute.xlu0 %6619
        %6621 = vrot.lane.b32.xlu0 %v3712, 32
        %v6622 = vpop.permute.xlu0 %6621
        %6623 = vrot.lane.b32.xlu0 %v3717, 32
        %v6624 = vpop.permute.xlu0 %6623
        %6625 = vrot.lane.b32.xlu0 %v3720, 32
        %v6626 = vpop.permute.xlu0 %6625
        %6691 = vrot.lane.b32.xlu0 %v5025, 64
        %v6692 = vpop.permute.xlu0 %6691
        %6693 = vrot.lane.b32.xlu0 %v5028, 64
        %v6694 = vpop.permute.xlu0 %6693
        %6695 = vrot.lane.b32.xlu0 %v5033, 64
        %v6696 = vpop.permute.xlu0 %6695
        %6697 = vrot.lane.b32.xlu0 %v5036, 64
        %v6698 = vpop.permute.xlu0 %6697
        %6699 = vrot.lane.b32.xlu0 %v5041, 64
        %v6700 = vpop.permute.xlu0 %6699
        %6701 = vrot.lane.b32.xlu0 %v5044, 64
        %v6702 = vpop.permute.xlu0 %6701
        %6703 = vrot.lane.b32.xlu0 %v5049, 64
        %v6704 = vpop.permute.xlu0 %6703
        %6705 = vrot.lane.b32.xlu0 %v5052, 64
        %v6706 = vpop.permute.xlu0 %6705
        %6707 = vrot.lane.b32.xlu0 %v5057, 64
        %v6708 = vpop.permute.xlu0 %6707
        %6709 = vrot.lane.b32.xlu0 %v5060, 64
        %v6710 = vpop.permute.xlu0 %6709
        %6711 = vrot.lane.b32.xlu0 %v5065, 64
        %v6712 = vpop.permute.xlu0 %6711
        %6713 = vrot.lane.b32.xlu0 %v5068, 64
        %v6714 = vpop.permute.xlu0 %6713
        %6715 = vrot.lane.b32.xlu0 %v5073, 64
        %v6716 = vpop.permute.xlu0 %6715
        %6717 = vrot.lane.b32.xlu0 %v5076, 64
        %v6718 = vpop.permute.xlu0 %6717
        %6719 = vrot.lane.b32.xlu0 %v5081, 64
        %v6720 = vpop.permute.xlu0 %6719
        %6721 = vrot.lane.b32.xlu0 %v5084, 64
        %v6722 = vpop.permute.xlu0 %6721
        %6723 = vrot.lane.b32.xlu0 %v5089, 64
        %v6724 = vpop.permute.xlu0 %6723
        %6725 = vrot.lane.b32.xlu0 %v5092, 64
        %v6726 = vpop.permute.xlu0 %6725
        %6727 = vrot.lane.b32.xlu0 %v5097, 64
        %v6728 = vpop.permute.xlu0 %6727
        %6729 = vrot.lane.b32.xlu0 %v5100, 64
        %v6730 = vpop.permute.xlu0 %6729
        %6731 = vrot.lane.b32.xlu0 %v5105, 64
        %v6732 = vpop.permute.xlu0 %6731
        %6733 = vrot.lane.b32.xlu0 %v5108, 64
        %v6734 = vpop.permute.xlu0 %6733
        %6735 = vrot.lane.b32.xlu0 %v5113, 64
        %v6736 = vpop.permute.xlu0 %6735
        %6737 = vrot.lane.b32.xlu0 %v5116, 64
        %v6738 = vpop.permute.xlu0 %6737
        %6739 = vrot.lane.b32.xlu0 %v5121, 64
        %v6740 = vpop.permute.xlu0 %6739
        %6741 = vrot.lane.b32.xlu0 %v5124, 64
        %v6742 = vpop.permute.xlu0 %6741
        %6743 = vrot.lane.b32.xlu0 %v5129, 64
        %v6744 = vpop.permute.xlu0 %6743
        %6745 = vrot.lane.b32.xlu0 %v5132, 64
        %v6746 = vpop.permute.xlu0 %6745
        %6747 = vrot.lane.b32.xlu0 %v5137, 64
        %v6748 = vpop.permute.xlu0 %6747
        %6749 = vrot.lane.b32.xlu0 %v5140, 64
        %v6750 = vpop.permute.xlu0 %6749
        %6751 = vrot.lane.b32.xlu0 %v5145, 64
        %v6752 = vpop.permute.xlu0 %6751
        %6753 = vrot.lane.b32.xlu0 %v5148, 64
        %v6754 = vpop.permute.xlu0 %6753
        %6819 = vrot.lane.b32.xlu0 %v6405, 96
        %v6820 = vpop.permute.xlu0 %6819
        %6821 = vrot.lane.b32.xlu0 %v6408, 96
        %v6822 = vpop.permute.xlu0 %6821
        %6823 = vrot.lane.b32.xlu0 %v6413, 96
        %v6824 = vpop.permute.xlu0 %6823
        %6825 = vrot.lane.b32.xlu0 %v6416, 96
        %v6826 = vpop.permute.xlu0 %6825
        %6827 = vrot.lane.b32.xlu0 %v6421, 96
        %v6828 = vpop.permute.xlu0 %6827
        %6829 = vrot.lane.b32.xlu0 %v6424, 96
        %v6830 = vpop.permute.xlu0 %6829
        %6831 = vrot.lane.b32.xlu0 %v6429, 96
        %v6832 = vpop.permute.xlu0 %6831
        %6833 = vrot.lane.b32.xlu0 %v6432, 96
        %v6834 = vpop.permute.xlu0 %6833
        %6835 = vrot.lane.b32.xlu0 %v6437, 96
        %v6836 = vpop.permute.xlu0 %6835
        %6837 = vrot.lane.b32.xlu0 %v6440, 96
        %v6838 = vpop.permute.xlu0 %6837
        %6839 = vrot.lane.b32.xlu0 %v6445, 96
        %v6840 = vpop.permute.xlu0 %6839
        %6841 = vrot.lane.b32.xlu0 %v6448, 96
        %v6842 = vpop.permute.xlu0 %6841
        %6843 = vrot.lane.b32.xlu0 %v6453, 96
        %v6844 = vpop.permute.xlu0 %6843
        %6845 = vrot.lane.b32.xlu0 %v6456, 96
        %v6846 = vpop.permute.xlu0 %6845
        %6847 = vrot.lane.b32.xlu0 %v6461, 96
        %v6848 = vpop.permute.xlu0 %6847
        %6849 = vrot.lane.b32.xlu0 %v6464, 96
        %v6850 = vpop.permute.xlu0 %6849
        %6851 = vrot.lane.b32.xlu0 %v6469, 96
        %v6852 = vpop.permute.xlu0 %6851
        %6853 = vrot.lane.b32.xlu0 %v6472, 96
        %v6854 = vpop.permute.xlu0 %6853
        %6855 = vrot.lane.b32.xlu0 %v6477, 96
        %v6856 = vpop.permute.xlu0 %6855
        %6857 = vrot.lane.b32.xlu0 %v6480, 96
        %v6858 = vpop.permute.xlu0 %6857
        %6859 = vrot.lane.b32.xlu0 %v6485, 96
        %v6860 = vpop.permute.xlu0 %6859
        %6861 = vrot.lane.b32.xlu0 %v6488, 96
        %v6862 = vpop.permute.xlu0 %6861
        %6863 = vrot.lane.b32.xlu0 %v6493, 96
        %v6864 = vpop.permute.xlu0 %6863
        %6865 = vrot.lane.b32.xlu0 %v6496, 96
        %v6866 = vpop.permute.xlu0 %6865
        %6867 = vrot.lane.b32.xlu0 %v6501, 96
        %v6868 = vpop.permute.xlu0 %6867
        %6869 = vrot.lane.b32.xlu0 %v6504, 96
        %v6870 = vpop.permute.xlu0 %6869
        %6871 = vrot.lane.b32.xlu0 %v6509, 96
        %v6872 = vpop.permute.xlu0 %6871
        %6873 = vrot.lane.b32.xlu0 %v6512, 96
        %v6874 = vpop.permute.xlu0 %6873
        %6875 = vrot.lane.b32.xlu0 %v6517, 96
        %v6876 = vpop.permute.xlu0 %6875
        %6877 = vrot.lane.b32.xlu0 %v6520, 96
        %v6878 = vpop.permute.xlu0 %6877
        %6879 = vrot.lane.b32.xlu0 %v6525, 96
        %v6880 = vpop.permute.xlu0 %6879
        %6881 = vrot.lane.b32.xlu0 %v6528, 96
        %v6882 = vpop.permute.xlu0 %6881
        %v6915 = vsel %vm430, %v2169, %v6564
        %v6916 = vsel %vm430, %v2172, %v6566
        %v6917 = vsel %vm430, %v2177, %v6568
        %v6918 = vsel %vm430, %v2180, %v6570
        %v6919 = vsel %vm430, %v2185, %v6572
        %v6920 = vsel %vm430, %v2188, %v6574
        %v6921 = vsel %vm430, %v2193, %v6576
        %v6922 = vsel %vm430, %v2196, %v6578
        %v6923 = vsel %vm430, %v2201, %v6580
        %v6924 = vsel %vm430, %v2204, %v6582
        %v6925 = vsel %vm430, %v2209, %v6584
        %v6926 = vsel %vm430, %v2212, %v6586
        %v6927 = vsel %vm430, %v2217, %v6588
        %v6928 = vsel %vm430, %v2220, %v6590
        %v6929 = vsel %vm430, %v2225, %v6592
        %v6930 = vsel %vm430, %v2228, %v6594
        %v6931 = vsel %vm430, %v2233, %v6596
        %v6932 = vsel %vm430, %v2236, %v6598
        %v6933 = vsel %vm430, %v2241, %v6600
        %v6934 = vsel %vm430, %v2244, %v6602
        %v6935 = vsel %vm430, %v2249, %v6604
        %v6936 = vsel %vm430, %v2252, %v6606
        %v6937 = vsel %vm430, %v2257, %v6608
        %v6938 = vsel %vm430, %v2260, %v6610
        %v6939 = vsel %vm430, %v2265, %v6612
        %v6940 = vsel %vm430, %v2268, %v6614
        %v6941 = vsel %vm430, %v2273, %v6616
        %v6942 = vsel %vm430, %v2276, %v6618
        %v6943 = vsel %vm430, %v2281, %v6620
        %v6944 = vsel %vm430, %v2284, %v6622
        %v6945 = vsel %vm430, %v2289, %v6624
        %v6946 = vsel %vm430, %v2292, %v6626
        %v6947 = vsel %vm1571, %v6915, %v6692
        %v6948 = vsel %vm1571, %v6916, %v6694
        %v6949 = vsel %vm1571, %v6917, %v6696
        %v6950 = vsel %vm1571, %v6918, %v6698
        %v6951 = vsel %vm1571, %v6919, %v6700
        %v6952 = vsel %vm1571, %v6920, %v6702
        %v6953 = vsel %vm1571, %v6921, %v6704
        %v6954 = vsel %vm1571, %v6922, %v6706
        %v6955 = vsel %vm1571, %v6923, %v6708
        %v6956 = vsel %vm1571, %v6924, %v6710
        %v6957 = vsel %vm1571, %v6925, %v6712
        %v6958 = vsel %vm1571, %v6926, %v6714
        %v6959 = vsel %vm1571, %v6927, %v6716
        %v6960 = vsel %vm1571, %v6928, %v6718
        %v6961 = vsel %vm1571, %v6929, %v6720
        %v6962 = vsel %vm1571, %v6930, %v6722
        %v6963 = vsel %vm1571, %v6931, %v6724
        %v6964 = vsel %vm1571, %v6932, %v6726
        %v6965 = vsel %vm1571, %v6933, %v6728
        %v6966 = vsel %vm1571, %v6934, %v6730
        %v6967 = vsel %vm1571, %v6935, %v6732
        %v6968 = vsel %vm1571, %v6936, %v6734
        %v6969 = vsel %vm1571, %v6937, %v6736
        %v6970 = vsel %vm1571, %v6938, %v6738
        %v6971 = vsel %vm1571, %v6939, %v6740
        %v6972 = vsel %vm1571, %v6940, %v6742
        %v6973 = vsel %vm1571, %v6941, %v6744
        %v6974 = vsel %vm1571, %v6942, %v6746
        %v6975 = vsel %vm1571, %v6943, %v6748
        %v6976 = vsel %vm1571, %v6944, %v6750
        %v6977 = vsel %vm1571, %v6945, %v6752
        %v6978 = vsel %vm1571, %v6946, %v6754
        %v6979 = vsel %vm1604, %v6947, %v6820
        %v6980 = vsel %vm1604, %v6948, %v6822
        %v6981 = vsel %vm1604, %v6949, %v6824
        %v6982 = vsel %vm1604, %v6950, %v6826
        %v6983 = vsel %vm1604, %v6951, %v6828
        %v6984 = vsel %vm1604, %v6952, %v6830
        %v6985 = vsel %vm1604, %v6953, %v6832
        %v6986 = vsel %vm1604, %v6954, %v6834
        %v6987 = vsel %vm1604, %v6955, %v6836
        %v6988 = vsel %vm1604, %v6956, %v6838
        %v6989 = vsel %vm1604, %v6957, %v6840
        %v6990 = vsel %vm1604, %v6958, %v6842
        %v6991 = vsel %vm1604, %v6959, %v6844
        %v6992 = vsel %vm1604, %v6960, %v6846
        %v6993 = vsel %vm1604, %v6961, %v6848
        %v6994 = vsel %vm1604, %v6962, %v6850
        %v6995 = vsel %vm1604, %v6963, %v6852
        %v6996 = vsel %vm1604, %v6964, %v6854
        %v6997 = vsel %vm1604, %v6965, %v6856
        %v6998 = vsel %vm1604, %v6966, %v6858
        %v6999 = vsel %vm1604, %v6967, %v6860
        %v7000 = vsel %vm1604, %v6968, %v6862
        %v7001 = vsel %vm1604, %v6969, %v6864
        %v7002 = vsel %vm1604, %v6970, %v6866
        %v7003 = vsel %vm1604, %v6971, %v6868
        %v7004 = vsel %vm1604, %v6972, %v6870
        %v7005 = vsel %vm1604, %v6973, %v6872
        %v7006 = vsel %vm1604, %v6974, %v6874
        %v7007 = vsel %vm1604, %v6975, %v6876
        %v7008 = vsel %vm1604, %v6976, %v6878
        %v7009 = vsel %vm1604, %v6977, %v6880
        %v7010 = vsel %vm1604, %v6978, %v6882
        %v7011 = vld [vmem:[%s7] sm:$0x1]
        %v7013 = vlaneseq
        %v7014 = vshrl.u32 %v7013, 7
        %v7015 = vsub.s32 0, %v7014
        %v7016 = vrot.slane %v7011, %v7015
        %v7018 = vadd.f32 %v6979, %v7016
        %v7019 = vadd.f32 %v6980, %v7016
        %v7020 = vadd.f32 %v6981, %v7016
        %v7021 = vadd.f32 %v6982, %v7016
        %v7022 = vadd.f32 %v6983, %v7016
        %v7023 = vadd.f32 %v6984, %v7016
        %v7024 = vadd.f32 %v6985, %v7016
        %v7025 = vadd.f32 %v6986, %v7016
        %v7026 = vadd.f32 %v6987, %v7016
        %v7027 = vadd.f32 %v6988, %v7016
        %v7028 = vadd.f32 %v6989, %v7016
        %v7029 = vadd.f32 %v6990, %v7016
        %v7030 = vadd.f32 %v6991, %v7016
        %v7031 = vadd.f32 %v6992, %v7016
        %v7032 = vadd.f32 %v6993, %v7016
        %v7033 = vadd.f32 %v6994, %v7016
        %v7034 = vadd.f32 %v6995, %v7016
        %v7035 = vadd.f32 %v6996, %v7016
        %v7036 = vadd.f32 %v6997, %v7016
        %v7037 = vadd.f32 %v6998, %v7016
        %v7038 = vadd.f32 %v6999, %v7016
        %v7039 = vadd.f32 %v7000, %v7016
        %v7040 = vadd.f32 %v7001, %v7016
        %v7041 = vadd.f32 %v7002, %v7016
        %v7042 = vadd.f32 %v7003, %v7016
        %v7043 = vadd.f32 %v7004, %v7016
        %v7044 = vadd.f32 %v7005, %v7016
        %v7045 = vadd.f32 %v7006, %v7016
        %v7046 = vadd.f32 %v7007, %v7016
        %v7047 = vadd.f32 %v7008, %v7016
        %v7048 = vadd.f32 %v7009, %v7016
        %v7049 = vadd.f32 %v7010, %v7016
        %vm7050 = vcmp.ge.f32.partialorder %v7018, 0.0
        %vm7051 = vcmp.ge.f32.partialorder %v7019, 0.0
        %vm7052 = vcmp.ge.f32.partialorder %v7020, 0.0
        %vm7053 = vcmp.ge.f32.partialorder %v7021, 0.0
        %vm7054 = vcmp.ge.f32.partialorder %v7022, 0.0
        %vm7055 = vcmp.ge.f32.partialorder %v7023, 0.0
        %vm7056 = vcmp.ge.f32.partialorder %v7024, 0.0
        %vm7057 = vcmp.ge.f32.partialorder %v7025, 0.0
        %vm7058 = vcmp.ge.f32.partialorder %v7026, 0.0
        %vm7059 = vcmp.ge.f32.partialorder %v7027, 0.0
        %vm7060 = vcmp.ge.f32.partialorder %v7028, 0.0
        %vm7061 = vcmp.ge.f32.partialorder %v7029, 0.0
        %vm7062 = vcmp.ge.f32.partialorder %v7030, 0.0
        %vm7063 = vcmp.ge.f32.partialorder %v7031, 0.0
        %vm7064 = vcmp.ge.f32.partialorder %v7032, 0.0
        %vm7065 = vcmp.ge.f32.partialorder %v7033, 0.0
        %vm7066 = vcmp.ge.f32.partialorder %v7034, 0.0
        %vm7067 = vcmp.ge.f32.partialorder %v7035, 0.0
        %vm7068 = vcmp.ge.f32.partialorder %v7036, 0.0
        %vm7069 = vcmp.ge.f32.partialorder %v7037, 0.0
        %vm7070 = vcmp.ge.f32.partialorder %v7038, 0.0
        %vm7071 = vcmp.ge.f32.partialorder %v7039, 0.0
        %vm7072 = vcmp.ge.f32.partialorder %v7040, 0.0
        %vm7073 = vcmp.ge.f32.partialorder %v7041, 0.0
        %vm7074 = vcmp.ge.f32.partialorder %v7042, 0.0
        %vm7075 = vcmp.ge.f32.partialorder %v7043, 0.0
        %vm7076 = vcmp.ge.f32.partialorder %v7044, 0.0
        %vm7077 = vcmp.ge.f32.partialorder %v7045, 0.0
        %vm7078 = vcmp.ge.f32.partialorder %v7046, 0.0
        %vm7079 = vcmp.ge.f32.partialorder %v7047, 0.0
        %vm7080 = vcmp.ge.f32.partialorder %v7048, 0.0
        %vm7081 = vcmp.ge.f32.partialorder %v7049, 0.0
        %v7082 = vmul.f32 %v7018, 0.2
        %v7083 = vmul.f32 %v7019, 0.2
        %v7084 = vmul.f32 %v7020, 0.2
        %v7085 = vmul.f32 %v7021, 0.2
        %v7086 = vmul.f32 %v7022, 0.2
        %v7087 = vmul.f32 %v7023, 0.2
        %v7088 = vmul.f32 %v7024, 0.2
        %v7089 = vmul.f32 %v7025, 0.2
        %v7090 = vmul.f32 %v7026, 0.2
        %v7091 = vmul.f32 %v7027, 0.2
        %v7092 = vmul.f32 %v7028, 0.2
        %v7093 = vmul.f32 %v7029, 0.2
        %v7094 = vmul.f32 %v7030, 0.2
        %v7095 = vmul.f32 %v7031, 0.2
        %v7096 = vmul.f32 %v7032, 0.2
        %v7097 = vmul.f32 %v7033, 0.2
        %v7098 = vmul.f32 %v7034, 0.2
        %v7099 = vmul.f32 %v7035, 0.2
        %v7100 = vmul.f32 %v7036, 0.2
        %v7101 = vmul.f32 %v7037, 0.2
        %v7102 = vmul.f32 %v7038, 0.2
        %v7103 = vmul.f32 %v7039, 0.2
        %v7104 = vmul.f32 %v7040, 0.2
        %v7105 = vmul.f32 %v7041, 0.2
        %v7106 = vmul.f32 %v7042, 0.2
        %v7107 = vmul.f32 %v7043, 0.2
        %v7108 = vmul.f32 %v7044, 0.2
        %v7109 = vmul.f32 %v7045, 0.2
        %v7110 = vmul.f32 %v7046, 0.2
        %v7111 = vmul.f32 %v7047, 0.2
        %v7112 = vmul.f32 %v7048, 0.2
        %v7113 = vmul.f32 %v7049, 0.2
        %v7114 = vsel %vm7050, %v7018, %v7082
        %v7115 = vsel %vm7051, %v7019, %v7083
        %v7116 = vsel %vm7052, %v7020, %v7084
        %v7117 = vsel %vm7053, %v7021, %v7085
        %v7118 = vsel %vm7054, %v7022, %v7086
        %v7119 = vsel %vm7055, %v7023, %v7087
        %v7120 = vsel %vm7056, %v7024, %v7088
        %v7121 = vsel %vm7057, %v7025, %v7089
        %v7122 = vsel %vm7058, %v7026, %v7090
        %v7123 = vsel %vm7059, %v7027, %v7091
        %v7124 = vsel %vm7060, %v7028, %v7092
        %v7125 = vsel %vm7061, %v7029, %v7093
        %v7126 = vsel %vm7062, %v7030, %v7094
        %v7127 = vsel %vm7063, %v7031, %v7095
        %v7128 = vsel %vm7064, %v7032, %v7096
        %v7129 = vsel %vm7065, %v7033, %v7097
        %v7130 = vsel %vm7066, %v7034, %v7098
        %v7131 = vsel %vm7067, %v7035, %v7099
        %v7132 = vsel %vm7068, %v7036, %v7100
        %v7133 = vsel %vm7069, %v7037, %v7101
        %v7134 = vsel %vm7070, %v7038, %v7102
        %v7135 = vsel %vm7071, %v7039, %v7103
        %v7136 = vsel %vm7072, %v7040, %v7104
        %v7137 = vsel %vm7073, %v7041, %v7105
        %v7138 = vsel %vm7074, %v7042, %v7106
        %v7139 = vsel %vm7075, %v7043, %v7107
        %v7140 = vsel %vm7076, %v7044, %v7108
        %v7141 = vsel %vm7077, %v7045, %v7109
        %v7142 = vsel %vm7078, %v7046, %v7110
        %v7143 = vsel %vm7079, %v7047, %v7111
        %v7144 = vsel %vm7080, %v7048, %v7112
        %v7145 = vsel %vm7081, %v7049, %v7113
        %v7146 = vpack.c.bf16 %v7115, %v7114
        %v7147 = vpack.c.bf16 %v7117, %v7116
        %v7148 = vpack.c.bf16 %v7119, %v7118
        %v7149 = vpack.c.bf16 %v7121, %v7120
        %v7150 = vpack.c.bf16 %v7123, %v7122
        %v7151 = vpack.c.bf16 %v7125, %v7124
        %v7152 = vpack.c.bf16 %v7127, %v7126
        %v7153 = vpack.c.bf16 %v7129, %v7128
        %v7154 = vpack.c.bf16 %v7131, %v7130
        %v7155 = vpack.c.bf16 %v7133, %v7132
        %v7156 = vpack.c.bf16 %v7135, %v7134
        %v7157 = vpack.c.bf16 %v7137, %v7136
        %v7158 = vpack.c.bf16 %v7139, %v7138
        %v7159 = vpack.c.bf16 %v7141, %v7140
        %v7160 = vpack.c.bf16 %v7143, %v7142
        %v7161 = vpack.c.bf16 %v7145, %v7144
        %v7162 = vld [vmem:[%s8] sm:$0xf]
        %v7163 = vld [vmem:[%s8 + $0x4] sm:$0xf]
        %v7164 = vld [vmem:[%s8 + $0x8] sm:$0xf]
        %v7165 = vld [vmem:[%s8 + $0xc] sm:$0xf]
        %v7166 = vld [vmem:[%s8 + $0x10] sm:$0xf]
        %v7167 = vld [vmem:[%s8 + $0x14] sm:$0xf]
        %v7168 = vld [vmem:[%s8 + $0x18] sm:$0xf]
        %v7169 = vld [vmem:[%s8 + $0x1c] sm:$0xf]
        %v7170 = vld [vmem:[%s8 + $0x20] sm:$0xf]
        %v7171 = vld [vmem:[%s8 + $0x24] sm:$0xf]
        %v7172 = vld [vmem:[%s8 + $0x28] sm:$0xf]
        %v7173 = vld [vmem:[%s8 + $0x2c] sm:$0xf]
        %v7174 = vld [vmem:[%s8 + $0x30] sm:$0xf]
        %v7175 = vld [vmem:[%s8 + $0x34] sm:$0xf]
        %v7176 = vld [vmem:[%s8 + $0x38] sm:$0xf]
        %v7177 = vld [vmem:[%s8 + $0x3c] sm:$0xf]
        %v7178 = vld [vmem:[%s9] sm:$0x1]
        %v7180 = vlaneseq
        %v7181 = vshrl.u32 %v7180, 7
        %v7182 = vsub.s32 0, %v7181
        %v7183 = vrot.slane %v7178, %v7182
        %v7201 = vunpack.c.l.b16 %v7162
        %v7202 = vunpack.c.l.b16 %v7163
        %v7203 = vunpack.c.l.b16 %v7164
        %v7204 = vunpack.c.l.b16 %v7165
        %v7205 = vunpack.c.l.b16 %v7166
        %v7206 = vunpack.c.l.b16 %v7167
        %v7207 = vunpack.c.l.b16 %v7168
        %v7208 = vunpack.c.l.b16 %v7169
        %v7209 = vunpack.c.l.b16 %v7170
        %v7210 = vunpack.c.l.b16 %v7171
        %v7211 = vunpack.c.l.b16 %v7172
        %v7212 = vunpack.c.l.b16 %v7173
        %v7213 = vunpack.c.l.b16 %v7174
        %v7214 = vunpack.c.l.b16 %v7175
        %v7215 = vunpack.c.l.b16 %v7176
        %v7216 = vunpack.c.l.b16 %v7177
        %v7217 = vpack.c.b16 %v7202, %v7201
        %v7218 = vpack.c.b16 %v7204, %v7203
        %v7219 = vpack.c.b16 %v7206, %v7205
        %v7220 = vpack.c.b16 %v7208, %v7207
        %v7221 = vpack.c.b16 %v7210, %v7209
        %v7222 = vpack.c.b16 %v7212, %v7211
        %v7223 = vpack.c.b16 %v7214, %v7213
        %v7224 = vpack.c.b16 %v7216, %v7215
        %7233 = vmatprep.subr.bf16.mxu0 0
        %7234 = vmatpush1.bf16.msra.mxu0 %v7224
        %7235 = vmatprep.subr.bf16.mxu0 0
        %7236 = vmatpush1.bf16.msra.mxu0 %v7223
        %7237 = vmatprep.subr.bf16.mxu0 0
        %7238 = vmatpush1.bf16.msra.mxu0 %v7222
        %7239 = vmatprep.subr.bf16.mxu0 0
        %7240 = vmatpush1.bf16.msra.mxu0 %v7221
        %7241 = vmatprep.subr.bf16.mxu0 0
        %7242 = vmatpush1.bf16.msra.mxu0 %v7220
        %7243 = vmatprep.subr.bf16.mxu0 0
        %7244 = vmatpush1.bf16.msra.mxu0 %v7219
        %7245 = vmatprep.subr.bf16.mxu0 0
        %7246 = vmatpush1.bf16.msra.mxu0 %v7218
        %7247 = vmatprep.subr.bf16.mxu0 0
        %7248 = vmatpush1.bf16.msra.mxu0 %v7217
        %7249 = vmatprep.subr.bf16.mxu0 0
        %7250 = vmatpush2.bf16.msra.mxu0 0
        %7251 = vmatprep.subr.bf16.mxu0 0
        %7252 = vmatpush2.bf16.msra.mxu0 0
        %7253 = vmatprep.subr.bf16.mxu0 0
        %7254 = vmatpush2.bf16.msra.mxu0 0
        %7255 = vmatprep.subr.bf16.mxu0 0
        %7256 = vmatpush2.bf16.msra.mxu0 0
        %7257 = vmatprep.subr.bf16.mxu0 0
        %7258 = vmatpush2.bf16.msra.mxu0 0
        %7259 = vmatprep.subr.bf16.mxu0 0
        %7260 = vmatpush2.bf16.msra.mxu0 0
        %7261 = vmatprep.subr.bf16.mxu0 0
        %7262 = vmatpush2.bf16.msra.mxu0 0
        %7263 = vmatprep.subr.bf16.mxu0 0
        %7264 = vmatpush2.bf16.msra.mxu0 0
        %7265 = vmatprep.mubr.bf16.mxu0 0
        %7266 = vmatmul.mubr.bf16.gmra.mxu0 %v7146
        %v7267 = vpop.f32.mrf.mxu0
        %v7268 = vadd.f32 %v7183, %v7267
        %v7269 = vpop.f32.mrf.mxu0
        %v7270 = vpop.f32.mrf.mxu0
        %v7271 = vadd.f32 %v7183, %v7270
        %v7272 = vpop.f32.mrf.mxu0
        %7273 = vmatprep.mubr.bf16.mxu0 0
        %7274 = vmatmul.mubr.bf16.gmra.mxu0 %v7147
        %v7275 = vpop.f32.mrf.mxu0
        %v7276 = vadd.f32 %v7183, %v7275
        %v7277 = vpop.f32.mrf.mxu0
        %v7278 = vpop.f32.mrf.mxu0
        %v7279 = vadd.f32 %v7183, %v7278
        %v7280 = vpop.f32.mrf.mxu0
        %7281 = vmatprep.mubr.bf16.mxu0 0
        %7282 = vmatmul.mubr.bf16.gmra.mxu0 %v7148
        %v7283 = vpop.f32.mrf.mxu0
        %v7284 = vadd.f32 %v7183, %v7283
        %v7285 = vpop.f32.mrf.mxu0
        %v7286 = vpop.f32.mrf.mxu0
        %v7287 = vadd.f32 %v7183, %v7286
        %v7288 = vpop.f32.mrf.mxu0
        %7289 = vmatprep.mubr.bf16.mxu0 0
        %7290 = vmatmul.mubr.bf16.gmra.mxu0 %v7149
        %v7291 = vpop.f32.mrf.mxu0
        %v7292 = vadd.f32 %v7183, %v7291
        %v7293 = vpop.f32.mrf.mxu0
        %v7294 = vpop.f32.mrf.mxu0
        %v7295 = vadd.f32 %v7183, %v7294
        %v7296 = vpop.f32.mrf.mxu0
        %7297 = vmatprep.mubr.bf16.mxu0 0
        %7298 = vmatmul.mubr.bf16.gmra.mxu0 %v7150
        %v7299 = vpop.f32.mrf.mxu0
        %v7300 = vadd.f32 %v7183, %v7299
        %v7301 = vpop.f32.mrf.mxu0
        %v7302 = vpop.f32.mrf.mxu0
        %v7303 = vadd.f32 %v7183, %v7302
        %v7304 = vpop.f32.mrf.mxu0
        %7305 = vmatprep.mubr.bf16.mxu0 0
        %7306 = vmatmul.mubr.bf16.gmra.mxu0 %v7151
        %v7307 = vpop.f32.mrf.mxu0
        %v7308 = vadd.f32 %v7183, %v7307
        %v7309 = vpop.f32.mrf.mxu0
        %v7310 = vpop.f32.mrf.mxu0
        %v7311 = vadd.f32 %v7183, %v7310
        %v7312 = vpop.f32.mrf.mxu0
        %7313 = vmatprep.mubr.bf16.mxu0 0
        %7314 = vmatmul.mubr.bf16.gmra.mxu0 %v7152
        %v7315 = vpop.f32.mrf.mxu0
        %v7316 = vadd.f32 %v7183, %v7315
        %v7317 = vpop.f32.mrf.mxu0
        %v7318 = vpop.f32.mrf.mxu0
        %v7319 = vadd.f32 %v7183, %v7318
        %v7320 = vpop.f32.mrf.mxu0
        %7321 = vmatprep.mubr.bf16.mxu0 0
        %7322 = vmatmul.mubr.bf16.gmra.mxu0 %v7153
        %v7323 = vpop.f32.mrf.mxu0
        %v7324 = vadd.f32 %v7183, %v7323
        %v7325 = vpop.f32.mrf.mxu0
        %v7326 = vpop.f32.mrf.mxu0
        %v7327 = vadd.f32 %v7183, %v7326
        %v7328 = vpop.f32.mrf.mxu0
        %7329 = vmatprep.mubr.bf16.mxu0 0
        %7330 = vmatmul.mubr.bf16.gmra.mxu0 %v7154
        %v7331 = vpop.f32.mrf.mxu0
        %v7332 = vadd.f32 %v7183, %v7331
        %v7333 = vpop.f32.mrf.mxu0
        %v7334 = vpop.f32.mrf.mxu0
        %v7335 = vadd.f32 %v7183, %v7334
        %v7336 = vpop.f32.mrf.mxu0
        %7337 = vmatprep.mubr.bf16.mxu0 0
        %7338 = vmatmul.mubr.bf16.gmra.mxu0 %v7155
        %v7339 = vpop.f32.mrf.mxu0
        %v7340 = vadd.f32 %v7183, %v7339
        %v7341 = vpop.f32.mrf.mxu0
        %v7342 = vpop.f32.mrf.mxu0
        %v7343 = vadd.f32 %v7183, %v7342
        %v7344 = vpop.f32.mrf.mxu0
        %7345 = vmatprep.mubr.bf16.mxu0 0
        %7346 = vmatmul.mubr.bf16.gmra.mxu0 %v7156
        %v7347 = vpop.f32.mrf.mxu0
        %v7348 = vadd.f32 %v7183, %v7347
        %v7349 = vpop.f32.mrf.mxu0
        %v7350 = vpop.f32.mrf.mxu0
        %v7351 = vadd.f32 %v7183, %v7350
        %v7352 = vpop.f32.mrf.mxu0
        %7353 = vmatprep.mubr.bf16.mxu0 0
        %7354 = vmatmul.mubr.bf16.gmra.mxu0 %v7157
        %v7355 = vpop.f32.mrf.mxu0
        %v7356 = vadd.f32 %v7183, %v7355
        %v7357 = vpop.f32.mrf.mxu0
        %v7358 = vpop.f32.mrf.mxu0
        %v7359 = vadd.f32 %v7183, %v7358
        %v7360 = vpop.f32.mrf.mxu0
        %7361 = vmatprep.mubr.bf16.mxu0 0
        %7362 = vmatmul.mubr.bf16.gmra.mxu0 %v7158
        %v7363 = vpop.f32.mrf.mxu0
        %v7364 = vadd.f32 %v7183, %v7363
        %v7365 = vpop.f32.mrf.mxu0
        %v7366 = vpop.f32.mrf.mxu0
        %v7367 = vadd.f32 %v7183, %v7366
        %v7368 = vpop.f32.mrf.mxu0
        %7369 = vmatprep.mubr.bf16.mxu0 0
        %7370 = vmatmul.mubr.bf16.gmra.mxu0 %v7159
        %v7371 = vpop.f32.mrf.mxu0
        %v7372 = vadd.f32 %v7183, %v7371
        %v7373 = vpop.f32.mrf.mxu0
        %v7374 = vpop.f32.mrf.mxu0
        %v7375 = vadd.f32 %v7183, %v7374
        %v7376 = vpop.f32.mrf.mxu0
        %7377 = vmatprep.mubr.bf16.mxu0 0
        %7378 = vmatmul.mubr.bf16.gmra.mxu0 %v7160
        %v7379 = vpop.f32.mrf.mxu0
        %v7380 = vadd.f32 %v7183, %v7379
        %v7381 = vpop.f32.mrf.mxu0
        %v7382 = vpop.f32.mrf.mxu0
        %v7383 = vadd.f32 %v7183, %v7382
        %v7384 = vpop.f32.mrf.mxu0
        %7385 = vmatprep.mubr.bf16.mxu0 0
        %7386 = vmatmul.mubr.bf16.gmra.mxu0 %v7161
        %v7387 = vpop.f32.mrf.mxu0
        %v7388 = vadd.f32 %v7183, %v7387
        %v7389 = vpop.f32.mrf.mxu0
        %v7390 = vpop.f32.mrf.mxu0
        %v7391 = vadd.f32 %v7183, %v7390
        %v7392 = vpop.f32.mrf.mxu0
        %7393 = vdwg.mxu0
        %v7394 = vadd.f32 %v7268, %v359
        %v7395 = vadd.f32 %v7271, %v360
        %v7396 = vadd.f32 %v7276, %v361
        %v7397 = vadd.f32 %v7279, %v362
        %v7398 = vadd.f32 %v7284, %v363
        %v7399 = vadd.f32 %v7287, %v364
        %v7400 = vadd.f32 %v7292, %v365
        %v7401 = vadd.f32 %v7295, %v366
        %v7402 = vadd.f32 %v7300, %v367
        %v7403 = vadd.f32 %v7303, %v368
        %v7404 = vadd.f32 %v7308, %v369
        %v7405 = vadd.f32 %v7311, %v370
        %v7406 = vadd.f32 %v7316, %v371
        %v7407 = vadd.f32 %v7319, %v372
        %v7408 = vadd.f32 %v7324, %v373
        %v7409 = vadd.f32 %v7327, %v374
        %v7410 = vadd.f32 %v7332, %v375
        %v7411 = vadd.f32 %v7335, %v376
        %v7412 = vadd.f32 %v7340, %v377
        %v7413 = vadd.f32 %v7343, %v378
        %v7414 = vadd.f32 %v7348, %v379
        %v7415 = vadd.f32 %v7351, %v380
        %v7416 = vadd.f32 %v7356, %v381
        %v7417 = vadd.f32 %v7359, %v382
        %v7418 = vadd.f32 %v7364, %v383
        %v7419 = vadd.f32 %v7367, %v384
        %v7420 = vadd.f32 %v7372, %v385
        %v7421 = vadd.f32 %v7375, %v386
        %v7422 = vadd.f32 %v7380, %v387
        %v7423 = vadd.f32 %v7383, %v388
        %v7424 = vadd.f32 %v7388, %v389
        %v7425 = vadd.f32 %v7391, %v390
        %7426 = vst.msk [vmem:[%s352] sm:$0xff] %vm430, %v7394
        %7427 = vst.msk [vmem:[%s352 + $0x8] sm:$0xff] %vm430, %v7395
        %7428 = vst.msk [vmem:[%s352 + $0x10] sm:$0xff] %vm430, %v7396
        %7429 = vst.msk [vmem:[%s352 + $0x18] sm:$0xff] %vm430, %v7397
        %7430 = vst.msk [vmem:[%s352 + $0x20] sm:$0xff] %vm430, %v7398
        %7431 = vst.msk [vmem:[%s352 + $0x28] sm:$0xff] %vm430, %v7399
        %7432 = vst.msk [vmem:[%s352 + $0x30] sm:$0xff] %vm430, %v7400
        %7433 = vst.msk [vmem:[%s352 + $0x38] sm:$0xff] %vm430, %v7401
        %7434 = vst.msk [vmem:[%s352 + $0x40] sm:$0xff] %vm430, %v7402
        %7435 = vst.msk [vmem:[%s352 + $0x48] sm:$0xff] %vm430, %v7403
        %7436 = vst.msk [vmem:[%s352 + $0x50] sm:$0xff] %vm430, %v7404
        %7437 = vst.msk [vmem:[%s352 + $0x58] sm:$0xff] %vm430, %v7405
        %7438 = vst.msk [vmem:[%s352 + $0x60] sm:$0xff] %vm430, %v7406
        %7439 = vst.msk [vmem:[%s352 + $0x68] sm:$0xff] %vm430, %v7407
        %7440 = vst.msk [vmem:[%s352 + $0x70] sm:$0xff] %vm430, %v7408
        %7441 = vst.msk [vmem:[%s352 + $0x78] sm:$0xff] %vm430, %v7409
        %7442 = vst.msk [vmem:[%s352 + $0x80] sm:$0xff] %vm430, %v7410
        %7443 = vst.msk [vmem:[%s352 + $0x88] sm:$0xff] %vm430, %v7411
        %7444 = vst.msk [vmem:[%s352 + $0x90] sm:$0xff] %vm430, %v7412
        %7445 = vst.msk [vmem:[%s352 + $0x98] sm:$0xff] %vm430, %v7413
        %7446 = vst.msk [vmem:[%s352 + $0xa0] sm:$0xff] %vm430, %v7414
        %7447 = vst.msk [vmem:[%s352 + $0xa8] sm:$0xff] %vm430, %v7415
        %7448 = vst.msk [vmem:[%s352 + $0xb0] sm:$0xff] %vm430, %v7416
        %7449 = vst.msk [vmem:[%s352 + $0xb8] sm:$0xff] %vm430, %v7417
        %7450 = vst.msk [vmem:[%s352 + $0xc0] sm:$0xff] %vm430, %v7418
        %7451 = vst.msk [vmem:[%s352 + $0xc8] sm:$0xff] %vm430, %v7419
        %7452 = vst.msk [vmem:[%s352 + $0xd0] sm:$0xff] %vm430, %v7420
        %7453 = vst.msk [vmem:[%s352 + $0xd8] sm:$0xff] %vm430, %v7421
        %7454 = vst.msk [vmem:[%s352 + $0xe0] sm:$0xff] %vm430, %v7422
        %7455 = vst.msk [vmem:[%s352 + $0xe8] sm:$0xff] %vm430, %v7423
        %7456 = vst.msk [vmem:[%s352 + $0xf0] sm:$0xff] %vm430, %v7424
        %7457 = vst.msk [vmem:[%s352 + $0xf8] sm:$0xff] %vm430, %v7425
        %s7458 = sand.u32 %s247, 1
        %s7459 = scalar_lea.sflag [#allocation4], %s7458
        %s7460 = sand.u32 %s247, 1
        %s7461 = smul.addr %s7460, 256
        %s7462 = scalar_lea.vmem [#allocation3], %s7461
        // Predicated region
        $region61: #{tpu_custom_call.1} parent=59 // pred_check
          %p7463 = pneg %p257
        $region62: #{tpu_custom_call.1} parent=59 // pred_check_branch
          %7465 = sbr.rel (%p7463) target = $region64
        $region63: #{tpu_custom_call.1} parent=59 // pred_region
          %s7467 = ssub.s32 4096, 4096
          %7468 = vsyncadd %s7459, %s7467
          %s7469 = smul.addr %s24, 32
          %s7470 = smul.addr %s7469, 128
          %s7471 = scalar_lea.hbm %s10, %s7470
          %s7472 = sshll.u32 %s7462, 4
          %s7473 = int_to_ptr.vmem [resolvable:$true] %s7472
          %7478 = dma.vmem_to_hbm [thread:$0]  %s7473, 4096, %s7471, %s7459, 128, 128, 8
        $region64: #{tpu_custom_call.1} parent=59 // pred_fallthru
          _
      $region60: #{tpu_custom_call.1} parent=5 // pred_fallthru
        _
      %p7479 = scmp.le.s32.totalorder 2, %s19
      // Predicated region
      $region65: #{tpu_custom_call.1} parent=5 // pred_check
        %p7480 = pneg %p7479
      $region66: #{tpu_custom_call.1} parent=5 // pred_check_branch
        %7482 = sbr.rel (%p7480) target = $region68
      $region67: #{tpu_custom_call.1} parent=5 // pred_region
        %s7483 = ssub.s32 %s19, 2
        // Predicated region
        $region69: #{tpu_custom_call.1} parent=67 // pred_check
          %p7484 = pneg %p263
        $region70: #{tpu_custom_call.1} parent=67 // pred_check_branch
          %7486 = sbr.rel (%p7484) target = $region72
        $region71: #{tpu_custom_call.1} parent=67 // pred_region
          %s7487 = sand.u32 %s248, 1
          %s7488 = scalar_lea.sflag [#allocation4], %s7487
          %s7489 = sand.u32 %s248, 1
          %s7490 = smul.addr %s7489, 256
          %s7491 = scalar_lea.vmem [#allocation3], %s7490
          %7492 = dma.done %s7488, 4096
        $region72: #{tpu_custom_call.1} parent=67 // pred_fallthru
          _
      $region68: #{tpu_custom_call.1} parent=5 // pred_fallthru
        _
    $region6: #{tpu_custom_call.1} parent=1 // loop_footer
      %s23 = sadd.s32 1, %s19
    $region7: #{tpu_custom_call.1} parent=1 // loop_footer_branch
      %18 = sbr.rel target = $region3
    $region8: #{tpu_custom_call.1} parent=1 // loop_exit
      _
    %7493 = vsyncpa [#allocation4], 1
    %s7494 = scalar_lea.sflag [#allocation4], 1
    %7495 = vsyncpa %s7494, 1

</llo_original>
